<compile_context>
chip_gen: v7x
topology: tpu7x:2x2x1
jax: 0.10.0
libtpu: 0.0.40
codegen_flags: <defaults>
</compile_context>

<pallas_src>
import functools

import jax
import jax.numpy as jnp
from jax.experimental import pallas as pl
from jax.experimental.pallas import tpu as pltpu

BN_EPS = 1e-5

# Default *scoped* VMEM the compiler grants without an override is ~16 MiB (v5e) /
# ~32 MiB (v6e, v7x); v7x has only 64 MiB physical.  We never override
# vmem_limit_bytes; instead:
UNTILED_VMEM_BYTES = 8 * 1024 * 1024   # fused single-call path only below this
TILE_STEP_VMEM_BYTES = 8 * 1024 * 1024  # double-buffered per-step budget, tiled path


# ----------------------------------------------------------------------------------
# Weight folding & tap extraction (pure layout glue, no arithmetic)
# ----------------------------------------------------------------------------------
def fold_first_weight(w):
    """w: (100, Cout, 4, 4) -> (100, Cout*16), column index = o*16 + (kh*4 + kw)."""
    cin, cout = w.shape[0], w.shape[1]
    return w.reshape(cin, cout * 16)


def fold_deconv_weight(w):
    """ConvTranspose2d(k=4,s=2,p=1) weight (Cin, Cout, 4, 4) -> (4, Cout, Cin*4).

    Output parity p = 2*ry + rx; tap t = 2*a + b maps to kernel index
    (3 - ry - 2a, 3 - rx - 2b)."""
    cin, cout = w.shape[0], w.shape[1]
    per_parity = []
    for ry in range(2):
        for rx in range(2):
            taps = [w[:, :, 3 - ry - 2 * a, 3 - rx - 2 * b]
                    for a in range(2) for b in range(2)]           # each (Cin, Cout)
            wp = jnp.stack(taps, axis=1)                           # (Cin, 4, Cout)
            per_parity.append(jnp.transpose(wp, (2, 0, 1)).reshape(cout, cin * 4))
    return jnp.stack(per_parity, axis=0)                           # (4, Cout, Cin*4)


def build_parity_taps(x):
    """x: (Cin, N, Hi, Wi) channel-major -> taps (4, Cin*4, R), R = N*Hi*Wi.

    taps[2*ry+rx, c*4 + (2*a+b), (n,u,v)] = xpad[c, n, u+ry+a, v+rx+b]."""
    cin, n, hi, wi = x.shape
    xpad = jnp.pad(x, ((0, 0), (0, 0), (1, 1), (1, 1)))
    r = n * hi * wi
    parities = []
    for ry in range(2):
        for rx in range(2):
            taps = []
            for a in range(2):
                for b in range(2):
                    sl = jax.lax.slice(xpad, (0, 0, ry + a, rx + b),
                                       (cin, n, ry + a + hi, rx + b + wi))
                    taps.append(sl.reshape(cin, r))
            parities.append(jnp.stack(taps, axis=1).reshape(cin * 4, r))
    return jnp.stack(parities, axis=0)                             # (4, Cin*4, R)


def interleave_parities(y, n, hi, wi):
    """y: (4, Cout, N*Hi*Wi) parity-separated -> (Cout, N, 2Hi, 2Wi) channel-major."""
    cout = y.shape[1]
    y = y.reshape(2, 2, cout, n, hi, wi)            # (ry, rx, o, n, u, v)
    y = jnp.transpose(y, (2, 3, 4, 0, 5, 1))        # (o, n, u, ry, v, rx)
    return y.reshape(cout, n, 2 * hi, 2 * wi)


def _pick_r_tile(r, bytes_per_col):
    """Largest lane-dense (multiple-of-128) tile dividing r whose double-buffered
    per-step footprint fits TILE_STEP_VMEM_BYTES; falls back to r (small layers)."""
    divs = [t for t in (4096, 2048, 1024, 512, 256, 128) if r % t == 0]
    if not divs:
        return r
    for t in divs:                                   # descending
        if 2 * t * bytes_per_col <= TILE_STEP_VMEM_BYTES:
            return t
    return divs[-1]


# ----------------------------------------------------------------------------------
# Layer 1: deconv1 (4x4, stride 1, pad 0 on a 1x1 input) + BN + ReLU
# ----------------------------------------------------------------------------------
def first_block(z, w, gamma, beta):
    """z: (N, 100, 1, 1) f32 -> channel-major bf16 activation (Cout, N, 4, 4).

    Single matmul Y (N, Cout*16) = Z (N, 100) @ W (100, Cout*16): output last dim is
    lane-dense.  Conv bias is dropped (exactly cancelled by BN mean subtraction).
    Tiled over channel groups; per-channel BN stats never straddle a tile."""
    n = z.shape[0]
    cin, cout = w.shape[0], w.shape[1]
    wm = fold_first_weight(w).astype(jnp.bfloat16)       # (100, Cout*16) bf16
    z2 = z.reshape(n, cin)                               # (N, 100) f32

    tc = next(t for t in (64, 32, 16, 8) if cout % t == 0)   # channels per tile
    cols = tc * 16                                            # multiple of 128

    # 0/1 grouping matrices: sum 16 consecutive columns per channel / broadcast back.
    g_group = (jnp.arange(cols)[:, None] // 16 ==
               jnp.arange(tc)[None, :]).astype(jnp.float32)   # (cols, tc)
    g_spread = g_group.T                                      # (tc, cols)
    gcols = jnp.repeat(gamma, 16).reshape(1, cout * 16)
    bcols = jnp.repeat(beta, 16).reshape(1, cout * 16)
    inv_cnt = 1.0 / float(n * 16)

    def kernel(z_ref, w_ref, gc_ref, bc_ref, grp_ref, spr_ref, o_ref):
        y = jnp.dot(z_ref[...], w_ref[...].astype(jnp.float32),
                    preferred_element_type=jnp.float32)                 # (N, cols)
        colsum = jnp.sum(y, axis=0, keepdims=True)                      # (1, cols)
        colsq = jnp.sum(y * y, axis=0, keepdims=True)
        mean_c = jnp.dot(colsum, grp_ref[...],
                         preferred_element_type=jnp.float32) * inv_cnt  # (1, tc)
        ex2_c = jnp.dot(colsq, grp_ref[...],
                        preferred_element_type=jnp.float32) * inv_cnt
        inv_c = jax.lax.rsqrt(ex2_c - mean_c * mean_c + BN_EPS)
        mean_cols = jnp.dot(mean_c, spr_ref[...], preferred_element_type=jnp.float32)
        inv_cols = jnp.dot(inv_c, spr_ref[...], preferred_element_type=jnp.float32)
        o = (y - mean_cols) * inv_cols * gc_ref[...] + bc_ref[...]
        o_ref[...] = jnp.maximum(o, 0.0).astype(o_ref.dtype)

    cost = pl.CostEstimate(
        flops=2 * n * cin * cout * 16 + 10 * n * cout * 16,
        transcendentals=cout,
        bytes_accessed=(n * cin * 4 + cin * cout * 16 * 2 + 4 * cout * 16 * 4
                        + n * cout * 16 * 2),
    )
    y = pl.pallas_call(
        kernel,
        out_shape=jax.ShapeDtypeStruct((n, cout * 16), jnp.bfloat16),
        grid=(cout // tc,),
        in_specs=[
            pl.BlockSpec((n, cin), lambda i: (0, 0)),
            pl.BlockSpec((cin, cols), lambda i: (0, i)),
            pl.BlockSpec((1, cols), lambda i: (0, i)),
            pl.BlockSpec((1, cols), lambda i: (0, i)),
            pl.BlockSpec((cols, tc), lambda i: (0, 0)),
            pl.BlockSpec((tc, cols), lambda i: (0, 0)),
        ],
        out_specs=pl.BlockSpec((n, cols), lambda i: (0, i)),
        compiler_params=pltpu.CompilerParams(dimension_semantics=("parallel",)),
        cost_estimate=cost,
    )(z2, wm, gcols, bcols, g_group, g_spread)
    # (N, Cout*16) -> channel-major (Cout, N, 4, 4)
    return jnp.transpose(y.reshape(n, cout, 4, 4), (1, 0, 2, 3))


# ----------------------------------------------------------------------------------
# Layers 2-4: deconv (4x4, stride 2, pad 1) + BN + ReLU
# ----------------------------------------------------------------------------------
def _bn_relu_fused_small(taps, wf, gamma, beta, cout, ck, r):
    """Single fused kernel, used only when the whole layer provably fits well under the
    smallest default scoped-VMEM budget.  Each parity's y is stored to o_ref[p] while
    per-channel sum/sumsq accumulate, then normalized in place (no 4 live temporaries)."""
    g2 = gamma.reshape(cout, 1)
    b2 = beta.reshape(cout, 1)
    inv_cnt = 1.0 / (4.0 * r)

    def kernel(t_ref, w_ref, g_ref, be_ref, o_ref):
        acc_s = jnp.zeros((cout, 1), jnp.float32)
        acc_q = jnp.zeros((cout, 1), jnp.float32)
        for p in range(4):
            yp = jnp.dot(w_ref[p].astype(jnp.float32),
                         t_ref[p].astype(jnp.float32),
                         preferred_element_type=jnp.float32)       # (Cout, R)
            o_ref[p] = yp.astype(o_ref.dtype)
            acc_s = acc_s + jnp.sum(yp, axis=-1, keepdims=True)
            acc_q = acc_q + jnp.sum(yp * yp, axis=-1, keepdims=True)
        mean = acc_s * inv_cnt
        var = acc_q * inv_cnt - mean * mean
        scale = jax.lax.rsqrt(var + BN_EPS) * g_ref[...]
        shift = be_ref[...] - mean * scale
        for p in range(4):
            yp = o_ref[p].astype(jnp.float32)
            o_ref[p] = jnp.maximum(yp * scale + shift, 0.0).astype(o_ref.dtype)

    cost = pl.CostEstimate(
        flops=2 * 4 * cout * ck * r + 12 * 4 * cout * r,
        transcendentals=cout,
        bytes_accessed=4 * ck * r * 2 + 4 * cout * ck * 2 + 2 * cout * 4 + 4 * cout * r * 2,
    )
    return pl.pallas_call(
        kernel,
        out_shape=jax.ShapeDtypeStruct((4, cout, r), jnp.bfloat16),
        in_specs=[pl.BlockSpec(memory_space=pltpu.MemorySpace.VMEM)] * 4,
        out_specs=pl.BlockSpec(memory_space=pltpu.MemorySpace.VMEM),
        cost_estimate=cost,
    )(taps, wf, g2, b2)


def _bn_relu_tiled(taps, wf, gamma, beta, cout, ck, r):
    """Tiled streaming path: grid over (parity, R-tiles) with both axes "arbitrary";
    per-channel sum/sumsq accumulate into resident outputs (pl.when init on step 0);
    un-normalized y streams to HBM in f32; a second fully "parallel" pass applies
    scale/shift + ReLU and writes bf16.  Per-step VMEM is bounded for any d / batch."""
    tr = _pick_r_tile(r, bytes_per_col=ck * 2 + cout * 4)
    nr = r // tr

    def phase_a(t_ref, w_ref, y_ref, s_ref, q_ref):
        @pl.when(jnp.logical_and(pl.program_id(0) == 0, pl.program_id(1) == 0))
        def _():
            s_ref[...] = jnp.zeros_like(s_ref)
            q_ref[...] = jnp.zeros_like(q_ref)
        y = jnp.dot(w_ref[...].astype(jnp.float32),
                    t_ref[...].astype(jnp.float32),
                    preferred_element_type=jnp.float32)            # (Cout, tr)
        y_ref[...] = y
        s_ref[...] += jnp.sum(y, axis=-1, keepdims=True)
        q_ref[...] += jnp.sum(y * y, axis=-1, keepdims=True)

    cost_a = pl.CostEstimate(
        flops=2 * 4 * cout * ck * r + 4 * 4 * cout * r,
        transcendentals=0,
        bytes_accessed=4 * ck * r * 2 + 4 * 4 * cout * ck * 2 + 4 * cout * r * 4 + 2 * cout * 4,
    )
    y, ssum, sqsum = pl.pallas_call(
        phase_a,
        out_shape=(jax.ShapeDtypeStruct((4, cout, r), jnp.float32),
                   jax.ShapeDtypeStruct((cout, 1), jnp.float32),
                   jax.ShapeDtypeStruct((cout, 1), jnp.float32)),
        grid=(4, nr),
        in_specs=[
            pl.BlockSpec((None, ck, tr), lambda p, i: (p, 0, i)),
            pl.BlockSpec((None, cout, ck), lambda p, i: (p, 0, 0)),
        ],
        out_specs=(
            pl.BlockSpec((None, cout, tr), lambda p, i: (p, 0, i)),
            pl.BlockSpec((cout, 1), lambda p, i: (0, 0)),
            pl.BlockSpec((cout, 1), lambda p, i: (0, 0)),
        ),
        compiler_params=pltpu.CompilerParams(
            dimension_semantics=("arbitrary", "arbitrary")),
        cost_estimate=cost_a,
    )(taps, wf)

    # Per-channel scale/shift: a few scalars -- plain XLA ops (training-mode BN stats,
    # biased variance via E[x^2] - E[x]^2).
    cnt = 4.0 * r
    mean = ssum / cnt
    var = sqsum / cnt - mean * mean
    scale = jax.lax.rsqrt(var + BN_EPS) * gamma.reshape(cout, 1)
    shift = beta.reshape(cout, 1) - mean * scale

    def phase_b(y_ref, sc_ref, sh_ref, o_ref):
        o_ref[...] = jnp.maximum(
            y_ref[...] * sc_ref[...] + sh_ref[...], 0.0).astype(o_ref.dtype)

    cost_b = pl.CostEstimate(
        flops=3 * 4 * cout * r,
        transcendentals=0,
        bytes_accessed=4 * cout * r * 4 + 4 * cout * r * 2 + 2 * cout * 4,
    )
    return pl.pallas_call(
        phase_b,
        out_shape=jax.ShapeDtypeStruct((4, cout, r), jnp.bfloat16),
        grid=(4, nr),
        in_specs=[
            pl.BlockSpec((None, cout, tr), lambda p, i: (p, 0, i)),
            pl.BlockSpec((cout, 1), lambda p, i: (0, 0)),
            pl.BlockSpec((cout, 1), lambda p, i: (0, 0)),
        ],
        out_specs=pl.BlockSpec((None, cout, tr), lambda p, i: (p, 0, i)),
        compiler_params=pltpu.CompilerParams(
            dimension_semantics=("parallel", "parallel")),
        cost_estimate=cost_b,
    )(y, scale, shift)


def deconv_bn_relu_block(x, w, gamma, beta, force_tiled=False):
    """x: channel-major bf16 (Cin, N, Hi, Wi) -> bf16 (Cout, N, 2Hi, 2Wi).

    ConvTranspose2d(k=4,s=2,p=1) decomposed into 4 output parities; per parity the
    whole layer is one MXU matmul  y_p (Cout, R) = W_p (Cout, Cin*4) @ taps_p (Cin*4, R).
    Conv bias dropped (cancelled exactly by BN mean subtraction)."""
    cin, n, hi, wi = x.shape
    cout = w.shape[1]
    r = n * hi * wi
    ck = 4 * cin

    taps = build_parity_taps(x)                           # (4, ck, R) bf16
    wf = fold_deconv_weight(w).astype(jnp.bfloat16)       # (4, Cout, ck) bf16

    footprint = 4 * ck * r * 2 + 4 * cout * ck * 2 + 4 * cout * r * 2 + 4 * cout * 4
    if footprint <= UNTILED_VMEM_BYTES and not force_tiled:
        y = _bn_relu_fused_small(taps, wf, gamma, beta, cout, ck, r)
    else:
        y = _bn_relu_tiled(taps, wf, gamma, beta, cout, ck, r)
    return interleave_parities(y, n, hi, wi)


# ----------------------------------------------------------------------------------
# Layer 5: deconv (4x4, stride 2, pad 1) + bias + tanh
# ----------------------------------------------------------------------------------
def deconv_tanh_block(x, w, b):
    """x: channel-major bf16 (Cin, N, Hi, Wi) -> f32 (Cout, N, 2Hi, 2Wi).

    All 4 parities are computed inside one kernel (output block (4*Cout, tr)) so the
    Cout=3 rows become a 12-row store and the tiny weights stay resident; the grid is
    only over lane-dense R tiles."""
    cin, n, hi, wi = x.shape
    cout = w.shape[1]
    r = n * hi * wi
    ck = 4 * cin

    taps = build_parity_taps(x)                              # (4, ck, R) bf16
    wf = fold_deconv_weight(w).astype(jnp.bfloat16)          # (4, Cout, ck) bf16
    b2 = b.reshape(cout, 1).astype(jnp.float32)

    tr = _pick_r_tile(r, bytes_per_col=4 * ck * 2 + 4 * cout * 4)
    nsteps = r // tr

    def kernel(t_ref, w_ref, b_ref, o_ref):
        parts = []
        for p in range(4):
            yp = jnp.dot(w_ref[p].astype(jnp.float32),
                         t_ref[p].astype(jnp.float32),
                         preferred_element_type=jnp.float32)     # (Cout, tr)
            parts.append(jnp.tanh(yp + b_ref[...]))
        o_ref[...] = jnp.concatenate(parts, axis=0)              # (4*Cout, tr)

    cost = pl.CostEstimate(
        flops=2 * 4 * cout * ck * r + 2 * 4 * cout * r,
        transcendentals=4 * cout * r,
        bytes_accessed=4 * ck * r * 2 + 4 * cout * ck * 2 + cout * 4 + 4 * cout * r * 4,
    )
    y = pl.pallas_call(
        kernel,
        out_shape=jax.ShapeDtypeStruct((4 * cout, r), jnp.float32),
        grid=(nsteps,),
        in_specs=[
            pl.BlockSpec((4, ck, tr), lambda i: (0, 0, i)),
            pl.BlockSpec((4, cout, ck), lambda i: (0, 0, 0)),
            pl.BlockSpec((cout, 1), lambda i: (0, 0)),
        ],
        out_specs=pl.BlockSpec((4 * cout, tr), lambda i: (0, i)),
        compiler_params=pltpu.CompilerParams(dimension_semantics=("parallel",)),
        cost_estimate=cost,
    )(taps, wf, b2)
    return interleave_parities(y.reshape(4, cout, r), n, hi, wi)


# ----------------------------------------------------------------------------------
# Full generator forward, parameters, pure-JAX reference, driver
# ----------------------------------------------------------------------------------
def layer_cfgs(d):
    return [(100, 8 * d, True), (8 * d, 4 * d, True), (4 * d, 2 * d, True),
            (2 * d, d, True), (d, 3, False)]


def init_params(key, d):
    """Conv weights ~ N(0, 0.02) as in weight_init(0, 0.02).  PyTorch would zero the
    conv biases and leave BN affine at (1, 0); here they get small random values so the
    validation below exercises bias / affine handling (forward semantics unchanged)."""
    params = []
    for cin, cout, has_bn in layer_cfgs(d):
        key, kw, kb, kg, kbe = jax.random.split(key, 5)
        w = 0.02 * jax.random.normal(kw, (cin, cout, 4, 4), jnp.float32)
        b = 0.05 * jax.random.normal(kb, (cout,), jnp.float32)
        if has_bn:
            g = 1.0 + 0.1 * jax.random.normal(kg, (cout,), jnp.float32)
            be = 0.1 * jax.random.normal(kbe, (cout,), jnp.float32)
        else:
            g = be = None
        params.append((w, b, g, be))
    return params


def generator_forward(z, params, force_tiled=False):
    w1, _b1, g1, be1 = params[0]                     # pre-BN bias dropped (BN cancels it)
    x = first_block(z, w1, g1, be1)                  # (8d, N, 4, 4) bf16 channel-major
    for (w, _b, g, be) in params[1:-1]:
        x = deconv_bn_relu_block(x, w, g, be, force_tiled=force_tiled)
    w5, b5, _, _ = params[-1]
    x = deconv_tanh_block(x, w5, b5)                 # (3, N, 64, 64) f32
    return jnp.transpose(x, (1, 0, 2, 3))            # (N, 3, 64, 64), PyTorch layout


def _ref_conv_transpose(x, w, stride, padding):
    """f32 reference for PyTorch ConvTranspose2d with weight layout (Cin, Cout, k, k)."""
    k = w.shape[2]
    kern = jnp.flip(w, axis=(2, 3)).transpose(1, 0, 2, 3)    # (Cout, Cin, k, k)
    pad = k - 1 - padding
    return jax.lax.conv_general_dilated(
        x, kern, window_strides=(1, 1), padding=((pad, pad), (pad, pad)),
        lhs_dilation=(stride, stride),
        dimension_numbers=("NCHW", "OIHW", "NCHW"))


def generator_reference(z, params):
    """Pure-JAX f32 reference of Generator.forward (training-mode BatchNorm)."""
    x = z
    for li, (w, b, g, be) in enumerate(params):
        stride, pad = (1, 0) if li == 0 else (2, 1)
        x = _ref_conv_transpose(x, w, stride, pad) + b.reshape(1, -1, 1, 1)
        if g is not None:
            mean = jnp.mean(x, axis=(0, 2, 3), keepdims=True)
            var = jnp.mean(jnp.square(x - mean), axis=(0, 2, 3), keepdims=True)
            x = (x - mean) * jax.lax.rsqrt(var + BN_EPS)
            x = x * g.reshape(1, -1, 1, 1) + be.reshape(1, -1, 1, 1)
            x = jnp.maximum(x, 0.0)
        else:
            x = jnp.tanh(x)
    return x


if __name__ == "__main__":
    d = 4
    key = jax.random.PRNGKey(0)
    pkey, zkey = jax.random.split(key)
    params = init_params(pkey, d)
    z = jax.random.normal(zkey, (2, 100, 1, 1), jnp.float32)   # latent, as in DCGAN

    fwd = jax.jit(functools.partial(generator_forward, force_tiled=False))
    out = jax.block_until_ready(fwd(z, params))
    assert out.shape == (2, 3, 64, 64), out.shape
    assert bool(jnp.all(jnp.isfinite(out)))
    assert bool(jnp.all((out >= -1.0) & (out <= 1.0)))          # tanh output range

    # Validate the parity/tap decomposition, BN and tanh against a pure-JAX f32
    # reference.  bf16 activation/weight storage is the only deliberate deviation from
    # PyTorch f32 (expected error O(1e-2) at most; an index-mapping bug would be O(1)).
    ref = generator_reference(z, params)
    assert float(jnp.max(jnp.abs(out - ref))) < 5e-2

    # Also exercise the tiled streaming-BN path (used when a layer exceeds the honest
    # untiled VMEM budget, e.g. large d / batch).
    fwd_tiled = jax.jit(functools.partial(generator_forward, force_tiled=True))
    out_tiled = jax.block_until_ready(fwd_tiled(z, params))
    assert float(jnp.max(jnp.abs(out_tiled - ref))) < 5e-2

    print("KERNEL_OK")
</pallas_src>

<mosaic_0001>
module attributes {stable_mosaic.version = 11 : i64} {
  func.func @kernel(%arg0: i32, %arg1: memref<2x100xf32, #tpu.memory_space<vmem>>, %arg2: memref<100x512xbf16, #tpu.memory_space<vmem>>, %arg3: memref<1x512xf32, #tpu.memory_space<vmem>>, %arg4: memref<1x512xf32, #tpu.memory_space<vmem>>, %arg5: memref<512x32xf32, #tpu.memory_space<vmem>>, %arg6: memref<32x512xf32, #tpu.memory_space<vmem>>, %arg7: memref<2x512xbf16, #tpu.memory_space<vmem>>) attributes {dimension_semantics = [#tpu.dimension_semantics<parallel>], iteration_bounds = array<i64: 1>, scalar_prefetch = 0 : i64, scratch_operands = 0 : i64, tpu.core_type = #tpu.core_type<tc>, window_params = [{pipeline_mode = #tpu.pipeline_mode<synchronous>, transform_indices = @transform_0, window_bounds = array<i64: 2, 100>}, {transform_indices = @transform_1, window_bounds = array<i64: 100, 512>}, {transform_indices = @transform_2, window_bounds = array<i64: 1, 512>}, {transform_indices = @transform_3, window_bounds = array<i64: 1, 512>}, {pipeline_mode = #tpu.pipeline_mode<synchronous>, transform_indices = @transform_4, window_bounds = array<i64: 512, 32>}, {pipeline_mode = #tpu.pipeline_mode<synchronous>, transform_indices = @transform_5, window_bounds = array<i64: 32, 512>}, {transform_indices = @transform_6, window_bounds = array<i64: 2, 512>}]} {
    %c0 = arith.constant 0 : index
    %c0_0 = arith.constant 0 : index
    %0 = vector.load %arg1[%c0, %c0_0] : memref<2x100xf32, #tpu.memory_space<vmem>>, vector<2x100xf32>
    %c0_1 = arith.constant 0 : index
    %c0_2 = arith.constant 0 : index
    %1 = vector.load %arg2[%c0_1, %c0_2] : memref<100x512xbf16, #tpu.memory_space<vmem>>, vector<100x512xbf16>
    %2 = arith.extf %1 : vector<100x512xbf16> to vector<100x512xf32>
    %cst = arith.constant dense<0.000000e+00> : vector<2x512xf32>
    %3 = tpu.matmul %0, %2, %cst {dimension_numbers = #tpu.dot_dimension_numbers<[1], [0], [0], [1], [0, 0, 1, 1], [], []>} : vector<2x100xf32>, vector<100x512xf32>, vector<2x512xf32> -> vector<2x512xf32>
    %cst_3 = arith.constant dense<0.000000e+00> : vector<512xf32>
    %4 = vector.multi_reduction <add>, %3, %cst_3 [0] : vector<2x512xf32> to vector<512xf32>
    %5 = vector.shape_cast %4 : vector<512xf32> to vector<1x512xf32>
    %6 = arith.mulf %3, %3 : vector<2x512xf32>
    %cst_4 = arith.constant dense<0.000000e+00> : vector<512xf32>
    %7 = vector.multi_reduction <add>, %6, %cst_4 [0] : vector<2x512xf32> to vector<512xf32>
    %8 = vector.shape_cast %7 : vector<512xf32> to vector<1x512xf32>
    %c0_5 = arith.constant 0 : index
    %c0_6 = arith.constant 0 : index
    %9 = vector.load %arg5[%c0_5, %c0_6] : memref<512x32xf32, #tpu.memory_space<vmem>>, vector<512x32xf32>
    %cst_7 = arith.constant dense<0.000000e+00> : vector<1x32xf32>
    %10 = tpu.matmul %5, %9, %cst_7 {dimension_numbers = #tpu.dot_dimension_numbers<[1], [0], [0], [1], [0, 0, 1, 1], [], []>} : vector<1x512xf32>, vector<512x32xf32>, vector<1x32xf32> -> vector<1x32xf32>
    %cst_8 = arith.constant 3.125000e-02 : f32
    %11 = vector.broadcast %cst_8 : f32 to vector<1x32xf32>
    %12 = arith.mulf %10, %11 : vector<1x32xf32>
    %c0_9 = arith.constant 0 : index
    %c0_10 = arith.constant 0 : index
    %13 = vector.load %arg5[%c0_9, %c0_10] : memref<512x32xf32, #tpu.memory_space<vmem>>, vector<512x32xf32>
    %cst_11 = arith.constant dense<0.000000e+00> : vector<1x32xf32>
    %14 = tpu.matmul %8, %13, %cst_11 {dimension_numbers = #tpu.dot_dimension_numbers<[1], [0], [0], [1], [0, 0, 1, 1], [], []>} : vector<1x512xf32>, vector<512x32xf32>, vector<1x32xf32> -> vector<1x32xf32>
    %cst_12 = arith.constant 3.125000e-02 : f32
    %15 = vector.broadcast %cst_12 : f32 to vector<1x32xf32>
    %16 = arith.mulf %14, %15 : vector<1x32xf32>
    %17 = arith.mulf %12, %12 : vector<1x32xf32>
    %18 = arith.subf %16, %17 : vector<1x32xf32>
    %cst_13 = arith.constant 9.99999974E-6 : f32
    %19 = vector.broadcast %cst_13 : f32 to vector<1x32xf32>
    %20 = arith.addf %18, %19 : vector<1x32xf32>
    %21 = math.rsqrt %20 : vector<1x32xf32>
    %c0_14 = arith.constant 0 : index
    %c0_15 = arith.constant 0 : index
    %22 = vector.load %arg6[%c0_14, %c0_15] : memref<32x512xf32, #tpu.memory_space<vmem>>, vector<32x512xf32>
    %cst_16 = arith.constant dense<0.000000e+00> : vector<1x512xf32>
    %23 = tpu.matmul %12, %22, %cst_16 {dimension_numbers = #tpu.dot_dimension_numbers<[1], [0], [0], [1], [0, 0, 1, 1], [], []>} : vector<1x32xf32>, vector<32x512xf32>, vector<1x512xf32> -> vector<1x512xf32>
    %c0_17 = arith.constant 0 : index
    %c0_18 = arith.constant 0 : index
    %24 = vector.load %arg6[%c0_17, %c0_18] : memref<32x512xf32, #tpu.memory_space<vmem>>, vector<32x512xf32>
    %cst_19 = arith.constant dense<0.000000e+00> : vector<1x512xf32>
    %25 = tpu.matmul %21, %24, %cst_19 {dimension_numbers = #tpu.dot_dimension_numbers<[1], [0], [0], [1], [0, 0, 1, 1], [], []>} : vector<1x32xf32>, vector<32x512xf32>, vector<1x512xf32> -> vector<1x512xf32>
    %26 = vector.broadcast %23 : vector<1x512xf32> to vector<2x512xf32>
    %27 = arith.subf %3, %26 : vector<2x512xf32>
    %28 = vector.broadcast %25 : vector<1x512xf32> to vector<2x512xf32>
    %29 = arith.mulf %27, %28 : vector<2x512xf32>
    %c0_20 = arith.constant 0 : index
    %c0_21 = arith.constant 0 : index
    %30 = vector.load %arg3[%c0_20, %c0_21] : memref<1x512xf32, #tpu.memory_space<vmem>>, vector<1x512xf32>
    %31 = vector.broadcast %30 : vector<1x512xf32> to vector<2x512xf32>
    %32 = arith.mulf %29, %31 : vector<2x512xf32>
    %c0_22 = arith.constant 0 : index
    %c0_23 = arith.constant 0 : index
    %33 = vector.load %arg4[%c0_22, %c0_23] : memref<1x512xf32, #tpu.memory_space<vmem>>, vector<1x512xf32>
    %34 = vector.broadcast %33 : vector<1x512xf32> to vector<2x512xf32>
    %35 = arith.addf %32, %34 : vector<2x512xf32>
    %cst_24 = arith.constant 0.000000e+00 : f32
    %36 = vector.broadcast %cst_24 : f32 to vector<2x512xf32>
    %37 = arith.maximumf %35, %36 : vector<2x512xf32>
    %38 = arith.truncf %37 : vector<2x512xf32> to vector<2x512xbf16>
    %c0_25 = arith.constant 0 : index
    %c0_26 = arith.constant 0 : index
    %39 = vector.load %arg7[%c0_25, %c0_26] : memref<2x512xbf16, #tpu.memory_space<vmem>>, vector<2x512xbf16>
    tpu.vector_store %arg7[%c0_25, %c0_26], %38 {strides = array<i32>} : memref<2x512xbf16, #tpu.memory_space<vmem>>, vector<2x512xbf16>,
    return
  }
  func.func @transform_0(%arg0: i32) -> (i32, i32) {
    %c0_i32 = arith.constant 0 : i32
    %c0_i32_0 = arith.constant 0 : i32
    %c0_i32_1 = arith.constant 0 : i32
    return %c0_i32, %c0_i32_0 : i32, i32
  }
  func.func @transform_1(%arg0: i32) -> (i32, i32) {
    %c0_i32 = arith.constant 0 : i32
    %c0_i32_0 = arith.constant 0 : i32
    return %c0_i32, %arg0 : i32, i32
  }
  func.func @transform_2(%arg0: i32) -> (i32, i32) {
    %c0_i32 = arith.constant 0 : i32
    %c0_i32_0 = arith.constant 0 : i32
    return %c0_i32, %arg0 : i32, i32
  }
  func.func @transform_3(%arg0: i32) -> (i32, i32) {
    %c0_i32 = arith.constant 0 : i32
    %c0_i32_0 = arith.constant 0 : i32
    return %c0_i32, %arg0 : i32, i32
  }
  func.func @transform_4(%arg0: i32) -> (i32, i32) {
    %c0_i32 = arith.constant 0 : i32
    %c0_i32_0 = arith.constant 0 : i32
    %c0_i32_1 = arith.constant 0 : i32
    return %c0_i32, %c0_i32_0 : i32, i32
  }
  func.func @transform_5(%arg0: i32) -> (i32, i32) {
    %c0_i32 = arith.constant 0 : i32
    %c0_i32_0 = arith.constant 0 : i32
    %c0_i32_1 = arith.constant 0 : i32
    return %c0_i32, %c0_i32_0 : i32, i32
  }
  func.func @transform_6(%arg0: i32) -> (i32, i32) {
    %c0_i32 = arith.constant 0 : i32
    %c0_i32_0 = arith.constant 0 : i32
    return %c0_i32, %arg0 : i32, i32
  }
}

module attributes {stable_mosaic.version = 11 : i64} {
  func.func @kernel(%arg0: memref<4x128x32xbf16, #tpu.memory_space<vmem>>, %arg1: memref<4x16x128xbf16, #tpu.memory_space<vmem>>, %arg2: memref<16x1xf32, #tpu.memory_space<vmem>>, %arg3: memref<16x1xf32, #tpu.memory_space<vmem>>, %arg4: memref<4x16x32xbf16, #tpu.memory_space<vmem>>) attributes {dimension_semantics = [], scalar_prefetch = 0 : i64, scratch_operands = 0 : i64, tpu.core_type = #tpu.core_type<tc>} {
    %cst = arith.constant 0.000000e+00 : f32
    %0 = vector.broadcast %cst : f32 to vector<16x1xf32>
    %cst_0 = arith.constant 0.000000e+00 : f32
    %1 = vector.broadcast %cst_0 : f32 to vector<16x1xf32>
    %c0 = arith.constant 0 : index
    %c0_1 = arith.constant 0 : index
    %c0_2 = arith.constant 0 : index
    %2 = vector.load %arg1[%c0, %c0_1, %c0_2] : memref<4x16x128xbf16, #tpu.memory_space<vmem>>, vector<1x16x128xbf16>
    %3 = vector.shape_cast %2 : vector<1x16x128xbf16> to vector<16x128xbf16>
    %4 = arith.extf %3 : vector<16x128xbf16> to vector<16x128xf32>
    %c0_3 = arith.constant 0 : index
    %c0_4 = arith.constant 0 : index
    %c0_5 = arith.constant 0 : index
    %5 = vector.load %arg0[%c0_3, %c0_4, %c0_5] : memref<4x128x32xbf16, #tpu.memory_space<vmem>>, vector<1x128x32xbf16>
    %6 = vector.shape_cast %5 : vector<1x128x32xbf16> to vector<128x32xbf16>
    %7 = arith.extf %6 : vector<128x32xbf16> to vector<128x32xf32>
    %cst_6 = arith.constant dense<0.000000e+00> : vector<16x32xf32>
    %8 = tpu.matmul %4, %7, %cst_6 {dimension_numbers = #tpu.dot_dimension_numbers<[1], [0], [0], [1], [0, 0, 1, 1], [], []>} : vector<16x128xf32>, vector<128x32xf32>, vector<16x32xf32> -> vector<16x32xf32>
    %9 = arith.truncf %8 : vector<16x32xf32> to vector<16x32xbf16>
    %c0_7 = arith.constant 0 : index
    %c0_8 = arith.constant 0 : index
    %c0_9 = arith.constant 0 : index
    %10 = vector.load %arg4[%c0_7, %c0_8, %c0_9] : memref<4x16x32xbf16, #tpu.memory_space<vmem>>, vector<1x16x32xbf16>
    %11 = vector.shape_cast %10 : vector<1x16x32xbf16> to vector<16x32xbf16>
    %12 = vector.shape_cast %9 : vector<16x32xbf16> to vector<1x16x32xbf16>
    tpu.vector_store %arg4[%c0_7, %c0_8, %c0_9], %12 {strides = array<i32>} : memref<4x16x32xbf16, #tpu.memory_space<vmem>>, vector<1x16x32xbf16>,
    %cst_10 = arith.constant dense<0.000000e+00> : vector<16xf32>
    %13 = vector.multi_reduction <add>, %8, %cst_10 [1] : vector<16x32xf32> to vector<16xf32>
    %14 = vector.shape_cast %13 : vector<16xf32> to vector<16x1xf32>
    %15 = arith.addf %0, %14 : vector<16x1xf32>
    %16 = arith.mulf %8, %8 : vector<16x32xf32>
    %cst_11 = arith.constant dense<0.000000e+00> : vector<16xf32>
    %17 = vector.multi_reduction <add>, %16, %cst_11 [1] : vector<16x32xf32> to vector<16xf32>
    %18 = vector.shape_cast %17 : vector<16xf32> to vector<16x1xf32>
    %19 = arith.addf %1, %18 : vector<16x1xf32>
    %c1 = arith.constant 1 : index
    %c0_12 = arith.constant 0 : index
    %c0_13 = arith.constant 0 : index
    %20 = vector.load %arg1[%c1, %c0_12, %c0_13] : memref<4x16x128xbf16, #tpu.memory_space<vmem>>, vector<1x16x128xbf16>
    %21 = vector.shape_cast %20 : vector<1x16x128xbf16> to vector<16x128xbf16>
    %22 = arith.extf %21 : vector<16x128xbf16> to vector<16x128xf32>
    %c1_14 = arith.constant 1 : index
    %c0_15 = arith.constant 0 : index
    %c0_16 = arith.constant 0 : index
    %23 = vector.load %arg0[%c1_14, %c0_15, %c0_16] : memref<4x128x32xbf16, #tpu.memory_space<vmem>>, vector<1x128x32xbf16>
    %24 = vector.shape_cast %23 : vector<1x128x32xbf16> to vector<128x32xbf16>
    %25 = arith.extf %24 : vector<128x32xbf16> to vector<128x32xf32>
    %cst_17 = arith.constant dense<0.000000e+00> : vector<16x32xf32>
    %26 = tpu.matmul %22, %25, %cst_17 {dimension_numbers = #tpu.dot_dimension_numbers<[1], [0], [0], [1], [0, 0, 1, 1], [], []>} : vector<16x128xf32>, vector<128x32xf32>, vector<16x32xf32> -> vector<16x32xf32>
    %27 = arith.truncf %26 : vector<16x32xf32> to vector<16x32xbf16>
    %c1_18 = arith.constant 1 : index
    %c0_19 = arith.constant 0 : index
    %c0_20 = arith.constant 0 : index
    %28 = vector.load %arg4[%c1_18, %c0_19, %c0_20] : memref<4x16x32xbf16, #tpu.memory_space<vmem>>, vector<1x16x32xbf16>
    %29 = vector.shape_cast %28 : vector<1x16x32xbf16> to vector<16x32xbf16>
    %30 = vector.shape_cast %27 : vector<16x32xbf16> to vector<1x16x32xbf16>
    tpu.vector_store %arg4[%c1_18, %c0_19, %c0_20], %30 {strides = array<i32>} : memref<4x16x32xbf16, #tpu.memory_space<vmem>>, vector<1x16x32xbf16>,
    %cst_21 = arith.constant dense<0.000000e+00> : vector<16xf32>
    %31 = vector.multi_reduction <add>, %26, %cst_21 [1] : vector<16x32xf32> to vector<16xf32>
    %32 = vector.shape_cast %31 : vector<16xf32> to vector<16x1xf32>
    %33 = arith.addf %15, %32 : vector<16x1xf32>
    %34 = arith.mulf %26, %26 : vector<16x32xf32>
    %cst_22 = arith.constant dense<0.000000e+00> : vector<16xf32>
    %35 = vector.multi_reduction <add>, %34, %cst_22 [1] : vector<16x32xf32> to vector<16xf32>
    %36 = vector.shape_cast %35 : vector<16xf32> to vector<16x1xf32>
    %37 = arith.addf %19, %36 : vector<16x1xf32>
    %c2 = arith.constant 2 : index
    %c0_23 = arith.constant 0 : index
    %c0_24 = arith.constant 0 : index
    %38 = vector.load %arg1[%c2, %c0_23, %c0_24] : memref<4x16x128xbf16, #tpu.memory_space<vmem>>, vector<1x16x128xbf16>
    %39 = vector.shape_cast %38 : vector<1x16x128xbf16> to vector<16x128xbf16>
    %40 = arith.extf %39 : vector<16x128xbf16> to vector<16x128xf32>
    %c2_25 = arith.constant 2 : index
    %c0_26 = arith.constant 0 : index
    %c0_27 = arith.constant 0 : index
    %41 = vector.load %arg0[%c2_25, %c0_26, %c0_27] : memref<4x128x32xbf16, #tpu.memory_space<vmem>>, vector<1x128x32xbf16>
    %42 = vector.shape_cast %41 : vector<1x128x32xbf16> to vector<128x32xbf16>
    %43 = arith.extf %42 : vector<128x32xbf16> to vector<128x32xf32>
    %cst_28 = arith.constant dense<0.000000e+00> : vector<16x32xf32>
    %44 = tpu.matmul %40, %43, %cst_28 {dimension_numbers = #tpu.dot_dimension_numbers<[1], [0], [0], [1], [0, 0, 1, 1], [], []>} : vector<16x128xf32>, vector<128x32xf32>, vector<16x32xf32> -> vector<16x32xf32>
    %45 = arith.truncf %44 : vector<16x32xf32> to vector<16x32xbf16>
    %c2_29 = arith.constant 2 : index
    %c0_30 = arith.constant 0 : index
    %c0_31 = arith.constant 0 : index
    %46 = vector.load %arg4[%c2_29, %c0_30, %c0_31] : memref<4x16x32xbf16, #tpu.memory_space<vmem>>, vector<1x16x32xbf16>
    %47 = vector.shape_cast %46 : vector<1x16x32xbf16> to vector<16x32xbf16>
    %48 = vector.shape_cast %45 : vector<16x32xbf16> to vector<1x16x32xbf16>
    tpu.vector_store %arg4[%c2_29, %c0_30, %c0_31], %48 {strides = array<i32>} : memref<4x16x32xbf16, #tpu.memory_space<vmem>>, vector<1x16x32xbf16>,
    %cst_32 = arith.constant dense<0.000000e+00> : vector<16xf32>
    %49 = vector.multi_reduction <add>, %44, %cst_32 [1] : vector<16x32xf32> to vector<16xf32>
    %50 = vector.shape_cast %49 : vector<16xf32> to vector<16x1xf32>
    %51 = arith.addf %33, %50 : vector<16x1xf32>
    %52 = arith.mulf %44, %44 : vector<16x32xf32>
    %cst_33 = arith.constant dense<0.000000e+00> : vector<16xf32>
    %53 = vector.multi_reduction <add>, %52, %cst_33 [1] : vector<16x32xf32> to vector<16xf32>
    %54 = vector.shape_cast %53 : vector<16xf32> to vector<16x1xf32>
    %55 = arith.addf %37, %54 : vector<16x1xf32>
    %c3 = arith.constant 3 : index
    %c0_34 = arith.constant 0 : index
    %c0_35 = arith.constant 0 : index
    %56 = vector.load %arg1[%c3, %c0_34, %c0_35] : memref<4x16x128xbf16, #tpu.memory_space<vmem>>, vector<1x16x128xbf16>
    %57 = vector.shape_cast %56 : vector<1x16x128xbf16> to vector<16x128xbf16>
    %58 = arith.extf %57 : vector<16x128xbf16> to vector<16x128xf32>
    %c3_36 = arith.constant 3 : index
    %c0_37 = arith.constant 0 : index
    %c0_38 = arith.constant 0 : index
    %59 = vector.load %arg0[%c3_36, %c0_37, %c0_38] : memref<4x128x32xbf16, #tpu.memory_space<vmem>>, vector<1x128x32xbf16>
    %60 = vector.shape_cast %59 : vector<1x128x32xbf16> to vector<128x32xbf16>
    %61 = arith.extf %60 : vector<128x32xbf16> to vector<128x32xf32>
    %cst_39 = arith.constant dense<0.000000e+00> : vector<16x32xf32>
    %62 = tpu.matmul %58, %61, %cst_39 {dimension_numbers = #tpu.dot_dimension_numbers<[1], [0], [0], [1], [0, 0, 1, 1], [], []>} : vector<16x128xf32>, vector<128x32xf32>, vector<16x32xf32> -> vector<16x32xf32>
    %63 = arith.truncf %62 : vector<16x32xf32> to vector<16x32xbf16>
    %c3_40 = arith.constant 3 : index
    %c0_41 = arith.constant 0 : index
    %c0_42 = arith.constant 0 : index
    %64 = vector.load %arg4[%c3_40, %c0_41, %c0_42] : memref<4x16x32xbf16, #tpu.memory_space<vmem>>, vector<1x16x32xbf16>
    %65 = vector.shape_cast %64 : vector<1x16x32xbf16> to vector<16x32xbf16>
    %66 = vector.shape_cast %63 : vector<16x32xbf16> to vector<1x16x32xbf16>
    tpu.vector_store %arg4[%c3_40, %c0_41, %c0_42], %66 {strides = array<i32>} : memref<4x16x32xbf16, #tpu.memory_space<vmem>>, vector<1x16x32xbf16>,
    %cst_43 = arith.constant dense<0.000000e+00> : vector<16xf32>
    %67 = vector.multi_reduction <add>, %62, %cst_43 [1] : vector<16x32xf32> to vector<16xf32>
    %68 = vector.shape_cast %67 : vector<16xf32> to vector<16x1xf32>
    %69 = arith.addf %51, %68 : vector<16x1xf32>
    %70 = arith.mulf %62, %62 : vector<16x32xf32>
    %cst_44 = arith.constant dense<0.000000e+00> : vector<16xf32>
    %71 = vector.multi_reduction <add>, %70, %cst_44 [1] : vector<16x32xf32> to vector<16xf32>
    %72 = vector.shape_cast %71 : vector<16xf32> to vector<16x1xf32>
    %73 = arith.addf %55, %72 : vector<16x1xf32>
    %cst_45 = arith.constant 7.812500e-03 : f32
    %74 = vector.broadcast %cst_45 : f32 to vector<16x1xf32>
    %75 = arith.mulf %69, %74 : vector<16x1xf32>
    %cst_46 = arith.constant 7.812500e-03 : f32
    %76 = vector.broadcast %cst_46 : f32 to vector<16x1xf32>
    %77 = arith.mulf %73, %76 : vector<16x1xf32>
    %78 = arith.mulf %75, %75 : vector<16x1xf32>
    %79 = arith.subf %77, %78 : vector<16x1xf32>
    %cst_47 = arith.constant 9.99999974E-6 : f32
    %80 = vector.broadcast %cst_47 : f32 to vector<16x1xf32>
    %81 = arith.addf %79, %80 : vector<16x1xf32>
    %82 = math.rsqrt %81 : vector<16x1xf32>
    %c0_48 = arith.constant 0 : index
    %c0_49 = arith.constant 0 : index
    %83 = vector.load %arg2[%c0_48, %c0_49] : memref<16x1xf32, #tpu.memory_space<vmem>>, vector<16x1xf32>
    %84 = arith.mulf %82, %83 : vector<16x1xf32>
    %c0_50 = arith.constant 0 : index
    %c0_51 = arith.constant 0 : index
    %85 = vector.load %arg3[%c0_50, %c0_51] : memref<16x1xf32, #tpu.memory_space<vmem>>, vector<16x1xf32>
    %86 = arith.mulf %75, %84 : vector<16x1xf32>
    %87 = arith.subf %85, %86 : vector<16x1xf32>
    %c0_52 = arith.constant 0 : index
    %c0_53 = arith.constant 0 : index
    %c0_54 = arith.constant 0 : index
    %88 = vector.load %arg4[%c0_52, %c0_53, %c0_54] : memref<4x16x32xbf16, #tpu.memory_space<vmem>>, vector<1x16x32xbf16>
    %89 = vector.shape_cast %88 : vector<1x16x32xbf16> to vector<16x32xbf16>
    %90 = arith.extf %89 : vector<16x32xbf16> to vector<16x32xf32>
    %91 = vector.broadcast %84 : vector<16x1xf32> to vector<16x32xf32>
    %92 = arith.mulf %90, %91 : vector<16x32xf32>
    %93 = vector.broadcast %87 : vector<16x1xf32> to vector<16x32xf32>
    %94 = arith.addf %92, %93 : vector<16x32xf32>
    %cst_55 = arith.constant 0.000000e+00 : f32
    %95 = vector.broadcast %cst_55 : f32 to vector<16x32xf32>
    %96 = arith.maximumf %94, %95 : vector<16x32xf32>
    %97 = arith.truncf %96 : vector<16x32xf32> to vector<16x32xbf16>
    %c0_56 = arith.constant 0 : index
    %c0_57 = arith.constant 0 : index
    %c0_58 = arith.constant 0 : index
    %98 = vector.load %arg4[%c0_56, %c0_57, %c0_58] : memref<4x16x32xbf16, #tpu.memory_space<vmem>>, vector<1x16x32xbf16>
    %99 = vector.shape_cast %98 : vector<1x16x32xbf16> to vector<16x32xbf16>
    %100 = vector.shape_cast %97 : vector<16x32xbf16> to vector<1x16x32xbf16>
    tpu.vector_store %arg4[%c0_56, %c0_57, %c0_58], %100 {strides = array<i32>} : memref<4x16x32xbf16, #tpu.memory_space<vmem>>, vector<1x16x32xbf16>,
    %c1_59 = arith.constant 1 : index
    %c0_60 = arith.constant 0 : index
    %c0_61 = arith.constant 0 : index
    %101 = vector.load %arg4[%c1_59, %c0_60, %c0_61] : memref<4x16x32xbf16, #tpu.memory_space<vmem>>, vector<1x16x32xbf16>
    %102 = vector.shape_cast %101 : vector<1x16x32xbf16> to vector<16x32xbf16>
    %103 = arith.extf %102 : vector<16x32xbf16> to vector<16x32xf32>
    %104 = vector.broadcast %84 : vector<16x1xf32> to vector<16x32xf32>
    %105 = arith.mulf %103, %104 : vector<16x32xf32>
    %106 = vector.broadcast %87 : vector<16x1xf32> to vector<16x32xf32>
    %107 = arith.addf %105, %106 : vector<16x32xf32>
    %cst_62 = arith.constant 0.000000e+00 : f32
    %108 = vector.broadcast %cst_62 : f32 to vector<16x32xf32>
    %109 = arith.maximumf %107, %108 : vector<16x32xf32>
    %110 = arith.truncf %109 : vector<16x32xf32> to vector<16x32xbf16>
    %c1_63 = arith.constant 1 : index
    %c0_64 = arith.constant 0 : index
    %c0_65 = arith.constant 0 : index
    %111 = vector.load %arg4[%c1_63, %c0_64, %c0_65] : memref<4x16x32xbf16, #tpu.memory_space<vmem>>, vector<1x16x32xbf16>
    %112 = vector.shape_cast %111 : vector<1x16x32xbf16> to vector<16x32xbf16>
    %113 = vector.shape_cast %110 : vector<16x32xbf16> to vector<1x16x32xbf16>
    tpu.vector_store %arg4[%c1_63, %c0_64, %c0_65], %113 {strides = array<i32>} : memref<4x16x32xbf16, #tpu.memory_space<vmem>>, vector<1x16x32xbf16>,
    %c2_66 = arith.constant 2 : index
    %c0_67 = arith.constant 0 : index
    %c0_68 = arith.constant 0 : index
    %114 = vector.load %arg4[%c2_66, %c0_67, %c0_68] : memref<4x16x32xbf16, #tpu.memory_space<vmem>>, vector<1x16x32xbf16>
    %115 = vector.shape_cast %114 : vector<1x16x32xbf16> to vector<16x32xbf16>
    %116 = arith.extf %115 : vector<16x32xbf16> to vector<16x32xf32>
    %117 = vector.broadcast %84 : vector<16x1xf32> to vector<16x32xf32>
    %118 = arith.mulf %116, %117 : vector<16x32xf32>
    %119 = vector.broadcast %87 : vector<16x1xf32> to vector<16x32xf32>
    %120 = arith.addf %118, %119 : vector<16x32xf32>
    %cst_69 = arith.constant 0.000000e+00 : f32
    %121 = vector.broadcast %cst_69 : f32 to vector<16x32xf32>
    %122 = arith.maximumf %120, %121 : vector<16x32xf32>
    %123 = arith.truncf %122 : vector<16x32xf32> to vector<16x32xbf16>
    %c2_70 = arith.constant 2 : index
    %c0_71 = arith.constant 0 : index
    %c0_72 = arith.constant 0 : index
    %124 = vector.load %arg4[%c2_70, %c0_71, %c0_72] : memref<4x16x32xbf16, #tpu.memory_space<vmem>>, vector<1x16x32xbf16>
    %125 = vector.shape_cast %124 : vector<1x16x32xbf16> to vector<16x32xbf16>
    %126 = vector.shape_cast %123 : vector<16x32xbf16> to vector<1x16x32xbf16>
    tpu.vector_store %arg4[%c2_70, %c0_71, %c0_72], %126 {strides = array<i32>} : memref<4x16x32xbf16, #tpu.memory_space<vmem>>, vector<1x16x32xbf16>,
    %c3_73 = arith.constant 3 : index
    %c0_74 = arith.constant 0 : index
    %c0_75 = arith.constant 0 : index
    %127 = vector.load %arg4[%c3_73, %c0_74, %c0_75] : memref<4x16x32xbf16, #tpu.memory_space<vmem>>, vector<1x16x32xbf16>
    %128 = vector.shape_cast %127 : vector<1x16x32xbf16> to vector<16x32xbf16>
    %129 = arith.extf %128 : vector<16x32xbf16> to vector<16x32xf32>
    %130 = vector.broadcast %84 : vector<16x1xf32> to vector<16x32xf32>
    %131 = arith.mulf %129, %130 : vector<16x32xf32>
    %132 = vector.broadcast %87 : vector<16x1xf32> to vector<16x32xf32>
    %133 = arith.addf %131, %132 : vector<16x32xf32>
    %cst_76 = arith.constant 0.000000e+00 : f32
    %134 = vector.broadcast %cst_76 : f32 to vector<16x32xf32>
    %135 = arith.maximumf %133, %134 : vector<16x32xf32>
    %136 = arith.truncf %135 : vector<16x32xf32> to vector<16x32xbf16>
    %c3_77 = arith.constant 3 : index
    %c0_78 = arith.constant 0 : index
    %c0_79 = arith.constant 0 : index
    %137 = vector.load %arg4[%c3_77, %c0_78, %c0_79] : memref<4x16x32xbf16, #tpu.memory_space<vmem>>, vector<1x16x32xbf16>
    %138 = vector.shape_cast %137 : vector<1x16x32xbf16> to vector<16x32xbf16>
    %139 = vector.shape_cast %136 : vector<16x32xbf16> to vector<1x16x32xbf16>
    tpu.vector_store %arg4[%c3_77, %c0_78, %c0_79], %139 {strides = array<i32>} : memref<4x16x32xbf16, #tpu.memory_space<vmem>>, vector<1x16x32xbf16>,
    return
  }
}

module attributes {stable_mosaic.version = 11 : i64} {
  func.func @kernel(%arg0: memref<4x64x128xbf16, #tpu.memory_space<vmem>>, %arg1: memref<4x8x64xbf16, #tpu.memory_space<vmem>>, %arg2: memref<8x1xf32, #tpu.memory_space<vmem>>, %arg3: memref<8x1xf32, #tpu.memory_space<vmem>>, %arg4: memref<4x8x128xbf16, #tpu.memory_space<vmem>>) attributes {dimension_semantics = [], scalar_prefetch = 0 : i64, scratch_operands = 0 : i64, tpu.core_type = #tpu.core_type<tc>} {
    %cst = arith.constant 0.000000e+00 : f32
    %0 = vector.broadcast %cst : f32 to vector<8x1xf32>
    %cst_0 = arith.constant 0.000000e+00 : f32
    %1 = vector.broadcast %cst_0 : f32 to vector<8x1xf32>
    %c0 = arith.constant 0 : index
    %c0_1 = arith.constant 0 : index
    %c0_2 = arith.constant 0 : index
    %2 = vector.load %arg1[%c0, %c0_1, %c0_2] : memref<4x8x64xbf16, #tpu.memory_space<vmem>>, vector<1x8x64xbf16>
    %3 = vector.shape_cast %2 : vector<1x8x64xbf16> to vector<8x64xbf16>
    %4 = arith.extf %3 : vector<8x64xbf16> to vector<8x64xf32>
    %c0_3 = arith.constant 0 : index
    %c0_4 = arith.constant 0 : index
    %c0_5 = arith.constant 0 : index
    %5 = vector.load %arg0[%c0_3, %c0_4, %c0_5] : memref<4x64x128xbf16, #tpu.memory_space<vmem>>, vector<1x64x128xbf16>
    %6 = vector.shape_cast %5 : vector<1x64x128xbf16> to vector<64x128xbf16>
    %7 = arith.extf %6 : vector<64x128xbf16> to vector<64x128xf32>
    %cst_6 = arith.constant dense<0.000000e+00> : vector<8x128xf32>
    %8 = tpu.matmul %4, %7, %cst_6 {dimension_numbers = #tpu.dot_dimension_numbers<[1], [0], [0], [1], [0, 0, 1, 1], [], []>} : vector<8x64xf32>, vector<64x128xf32>, vector<8x128xf32> -> vector<8x128xf32>
    %9 = arith.truncf %8 : vector<8x128xf32> to vector<8x128xbf16>
    %c0_7 = arith.constant 0 : index
    %c0_8 = arith.constant 0 : index
    %c0_9 = arith.constant 0 : index
    %10 = vector.load %arg4[%c0_7, %c0_8, %c0_9] : memref<4x8x128xbf16, #tpu.memory_space<vmem>>, vector<1x8x128xbf16>
    %11 = vector.shape_cast %10 : vector<1x8x128xbf16> to vector<8x128xbf16>
    %12 = vector.shape_cast %9 : vector<8x128xbf16> to vector<1x8x128xbf16>
    tpu.vector_store %arg4[%c0_7, %c0_8, %c0_9], %12 {strides = array<i32>} : memref<4x8x128xbf16, #tpu.memory_space<vmem>>, vector<1x8x128xbf16>,
    %cst_10 = arith.constant dense<0.000000e+00> : vector<8xf32>
    %13 = vector.multi_reduction <add>, %8, %cst_10 [1] : vector<8x128xf32> to vector<8xf32>
    %14 = vector.shape_cast %13 : vector<8xf32> to vector<8x1xf32>
    %15 = arith.addf %0, %14 : vector<8x1xf32>
    %16 = arith.mulf %8, %8 : vector<8x128xf32>
    %cst_11 = arith.constant dense<0.000000e+00> : vector<8xf32>
    %17 = vector.multi_reduction <add>, %16, %cst_11 [1] : vector<8x128xf32> to vector<8xf32>
    %18 = vector.shape_cast %17 : vector<8xf32> to vector<8x1xf32>
    %19 = arith.addf %1, %18 : vector<8x1xf32>
    %c1 = arith.constant 1 : index
    %c0_12 = arith.constant 0 : index
    %c0_13 = arith.constant 0 : index
    %20 = vector.load %arg1[%c1, %c0_12, %c0_13] : memref<4x8x64xbf16, #tpu.memory_space<vmem>>, vector<1x8x64xbf16>
    %21 = vector.shape_cast %20 : vector<1x8x64xbf16> to vector<8x64xbf16>
    %22 = arith.extf %21 : vector<8x64xbf16> to vector<8x64xf32>
    %c1_14 = arith.constant 1 : index
    %c0_15 = arith.constant 0 : index
    %c0_16 = arith.constant 0 : index
    %23 = vector.load %arg0[%c1_14, %c0_15, %c0_16] : memref<4x64x128xbf16, #tpu.memory_space<vmem>>, vector<1x64x128xbf16>
    %24 = vector.shape_cast %23 : vector<1x64x128xbf16> to vector<64x128xbf16>
    %25 = arith.extf %24 : vector<64x128xbf16> to vector<64x128xf32>
    %cst_17 = arith.constant dense<0.000000e+00> : vector<8x128xf32>
    %26 = tpu.matmul %22, %25, %cst_17 {dimension_numbers = #tpu.dot_dimension_numbers<[1], [0], [0], [1], [0, 0, 1, 1], [], []>} : vector<8x64xf32>, vector<64x128xf32>, vector<8x128xf32> -> vector<8x128xf32>
    %27 = arith.truncf %26 : vector<8x128xf32> to vector<8x128xbf16>
    %c1_18 = arith.constant 1 : index
    %c0_19 = arith.constant 0 : index
    %c0_20 = arith.constant 0 : index
    %28 = vector.load %arg4[%c1_18, %c0_19, %c0_20] : memref<4x8x128xbf16, #tpu.memory_space<vmem>>, vector<1x8x128xbf16>
    %29 = vector.shape_cast %28 : vector<1x8x128xbf16> to vector<8x128xbf16>
    %30 = vector.shape_cast %27 : vector<8x128xbf16> to vector<1x8x128xbf16>
    tpu.vector_store %arg4[%c1_18, %c0_19, %c0_20], %30 {strides = array<i32>} : memref<4x8x128xbf16, #tpu.memory_space<vmem>>, vector<1x8x128xbf16>,
    %cst_21 = arith.constant dense<0.000000e+00> : vector<8xf32>
    %31 = vector.multi_reduction <add>, %26, %cst_21 [1] : vector<8x128xf32> to vector<8xf32>
    %32 = vector.shape_cast %31 : vector<8xf32> to vector<8x1xf32>
    %33 = arith.addf %15, %32 : vector<8x1xf32>
    %34 = arith.mulf %26, %26 : vector<8x128xf32>
    %cst_22 = arith.constant dense<0.000000e+00> : vector<8xf32>
    %35 = vector.multi_reduction <add>, %34, %cst_22 [1] : vector<8x128xf32> to vector<8xf32>
    %36 = vector.shape_cast %35 : vector<8xf32> to vector<8x1xf32>
    %37 = arith.addf %19, %36 : vector<8x1xf32>
    %c2 = arith.constant 2 : index
    %c0_23 = arith.constant 0 : index
    %c0_24 = arith.constant 0 : index
    %38 = vector.load %arg1[%c2, %c0_23, %c0_24] : memref<4x8x64xbf16, #tpu.memory_space<vmem>>, vector<1x8x64xbf16>
    %39 = vector.shape_cast %38 : vector<1x8x64xbf16> to vector<8x64xbf16>
    %40 = arith.extf %39 : vector<8x64xbf16> to vector<8x64xf32>
    %c2_25 = arith.constant 2 : index
    %c0_26 = arith.constant 0 : index
    %c0_27 = arith.constant 0 : index
    %41 = vector.load %arg0[%c2_25, %c0_26, %c0_27] : memref<4x64x128xbf16, #tpu.memory_space<vmem>>, vector<1x64x128xbf16>
    %42 = vector.shape_cast %41 : vector<1x64x128xbf16> to vector<64x128xbf16>
    %43 = arith.extf %42 : vector<64x128xbf16> to vector<64x128xf32>
    %cst_28 = arith.constant dense<0.000000e+00> : vector<8x128xf32>
    %44 = tpu.matmul %40, %43, %cst_28 {dimension_numbers = #tpu.dot_dimension_numbers<[1], [0], [0], [1], [0, 0, 1, 1], [], []>} : vector<8x64xf32>, vector<64x128xf32>, vector<8x128xf32> -> vector<8x128xf32>
    %45 = arith.truncf %44 : vector<8x128xf32> to vector<8x128xbf16>
    %c2_29 = arith.constant 2 : index
    %c0_30 = arith.constant 0 : index
    %c0_31 = arith.constant 0 : index
    %46 = vector.load %arg4[%c2_29, %c0_30, %c0_31] : memref<4x8x128xbf16, #tpu.memory_space<vmem>>, vector<1x8x128xbf16>
    %47 = vector.shape_cast %46 : vector<1x8x128xbf16> to vector<8x128xbf16>
    %48 = vector.shape_cast %45 : vector<8x128xbf16> to vector<1x8x128xbf16>
    tpu.vector_store %arg4[%c2_29, %c0_30, %c0_31], %48 {strides = array<i32>} : memref<4x8x128xbf16, #tpu.memory_space<vmem>>, vector<1x8x128xbf16>,
    %cst_32 = arith.constant dense<0.000000e+00> : vector<8xf32>
    %49 = vector.multi_reduction <add>, %44, %cst_32 [1] : vector<8x128xf32> to vector<8xf32>
    %50 = vector.shape_cast %49 : vector<8xf32> to vector<8x1xf32>
    %51 = arith.addf %33, %50 : vector<8x1xf32>
    %52 = arith.mulf %44, %44 : vector<8x128xf32>
    %cst_33 = arith.constant dense<0.000000e+00> : vector<8xf32>
    %53 = vector.multi_reduction <add>, %52, %cst_33 [1] : vector<8x128xf32> to vector<8xf32>
    %54 = vector.shape_cast %53 : vector<8xf32> to vector<8x1xf32>
    %55 = arith.addf %37, %54 : vector<8x1xf32>
    %c3 = arith.constant 3 : index
    %c0_34 = arith.constant 0 : index
    %c0_35 = arith.constant 0 : index
    %56 = vector.load %arg1[%c3, %c0_34, %c0_35] : memref<4x8x64xbf16, #tpu.memory_space<vmem>>, vector<1x8x64xbf16>
    %57 = vector.shape_cast %56 : vector<1x8x64xbf16> to vector<8x64xbf16>
    %58 = arith.extf %57 : vector<8x64xbf16> to vector<8x64xf32>
    %c3_36 = arith.constant 3 : index
    %c0_37 = arith.constant 0 : index
    %c0_38 = arith.constant 0 : index
    %59 = vector.load %arg0[%c3_36, %c0_37, %c0_38] : memref<4x64x128xbf16, #tpu.memory_space<vmem>>, vector<1x64x128xbf16>
    %60 = vector.shape_cast %59 : vector<1x64x128xbf16> to vector<64x128xbf16>
    %61 = arith.extf %60 : vector<64x128xbf16> to vector<64x128xf32>
    %cst_39 = arith.constant dense<0.000000e+00> : vector<8x128xf32>
    %62 = tpu.matmul %58, %61, %cst_39 {dimension_numbers = #tpu.dot_dimension_numbers<[1], [0], [0], [1], [0, 0, 1, 1], [], []>} : vector<8x64xf32>, vector<64x128xf32>, vector<8x128xf32> -> vector<8x128xf32>
    %63 = arith.truncf %62 : vector<8x128xf32> to vector<8x128xbf16>
    %c3_40 = arith.constant 3 : index
    %c0_41 = arith.constant 0 : index
    %c0_42 = arith.constant 0 : index
    %64 = vector.load %arg4[%c3_40, %c0_41, %c0_42] : memref<4x8x128xbf16, #tpu.memory_space<vmem>>, vector<1x8x128xbf16>
    %65 = vector.shape_cast %64 : vector<1x8x128xbf16> to vector<8x128xbf16>
    %66 = vector.shape_cast %63 : vector<8x128xbf16> to vector<1x8x128xbf16>
    tpu.vector_store %arg4[%c3_40, %c0_41, %c0_42], %66 {strides = array<i32>} : memref<4x8x128xbf16, #tpu.memory_space<vmem>>, vector<1x8x128xbf16>,
    %cst_43 = arith.constant dense<0.000000e+00> : vector<8xf32>
    %67 = vector.multi_reduction <add>, %62, %cst_43 [1] : vector<8x128xf32> to vector<8xf32>
    %68 = vector.shape_cast %67 : vector<8xf32> to vector<8x1xf32>
    %69 = arith.addf %51, %68 : vector<8x1xf32>
    %70 = arith.mulf %62, %62 : vector<8x128xf32>
    %cst_44 = arith.constant dense<0.000000e+00> : vector<8xf32>
    %71 = vector.multi_reduction <add>, %70, %cst_44 [1] : vector<8x128xf32> to vector<8xf32>
    %72 = vector.shape_cast %71 : vector<8xf32> to vector<8x1xf32>
    %73 = arith.addf %55, %72 : vector<8x1xf32>
    %cst_45 = arith.constant 0.001953125 : f32
    %74 = vector.broadcast %cst_45 : f32 to vector<8x1xf32>
    %75 = arith.mulf %69, %74 : vector<8x1xf32>
    %cst_46 = arith.constant 0.001953125 : f32
    %76 = vector.broadcast %cst_46 : f32 to vector<8x1xf32>
    %77 = arith.mulf %73, %76 : vector<8x1xf32>
    %78 = arith.mulf %75, %75 : vector<8x1xf32>
    %79 = arith.subf %77, %78 : vector<8x1xf32>
    %cst_47 = arith.constant 9.99999974E-6 : f32
    %80 = vector.broadcast %cst_47 : f32 to vector<8x1xf32>
    %81 = arith.addf %79, %80 : vector<8x1xf32>
    %82 = math.rsqrt %81 : vector<8x1xf32>
    %c0_48 = arith.constant 0 : index
    %c0_49 = arith.constant 0 : index
    %83 = vector.load %arg2[%c0_48, %c0_49] : memref<8x1xf32, #tpu.memory_space<vmem>>, vector<8x1xf32>
    %84 = arith.mulf %82, %83 : vector<8x1xf32>
    %c0_50 = arith.constant 0 : index
    %c0_51 = arith.constant 0 : index
    %85 = vector.load %arg3[%c0_50, %c0_51] : memref<8x1xf32, #tpu.memory_space<vmem>>, vector<8x1xf32>
    %86 = arith.mulf %75, %84 : vector<8x1xf32>
    %87 = arith.subf %85, %86 : vector<8x1xf32>
    %c0_52 = arith.constant 0 : index
    %c0_53 = arith.constant 0 : index
    %c0_54 = arith.constant 0 : index
    %88 = vector.load %arg4[%c0_52, %c0_53, %c0_54] : memref<4x8x128xbf16, #tpu.memory_space<vmem>>, vector<1x8x128xbf16>
    %89 = vector.shape_cast %88 : vector<1x8x128xbf16> to vector<8x128xbf16>
    %90 = arith.extf %89 : vector<8x128xbf16> to vector<8x128xf32>
    %91 = vector.broadcast %84 : vector<8x1xf32> to vector<8x128xf32>
    %92 = arith.mulf %90, %91 : vector<8x128xf32>
    %93 = vector.broadcast %87 : vector<8x1xf32> to vector<8x128xf32>
    %94 = arith.addf %92, %93 : vector<8x128xf32>
    %cst_55 = arith.constant 0.000000e+00 : f32
    %95 = vector.broadcast %cst_55 : f32 to vector<8x128xf32>
    %96 = arith.maximumf %94, %95 : vector<8x128xf32>
    %97 = arith.truncf %96 : vector<8x128xf32> to vector<8x128xbf16>
    %c0_56 = arith.constant 0 : index
    %c0_57 = arith.constant 0 : index
    %c0_58 = arith.constant 0 : index
    %98 = vector.load %arg4[%c0_56, %c0_57, %c0_58] : memref<4x8x128xbf16, #tpu.memory_space<vmem>>, vector<1x8x128xbf16>
    %99 = vector.shape_cast %98 : vector<1x8x128xbf16> to vector<8x128xbf16>
    %100 = vector.shape_cast %97 : vector<8x128xbf16> to vector<1x8x128xbf16>
    tpu.vector_store %arg4[%c0_56, %c0_57, %c0_58], %100 {strides = array<i32>} : memref<4x8x128xbf16, #tpu.memory_space<vmem>>, vector<1x8x128xbf16>,
    %c1_59 = arith.constant 1 : index
    %c0_60 = arith.constant 0 : index
    %c0_61 = arith.constant 0 : index
    %101 = vector.load %arg4[%c1_59, %c0_60, %c0_61] : memref<4x8x128xbf16, #tpu.memory_space<vmem>>, vector<1x8x128xbf16>
    %102 = vector.shape_cast %101 : vector<1x8x128xbf16> to vector<8x128xbf16>
    %103 = arith.extf %102 : vector<8x128xbf16> to vector<8x128xf32>
    %104 = vector.broadcast %84 : vector<8x1xf32> to vector<8x128xf32>
    %105 = arith.mulf %103, %104 : vector<8x128xf32>
    %106 = vector.broadcast %87 : vector<8x1xf32> to vector<8x128xf32>
    %107 = arith.addf %105, %106 : vector<8x128xf32>
    %cst_62 = arith.constant 0.000000e+00 : f32
    %108 = vector.broadcast %cst_62 : f32 to vector<8x128xf32>
    %109 = arith.maximumf %107, %108 : vector<8x128xf32>
    %110 = arith.truncf %109 : vector<8x128xf32> to vector<8x128xbf16>
    %c1_63 = arith.constant 1 : index
    %c0_64 = arith.constant 0 : index
    %c0_65 = arith.constant 0 : index
    %111 = vector.load %arg4[%c1_63, %c0_64, %c0_65] : memref<4x8x128xbf16, #tpu.memory_space<vmem>>, vector<1x8x128xbf16>
    %112 = vector.shape_cast %111 : vector<1x8x128xbf16> to vector<8x128xbf16>
    %113 = vector.shape_cast %110 : vector<8x128xbf16> to vector<1x8x128xbf16>
    tpu.vector_store %arg4[%c1_63, %c0_64, %c0_65], %113 {strides = array<i32>} : memref<4x8x128xbf16, #tpu.memory_space<vmem>>, vector<1x8x128xbf16>,
    %c2_66 = arith.constant 2 : index
    %c0_67 = arith.constant 0 : index
    %c0_68 = arith.constant 0 : index
    %114 = vector.load %arg4[%c2_66, %c0_67, %c0_68] : memref<4x8x128xbf16, #tpu.memory_space<vmem>>, vector<1x8x128xbf16>
    %115 = vector.shape_cast %114 : vector<1x8x128xbf16> to vector<8x128xbf16>
    %116 = arith.extf %115 : vector<8x128xbf16> to vector<8x128xf32>
    %117 = vector.broadcast %84 : vector<8x1xf32> to vector<8x128xf32>
    %118 = arith.mulf %116, %117 : vector<8x128xf32>
    %119 = vector.broadcast %87 : vector<8x1xf32> to vector<8x128xf32>
    %120 = arith.addf %118, %119 : vector<8x128xf32>
    %cst_69 = arith.constant 0.000000e+00 : f32
    %121 = vector.broadcast %cst_69 : f32 to vector<8x128xf32>
    %122 = arith.maximumf %120, %121 : vector<8x128xf32>
    %123 = arith.truncf %122 : vector<8x128xf32> to vector<8x128xbf16>
    %c2_70 = arith.constant 2 : index
    %c0_71 = arith.constant 0 : index
    %c0_72 = arith.constant 0 : index
    %124 = vector.load %arg4[%c2_70, %c0_71, %c0_72] : memref<4x8x128xbf16, #tpu.memory_space<vmem>>, vector<1x8x128xbf16>
    %125 = vector.shape_cast %124 : vector<1x8x128xbf16> to vector<8x128xbf16>
    %126 = vector.shape_cast %123 : vector<8x128xbf16> to vector<1x8x128xbf16>
    tpu.vector_store %arg4[%c2_70, %c0_71, %c0_72], %126 {strides = array<i32>} : memref<4x8x128xbf16, #tpu.memory_space<vmem>>, vector<1x8x128xbf16>,
    %c3_73 = arith.constant 3 : index
    %c0_74 = arith.constant 0 : index
    %c0_75 = arith.constant 0 : index
    %127 = vector.load %arg4[%c3_73, %c0_74, %c0_75] : memref<4x8x128xbf16, #tpu.memory_space<vmem>>, vector<1x8x128xbf16>
    %128 = vector.shape_cast %127 : vector<1x8x128xbf16> to vector<8x128xbf16>
    %129 = arith.extf %128 : vector<8x128xbf16> to vector<8x128xf32>
    %130 = vector.broadcast %84 : vector<8x1xf32> to vector<8x128xf32>
    %131 = arith.mulf %129, %130 : vector<8x128xf32>
    %132 = vector.broadcast %87 : vector<8x1xf32> to vector<8x128xf32>
    %133 = arith.addf %131, %132 : vector<8x128xf32>
    %cst_76 = arith.constant 0.000000e+00 : f32
    %134 = vector.broadcast %cst_76 : f32 to vector<8x128xf32>
    %135 = arith.maximumf %133, %134 : vector<8x128xf32>
    %136 = arith.truncf %135 : vector<8x128xf32> to vector<8x128xbf16>
    %c3_77 = arith.constant 3 : index
    %c0_78 = arith.constant 0 : index
    %c0_79 = arith.constant 0 : index
    %137 = vector.load %arg4[%c3_77, %c0_78, %c0_79] : memref<4x8x128xbf16, #tpu.memory_space<vmem>>, vector<1x8x128xbf16>
    %138 = vector.shape_cast %137 : vector<1x8x128xbf16> to vector<8x128xbf16>
    %139 = vector.shape_cast %136 : vector<8x128xbf16> to vector<1x8x128xbf16>
    tpu.vector_store %arg4[%c3_77, %c0_78, %c0_79], %139 {strides = array<i32>} : memref<4x8x128xbf16, #tpu.memory_space<vmem>>, vector<1x8x128xbf16>,
    return
  }
}

module attributes {stable_mosaic.version = 11 : i64} {
  func.func @kernel(%arg0: memref<4x32x512xbf16, #tpu.memory_space<vmem>>, %arg1: memref<4x4x32xbf16, #tpu.memory_space<vmem>>, %arg2: memref<4x1xf32, #tpu.memory_space<vmem>>, %arg3: memref<4x1xf32, #tpu.memory_space<vmem>>, %arg4: memref<4x4x512xbf16, #tpu.memory_space<vmem>>) attributes {dimension_semantics = [], scalar_prefetch = 0 : i64, scratch_operands = 0 : i64, tpu.core_type = #tpu.core_type<tc>} {
    %cst = arith.constant 0.000000e+00 : f32
    %0 = vector.broadcast %cst : f32 to vector<4x1xf32>
    %cst_0 = arith.constant 0.000000e+00 : f32
    %1 = vector.broadcast %cst_0 : f32 to vector<4x1xf32>
    %c0 = arith.constant 0 : index
    %c0_1 = arith.constant 0 : index
    %c0_2 = arith.constant 0 : index
    %2 = vector.load %arg1[%c0, %c0_1, %c0_2] : memref<4x4x32xbf16, #tpu.memory_space<vmem>>, vector<1x4x32xbf16>
    %3 = vector.shape_cast %2 : vector<1x4x32xbf16> to vector<4x32xbf16>
    %4 = arith.extf %3 : vector<4x32xbf16> to vector<4x32xf32>
    %c0_3 = arith.constant 0 : index
    %c0_4 = arith.constant 0 : index
    %c0_5 = arith.constant 0 : index
    %5 = vector.load %arg0[%c0_3, %c0_4, %c0_5] : memref<4x32x512xbf16, #tpu.memory_space<vmem>>, vector<1x32x512xbf16>
    %6 = vector.shape_cast %5 : vector<1x32x512xbf16> to vector<32x512xbf16>
    %7 = arith.extf %6 : vector<32x512xbf16> to vector<32x512xf32>
    %cst_6 = arith.constant dense<0.000000e+00> : vector<4x512xf32>
    %8 = tpu.matmul %4, %7, %cst_6 {dimension_numbers = #tpu.dot_dimension_numbers<[1], [0], [0], [1], [0, 0, 1, 1], [], []>} : vector<4x32xf32>, vector<32x512xf32>, vector<4x512xf32> -> vector<4x512xf32>
    %9 = arith.truncf %8 : vector<4x512xf32> to vector<4x512xbf16>
    %c0_7 = arith.constant 0 : index
    %c0_8 = arith.constant 0 : index
    %c0_9 = arith.constant 0 : index
    %10 = vector.load %arg4[%c0_7, %c0_8, %c0_9] : memref<4x4x512xbf16, #tpu.memory_space<vmem>>, vector<1x4x512xbf16>
    %11 = vector.shape_cast %10 : vector<1x4x512xbf16> to vector<4x512xbf16>
    %12 = vector.shape_cast %9 : vector<4x512xbf16> to vector<1x4x512xbf16>
    tpu.vector_store %arg4[%c0_7, %c0_8, %c0_9], %12 {strides = array<i32>} : memref<4x4x512xbf16, #tpu.memory_space<vmem>>, vector<1x4x512xbf16>,
    %cst_10 = arith.constant dense<0.000000e+00> : vector<4xf32>
    %13 = vector.multi_reduction <add>, %8, %cst_10 [1] : vector<4x512xf32> to vector<4xf32>
    %14 = vector.shape_cast %13 : vector<4xf32> to vector<4x1xf32>
    %15 = arith.addf %0, %14 : vector<4x1xf32>
    %16 = arith.mulf %8, %8 : vector<4x512xf32>
    %cst_11 = arith.constant dense<0.000000e+00> : vector<4xf32>
    %17 = vector.multi_reduction <add>, %16, %cst_11 [1] : vector<4x512xf32> to vector<4xf32>
    %18 = vector.shape_cast %17 : vector<4xf32> to vector<4x1xf32>
    %19 = arith.addf %1, %18 : vector<4x1xf32>
    %c1 = arith.constant 1 : index
    %c0_12 = arith.constant 0 : index
    %c0_13 = arith.constant 0 : index
    %20 = vector.load %arg1[%c1, %c0_12, %c0_13] : memref<4x4x32xbf16, #tpu.memory_space<vmem>>, vector<1x4x32xbf16>
    %21 = vector.shape_cast %20 : vector<1x4x32xbf16> to vector<4x32xbf16>
    %22 = arith.extf %21 : vector<4x32xbf16> to vector<4x32xf32>
    %c1_14 = arith.constant 1 : index
    %c0_15 = arith.constant 0 : index
    %c0_16 = arith.constant 0 : index
    %23 = vector.load %arg0[%c1_14, %c0_15, %c0_16] : memref<4x32x512xbf16, #tpu.memory_space<vmem>>, vector<1x32x512xbf16>
    %24 = vector.shape_cast %23 : vector<1x32x512xbf16> to vector<32x512xbf16>
    %25 = arith.extf %24 : vector<32x512xbf16> to vector<32x512xf32>
    %cst_17 = arith.constant dense<0.000000e+00> : vector<4x512xf32>
    %26 = tpu.matmul %22, %25, %cst_17 {dimension_numbers = #tpu.dot_dimension_numbers<[1], [0], [0], [1], [0, 0, 1, 1], [], []>} : vector<4x32xf32>, vector<32x512xf32>, vector<4x512xf32> -> vector<4x512xf32>
    %27 = arith.truncf %26 : vector<4x512xf32> to vector<4x512xbf16>
    %c1_18 = arith.constant 1 : index
    %c0_19 = arith.constant 0 : index
    %c0_20 = arith.constant 0 : index
    %28 = vector.load %arg4[%c1_18, %c0_19, %c0_20] : memref<4x4x512xbf16, #tpu.memory_space<vmem>>, vector<1x4x512xbf16>
    %29 = vector.shape_cast %28 : vector<1x4x512xbf16> to vector<4x512xbf16>
    %30 = vector.shape_cast %27 : vector<4x512xbf16> to vector<1x4x512xbf16>
    tpu.vector_store %arg4[%c1_18, %c0_19, %c0_20], %30 {strides = array<i32>} : memref<4x4x512xbf16, #tpu.memory_space<vmem>>, vector<1x4x512xbf16>,
    %cst_21 = arith.constant dense<0.000000e+00> : vector<4xf32>
    %31 = vector.multi_reduction <add>, %26, %cst_21 [1] : vector<4x512xf32> to vector<4xf32>
    %32 = vector.shape_cast %31 : vector<4xf32> to vector<4x1xf32>
    %33 = arith.addf %15, %32 : vector<4x1xf32>
    %34 = arith.mulf %26, %26 : vector<4x512xf32>
    %cst_22 = arith.constant dense<0.000000e+00> : vector<4xf32>
    %35 = vector.multi_reduction <add>, %34, %cst_22 [1] : vector<4x512xf32> to vector<4xf32>
    %36 = vector.shape_cast %35 : vector<4xf32> to vector<4x1xf32>
    %37 = arith.addf %19, %36 : vector<4x1xf32>
    %c2 = arith.constant 2 : index
    %c0_23 = arith.constant 0 : index
    %c0_24 = arith.constant 0 : index
    %38 = vector.load %arg1[%c2, %c0_23, %c0_24] : memref<4x4x32xbf16, #tpu.memory_space<vmem>>, vector<1x4x32xbf16>
    %39 = vector.shape_cast %38 : vector<1x4x32xbf16> to vector<4x32xbf16>
    %40 = arith.extf %39 : vector<4x32xbf16> to vector<4x32xf32>
    %c2_25 = arith.constant 2 : index
    %c0_26 = arith.constant 0 : index
    %c0_27 = arith.constant 0 : index
    %41 = vector.load %arg0[%c2_25, %c0_26, %c0_27] : memref<4x32x512xbf16, #tpu.memory_space<vmem>>, vector<1x32x512xbf16>
    %42 = vector.shape_cast %41 : vector<1x32x512xbf16> to vector<32x512xbf16>
    %43 = arith.extf %42 : vector<32x512xbf16> to vector<32x512xf32>
    %cst_28 = arith.constant dense<0.000000e+00> : vector<4x512xf32>
    %44 = tpu.matmul %40, %43, %cst_28 {dimension_numbers = #tpu.dot_dimension_numbers<[1], [0], [0], [1], [0, 0, 1, 1], [], []>} : vector<4x32xf32>, vector<32x512xf32>, vector<4x512xf32> -> vector<4x512xf32>
    %45 = arith.truncf %44 : vector<4x512xf32> to vector<4x512xbf16>
    %c2_29 = arith.constant 2 : index
    %c0_30 = arith.constant 0 : index
    %c0_31 = arith.constant 0 : index
    %46 = vector.load %arg4[%c2_29, %c0_30, %c0_31] : memref<4x4x512xbf16, #tpu.memory_space<vmem>>, vector<1x4x512xbf16>
    %47 = vector.shape_cast %46 : vector<1x4x512xbf16> to vector<4x512xbf16>
    %48 = vector.shape_cast %45 : vector<4x512xbf16> to vector<1x4x512xbf16>
    tpu.vector_store %arg4[%c2_29, %c0_30, %c0_31], %48 {strides = array<i32>} : memref<4x4x512xbf16, #tpu.memory_space<vmem>>, vector<1x4x512xbf16>,
    %cst_32 = arith.constant dense<0.000000e+00> : vector<4xf32>
    %49 = vector.multi_reduction <add>, %44, %cst_32 [1] : vector<4x512xf32> to vector<4xf32>
    %50 = vector.shape_cast %49 : vector<4xf32> to vector<4x1xf32>
    %51 = arith.addf %33, %50 : vector<4x1xf32>
    %52 = arith.mulf %44, %44 : vector<4x512xf32>
    %cst_33 = arith.constant dense<0.000000e+00> : vector<4xf32>
    %53 = vector.multi_reduction <add>, %52, %cst_33 [1] : vector<4x512xf32> to vector<4xf32>
    %54 = vector.shape_cast %53 : vector<4xf32> to vector<4x1xf32>
    %55 = arith.addf %37, %54 : vector<4x1xf32>
    %c3 = arith.constant 3 : index
    %c0_34 = arith.constant 0 : index
    %c0_35 = arith.constant 0 : index
    %56 = vector.load %arg1[%c3, %c0_34, %c0_35] : memref<4x4x32xbf16, #tpu.memory_space<vmem>>, vector<1x4x32xbf16>
    %57 = vector.shape_cast %56 : vector<1x4x32xbf16> to vector<4x32xbf16>
    %58 = arith.extf %57 : vector<4x32xbf16> to vector<4x32xf32>
    %c3_36 = arith.constant 3 : index
    %c0_37 = arith.constant 0 : index
    %c0_38 = arith.constant 0 : index
    %59 = vector.load %arg0[%c3_36, %c0_37, %c0_38] : memref<4x32x512xbf16, #tpu.memory_space<vmem>>, vector<1x32x512xbf16>
    %60 = vector.shape_cast %59 : vector<1x32x512xbf16> to vector<32x512xbf16>
    %61 = arith.extf %60 : vector<32x512xbf16> to vector<32x512xf32>
    %cst_39 = arith.constant dense<0.000000e+00> : vector<4x512xf32>
    %62 = tpu.matmul %58, %61, %cst_39 {dimension_numbers = #tpu.dot_dimension_numbers<[1], [0], [0], [1], [0, 0, 1, 1], [], []>} : vector<4x32xf32>, vector<32x512xf32>, vector<4x512xf32> -> vector<4x512xf32>
    %63 = arith.truncf %62 : vector<4x512xf32> to vector<4x512xbf16>
    %c3_40 = arith.constant 3 : index
    %c0_41 = arith.constant 0 : index
    %c0_42 = arith.constant 0 : index
    %64 = vector.load %arg4[%c3_40, %c0_41, %c0_42] : memref<4x4x512xbf16, #tpu.memory_space<vmem>>, vector<1x4x512xbf16>
    %65 = vector.shape_cast %64 : vector<1x4x512xbf16> to vector<4x512xbf16>
    %66 = vector.shape_cast %63 : vector<4x512xbf16> to vector<1x4x512xbf16>
    tpu.vector_store %arg4[%c3_40, %c0_41, %c0_42], %66 {strides = array<i32>} : memref<4x4x512xbf16, #tpu.memory_space<vmem>>, vector<1x4x512xbf16>,
    %cst_43 = arith.constant dense<0.000000e+00> : vector<4xf32>
    %67 = vector.multi_reduction <add>, %62, %cst_43 [1] : vector<4x512xf32> to vector<4xf32>
    %68 = vector.shape_cast %67 : vector<4xf32> to vector<4x1xf32>
    %69 = arith.addf %51, %68 : vector<4x1xf32>
    %70 = arith.mulf %62, %62 : vector<4x512xf32>
    %cst_44 = arith.constant dense<0.000000e+00> : vector<4xf32>
    %71 = vector.multi_reduction <add>, %70, %cst_44 [1] : vector<4x512xf32> to vector<4xf32>
    %72 = vector.shape_cast %71 : vector<4xf32> to vector<4x1xf32>
    %73 = arith.addf %55, %72 : vector<4x1xf32>
    %cst_45 = arith.constant 4.8828125E-4 : f32
    %74 = vector.broadcast %cst_45 : f32 to vector<4x1xf32>
    %75 = arith.mulf %69, %74 : vector<4x1xf32>
    %cst_46 = arith.constant 4.8828125E-4 : f32
    %76 = vector.broadcast %cst_46 : f32 to vector<4x1xf32>
    %77 = arith.mulf %73, %76 : vector<4x1xf32>
    %78 = arith.mulf %75, %75 : vector<4x1xf32>
    %79 = arith.subf %77, %78 : vector<4x1xf32>
    %cst_47 = arith.constant 9.99999974E-6 : f32
    %80 = vector.broadcast %cst_47 : f32 to vector<4x1xf32>
    %81 = arith.addf %79, %80 : vector<4x1xf32>
    %82 = math.rsqrt %81 : vector<4x1xf32>
    %c0_48 = arith.constant 0 : index
    %c0_49 = arith.constant 0 : index
    %83 = vector.load %arg2[%c0_48, %c0_49] : memref<4x1xf32, #tpu.memory_space<vmem>>, vector<4x1xf32>
    %84 = arith.mulf %82, %83 : vector<4x1xf32>
    %c0_50 = arith.constant 0 : index
    %c0_51 = arith.constant 0 : index
    %85 = vector.load %arg3[%c0_50, %c0_51] : memref<4x1xf32, #tpu.memory_space<vmem>>, vector<4x1xf32>
    %86 = arith.mulf %75, %84 : vector<4x1xf32>
    %87 = arith.subf %85, %86 : vector<4x1xf32>
    %c0_52 = arith.constant 0 : index
    %c0_53 = arith.constant 0 : index
    %c0_54 = arith.constant 0 : index
    %88 = vector.load %arg4[%c0_52, %c0_53, %c0_54] : memref<4x4x512xbf16, #tpu.memory_space<vmem>>, vector<1x4x512xbf16>
    %89 = vector.shape_cast %88 : vector<1x4x512xbf16> to vector<4x512xbf16>
    %90 = arith.extf %89 : vector<4x512xbf16> to vector<4x512xf32>
    %91 = vector.broadcast %84 : vector<4x1xf32> to vector<4x512xf32>
    %92 = arith.mulf %90, %91 : vector<4x512xf32>
    %93 = vector.broadcast %87 : vector<4x1xf32> to vector<4x512xf32>
    %94 = arith.addf %92, %93 : vector<4x512xf32>
    %cst_55 = arith.constant 0.000000e+00 : f32
    %95 = vector.broadcast %cst_55 : f32 to vector<4x512xf32>
    %96 = arith.maximumf %94, %95 : vector<4x512xf32>
    %97 = arith.truncf %96 : vector<4x512xf32> to vector<4x512xbf16>
    %c0_56 = arith.constant 0 : index
    %c0_57 = arith.constant 0 : index
    %c0_58 = arith.constant 0 : index
    %98 = vector.load %arg4[%c0_56, %c0_57, %c0_58] : memref<4x4x512xbf16, #tpu.memory_space<vmem>>, vector<1x4x512xbf16>
    %99 = vector.shape_cast %98 : vector<1x4x512xbf16> to vector<4x512xbf16>
    %100 = vector.shape_cast %97 : vector<4x512xbf16> to vector<1x4x512xbf16>
    tpu.vector_store %arg4[%c0_56, %c0_57, %c0_58], %100 {strides = array<i32>} : memref<4x4x512xbf16, #tpu.memory_space<vmem>>, vector<1x4x512xbf16>,
    %c1_59 = arith.constant 1 : index
    %c0_60 = arith.constant 0 : index
    %c0_61 = arith.constant 0 : index
    %101 = vector.load %arg4[%c1_59, %c0_60, %c0_61] : memref<4x4x512xbf16, #tpu.memory_space<vmem>>, vector<1x4x512xbf16>
    %102 = vector.shape_cast %101 : vector<1x4x512xbf16> to vector<4x512xbf16>
    %103 = arith.extf %102 : vector<4x512xbf16> to vector<4x512xf32>
    %104 = vector.broadcast %84 : vector<4x1xf32> to vector<4x512xf32>
    %105 = arith.mulf %103, %104 : vector<4x512xf32>
    %106 = vector.broadcast %87 : vector<4x1xf32> to vector<4x512xf32>
    %107 = arith.addf %105, %106 : vector<4x512xf32>
    %cst_62 = arith.constant 0.000000e+00 : f32
    %108 = vector.broadcast %cst_62 : f32 to vector<4x512xf32>
    %109 = arith.maximumf %107, %108 : vector<4x512xf32>
    %110 = arith.truncf %109 : vector<4x512xf32> to vector<4x512xbf16>
    %c1_63 = arith.constant 1 : index
    %c0_64 = arith.constant 0 : index
    %c0_65 = arith.constant 0 : index
    %111 = vector.load %arg4[%c1_63, %c0_64, %c0_65] : memref<4x4x512xbf16, #tpu.memory_space<vmem>>, vector<1x4x512xbf16>
    %112 = vector.shape_cast %111 : vector<1x4x512xbf16> to vector<4x512xbf16>
    %113 = vector.shape_cast %110 : vector<4x512xbf16> to vector<1x4x512xbf16>
    tpu.vector_store %arg4[%c1_63, %c0_64, %c0_65], %113 {strides = array<i32>} : memref<4x4x512xbf16, #tpu.memory_space<vmem>>, vector<1x4x512xbf16>,
    %c2_66 = arith.constant 2 : index
    %c0_67 = arith.constant 0 : index
    %c0_68 = arith.constant 0 : index
    %114 = vector.load %arg4[%c2_66, %c0_67, %c0_68] : memref<4x4x512xbf16, #tpu.memory_space<vmem>>, vector<1x4x512xbf16>
    %115 = vector.shape_cast %114 : vector<1x4x512xbf16> to vector<4x512xbf16>
    %116 = arith.extf %115 : vector<4x512xbf16> to vector<4x512xf32>
    %117 = vector.broadcast %84 : vector<4x1xf32> to vector<4x512xf32>
    %118 = arith.mulf %116, %117 : vector<4x512xf32>
    %119 = vector.broadcast %87 : vector<4x1xf32> to vector<4x512xf32>
    %120 = arith.addf %118, %119 : vector<4x512xf32>
    %cst_69 = arith.constant 0.000000e+00 : f32
    %121 = vector.broadcast %cst_69 : f32 to vector<4x512xf32>
    %122 = arith.maximumf %120, %121 : vector<4x512xf32>
    %123 = arith.truncf %122 : vector<4x512xf32> to vector<4x512xbf16>
    %c2_70 = arith.constant 2 : index
    %c0_71 = arith.constant 0 : index
    %c0_72 = arith.constant 0 : index
    %124 = vector.load %arg4[%c2_70, %c0_71, %c0_72] : memref<4x4x512xbf16, #tpu.memory_space<vmem>>, vector<1x4x512xbf16>
    %125 = vector.shape_cast %124 : vector<1x4x512xbf16> to vector<4x512xbf16>
    %126 = vector.shape_cast %123 : vector<4x512xbf16> to vector<1x4x512xbf16>
    tpu.vector_store %arg4[%c2_70, %c0_71, %c0_72], %126 {strides = array<i32>} : memref<4x4x512xbf16, #tpu.memory_space<vmem>>, vector<1x4x512xbf16>,
    %c3_73 = arith.constant 3 : index
    %c0_74 = arith.constant 0 : index
    %c0_75 = arith.constant 0 : index
    %127 = vector.load %arg4[%c3_73, %c0_74, %c0_75] : memref<4x4x512xbf16, #tpu.memory_space<vmem>>, vector<1x4x512xbf16>
    %128 = vector.shape_cast %127 : vector<1x4x512xbf16> to vector<4x512xbf16>
    %129 = arith.extf %128 : vector<4x512xbf16> to vector<4x512xf32>
    %130 = vector.broadcast %84 : vector<4x1xf32> to vector<4x512xf32>
    %131 = arith.mulf %129, %130 : vector<4x512xf32>
    %132 = vector.broadcast %87 : vector<4x1xf32> to vector<4x512xf32>
    %133 = arith.addf %131, %132 : vector<4x512xf32>
    %cst_76 = arith.constant 0.000000e+00 : f32
    %134 = vector.broadcast %cst_76 : f32 to vector<4x512xf32>
    %135 = arith.maximumf %133, %134 : vector<4x512xf32>
    %136 = arith.truncf %135 : vector<4x512xf32> to vector<4x512xbf16>
    %c3_77 = arith.constant 3 : index
    %c0_78 = arith.constant 0 : index
    %c0_79 = arith.constant 0 : index
    %137 = vector.load %arg4[%c3_77, %c0_78, %c0_79] : memref<4x4x512xbf16, #tpu.memory_space<vmem>>, vector<1x4x512xbf16>
    %138 = vector.shape_cast %137 : vector<1x4x512xbf16> to vector<4x512xbf16>
    %139 = vector.shape_cast %136 : vector<4x512xbf16> to vector<1x4x512xbf16>
    tpu.vector_store %arg4[%c3_77, %c0_78, %c0_79], %139 {strides = array<i32>} : memref<4x4x512xbf16, #tpu.memory_space<vmem>>, vector<1x4x512xbf16>,
    return
  }
}

module attributes {stable_mosaic.version = 11 : i64} {
  func.func @kernel(%arg0: i32, %arg1: memref<4x16x2048xbf16, #tpu.memory_space<vmem>>, %arg2: memref<4x3x16xbf16, #tpu.memory_space<vmem>>, %arg3: memref<3x1xf32, #tpu.memory_space<vmem>>, %arg4: memref<12x2048xf32, #tpu.memory_space<vmem>>) attributes {dimension_semantics = [#tpu.dimension_semantics<parallel>], iteration_bounds = array<i64: 1>, scalar_prefetch = 0 : i64, scratch_operands = 0 : i64, tpu.core_type = #tpu.core_type<tc>, window_params = [{transform_indices = @transform_0, window_bounds = array<i64: 4, 16, 2048>}, {pipeline_mode = #tpu.pipeline_mode<synchronous>, transform_indices = @transform_1, window_bounds = array<i64: 4, 3, 16>}, {pipeline_mode = #tpu.pipeline_mode<synchronous>, transform_indices = @transform_2, window_bounds = array<i64: 3, 1>}, {transform_indices = @transform_3, window_bounds = array<i64: 12, 2048>}]} {
    %c0 = arith.constant 0 : index
    %c0_0 = arith.constant 0 : index
    %c0_1 = arith.constant 0 : index
    %0 = vector.load %arg2[%c0, %c0_0, %c0_1] : memref<4x3x16xbf16, #tpu.memory_space<vmem>>, vector<1x3x16xbf16>
    %1 = vector.shape_cast %0 : vector<1x3x16xbf16> to vector<3x16xbf16>
    %2 = arith.extf %1 : vector<3x16xbf16> to vector<3x16xf32>
    %c0_2 = arith.constant 0 : index
    %c0_3 = arith.constant 0 : index
    %c0_4 = arith.constant 0 : index
    %3 = vector.load %arg1[%c0_2, %c0_3, %c0_4] : memref<4x16x2048xbf16, #tpu.memory_space<vmem>>, vector<1x16x2048xbf16>
    %4 = vector.shape_cast %3 : vector<1x16x2048xbf16> to vector<16x2048xbf16>
    %5 = arith.extf %4 : vector<16x2048xbf16> to vector<16x2048xf32>
    %cst = arith.constant dense<0.000000e+00> : vector<3x2048xf32>
    %6 = tpu.matmul %2, %5, %cst {dimension_numbers = #tpu.dot_dimension_numbers<[1], [0], [0], [1], [0, 0, 1, 1], [], []>} : vector<3x16xf32>, vector<16x2048xf32>, vector<3x2048xf32> -> vector<3x2048xf32>
    %c0_5 = arith.constant 0 : index
    %c0_6 = arith.constant 0 : index
    %7 = vector.load %arg3[%c0_5, %c0_6] : memref<3x1xf32, #tpu.memory_space<vmem>>, vector<3x1xf32>
    %8 = vector.broadcast %7 : vector<3x1xf32> to vector<3x2048xf32>
    %9 = arith.addf %6, %8 : vector<3x2048xf32>
    %10 = math.tanh %9 : vector<3x2048xf32>
    %c1 = arith.constant 1 : index
    %c0_7 = arith.constant 0 : index
    %c0_8 = arith.constant 0 : index
    %11 = vector.load %arg2[%c1, %c0_7, %c0_8] : memref<4x3x16xbf16, #tpu.memory_space<vmem>>, vector<1x3x16xbf16>
    %12 = vector.shape_cast %11 : vector<1x3x16xbf16> to vector<3x16xbf16>
    %13 = arith.extf %12 : vector<3x16xbf16> to vector<3x16xf32>
    %c1_9 = arith.constant 1 : index
    %c0_10 = arith.constant 0 : index
    %c0_11 = arith.constant 0 : index
    %14 = vector.load %arg1[%c1_9, %c0_10, %c0_11] : memref<4x16x2048xbf16, #tpu.memory_space<vmem>>, vector<1x16x2048xbf16>
    %15 = vector.shape_cast %14 : vector<1x16x2048xbf16> to vector<16x2048xbf16>
    %16 = arith.extf %15 : vector<16x2048xbf16> to vector<16x2048xf32>
    %cst_12 = arith.constant dense<0.000000e+00> : vector<3x2048xf32>
    %17 = tpu.matmul %13, %16, %cst_12 {dimension_numbers = #tpu.dot_dimension_numbers<[1], [0], [0], [1], [0, 0, 1, 1], [], []>} : vector<3x16xf32>, vector<16x2048xf32>, vector<3x2048xf32> -> vector<3x2048xf32>
    %c0_13 = arith.constant 0 : index
    %c0_14 = arith.constant 0 : index
    %18 = vector.load %arg3[%c0_13, %c0_14] : memref<3x1xf32, #tpu.memory_space<vmem>>, vector<3x1xf32>
    %19 = vector.broadcast %18 : vector<3x1xf32> to vector<3x2048xf32>
    %20 = arith.addf %17, %19 : vector<3x2048xf32>
    %21 = math.tanh %20 : vector<3x2048xf32>
    %c2 = arith.constant 2 : index
    %c0_15 = arith.constant 0 : index
    %c0_16 = arith.constant 0 : index
    %22 = vector.load %arg2[%c2, %c0_15, %c0_16] : memref<4x3x16xbf16, #tpu.memory_space<vmem>>, vector<1x3x16xbf16>
    %23 = vector.shape_cast %22 : vector<1x3x16xbf16> to vector<3x16xbf16>
    %24 = arith.extf %23 : vector<3x16xbf16> to vector<3x16xf32>
    %c2_17 = arith.constant 2 : index
    %c0_18 = arith.constant 0 : index
    %c0_19 = arith.constant 0 : index
    %25 = vector.load %arg1[%c2_17, %c0_18, %c0_19] : memref<4x16x2048xbf16, #tpu.memory_space<vmem>>, vector<1x16x2048xbf16>
    %26 = vector.shape_cast %25 : vector<1x16x2048xbf16> to vector<16x2048xbf16>
    %27 = arith.extf %26 : vector<16x2048xbf16> to vector<16x2048xf32>
    %cst_20 = arith.constant dense<0.000000e+00> : vector<3x2048xf32>
    %28 = tpu.matmul %24, %27, %cst_20 {dimension_numbers = #tpu.dot_dimension_numbers<[1], [0], [0], [1], [0, 0, 1, 1], [], []>} : vector<3x16xf32>, vector<16x2048xf32>, vector<3x2048xf32> -> vector<3x2048xf32>
    %c0_21 = arith.constant 0 : index
    %c0_22 = arith.constant 0 : index
    %29 = vector.load %arg3[%c0_21, %c0_22] : memref<3x1xf32, #tpu.memory_space<vmem>>, vector<3x1xf32>
    %30 = vector.broadcast %29 : vector<3x1xf32> to vector<3x2048xf32>
    %31 = arith.addf %28, %30 : vector<3x2048xf32>
    %32 = math.tanh %31 : vector<3x2048xf32>
    %c3 = arith.constant 3 : index
    %c0_23 = arith.constant 0 : index
    %c0_24 = arith.constant 0 : index
    %33 = vector.load %arg2[%c3, %c0_23, %c0_24] : memref<4x3x16xbf16, #tpu.memory_space<vmem>>, vector<1x3x16xbf16>
    %34 = vector.shape_cast %33 : vector<1x3x16xbf16> to vector<3x16xbf16>
    %35 = arith.extf %34 : vector<3x16xbf16> to vector<3x16xf32>
    %c3_25 = arith.constant 3 : index
    %c0_26 = arith.constant 0 : index
    %c0_27 = arith.constant 0 : index
    %36 = vector.load %arg1[%c3_25, %c0_26, %c0_27] : memref<4x16x2048xbf16, #tpu.memory_space<vmem>>, vector<1x16x2048xbf16>
    %37 = vector.shape_cast %36 : vector<1x16x2048xbf16> to vector<16x2048xbf16>
    %38 = arith.extf %37 : vector<16x2048xbf16> to vector<16x2048xf32>
    %cst_28 = arith.constant dense<0.000000e+00> : vector<3x2048xf32>
    %39 = tpu.matmul %35, %38, %cst_28 {dimension_numbers = #tpu.dot_dimension_numbers<[1], [0], [0], [1], [0, 0, 1, 1], [], []>} : vector<3x16xf32>, vector<16x2048xf32>, vector<3x2048xf32> -> vector<3x2048xf32>
    %c0_29 = arith.constant 0 : index
    %c0_30 = arith.constant 0 : index
    %40 = vector.load %arg3[%c0_29, %c0_30] : memref<3x1xf32, #tpu.memory_space<vmem>>, vector<3x1xf32>
    %41 = vector.broadcast %40 : vector<3x1xf32> to vector<3x2048xf32>
    %42 = arith.addf %39, %41 : vector<3x2048xf32>
    %43 = math.tanh %42 : vector<3x2048xf32>
    %44 = tpu.concatenate %10, %21, %32, %43 in 0 : vector<3x2048xf32>, vector<3x2048xf32>, vector<3x2048xf32>, vector<3x2048xf32> -> vector<12x2048xf32>
    %c0_31 = arith.constant 0 : index
    %c0_32 = arith.constant 0 : index
    %45 = vector.load %arg4[%c0_31, %c0_32] : memref<12x2048xf32, #tpu.memory_space<vmem>>, vector<12x2048xf32>
    tpu.vector_store %arg4[%c0_31, %c0_32], %44 {strides = array<i32>} : memref<12x2048xf32, #tpu.memory_space<vmem>>, vector<12x2048xf32>,
    return
  }
  func.func @transform_0(%arg0: i32) -> (i32, i32, i32) {
    %c0_i32 = arith.constant 0 : i32
    %c0_i32_0 = arith.constant 0 : i32
    %c0_i32_1 = arith.constant 0 : i32
    return %c0_i32, %c0_i32_0, %arg0 : i32, i32, i32
  }
  func.func @transform_1(%arg0: i32) -> (i32, i32, i32) {
    %c0_i32 = arith.constant 0 : i32
    %c0_i32_0 = arith.constant 0 : i32
    %c0_i32_1 = arith.constant 0 : i32
    %c0_i32_2 = arith.constant 0 : i32
    return %c0_i32, %c0_i32_0, %c0_i32_1 : i32, i32, i32
  }
  func.func @transform_2(%arg0: i32) -> (i32, i32) {
    %c0_i32 = arith.constant 0 : i32
    %c0_i32_0 = arith.constant 0 : i32
    %c0_i32_1 = arith.constant 0 : i32
    return %c0_i32, %c0_i32_0 : i32, i32
  }
  func.func @transform_3(%arg0: i32) -> (i32, i32) {
    %c0_i32 = arith.constant 0 : i32
    %c0_i32_0 = arith.constant 0 : i32
    return %c0_i32, %arg0 : i32, i32
  }
}

</mosaic_0001>

<llo_original>
// kernel: generator_forward.5
$region0: #{generator_forward.5}
  #allocation0 [shape = 'u32[]', space=smem, size = 0x4, offset = 0x4, fixed_abs, tag = 'smem constant byte address 0x4 - core index']
  #allocation1 [shape = 'u32[144,128]{1,0:T(1,128)}', space=vmem, size = 0x12000, scoped, tag = 'internal scratch']
  %s0 = inlined_call_operand.hbm [shape: f32[2,100], index: 0, kind: input, shape index: {}]
  %s1 = inlined_call_operand.vmem [shape: bf16[100,512], index: 1, kind: input, shape index: {}]
  %s2 = inlined_call_operand.vmem [shape: f32[1,512], index: 2, kind: input, shape index: {}]
  %s3 = inlined_call_operand.vmem [shape: f32[1,512], index: 3, kind: input, shape index: {}]
  %s4 = inlined_call_operand.vmem [shape: f32[512,32], index: 4, kind: input, shape index: {}]
  %s5 = inlined_call_operand.vmem [shape: f32[32,512], index: 5, kind: input, shape index: {}]
  %s6 = inlined_call_operand.vmem [shape: bf16[2,512], index: 6, kind: output, shape index: {}]
  %s7 = sld [smem:[#allocation0]]
  $region38: #{generator_forward.5} parent=0
    _
  %s9 = ssub.s32 1, %s7
  %s10 = scalar_select 0, %s9, %s7
  $region1: #{generator_forward.5} parent=0
    #allocation2 [shape = 'u8[1024]{0}', space=vmem, size = 0x400, scoped, tag = 'input window, operand 0, single buffered']
    #allocation3 [shape = 's32[1]{0}', space=sflag, size = 0x4, scoped, tag = 'scoped memory for generator_forward.5']
    %11 = vsyncpa [#allocation3], 0
    // Predicated region
    $region2: #{generator_forward.5} parent=1 // pred_check
      _
    $region3: #{generator_forward.5} parent=1 // pred_check_branch
      %13 = sbr.rel (0) target = $region5
    $region4: #{generator_forward.5} parent=1 // pred_region
      %s15 = ssub.s32 32, 32
      %16 = vsyncadd [#allocation3], %s15
      %s18 = sshll.u32 [#allocation2], 4
      %s19 = int_to_ptr.vmem [resolvable:$true] %s18
      %21 = dma.hbm_to_vmem [thread:$0]  %s0, 32, %s19, [#allocation3]
    $region5: #{generator_forward.5} parent=1 // pred_fallthru
      _
    // Predicated region
    $region6: #{generator_forward.5} parent=1 // pred_check
      _
    $region7: #{generator_forward.5} parent=1 // pred_check_branch
      %23 = sbr.rel (0) target = $region9
    $region8: #{generator_forward.5} parent=1 // pred_region
      _
    $region9: #{generator_forward.5} parent=1 // pred_fallthru
      _
    // Predicated region
    $region10: #{generator_forward.5} parent=1 // pred_check
      _
    $region11: #{generator_forward.5} parent=1 // pred_check_branch
      %25 = sbr.rel (0) target = $region13
    $region12: #{generator_forward.5} parent=1 // pred_region
      _
    $region13: #{generator_forward.5} parent=1 // pred_fallthru
      _
    // Predicated region
    $region14: #{generator_forward.5} parent=1 // pred_check
      _
    $region15: #{generator_forward.5} parent=1 // pred_check_branch
      %27 = sbr.rel (0) target = $region17
    $region16: #{generator_forward.5} parent=1 // pred_region
      _
    $region17: #{generator_forward.5} parent=1 // pred_fallthru
      _
    // Predicated region
    $region18: #{generator_forward.5} parent=1 // pred_check
      _
    $region19: #{generator_forward.5} parent=1 // pred_check_branch
      %29 = sbr.rel (0) target = $region21
    $region20: #{generator_forward.5} parent=1 // pred_region
      _
    $region21: #{generator_forward.5} parent=1 // pred_fallthru
      _
    // Predicated region
    $region22: #{generator_forward.5} parent=1 // pred_check
      _
    $region23: #{generator_forward.5} parent=1 // pred_check_branch
      %31 = sbr.rel (0) target = $region25
    $region24: #{generator_forward.5} parent=1 // pred_region
      _
    $region25: #{generator_forward.5} parent=1 // pred_fallthru
      _
    // Predicated region
    $region26: #{generator_forward.5} parent=1 // pred_check
      _
    $region27: #{generator_forward.5} parent=1 // pred_check_branch
      %33 = sbr.rel (0) target = $region29
    $region28: #{generator_forward.5} parent=1 // pred_region
      %34 = dma.done [#allocation3], 32
    $region29: #{generator_forward.5} parent=1 // pred_fallthru
      _
    %v35 = vld [vmem:[#allocation2] sm:$0x3]
    %v36 = vld [vmem:[%s1] sm:$0xff]
    %v37 = vld [vmem:[%s1 + $0x8] sm:$0xff]
    %v38 = vld [vmem:[%s1 + $0x10] sm:$0xff]
    %v39 = vld [vmem:[%s1 + $0x18] sm:$0xff]
    %v40 = vld [vmem:[%s1 + $0x20] sm:$0xff]
    %v41 = vld [vmem:[%s1 + $0x28] sm:$0xff]
    %v42 = vld [vmem:[%s1 + $0x30] sm:$0xff]
    %v43 = vld [vmem:[%s1 + $0x38] sm:$0xff]
    %v44 = vld [vmem:[%s1 + $0x40] sm:$0xff]
    %v45 = vld [vmem:[%s1 + $0x48] sm:$0xff]
    %v46 = vld [vmem:[%s1 + $0x50] sm:$0xff]
    %v47 = vld [vmem:[%s1 + $0x58] sm:$0xff]
    %v48 = vld [vmem:[%s1 + $0x60] sm:$0xff]
    %v49 = vld [vmem:[%s1 + $0x68] sm:$0xff]
    %v50 = vld [vmem:[%s1 + $0x70] sm:$0xff]
    %v51 = vld [vmem:[%s1 + $0x78] sm:$0xff]
    %v52 = vld [vmem:[%s1 + $0x80] sm:$0xff]
    %v53 = vld [vmem:[%s1 + $0x88] sm:$0xff]
    %v54 = vld [vmem:[%s1 + $0x90] sm:$0xff]
    %v55 = vld [vmem:[%s1 + $0x98] sm:$0xff]
    %v56 = vld [vmem:[%s1 + $0xa0] sm:$0xff]
    %v57 = vld [vmem:[%s1 + $0xa8] sm:$0xff]
    %v58 = vld [vmem:[%s1 + $0xb0] sm:$0xff]
    %v59 = vld [vmem:[%s1 + $0xb8] sm:$0xff]
    %v60 = vld [vmem:[%s1 + $0xc0] sm:$0x33]
    %v61 = vld [vmem:[%s1 + $0xc8] sm:$0x33]
    %v62 = vunpack.c.l.bf16 %v36
    %v63 = vunpack.c.h.bf16 %v36
    %v64 = vunpack.c.l.bf16 %v37
    %v65 = vunpack.c.h.bf16 %v37
    %v66 = vunpack.c.l.bf16 %v38
    %v67 = vunpack.c.h.bf16 %v38
    %v68 = vunpack.c.l.bf16 %v39
    %v69 = vunpack.c.h.bf16 %v39
    %v70 = vunpack.c.l.bf16 %v40
    %v71 = vunpack.c.h.bf16 %v40
    %v72 = vunpack.c.l.bf16 %v41
    %v73 = vunpack.c.h.bf16 %v41
    %v74 = vunpack.c.l.bf16 %v42
    %v75 = vunpack.c.h.bf16 %v42
    %v76 = vunpack.c.l.bf16 %v43
    %v77 = vunpack.c.h.bf16 %v43
    %v78 = vunpack.c.l.bf16 %v44
    %v79 = vunpack.c.h.bf16 %v44
    %v80 = vunpack.c.l.bf16 %v45
    %v81 = vunpack.c.h.bf16 %v45
    %v82 = vunpack.c.l.bf16 %v46
    %v83 = vunpack.c.h.bf16 %v46
    %v84 = vunpack.c.l.bf16 %v47
    %v85 = vunpack.c.h.bf16 %v47
    %v86 = vunpack.c.l.bf16 %v48
    %v87 = vunpack.c.h.bf16 %v48
    %v88 = vunpack.c.l.bf16 %v49
    %v89 = vunpack.c.h.bf16 %v49
    %v90 = vunpack.c.l.bf16 %v50
    %v91 = vunpack.c.h.bf16 %v50
    %v92 = vunpack.c.l.bf16 %v51
    %v93 = vunpack.c.h.bf16 %v51
    %v94 = vunpack.c.l.bf16 %v52
    %v95 = vunpack.c.h.bf16 %v52
    %v96 = vunpack.c.l.bf16 %v53
    %v97 = vunpack.c.h.bf16 %v53
    %v98 = vunpack.c.l.bf16 %v54
    %v99 = vunpack.c.h.bf16 %v54
    %v100 = vunpack.c.l.bf16 %v55
    %v101 = vunpack.c.h.bf16 %v55
    %v102 = vunpack.c.l.bf16 %v56
    %v103 = vunpack.c.h.bf16 %v56
    %v104 = vunpack.c.l.bf16 %v57
    %v105 = vunpack.c.h.bf16 %v57
    %v106 = vunpack.c.l.bf16 %v58
    %v107 = vunpack.c.h.bf16 %v58
    %v108 = vunpack.c.l.bf16 %v59
    %v109 = vunpack.c.h.bf16 %v59
    %v110 = vunpack.c.l.bf16 %v60
    %v111 = vunpack.c.h.bf16 %v60
    %v112 = vunpack.c.l.bf16 %v61
    %v113 = vunpack.c.h.bf16 %v61
    %vm114 = vcmask 818176
    %v116 = vsel %vm114, %v35, 0
    %vm118 = vcmask 1043456
    %v120 = vsel %vm118, %v110, 0
    %v123 = vsel %vm118, %v111, 0
    %v126 = vsel %vm118, %v112, 0
    %v129 = vsel %vm118, %v113, 0
    %131 = vmatprep.subr.mxu0 %v63
    %132 = vmatpush1.msra.mxu0 %v62
    %133 = vmatprep.subr.mxu0 %v67
    %134 = vmatpush1.msra.mxu0 %v66
    %135 = vmatprep.subr.mxu0 %v71
    %136 = vmatpush1.msra.mxu0 %v70
    %137 = vmatprep.subr.mxu0 %v75
    %138 = vmatpush1.msra.mxu0 %v74
    %139 = vmatprep.subr.mxu0 %v79
    %140 = vmatpush1.msra.mxu0 %v78
    %141 = vmatprep.subr.mxu0 %v83
    %142 = vmatpush1.msra.mxu0 %v82
    %143 = vmatprep.subr.mxu0 %v87
    %144 = vmatpush1.msra.mxu0 %v86
    %145 = vmatprep.subr.mxu0 %v91
    %146 = vmatpush1.msra.mxu0 %v90
    %147 = vmatprep.subr.mxu0 %v95
    %148 = vmatpush1.msra.mxu0 %v94
    %149 = vmatprep.subr.mxu0 %v99
    %150 = vmatpush1.msra.mxu0 %v98
    %151 = vmatprep.subr.mxu0 %v103
    %152 = vmatpush1.msra.mxu0 %v102
    %153 = vmatprep.subr.mxu0 %v107
    %154 = vmatpush1.msra.mxu0 %v106
    %155 = vmatprep.subr.mxu0 %v123
    %156 = vmatpush1.msra.mxu0 %v120
    %157 = vmatprep.subr.mxu0 0.0
    %158 = vmatpush1.msra.mxu0 0.0
    %159 = vmatprep.subr.mxu0 0.0
    %160 = vmatpush1.msra.mxu0 0.0
    %161 = vmatprep.subr.mxu0 0.0
    %162 = vmatpush1.msra.mxu0 0.0
    %163 = vmatprep.subr.mxu0 0.0
    %164 = vmatpush1.msra.mxu0 0.0
    %165 = vmatprep.subr.mxu0 0.0
    %166 = vmatpush1.msra.mxu0 0.0
    %167 = vmatprep.subr.mxu0 0.0
    %168 = vmatpush1.msra.mxu0 0.0
    %169 = vmatprep.subr.mxu0 0.0
    %170 = vmatpush1.msra.mxu0 0.0
    %171 = vmatprep.subr.mxu0 0.0
    %172 = vmatpush1.msra.mxu0 0.0
    %173 = vmatprep.subr.mxu0 0.0
    %174 = vmatpush1.msra.mxu0 0.0
    %175 = vmatprep.subr.mxu0 0.0
    %176 = vmatpush1.msra.mxu0 0.0
    %177 = vmatprep.subr.mxu0 0.0
    %178 = vmatpush1.msra.mxu0 0.0
    %179 = vmatprep.subr.mxu0 0.0
    %180 = vmatpush1.msra.mxu0 0.0
    %181 = vmatprep.subr.mxu0 0.0
    %182 = vmatpush1.msra.mxu0 0.0
    %183 = vmatprep.subr.mxu0 0.0
    %184 = vmatpush1.msra.mxu0 0.0
    %185 = vmatprep.subr.mxu0 0.0
    %186 = vmatpush1.msra.mxu0 0.0
    %187 = vmatprep.subr.mxu0 0.0
    %188 = vmatpush1.msra.mxu0 0.0
    %189 = vmatprep.subr.mxu0 0.0
    %190 = vmatpush1.msra.mxu0 0.0
    %191 = vmatprep.subr.mxu0 0.0
    %192 = vmatpush1.msra.mxu0 0.0
    %193 = vmatprep.subr.mxu0 0.0
    %194 = vmatpush1.msra.mxu0 0.0
    %195 = vmatprep.mubr.f32.mxu0 0.0
    %196 = vmatmul.mubr.f32.gmra.mrb[0].mxu0 %v116
    %v197 = vpop.f32.mrb[0].mxu0
    %v198 = vadd.f32 0.0, %v197
    %v199 = vpop.f32.mrb[0].mxu0
    %v200 = vadd.f32 0.0, %v199
    %201 = vdwg.mxu0
    %202 = vmatprep.subr.mxu0 %v65
    %203 = vmatpush1.msra.mxu0 %v64
    %204 = vmatprep.subr.mxu0 %v69
    %205 = vmatpush1.msra.mxu0 %v68
    %206 = vmatprep.subr.mxu0 %v73
    %207 = vmatpush1.msra.mxu0 %v72
    %208 = vmatprep.subr.mxu0 %v77
    %209 = vmatpush1.msra.mxu0 %v76
    %210 = vmatprep.subr.mxu0 %v81
    %211 = vmatpush1.msra.mxu0 %v80
    %212 = vmatprep.subr.mxu0 %v85
    %213 = vmatpush1.msra.mxu0 %v84
    %214 = vmatprep.subr.mxu0 %v89
    %215 = vmatpush1.msra.mxu0 %v88
    %216 = vmatprep.subr.mxu0 %v93
    %217 = vmatpush1.msra.mxu0 %v92
    %218 = vmatprep.subr.mxu0 %v97
    %219 = vmatpush1.msra.mxu0 %v96
    %220 = vmatprep.subr.mxu0 %v101
    %221 = vmatpush1.msra.mxu0 %v100
    %222 = vmatprep.subr.mxu0 %v105
    %223 = vmatpush1.msra.mxu0 %v104
    %224 = vmatprep.subr.mxu0 %v109
    %225 = vmatpush1.msra.mxu0 %v108
    %226 = vmatprep.subr.mxu0 %v129
    %227 = vmatpush1.msra.mxu0 %v126
    %228 = vmatprep.subr.mxu0 0.0
    %229 = vmatpush1.msra.mxu0 0.0
    %230 = vmatprep.subr.mxu0 0.0
    %231 = vmatpush1.msra.mxu0 0.0
    %232 = vmatprep.subr.mxu0 0.0
    %233 = vmatpush1.msra.mxu0 0.0
    %234 = vmatprep.subr.mxu0 0.0
    %235 = vmatpush1.msra.mxu0 0.0
    %236 = vmatprep.subr.mxu0 0.0
    %237 = vmatpush1.msra.mxu0 0.0
    %238 = vmatprep.subr.mxu0 0.0
    %239 = vmatpush1.msra.mxu0 0.0
    %240 = vmatprep.subr.mxu0 0.0
    %241 = vmatpush1.msra.mxu0 0.0
    %242 = vmatprep.subr.mxu0 0.0
    %243 = vmatpush1.msra.mxu0 0.0
    %244 = vmatprep.subr.mxu0 0.0
    %245 = vmatpush1.msra.mxu0 0.0
    %246 = vmatprep.subr.mxu0 0.0
    %247 = vmatpush1.msra.mxu0 0.0
    %248 = vmatprep.subr.mxu0 0.0
    %249 = vmatpush1.msra.mxu0 0.0
    %250 = vmatprep.subr.mxu0 0.0
    %251 = vmatpush1.msra.mxu0 0.0
    %252 = vmatprep.subr.mxu0 0.0
    %253 = vmatpush1.msra.mxu0 0.0
    %254 = vmatprep.subr.mxu0 0.0
    %255 = vmatpush1.msra.mxu0 0.0
    %256 = vmatprep.subr.mxu0 0.0
    %257 = vmatpush1.msra.mxu0 0.0
    %258 = vmatprep.subr.mxu0 0.0
    %259 = vmatpush1.msra.mxu0 0.0
    %260 = vmatprep.subr.mxu0 0.0
    %261 = vmatpush1.msra.mxu0 0.0
    %262 = vmatprep.subr.mxu0 0.0
    %263 = vmatpush1.msra.mxu0 0.0
    %264 = vmatprep.subr.mxu0 0.0
    %265 = vmatpush1.msra.mxu0 0.0
    %266 = vmatprep.mubr.f32.mxu0 0.0
    %267 = vmatmul.mubr.f32.gmra.mrb[0].mxu0 %v116
    %v268 = vpop.f32.mrb[0].mxu0
    %v269 = vadd.f32 0.0, %v268
    %v270 = vpop.f32.mrb[0].mxu0
    %v271 = vadd.f32 0.0, %v270
    %272 = vdwg.mxu0
    %vm273 = vcmask 1041408
    %v274 = vsel %vm273, %v198, 0.0
    %v275 = vrot.slane %v274, 4
    %v276 = vadd.f32 %v274, %v275
    %v277 = vrot.slane %v276, 2
    %v278 = vadd.f32 %v276, %v277
    %v279 = vrot.slane %v278, 1
    %v280 = vadd.f32 %v278, %v279
    %v281 = vsel %vm273, %v200, 0.0
    %v282 = vrot.slane %v281, 4
    %v283 = vadd.f32 %v281, %v282
    %v284 = vrot.slane %v283, 2
    %v285 = vadd.f32 %v283, %v284
    %v286 = vrot.slane %v285, 1
    %v287 = vadd.f32 %v285, %v286
    %v288 = vsel %vm273, %v269, 0.0
    %v289 = vrot.slane %v288, 4
    %v290 = vadd.f32 %v288, %v289
    %v291 = vrot.slane %v290, 2
    %v292 = vadd.f32 %v290, %v291
    %v293 = vrot.slane %v292, 1
    %v294 = vadd.f32 %v292, %v293
    %v295 = vsel %vm273, %v271, 0.0
    %v296 = vrot.slane %v295, 4
    %v297 = vadd.f32 %v295, %v296
    %v298 = vrot.slane %v297, 2
    %v299 = vadd.f32 %v297, %v298
    %v300 = vrot.slane %v299, 1
    %v301 = vadd.f32 %v299, %v300
    %v302 = vmul.f32 %v198, %v198
    %v303 = vmul.f32 %v200, %v200
    %v304 = vmul.f32 %v269, %v269
    %v305 = vmul.f32 %v271, %v271
    %v306 = vsel %vm273, %v302, 0.0
    %v307 = vrot.slane %v306, 4
    %v308 = vadd.f32 %v306, %v307
    %v309 = vrot.slane %v308, 2
    %v310 = vadd.f32 %v308, %v309
    %v311 = vrot.slane %v310, 1
    %v312 = vadd.f32 %v310, %v311
    %v313 = vsel %vm273, %v303, 0.0
    %v314 = vrot.slane %v313, 4
    %v315 = vadd.f32 %v313, %v314
    %v316 = vrot.slane %v315, 2
    %v317 = vadd.f32 %v315, %v316
    %v318 = vrot.slane %v317, 1
    %v319 = vadd.f32 %v317, %v318
    %v320 = vsel %vm273, %v304, 0.0
    %v321 = vrot.slane %v320, 4
    %v322 = vadd.f32 %v320, %v321
    %v323 = vrot.slane %v322, 2
    %v324 = vadd.f32 %v322, %v323
    %v325 = vrot.slane %v324, 1
    %v326 = vadd.f32 %v324, %v325
    %v327 = vsel %vm273, %v305, 0.0
    %v328 = vrot.slane %v327, 4
    %v329 = vadd.f32 %v327, %v328
    %v330 = vrot.slane %v329, 2
    %v331 = vadd.f32 %v329, %v330
    %v332 = vrot.slane %v331, 1
    %v333 = vadd.f32 %v331, %v332
    %v334 = vld [vmem:[%s4] sm:$0xff]
    %v335 = vld [vmem:[%s4 + $0x8] sm:$0xff]
    %v336 = vld [vmem:[%s4 + $0x10] sm:$0xff]
    %v337 = vld [vmem:[%s4 + $0x18] sm:$0xff]
    %v338 = vld [vmem:[%s4 + $0x20] sm:$0xff]
    %v339 = vld [vmem:[%s4 + $0x28] sm:$0xff]
    %v340 = vld [vmem:[%s4 + $0x30] sm:$0xff]
    %v341 = vld [vmem:[%s4 + $0x38] sm:$0xff]
    %v342 = vld [vmem:[%s4 + $0x40] sm:$0xff]
    %v343 = vld [vmem:[%s4 + $0x48] sm:$0xff]
    %v344 = vld [vmem:[%s4 + $0x50] sm:$0xff]
    %v345 = vld [vmem:[%s4 + $0x58] sm:$0xff]
    %v346 = vld [vmem:[%s4 + $0x60] sm:$0xff]
    %v347 = vld [vmem:[%s4 + $0x68] sm:$0xff]
    %v348 = vld [vmem:[%s4 + $0x70] sm:$0xff]
    %v349 = vld [vmem:[%s4 + $0x78] sm:$0xff]
    %v350 = vld [vmem:[%s4 + $0x80] sm:$0xff]
    %v351 = vld [vmem:[%s4 + $0x88] sm:$0xff]
    %v352 = vld [vmem:[%s4 + $0x90] sm:$0xff]
    %v353 = vld [vmem:[%s4 + $0x98] sm:$0xff]
    %v354 = vld [vmem:[%s4 + $0xa0] sm:$0xff]
    %v355 = vld [vmem:[%s4 + $0xa8] sm:$0xff]
    %v356 = vld [vmem:[%s4 + $0xb0] sm:$0xff]
    %v357 = vld [vmem:[%s4 + $0xb8] sm:$0xff]
    %v358 = vld [vmem:[%s4 + $0xc0] sm:$0xff]
    %v359 = vld [vmem:[%s4 + $0xc8] sm:$0xff]
    %v360 = vld [vmem:[%s4 + $0xd0] sm:$0xff]
    %v361 = vld [vmem:[%s4 + $0xd8] sm:$0xff]
    %v362 = vld [vmem:[%s4 + $0xe0] sm:$0xff]
    %v363 = vld [vmem:[%s4 + $0xe8] sm:$0xff]
    %v364 = vld [vmem:[%s4 + $0xf0] sm:$0xff]
    %v365 = vld [vmem:[%s4 + $0xf8] sm:$0xff]
    %v366 = vld [vmem:[%s4 + $0x100] sm:$0xff]
    %v367 = vld [vmem:[%s4 + $0x108] sm:$0xff]
    %v368 = vld [vmem:[%s4 + $0x110] sm:$0xff]
    %v369 = vld [vmem:[%s4 + $0x118] sm:$0xff]
    %v370 = vld [vmem:[%s4 + $0x120] sm:$0xff]
    %v371 = vld [vmem:[%s4 + $0x128] sm:$0xff]
    %v372 = vld [vmem:[%s4 + $0x130] sm:$0xff]
    %v373 = vld [vmem:[%s4 + $0x138] sm:$0xff]
    %v374 = vld [vmem:[%s4 + $0x140] sm:$0xff]
    %v375 = vld [vmem:[%s4 + $0x148] sm:$0xff]
    %v376 = vld [vmem:[%s4 + $0x150] sm:$0xff]
    %v377 = vld [vmem:[%s4 + $0x158] sm:$0xff]
    %v378 = vld [vmem:[%s4 + $0x160] sm:$0xff]
    %v379 = vld [vmem:[%s4 + $0x168] sm:$0xff]
    %v380 = vld [vmem:[%s4 + $0x170] sm:$0xff]
    %v381 = vld [vmem:[%s4 + $0x178] sm:$0xff]
    %v382 = vld [vmem:[%s4 + $0x180] sm:$0xff]
    %v383 = vld [vmem:[%s4 + $0x188] sm:$0xff]
    %v384 = vld [vmem:[%s4 + $0x190] sm:$0xff]
    %v385 = vld [vmem:[%s4 + $0x198] sm:$0xff]
    %v386 = vld [vmem:[%s4 + $0x1a0] sm:$0xff]
    %v387 = vld [vmem:[%s4 + $0x1a8] sm:$0xff]
    %v388 = vld [vmem:[%s4 + $0x1b0] sm:$0xff]
    %v389 = vld [vmem:[%s4 + $0x1b8] sm:$0xff]
    %v390 = vld [vmem:[%s4 + $0x1c0] sm:$0xff]
    %v391 = vld [vmem:[%s4 + $0x1c8] sm:$0xff]
    %v392 = vld [vmem:[%s4 + $0x1d0] sm:$0xff]
    %v393 = vld [vmem:[%s4 + $0x1d8] sm:$0xff]
    %v394 = vld [vmem:[%s4 + $0x1e0] sm:$0xff]
    %v395 = vld [vmem:[%s4 + $0x1e8] sm:$0xff]
    %v396 = vld [vmem:[%s4 + $0x1f0] sm:$0xff]
    %v397 = vld [vmem:[%s4 + $0x1f8] sm:$0xff]
    %398 = vmatprep.subr.mxu0 0.0
    %399 = vmatpush1.msra.mxu0 %v334
    %400 = vmatprep.subr.mxu0 0.0
    %401 = vmatpush1.msra.mxu0 %v335
    %402 = vmatprep.subr.mxu0 0.0
    %403 = vmatpush1.msra.mxu0 %v336
    %404 = vmatprep.subr.mxu0 0.0
    %405 = vmatpush1.msra.mxu0 %v337
    %406 = vmatprep.subr.mxu0 0.0
    %407 = vmatpush1.msra.mxu0 %v338
    %408 = vmatprep.subr.mxu0 0.0
    %409 = vmatpush1.msra.mxu0 %v339
    %410 = vmatprep.subr.mxu0 0.0
    %411 = vmatpush1.msra.mxu0 %v340
    %412 = vmatprep.subr.mxu0 0.0
    %413 = vmatpush1.msra.mxu0 %v341
    %414 = vmatprep.subr.mxu0 0.0
    %415 = vmatpush1.msra.mxu0 %v342
    %416 = vmatprep.subr.mxu0 0.0
    %417 = vmatpush1.msra.mxu0 %v343
    %418 = vmatprep.subr.mxu0 0.0
    %419 = vmatpush1.msra.mxu0 %v344
    %420 = vmatprep.subr.mxu0 0.0
    %421 = vmatpush1.msra.mxu0 %v345
    %422 = vmatprep.subr.mxu0 0.0
    %423 = vmatpush1.msra.mxu0 %v346
    %424 = vmatprep.subr.mxu0 0.0
    %425 = vmatpush1.msra.mxu0 %v347
    %426 = vmatprep.subr.mxu0 0.0
    %427 = vmatpush1.msra.mxu0 %v348
    %428 = vmatprep.subr.mxu0 0.0
    %429 = vmatpush1.msra.mxu0 %v349
    %430 = vmatprep.subr.mxu0 0.0
    %431 = vmatpush1.msra.mxu0 %v350
    %432 = vmatprep.subr.mxu0 0.0
    %433 = vmatpush1.msra.mxu0 %v351
    %434 = vmatprep.subr.mxu0 0.0
    %435 = vmatpush1.msra.mxu0 %v352
    %436 = vmatprep.subr.mxu0 0.0
    %437 = vmatpush1.msra.mxu0 %v353
    %438 = vmatprep.subr.mxu0 0.0
    %439 = vmatpush1.msra.mxu0 %v354
    %440 = vmatprep.subr.mxu0 0.0
    %441 = vmatpush1.msra.mxu0 %v355
    %442 = vmatprep.subr.mxu0 0.0
    %443 = vmatpush1.msra.mxu0 %v356
    %444 = vmatprep.subr.mxu0 0.0
    %445 = vmatpush1.msra.mxu0 %v357
    %446 = vmatprep.subr.mxu0 0.0
    %447 = vmatpush1.msra.mxu0 %v358
    %448 = vmatprep.subr.mxu0 0.0
    %449 = vmatpush1.msra.mxu0 %v359
    %450 = vmatprep.subr.mxu0 0.0
    %451 = vmatpush1.msra.mxu0 %v360
    %452 = vmatprep.subr.mxu0 0.0
    %453 = vmatpush1.msra.mxu0 %v361
    %454 = vmatprep.subr.mxu0 0.0
    %455 = vmatpush1.msra.mxu0 %v362
    %456 = vmatprep.subr.mxu0 0.0
    %457 = vmatpush1.msra.mxu0 %v363
    %458 = vmatprep.subr.mxu0 0.0
    %459 = vmatpush1.msra.mxu0 %v364
    %460 = vmatprep.subr.mxu0 0.0
    %461 = vmatpush1.msra.mxu0 %v365
    %462 = vmatprep.mubr.f32.mxu0 %v287
    %463 = vmatmul.mubr.f32.gmra.mrb[0].mxu0 %v280
    %v464 = vpop.f32.mrb[0].mxu0
    %v465 = vadd.f32 0.0, %v464
    %v466 = vpop.f32.mrb[0].mxu0
    %467 = vdwg.mxu0
    %468 = vmatprep.subr.mxu0 0.0
    %469 = vmatpush1.msra.mxu0 %v366
    %470 = vmatprep.subr.mxu0 0.0
    %471 = vmatpush1.msra.mxu0 %v367
    %472 = vmatprep.subr.mxu0 0.0
    %473 = vmatpush1.msra.mxu0 %v368
    %474 = vmatprep.subr.mxu0 0.0
    %475 = vmatpush1.msra.mxu0 %v369
    %476 = vmatprep.subr.mxu0 0.0
    %477 = vmatpush1.msra.mxu0 %v370
    %478 = vmatprep.subr.mxu0 0.0
    %479 = vmatpush1.msra.mxu0 %v371
    %480 = vmatprep.subr.mxu0 0.0
    %481 = vmatpush1.msra.mxu0 %v372
    %482 = vmatprep.subr.mxu0 0.0
    %483 = vmatpush1.msra.mxu0 %v373
    %484 = vmatprep.subr.mxu0 0.0
    %485 = vmatpush1.msra.mxu0 %v374
    %486 = vmatprep.subr.mxu0 0.0
    %487 = vmatpush1.msra.mxu0 %v375
    %488 = vmatprep.subr.mxu0 0.0
    %489 = vmatpush1.msra.mxu0 %v376
    %490 = vmatprep.subr.mxu0 0.0
    %491 = vmatpush1.msra.mxu0 %v377
    %492 = vmatprep.subr.mxu0 0.0
    %493 = vmatpush1.msra.mxu0 %v378
    %494 = vmatprep.subr.mxu0 0.0
    %495 = vmatpush1.msra.mxu0 %v379
    %496 = vmatprep.subr.mxu0 0.0
    %497 = vmatpush1.msra.mxu0 %v380
    %498 = vmatprep.subr.mxu0 0.0
    %499 = vmatpush1.msra.mxu0 %v381
    %500 = vmatprep.subr.mxu0 0.0
    %501 = vmatpush1.msra.mxu0 %v382
    %502 = vmatprep.subr.mxu0 0.0
    %503 = vmatpush1.msra.mxu0 %v383
    %504 = vmatprep.subr.mxu0 0.0
    %505 = vmatpush1.msra.mxu0 %v384
    %506 = vmatprep.subr.mxu0 0.0
    %507 = vmatpush1.msra.mxu0 %v385
    %508 = vmatprep.subr.mxu0 0.0
    %509 = vmatpush1.msra.mxu0 %v386
    %510 = vmatprep.subr.mxu0 0.0
    %511 = vmatpush1.msra.mxu0 %v387
    %512 = vmatprep.subr.mxu0 0.0
    %513 = vmatpush1.msra.mxu0 %v388
    %514 = vmatprep.subr.mxu0 0.0
    %515 = vmatpush1.msra.mxu0 %v389
    %516 = vmatprep.subr.mxu0 0.0
    %517 = vmatpush1.msra.mxu0 %v390
    %518 = vmatprep.subr.mxu0 0.0
    %519 = vmatpush1.msra.mxu0 %v391
    %520 = vmatprep.subr.mxu0 0.0
    %521 = vmatpush1.msra.mxu0 %v392
    %522 = vmatprep.subr.mxu0 0.0
    %523 = vmatpush1.msra.mxu0 %v393
    %524 = vmatprep.subr.mxu0 0.0
    %525 = vmatpush1.msra.mxu0 %v394
    %526 = vmatprep.subr.mxu0 0.0
    %527 = vmatpush1.msra.mxu0 %v395
    %528 = vmatprep.subr.mxu0 0.0
    %529 = vmatpush1.msra.mxu0 %v396
    %530 = vmatprep.subr.mxu0 0.0
    %531 = vmatpush1.msra.mxu0 %v397
    %532 = vmatprep.mubr.f32.mxu0 %v301
    %533 = vmatmul.mubr.f32.gmra.mrb[0].mxu0 %v294
    %v534 = vpop.f32.mrb[0].mxu0
    %v535 = vadd.f32 %v465, %v534
    %v536 = vpop.f32.mrb[0].mxu0
    %537 = vdwg.mxu0
    %v538 = vmul.f32 %v535, 0.03125
    %539 = vmatprep.subr.mxu0 0.0
    %540 = vmatpush1.msra.mxu0 %v334
    %541 = vmatprep.subr.mxu0 0.0
    %542 = vmatpush1.msra.mxu0 %v335
    %543 = vmatprep.subr.mxu0 0.0
    %544 = vmatpush1.msra.mxu0 %v336
    %545 = vmatprep.subr.mxu0 0.0
    %546 = vmatpush1.msra.mxu0 %v337
    %547 = vmatprep.subr.mxu0 0.0
    %548 = vmatpush1.msra.mxu0 %v338
    %549 = vmatprep.subr.mxu0 0.0
    %550 = vmatpush1.msra.mxu0 %v339
    %551 = vmatprep.subr.mxu0 0.0
    %552 = vmatpush1.msra.mxu0 %v340
    %553 = vmatprep.subr.mxu0 0.0
    %554 = vmatpush1.msra.mxu0 %v341
    %555 = vmatprep.subr.mxu0 0.0
    %556 = vmatpush1.msra.mxu0 %v342
    %557 = vmatprep.subr.mxu0 0.0
    %558 = vmatpush1.msra.mxu0 %v343
    %559 = vmatprep.subr.mxu0 0.0
    %560 = vmatpush1.msra.mxu0 %v344
    %561 = vmatprep.subr.mxu0 0.0
    %562 = vmatpush1.msra.mxu0 %v345
    %563 = vmatprep.subr.mxu0 0.0
    %564 = vmatpush1.msra.mxu0 %v346
    %565 = vmatprep.subr.mxu0 0.0
    %566 = vmatpush1.msra.mxu0 %v347
    %567 = vmatprep.subr.mxu0 0.0
    %568 = vmatpush1.msra.mxu0 %v348
    %569 = vmatprep.subr.mxu0 0.0
    %570 = vmatpush1.msra.mxu0 %v349
    %571 = vmatprep.subr.mxu0 0.0
    %572 = vmatpush1.msra.mxu0 %v350
    %573 = vmatprep.subr.mxu0 0.0
    %574 = vmatpush1.msra.mxu0 %v351
    %575 = vmatprep.subr.mxu0 0.0
    %576 = vmatpush1.msra.mxu0 %v352
    %577 = vmatprep.subr.mxu0 0.0
    %578 = vmatpush1.msra.mxu0 %v353
    %579 = vmatprep.subr.mxu0 0.0
    %580 = vmatpush1.msra.mxu0 %v354
    %581 = vmatprep.subr.mxu0 0.0
    %582 = vmatpush1.msra.mxu0 %v355
    %583 = vmatprep.subr.mxu0 0.0
    %584 = vmatpush1.msra.mxu0 %v356
    %585 = vmatprep.subr.mxu0 0.0
    %586 = vmatpush1.msra.mxu0 %v357
    %587 = vmatprep.subr.mxu0 0.0
    %588 = vmatpush1.msra.mxu0 %v358
    %589 = vmatprep.subr.mxu0 0.0
    %590 = vmatpush1.msra.mxu0 %v359
    %591 = vmatprep.subr.mxu0 0.0
    %592 = vmatpush1.msra.mxu0 %v360
    %593 = vmatprep.subr.mxu0 0.0
    %594 = vmatpush1.msra.mxu0 %v361
    %595 = vmatprep.subr.mxu0 0.0
    %596 = vmatpush1.msra.mxu0 %v362
    %597 = vmatprep.subr.mxu0 0.0
    %598 = vmatpush1.msra.mxu0 %v363
    %599 = vmatprep.subr.mxu0 0.0
    %600 = vmatpush1.msra.mxu0 %v364
    %601 = vmatprep.subr.mxu0 0.0
    %602 = vmatpush1.msra.mxu0 %v365
    %603 = vmatprep.mubr.f32.mxu0 %v319
    %604 = vmatmul.mubr.f32.gmra.mrb[0].mxu0 %v312
    %v605 = vpop.f32.mrb[0].mxu0
    %v606 = vadd.f32 0.0, %v605
    %v607 = vpop.f32.mrb[0].mxu0
    %608 = vdwg.mxu0
    %609 = vmatprep.subr.mxu0 0.0
    %610 = vmatpush1.msra.mxu0 %v366
    %611 = vmatprep.subr.mxu0 0.0
    %612 = vmatpush1.msra.mxu0 %v367
    %613 = vmatprep.subr.mxu0 0.0
    %614 = vmatpush1.msra.mxu0 %v368
    %615 = vmatprep.subr.mxu0 0.0
    %616 = vmatpush1.msra.mxu0 %v369
    %617 = vmatprep.subr.mxu0 0.0
    %618 = vmatpush1.msra.mxu0 %v370
    %619 = vmatprep.subr.mxu0 0.0
    %620 = vmatpush1.msra.mxu0 %v371
    %621 = vmatprep.subr.mxu0 0.0
    %622 = vmatpush1.msra.mxu0 %v372
    %623 = vmatprep.subr.mxu0 0.0
    %624 = vmatpush1.msra.mxu0 %v373
    %625 = vmatprep.subr.mxu0 0.0
    %626 = vmatpush1.msra.mxu0 %v374
    %627 = vmatprep.subr.mxu0 0.0
    %628 = vmatpush1.msra.mxu0 %v375
    %629 = vmatprep.subr.mxu0 0.0
    %630 = vmatpush1.msra.mxu0 %v376
    %631 = vmatprep.subr.mxu0 0.0
    %632 = vmatpush1.msra.mxu0 %v377
    %633 = vmatprep.subr.mxu0 0.0
    %634 = vmatpush1.msra.mxu0 %v378
    %635 = vmatprep.subr.mxu0 0.0
    %636 = vmatpush1.msra.mxu0 %v379
    %637 = vmatprep.subr.mxu0 0.0
    %638 = vmatpush1.msra.mxu0 %v380
    %639 = vmatprep.subr.mxu0 0.0
    %640 = vmatpush1.msra.mxu0 %v381
    %641 = vmatprep.subr.mxu0 0.0
    %642 = vmatpush1.msra.mxu0 %v382
    %643 = vmatprep.subr.mxu0 0.0
    %644 = vmatpush1.msra.mxu0 %v383
    %645 = vmatprep.subr.mxu0 0.0
    %646 = vmatpush1.msra.mxu0 %v384
    %647 = vmatprep.subr.mxu0 0.0
    %648 = vmatpush1.msra.mxu0 %v385
    %649 = vmatprep.subr.mxu0 0.0
    %650 = vmatpush1.msra.mxu0 %v386
    %651 = vmatprep.subr.mxu0 0.0
    %652 = vmatpush1.msra.mxu0 %v387
    %653 = vmatprep.subr.mxu0 0.0
    %654 = vmatpush1.msra.mxu0 %v388
    %655 = vmatprep.subr.mxu0 0.0
    %656 = vmatpush1.msra.mxu0 %v389
    %657 = vmatprep.subr.mxu0 0.0
    %658 = vmatpush1.msra.mxu0 %v390
    %659 = vmatprep.subr.mxu0 0.0
    %660 = vmatpush1.msra.mxu0 %v391
    %661 = vmatprep.subr.mxu0 0.0
    %662 = vmatpush1.msra.mxu0 %v392
    %663 = vmatprep.subr.mxu0 0.0
    %664 = vmatpush1.msra.mxu0 %v393
    %665 = vmatprep.subr.mxu0 0.0
    %666 = vmatpush1.msra.mxu0 %v394
    %667 = vmatprep.subr.mxu0 0.0
    %668 = vmatpush1.msra.mxu0 %v395
    %669 = vmatprep.subr.mxu0 0.0
    %670 = vmatpush1.msra.mxu0 %v396
    %671 = vmatprep.subr.mxu0 0.0
    %672 = vmatpush1.msra.mxu0 %v397
    %673 = vmatprep.mubr.f32.mxu0 %v333
    %674 = vmatmul.mubr.f32.gmra.mrb[0].mxu0 %v326
    %v675 = vpop.f32.mrb[0].mxu0
    %v676 = vadd.f32 %v606, %v675
    %v677 = vpop.f32.mrb[0].mxu0
    %678 = vdwg.mxu0
    %v679 = vmul.f32 %v676, 0.03125
    %v680 = vmul.f32 %v538, %v538
    %v681 = vsub.f32 %v679, %v680
    %v682 = vadd.f32 %v681, 1e-05
    %v683 = vrsqrt.pop %v682
    %v684 = vld [vmem:[%s5] sm:$0xff]
    %v685 = vld [vmem:[%s5 + $0x8] sm:$0xff]
    %v686 = vld [vmem:[%s5 + $0x10] sm:$0xff]
    %v687 = vld [vmem:[%s5 + $0x18] sm:$0xff]
    %v688 = vld [vmem:[%s5 + $0x20] sm:$0xff]
    %v689 = vld [vmem:[%s5 + $0x28] sm:$0xff]
    %v690 = vld [vmem:[%s5 + $0x30] sm:$0xff]
    %v691 = vld [vmem:[%s5 + $0x38] sm:$0xff]
    %v692 = vld [vmem:[%s5 + $0x40] sm:$0xff]
    %v693 = vld [vmem:[%s5 + $0x48] sm:$0xff]
    %v694 = vld [vmem:[%s5 + $0x50] sm:$0xff]
    %v695 = vld [vmem:[%s5 + $0x58] sm:$0xff]
    %v696 = vld [vmem:[%s5 + $0x60] sm:$0xff]
    %v697 = vld [vmem:[%s5 + $0x68] sm:$0xff]
    %v698 = vld [vmem:[%s5 + $0x70] sm:$0xff]
    %v699 = vld [vmem:[%s5 + $0x78] sm:$0xff]
    %vm700 = vcmask 261120
    %v702 = vsel %vm700, %v538, 0
    %704 = vmatprep.subr.mxu0 %v685
    %705 = vmatpush1.msra.mxu0 %v684
    %706 = vmatprep.subr.mxu0 %v689
    %707 = vmatpush1.msra.mxu0 %v688
    %708 = vmatprep.subr.mxu0 %v693
    %709 = vmatpush1.msra.mxu0 %v692
    %710 = vmatprep.subr.mxu0 %v697
    %711 = vmatpush1.msra.mxu0 %v696
    %712 = vmatprep.subr.mxu0 0.0
    %713 = vmatpush1.msra.mxu0 0.0
    %714 = vmatprep.subr.mxu0 0.0
    %715 = vmatpush1.msra.mxu0 0.0
    %716 = vmatprep.subr.mxu0 0.0
    %717 = vmatpush1.msra.mxu0 0.0
    %718 = vmatprep.subr.mxu0 0.0
    %719 = vmatpush1.msra.mxu0 0.0
    %720 = vmatprep.subr.mxu0 0.0
    %721 = vmatpush1.msra.mxu0 0.0
    %722 = vmatprep.subr.mxu0 0.0
    %723 = vmatpush1.msra.mxu0 0.0
    %724 = vmatprep.subr.mxu0 0.0
    %725 = vmatpush1.msra.mxu0 0.0
    %726 = vmatprep.subr.mxu0 0.0
    %727 = vmatpush1.msra.mxu0 0.0
    %728 = vmatprep.subr.mxu0 0.0
    %729 = vmatpush1.msra.mxu0 0.0
    %730 = vmatprep.subr.mxu0 0.0
    %731 = vmatpush1.msra.mxu0 0.0
    %732 = vmatprep.subr.mxu0 0.0
    %733 = vmatpush1.msra.mxu0 0.0
    %734 = vmatprep.subr.mxu0 0.0
    %735 = vmatpush1.msra.mxu0 0.0
    %736 = vmatprep.subr.mxu0 0.0
    %737 = vmatpush1.msra.mxu0 0.0
    %738 = vmatprep.subr.mxu0 0.0
    %739 = vmatpush1.msra.mxu0 0.0
    %740 = vmatprep.subr.mxu0 0.0
    %741 = vmatpush1.msra.mxu0 0.0
    %742 = vmatprep.subr.mxu0 0.0
    %743 = vmatpush1.msra.mxu0 0.0
    %744 = vmatprep.subr.mxu0 0.0
    %745 = vmatpush1.msra.mxu0 0.0
    %746 = vmatprep.subr.mxu0 0.0
    %747 = vmatpush1.msra.mxu0 0.0
    %748 = vmatprep.subr.mxu0 0.0
    %749 = vmatpush1.msra.mxu0 0.0
    %750 = vmatprep.subr.mxu0 0.0
    %751 = vmatpush1.msra.mxu0 0.0
    %752 = vmatprep.subr.mxu0 0.0
    %753 = vmatpush1.msra.mxu0 0.0
    %754 = vmatprep.subr.mxu0 0.0
    %755 = vmatpush1.msra.mxu0 0.0
    %756 = vmatprep.subr.mxu0 0.0
    %757 = vmatpush1.msra.mxu0 0.0
    %758 = vmatprep.subr.mxu0 0.0
    %759 = vmatpush1.msra.mxu0 0.0
    %760 = vmatprep.subr.mxu0 0.0
    %761 = vmatpush1.msra.mxu0 0.0
    %762 = vmatprep.subr.mxu0 0.0
    %763 = vmatpush1.msra.mxu0 0.0
    %764 = vmatprep.subr.mxu0 0.0
    %765 = vmatpush1.msra.mxu0 0.0
    %766 = vmatprep.subr.mxu0 0.0
    %767 = vmatpush1.msra.mxu0 0.0
    %768 = vmatprep.mubr.f32.mxu0 0.0
    %769 = vmatmul.mubr.f32.gmra.mrb[0].mxu0 %v702
    %v770 = vpop.f32.mrb[0].mxu0
    %v771 = vadd.f32 0.0, %v770
    %v772 = vpop.f32.mrb[0].mxu0
    %v773 = vadd.f32 0.0, %v772
    %774 = vdwg.mxu0
    %775 = vmatprep.subr.mxu0 %v687
    %776 = vmatpush1.msra.mxu0 %v686
    %777 = vmatprep.subr.mxu0 %v691
    %778 = vmatpush1.msra.mxu0 %v690
    %779 = vmatprep.subr.mxu0 %v695
    %780 = vmatpush1.msra.mxu0 %v694
    %781 = vmatprep.subr.mxu0 %v699
    %782 = vmatpush1.msra.mxu0 %v698
    %783 = vmatprep.subr.mxu0 0.0
    %784 = vmatpush1.msra.mxu0 0.0
    %785 = vmatprep.subr.mxu0 0.0
    %786 = vmatpush1.msra.mxu0 0.0
    %787 = vmatprep.subr.mxu0 0.0
    %788 = vmatpush1.msra.mxu0 0.0
    %789 = vmatprep.subr.mxu0 0.0
    %790 = vmatpush1.msra.mxu0 0.0
    %791 = vmatprep.subr.mxu0 0.0
    %792 = vmatpush1.msra.mxu0 0.0
    %793 = vmatprep.subr.mxu0 0.0
    %794 = vmatpush1.msra.mxu0 0.0
    %795 = vmatprep.subr.mxu0 0.0
    %796 = vmatpush1.msra.mxu0 0.0
    %797 = vmatprep.subr.mxu0 0.0
    %798 = vmatpush1.msra.mxu0 0.0
    %799 = vmatprep.subr.mxu0 0.0
    %800 = vmatpush1.msra.mxu0 0.0
    %801 = vmatprep.subr.mxu0 0.0
    %802 = vmatpush1.msra.mxu0 0.0
    %803 = vmatprep.subr.mxu0 0.0
    %804 = vmatpush1.msra.mxu0 0.0
    %805 = vmatprep.subr.mxu0 0.0
    %806 = vmatpush1.msra.mxu0 0.0
    %807 = vmatprep.subr.mxu0 0.0
    %808 = vmatpush1.msra.mxu0 0.0
    %809 = vmatprep.subr.mxu0 0.0
    %810 = vmatpush1.msra.mxu0 0.0
    %811 = vmatprep.subr.mxu0 0.0
    %812 = vmatpush1.msra.mxu0 0.0
    %813 = vmatprep.subr.mxu0 0.0
    %814 = vmatpush1.msra.mxu0 0.0
    %815 = vmatprep.subr.mxu0 0.0
    %816 = vmatpush1.msra.mxu0 0.0
    %817 = vmatprep.subr.mxu0 0.0
    %818 = vmatpush1.msra.mxu0 0.0
    %819 = vmatprep.subr.mxu0 0.0
    %820 = vmatpush1.msra.mxu0 0.0
    %821 = vmatprep.subr.mxu0 0.0
    %822 = vmatpush1.msra.mxu0 0.0
    %823 = vmatprep.subr.mxu0 0.0
    %824 = vmatpush1.msra.mxu0 0.0
    %825 = vmatprep.subr.mxu0 0.0
    %826 = vmatpush1.msra.mxu0 0.0
    %827 = vmatprep.subr.mxu0 0.0
    %828 = vmatpush1.msra.mxu0 0.0
    %829 = vmatprep.subr.mxu0 0.0
    %830 = vmatpush1.msra.mxu0 0.0
    %831 = vmatprep.subr.mxu0 0.0
    %832 = vmatpush1.msra.mxu0 0.0
    %833 = vmatprep.subr.mxu0 0.0
    %834 = vmatpush1.msra.mxu0 0.0
    %835 = vmatprep.subr.mxu0 0.0
    %836 = vmatpush1.msra.mxu0 0.0
    %837 = vmatprep.subr.mxu0 0.0
    %838 = vmatpush1.msra.mxu0 0.0
    %839 = vmatprep.mubr.f32.mxu0 0.0
    %840 = vmatmul.mubr.f32.gmra.mrb[0].mxu0 %v702
    %v841 = vpop.f32.mrb[0].mxu0
    %v842 = vadd.f32 0.0, %v841
    %v843 = vpop.f32.mrb[0].mxu0
    %v844 = vadd.f32 0.0, %v843
    %845 = vdwg.mxu0
    %v847 = vsel %vm700, %v683, 0
    %849 = vmatprep.subr.mxu0 %v685
    %850 = vmatpush1.msra.mxu0 %v684
    %851 = vmatprep.subr.mxu0 %v689
    %852 = vmatpush1.msra.mxu0 %v688
    %853 = vmatprep.subr.mxu0 %v693
    %854 = vmatpush1.msra.mxu0 %v692
    %855 = vmatprep.subr.mxu0 %v697
    %856 = vmatpush1.msra.mxu0 %v696
    %857 = vmatprep.subr.mxu0 0.0
    %858 = vmatpush1.msra.mxu0 0.0
    %859 = vmatprep.subr.mxu0 0.0
    %860 = vmatpush1.msra.mxu0 0.0
    %861 = vmatprep.subr.mxu0 0.0
    %862 = vmatpush1.msra.mxu0 0.0
    %863 = vmatprep.subr.mxu0 0.0
    %864 = vmatpush1.msra.mxu0 0.0
    %865 = vmatprep.subr.mxu0 0.0
    %866 = vmatpush1.msra.mxu0 0.0
    %867 = vmatprep.subr.mxu0 0.0
    %868 = vmatpush1.msra.mxu0 0.0
    %869 = vmatprep.subr.mxu0 0.0
    %870 = vmatpush1.msra.mxu0 0.0
    %871 = vmatprep.subr.mxu0 0.0
    %872 = vmatpush1.msra.mxu0 0.0
    %873 = vmatprep.subr.mxu0 0.0
    %874 = vmatpush1.msra.mxu0 0.0
    %875 = vmatprep.subr.mxu0 0.0
    %876 = vmatpush1.msra.mxu0 0.0
    %877 = vmatprep.subr.mxu0 0.0
    %878 = vmatpush1.msra.mxu0 0.0
    %879 = vmatprep.subr.mxu0 0.0
    %880 = vmatpush1.msra.mxu0 0.0
    %881 = vmatprep.subr.mxu0 0.0
    %882 = vmatpush1.msra.mxu0 0.0
    %883 = vmatprep.subr.mxu0 0.0
    %884 = vmatpush1.msra.mxu0 0.0
    %885 = vmatprep.subr.mxu0 0.0
    %886 = vmatpush1.msra.mxu0 0.0
    %887 = vmatprep.subr.mxu0 0.0
    %888 = vmatpush1.msra.mxu0 0.0
    %889 = vmatprep.subr.mxu0 0.0
    %890 = vmatpush1.msra.mxu0 0.0
    %891 = vmatprep.subr.mxu0 0.0
    %892 = vmatpush1.msra.mxu0 0.0
    %893 = vmatprep.subr.mxu0 0.0
    %894 = vmatpush1.msra.mxu0 0.0
    %895 = vmatprep.subr.mxu0 0.0
    %896 = vmatpush1.msra.mxu0 0.0
    %897 = vmatprep.subr.mxu0 0.0
    %898 = vmatpush1.msra.mxu0 0.0
    %899 = vmatprep.subr.mxu0 0.0
    %900 = vmatpush1.msra.mxu0 0.0
    %901 = vmatprep.subr.mxu0 0.0
    %902 = vmatpush1.msra.mxu0 0.0
    %903 = vmatprep.subr.mxu0 0.0
    %904 = vmatpush1.msra.mxu0 0.0
    %905 = vmatprep.subr.mxu0 0.0
    %906 = vmatpush1.msra.mxu0 0.0
    %907 = vmatprep.subr.mxu0 0.0
    %908 = vmatpush1.msra.mxu0 0.0
    %909 = vmatprep.subr.mxu0 0.0
    %910 = vmatpush1.msra.mxu0 0.0
    %911 = vmatprep.subr.mxu0 0.0
    %912 = vmatpush1.msra.mxu0 0.0
    %913 = vmatprep.mubr.f32.mxu0 0.0
    %914 = vmatmul.mubr.f32.gmra.mrb[0].mxu0 %v847
    %v915 = vpop.f32.mrb[0].mxu0
    %v916 = vadd.f32 0.0, %v915
    %v917 = vpop.f32.mrb[0].mxu0
    %v918 = vadd.f32 0.0, %v917
    %919 = vdwg.mxu0
    %920 = vmatprep.subr.mxu0 %v687
    %921 = vmatpush1.msra.mxu0 %v686
    %922 = vmatprep.subr.mxu0 %v691
    %923 = vmatpush1.msra.mxu0 %v690
    %924 = vmatprep.subr.mxu0 %v695
    %925 = vmatpush1.msra.mxu0 %v694
    %926 = vmatprep.subr.mxu0 %v699
    %927 = vmatpush1.msra.mxu0 %v698
    %928 = vmatprep.subr.mxu0 0.0
    %929 = vmatpush1.msra.mxu0 0.0
    %930 = vmatprep.subr.mxu0 0.0
    %931 = vmatpush1.msra.mxu0 0.0
    %932 = vmatprep.subr.mxu0 0.0
    %933 = vmatpush1.msra.mxu0 0.0
    %934 = vmatprep.subr.mxu0 0.0
    %935 = vmatpush1.msra.mxu0 0.0
    %936 = vmatprep.subr.mxu0 0.0
    %937 = vmatpush1.msra.mxu0 0.0
    %938 = vmatprep.subr.mxu0 0.0
    %939 = vmatpush1.msra.mxu0 0.0
    %940 = vmatprep.subr.mxu0 0.0
    %941 = vmatpush1.msra.mxu0 0.0
    %942 = vmatprep.subr.mxu0 0.0
    %943 = vmatpush1.msra.mxu0 0.0
    %944 = vmatprep.subr.mxu0 0.0
    %945 = vmatpush1.msra.mxu0 0.0
    %946 = vmatprep.subr.mxu0 0.0
    %947 = vmatpush1.msra.mxu0 0.0
    %948 = vmatprep.subr.mxu0 0.0
    %949 = vmatpush1.msra.mxu0 0.0
    %950 = vmatprep.subr.mxu0 0.0
    %951 = vmatpush1.msra.mxu0 0.0
    %952 = vmatprep.subr.mxu0 0.0
    %953 = vmatpush1.msra.mxu0 0.0
    %954 = vmatprep.subr.mxu0 0.0
    %955 = vmatpush1.msra.mxu0 0.0
    %956 = vmatprep.subr.mxu0 0.0
    %957 = vmatpush1.msra.mxu0 0.0
    %958 = vmatprep.subr.mxu0 0.0
    %959 = vmatpush1.msra.mxu0 0.0
    %960 = vmatprep.subr.mxu0 0.0
    %961 = vmatpush1.msra.mxu0 0.0
    %962 = vmatprep.subr.mxu0 0.0
    %963 = vmatpush1.msra.mxu0 0.0
    %964 = vmatprep.subr.mxu0 0.0
    %965 = vmatpush1.msra.mxu0 0.0
    %966 = vmatprep.subr.mxu0 0.0
    %967 = vmatpush1.msra.mxu0 0.0
    %968 = vmatprep.subr.mxu0 0.0
    %969 = vmatpush1.msra.mxu0 0.0
    %970 = vmatprep.subr.mxu0 0.0
    %971 = vmatpush1.msra.mxu0 0.0
    %972 = vmatprep.subr.mxu0 0.0
    %973 = vmatpush1.msra.mxu0 0.0
    %974 = vmatprep.subr.mxu0 0.0
    %975 = vmatpush1.msra.mxu0 0.0
    %976 = vmatprep.subr.mxu0 0.0
    %977 = vmatpush1.msra.mxu0 0.0
    %978 = vmatprep.subr.mxu0 0.0
    %979 = vmatpush1.msra.mxu0 0.0
    %980 = vmatprep.subr.mxu0 0.0
    %981 = vmatpush1.msra.mxu0 0.0
    %982 = vmatprep.subr.mxu0 0.0
    %983 = vmatpush1.msra.mxu0 0.0
    %984 = vmatprep.mubr.f32.mxu0 0.0
    %985 = vmatmul.mubr.f32.gmra.mrb[0].mxu0 %v847
    %v986 = vpop.f32.mrb[0].mxu0
    %v987 = vadd.f32 0.0, %v986
    %v988 = vpop.f32.mrb[0].mxu0
    %v989 = vadd.f32 0.0, %v988
    %990 = vdwg.mxu0
    %v991 = vlaneseq
    %v992 = vshrl.u32 %v991, 7
    %v993 = vsub.s32 0, %v992
    %v994 = vrot.slane %v771, %v993
    %v995 = vlaneseq
    %v996 = vshrl.u32 %v995, 7
    %v997 = vsub.s32 0, %v996
    %v998 = vrot.slane %v773, %v997
    %v999 = vlaneseq
    %v1000 = vshrl.u32 %v999, 7
    %v1001 = vsub.s32 0, %v1000
    %v1002 = vrot.slane %v842, %v1001
    %v1003 = vlaneseq
    %v1004 = vshrl.u32 %v1003, 7
    %v1005 = vsub.s32 0, %v1004
    %v1006 = vrot.slane %v844, %v1005
    %v1007 = vsub.f32 %v198, %v994
    %v1008 = vsub.f32 %v200, %v998
    %v1009 = vsub.f32 %v269, %v1002
    %v1010 = vsub.f32 %v271, %v1006
    %v1011 = vlaneseq
    %v1012 = vshrl.u32 %v1011, 7
    %v1013 = vsub.s32 0, %v1012
    %v1014 = vrot.slane %v916, %v1013
    %v1015 = vlaneseq
    %v1016 = vshrl.u32 %v1015, 7
    %v1017 = vsub.s32 0, %v1016
    %v1018 = vrot.slane %v918, %v1017
    %v1019 = vlaneseq
    %v1020 = vshrl.u32 %v1019, 7
    %v1021 = vsub.s32 0, %v1020
    %v1022 = vrot.slane %v987, %v1021
    %v1023 = vlaneseq
    %v1024 = vshrl.u32 %v1023, 7
    %v1025 = vsub.s32 0, %v1024
    %v1026 = vrot.slane %v989, %v1025
    %v1027 = vmul.f32 %v1007, %v1014
    %v1028 = vmul.f32 %v1008, %v1018
    %v1029 = vmul.f32 %v1009, %v1022
    %v1030 = vmul.f32 %v1010, %v1026
    %v1031 = vld [vmem:[%s2] sm:$0xf]
    %v1033 = vlaneseq
    %v1034 = vshrl.u32 %v1033, 7
    %v1035 = vsub.s32 0, %v1034
    %v1036 = vrot.slane %v1031, %v1035
    %v1037 = vlaneseq
    %v1038 = vshrl.u32 %v1037, 7
    %v1039 = vsub.s32 1, %v1038
    %v1040 = vrot.slane %v1031, %v1039
    %v1041 = vlaneseq
    %v1042 = vshrl.u32 %v1041, 7
    %v1043 = vsub.s32 2, %v1042
    %v1044 = vrot.slane %v1031, %v1043
    %v1045 = vlaneseq
    %v1046 = vshrl.u32 %v1045, 7
    %v1047 = vsub.s32 3, %v1046
    %v1048 = vrot.slane %v1031, %v1047
    %v1053 = vmul.f32 %v1027, %v1036
    %v1054 = vmul.f32 %v1028, %v1040
    %v1055 = vmul.f32 %v1029, %v1044
    %v1056 = vmul.f32 %v1030, %v1048
    %v1057 = vld [vmem:[%s3] sm:$0xf]
    %v1059 = vlaneseq
    %v1060 = vshrl.u32 %v1059, 7
    %v1061 = vsub.s32 0, %v1060
    %v1062 = vrot.slane %v1057, %v1061
    %v1063 = vlaneseq
    %v1064 = vshrl.u32 %v1063, 7
    %v1065 = vsub.s32 1, %v1064
    %v1066 = vrot.slane %v1057, %v1065
    %v1067 = vlaneseq
    %v1068 = vshrl.u32 %v1067, 7
    %v1069 = vsub.s32 2, %v1068
    %v1070 = vrot.slane %v1057, %v1069
    %v1071 = vlaneseq
    %v1072 = vshrl.u32 %v1071, 7
    %v1073 = vsub.s32 3, %v1072
    %v1074 = vrot.slane %v1057, %v1073
    %v1079 = vadd.f32 %v1053, %v1062
    %v1080 = vadd.f32 %v1054, %v1066
    %v1081 = vadd.f32 %v1055, %v1070
    %v1082 = vadd.f32 %v1056, %v1074
    %v1083 = vmax.f32 %v1079, 0.0
    %v1084 = vmax.f32 %v1080, 0.0
    %v1085 = vmax.f32 %v1081, 0.0
    %v1086 = vmax.f32 %v1082, 0.0
    %v1087 = vpack.c.bf16 %v1083, %v1083
    %v1088 = vpack.c.bf16 %v1084, %v1084
    %v1089 = vpack.c.bf16 %v1085, %v1085
    %v1090 = vpack.c.bf16 %v1086, %v1086
    %v1095 = vcombine.low %v1087, %v1088
    %v1096 = vcombine.low %v1089, %v1090
    %v1098 = vunpack.c.l.s4 1966171168
    %v1099 = vunpack.c.0.s8 %v1098
    %v1100 = vlaneseq
    %v1101 = vshrl.u32 %v1100, 7
    %v1102 = vsub.s32 %v1099, %v1101
    %v1103 = vrot.slane %v1095, %v1102
    %v1105 = vunpack.c.l.s4 1966171168
    %v1106 = vunpack.c.0.s8 %v1105
    %v1107 = vlaneseq
    %v1108 = vshrl.u32 %v1107, 7
    %v1109 = vsub.s32 %v1106, %v1108
    %v1110 = vrot.slane %v1096, %v1109
    %v1111 = vcombine.low %v1103, %v1110
    %v1113 = vunpack.c.l.s4 1966171168
    %v1114 = vunpack.c.0.s8 %v1113
    %v1115 = vlaneseq
    %v1116 = vshrl.u32 %v1115, 7
    %v1117 = vsub.s32 %v1114, %v1116
    %v1118 = vrot.slane %v1111, %v1117
    %1120 = vst [vmem:[%s6] sm:$0xf] %v1118
    // Predicated region
    $region30: #{generator_forward.5} parent=1 // pred_check
      _
    $region31: #{generator_forward.5} parent=1 // pred_check_branch
      %1122 = sbr.rel (0) target = $region33
    $region32: #{generator_forward.5} parent=1 // pred_region
      _
    $region33: #{generator_forward.5} parent=1 // pred_fallthru
      _
    // Predicated region
    $region34: #{generator_forward.5} parent=1 // pred_check
      _
    $region35: #{generator_forward.5} parent=1 // pred_check_branch
      %1124 = sbr.rel (0) target = $region37
    $region36: #{generator_forward.5} parent=1 // pred_region
      _
    $region37: #{generator_forward.5} parent=1 // pred_fallthru
      _
    %1125 = vsyncpa [#allocation3], 1

// kernel: generator_forward.6
$region0: #{generator_forward.6}
  #allocation0 [shape = 'u32[]', space=smem, size = 0x4, offset = 0x4, fixed_abs, tag = 'smem constant byte address 0x4 - core index']
  #allocation1 [shape = 'u32[144,128]{1,0:T(1,128)}', space=vmem, size = 0x12000, scoped, tag = 'internal scratch']
  %s0 = inlined_call_operand.vmem [shape: bf16[4,128,32], index: 0, kind: input, shape index: {}]
  %s1 = inlined_call_operand.vmem [shape: bf16[4,16,128], index: 1, kind: input, shape index: {}]
  %s2 = inlined_call_operand.vmem [shape: f32[16,1], index: 2, kind: input, shape index: {}]
  %s3 = inlined_call_operand.vmem [shape: f32[16,1], index: 3, kind: input, shape index: {}]
  %s4 = inlined_call_operand.vmem [shape: bf16[4,16,32], index: 4, kind: output, shape index: {}]
  %s5 = sld [smem:[#allocation0]]
  $region26: #{generator_forward.6} parent=0
    _
  %s7 = ssub.s32 1, %s5
  %s8 = scalar_select 0, %s7, %s5
  // Predicated region
  $region2: #{generator_forward.6} parent=0 // pred_check
    _
  $region3: #{generator_forward.6} parent=0 // pred_check_branch
    %10 = sbr.rel (0) target = $region5
  $region4: #{generator_forward.6} parent=0 // pred_region
    _
  $region5: #{generator_forward.6} parent=0 // pred_fallthru
    _
  // Predicated region
  $region6: #{generator_forward.6} parent=0 // pred_check
    _
  $region7: #{generator_forward.6} parent=0 // pred_check_branch
    %12 = sbr.rel (0) target = $region9
  $region8: #{generator_forward.6} parent=0 // pred_region
    _
  $region9: #{generator_forward.6} parent=0 // pred_fallthru
    _
  // Predicated region
  $region10: #{generator_forward.6} parent=0 // pred_check
    _
  $region11: #{generator_forward.6} parent=0 // pred_check_branch
    %14 = sbr.rel (0) target = $region13
  $region12: #{generator_forward.6} parent=0 // pred_region
    _
  $region13: #{generator_forward.6} parent=0 // pred_fallthru
    _
  // Predicated region
  $region14: #{generator_forward.6} parent=0 // pred_check
    _
  $region15: #{generator_forward.6} parent=0 // pred_check_branch
    %16 = sbr.rel (0) target = $region17
  $region16: #{generator_forward.6} parent=0 // pred_region
    _
  $region17: #{generator_forward.6} parent=0 // pred_fallthru
    _
  %v17 = vld [vmem:[%s1] sm:$0xf]
  %v18 = vld [vmem:[%s1 + $0x4] sm:$0xf]
  %v19 = vunpack.c.l.bf16 %v17
  %v20 = vunpack.c.l.bf16 %v18
  %v21 = vld [vmem:[%s0] sm:$0xf]
  %v22 = vld [vmem:[%s0 + $0x4] sm:$0xf]
  %v23 = vld [vmem:[%s0 + $0x8] sm:$0xf]
  %v24 = vld [vmem:[%s0 + $0xc] sm:$0xf]
  %v25 = vld [vmem:[%s0 + $0x10] sm:$0xf]
  %v26 = vld [vmem:[%s0 + $0x14] sm:$0xf]
  %v27 = vld [vmem:[%s0 + $0x18] sm:$0xf]
  %v28 = vld [vmem:[%s0 + $0x1c] sm:$0xf]
  %v29 = vld [vmem:[%s0 + $0x20] sm:$0xf]
  %v30 = vld [vmem:[%s0 + $0x24] sm:$0xf]
  %v31 = vld [vmem:[%s0 + $0x28] sm:$0xf]
  %v32 = vld [vmem:[%s0 + $0x2c] sm:$0xf]
  %v33 = vld [vmem:[%s0 + $0x30] sm:$0xf]
  %v34 = vld [vmem:[%s0 + $0x34] sm:$0xf]
  %v35 = vld [vmem:[%s0 + $0x38] sm:$0xf]
  %v36 = vld [vmem:[%s0 + $0x3c] sm:$0xf]
  %v37 = vunpack.c.l.bf16 %v21
  %v38 = vunpack.c.l.bf16 %v22
  %v39 = vunpack.c.l.bf16 %v23
  %v40 = vunpack.c.l.bf16 %v24
  %v41 = vunpack.c.l.bf16 %v25
  %v42 = vunpack.c.l.bf16 %v26
  %v43 = vunpack.c.l.bf16 %v27
  %v44 = vunpack.c.l.bf16 %v28
  %v45 = vunpack.c.l.bf16 %v29
  %v46 = vunpack.c.l.bf16 %v30
  %v47 = vunpack.c.l.bf16 %v31
  %v48 = vunpack.c.l.bf16 %v32
  %v49 = vunpack.c.l.bf16 %v33
  %v50 = vunpack.c.l.bf16 %v34
  %v51 = vunpack.c.l.bf16 %v35
  %v52 = vunpack.c.l.bf16 %v36
  %53 = vmatprep.subr.mxu0 0.0
  %54 = vmatpush1.msra.mxu0 %v37
  %55 = vmatprep.subr.mxu0 0.0
  %56 = vmatpush1.msra.mxu0 %v38
  %57 = vmatprep.subr.mxu0 0.0
  %58 = vmatpush1.msra.mxu0 %v39
  %59 = vmatprep.subr.mxu0 0.0
  %60 = vmatpush1.msra.mxu0 %v40
  %61 = vmatprep.subr.mxu0 0.0
  %62 = vmatpush1.msra.mxu0 %v41
  %63 = vmatprep.subr.mxu0 0.0
  %64 = vmatpush1.msra.mxu0 %v42
  %65 = vmatprep.subr.mxu0 0.0
  %66 = vmatpush1.msra.mxu0 %v43
  %67 = vmatprep.subr.mxu0 0.0
  %68 = vmatpush1.msra.mxu0 %v44
  %69 = vmatprep.subr.mxu0 0.0
  %70 = vmatpush1.msra.mxu0 %v45
  %71 = vmatprep.subr.mxu0 0.0
  %72 = vmatpush1.msra.mxu0 %v46
  %73 = vmatprep.subr.mxu0 0.0
  %74 = vmatpush1.msra.mxu0 %v47
  %75 = vmatprep.subr.mxu0 0.0
  %76 = vmatpush1.msra.mxu0 %v48
  %77 = vmatprep.subr.mxu0 0.0
  %78 = vmatpush1.msra.mxu0 %v49
  %79 = vmatprep.subr.mxu0 0.0
  %80 = vmatpush1.msra.mxu0 %v50
  %81 = vmatprep.subr.mxu0 0.0
  %82 = vmatpush1.msra.mxu0 %v51
  %83 = vmatprep.subr.mxu0 0.0
  %84 = vmatpush1.msra.mxu0 %v52
  %85 = vmatprep.subr.mxu0 0.0
  %86 = vmatpush1.msra.mxu0 0.0
  %87 = vmatprep.subr.mxu0 0.0
  %88 = vmatpush1.msra.mxu0 0.0
  %89 = vmatprep.subr.mxu0 0.0
  %90 = vmatpush1.msra.mxu0 0.0
  %91 = vmatprep.subr.mxu0 0.0
  %92 = vmatpush1.msra.mxu0 0.0
  %93 = vmatprep.subr.mxu0 0.0
  %94 = vmatpush1.msra.mxu0 0.0
  %95 = vmatprep.subr.mxu0 0.0
  %96 = vmatpush1.msra.mxu0 0.0
  %97 = vmatprep.subr.mxu0 0.0
  %98 = vmatpush1.msra.mxu0 0.0
  %99 = vmatprep.subr.mxu0 0.0
  %100 = vmatpush1.msra.mxu0 0.0
  %101 = vmatprep.subr.mxu0 0.0
  %102 = vmatpush1.msra.mxu0 0.0
  %103 = vmatprep.subr.mxu0 0.0
  %104 = vmatpush1.msra.mxu0 0.0
  %105 = vmatprep.subr.mxu0 0.0
  %106 = vmatpush1.msra.mxu0 0.0
  %107 = vmatprep.subr.mxu0 0.0
  %108 = vmatpush1.msra.mxu0 0.0
  %109 = vmatprep.subr.mxu0 0.0
  %110 = vmatpush1.msra.mxu0 0.0
  %111 = vmatprep.subr.mxu0 0.0
  %112 = vmatpush1.msra.mxu0 0.0
  %113 = vmatprep.subr.mxu0 0.0
  %114 = vmatpush1.msra.mxu0 0.0
  %115 = vmatprep.subr.mxu0 0.0
  %116 = vmatpush1.msra.mxu0 0.0
  %117 = vmatprep.mubr.f32.mxu0 0.0
  %118 = vmatmul.mubr.f32.gmra.mrb[0].mxu0 %v19
  %v119 = vpop.f32.mrb[0].mxu0
  %v120 = vadd.f32 0.0, %v119
  %v121 = vpop.f32.mrb[0].mxu0
  %122 = vmatprep.mubr.f32.mxu0 0.0
  %123 = vmatmul.mubr.f32.gmra.mrb[0].mxu0 %v20
  %v124 = vpop.f32.mrb[0].mxu0
  %v125 = vadd.f32 0.0, %v124
  %v126 = vpop.f32.mrb[0].mxu0
  %127 = vdwg.mxu0
  %v128 = vpack.c.bf16 %v125, %v120
  %v130 = vunpack.c.l.b16 %v128
  %v131 = vunpack.c.h.b16 %v128
  %v132 = vpack.c.b16 %v130, %v130
  %v133 = vpack.c.b16 %v131, %v131
  %vm136 = vcmask 257024
  %137 = vst.msk [vmem:[%s4] sm:$0xf] %vm136, %v132
  %138 = vst.msk [vmem:[%s4 + $0x4] sm:$0xf] %vm136, %v133
  %vm139 = vcmask 261120
  %v140 = vsel %vm139, %v120, 0.0
  %141 = vadd.xlane.f32.xlu0 %v140
  %v142 = vpop.xlane.xlu0 %141
  %v143 = vsel %vm139, %v125, 0.0
  %144 = vadd.xlane.f32.xlu0 %v143
  %v145 = vpop.xlane.xlu0 %144
  %v146 = vadd.f32 %v142, 0.0
  %v147 = vadd.f32 %v145, 0.0
  %v148 = vmul.f32 %v120, %v120
  %v149 = vmul.f32 %v125, %v125
  %v150 = vsel %vm139, %v148, 0.0
  %151 = vadd.xlane.f32.xlu0 %v150
  %v152 = vpop.xlane.xlu0 %151
  %v153 = vsel %vm139, %v149, 0.0
  %154 = vadd.xlane.f32.xlu0 %v153
  %v155 = vpop.xlane.xlu0 %154
  %v156 = vadd.f32 %v152, 0.0
  %v157 = vadd.f32 %v155, 0.0
  %s158 = scalar_lea.vmem %s1, 8
  %v159 = vld [vmem:[%s158] sm:$0xf]
  %v160 = vld [vmem:[%s158 + $0x4] sm:$0xf]
  %v161 = vunpack.c.l.bf16 %v159
  %v162 = vunpack.c.l.bf16 %v160
  %s163 = scalar_lea.vmem %s0, 64
  %v164 = vld [vmem:[%s163] sm:$0xf]
  %v165 = vld [vmem:[%s163 + $0x4] sm:$0xf]
  %v166 = vld [vmem:[%s163 + $0x8] sm:$0xf]
  %v167 = vld [vmem:[%s163 + $0xc] sm:$0xf]
  %v168 = vld [vmem:[%s163 + $0x10] sm:$0xf]
  %v169 = vld [vmem:[%s163 + $0x14] sm:$0xf]
  %v170 = vld [vmem:[%s163 + $0x18] sm:$0xf]
  %v171 = vld [vmem:[%s163 + $0x1c] sm:$0xf]
  %v172 = vld [vmem:[%s163 + $0x20] sm:$0xf]
  %v173 = vld [vmem:[%s163 + $0x24] sm:$0xf]
  %v174 = vld [vmem:[%s163 + $0x28] sm:$0xf]
  %v175 = vld [vmem:[%s163 + $0x2c] sm:$0xf]
  %v176 = vld [vmem:[%s163 + $0x30] sm:$0xf]
  %v177 = vld [vmem:[%s163 + $0x34] sm:$0xf]
  %v178 = vld [vmem:[%s163 + $0x38] sm:$0xf]
  %v179 = vld [vmem:[%s163 + $0x3c] sm:$0xf]
  %v180 = vunpack.c.l.bf16 %v164
  %v181 = vunpack.c.l.bf16 %v165
  %v182 = vunpack.c.l.bf16 %v166
  %v183 = vunpack.c.l.bf16 %v167
  %v184 = vunpack.c.l.bf16 %v168
  %v185 = vunpack.c.l.bf16 %v169
  %v186 = vunpack.c.l.bf16 %v170
  %v187 = vunpack.c.l.bf16 %v171
  %v188 = vunpack.c.l.bf16 %v172
  %v189 = vunpack.c.l.bf16 %v173
  %v190 = vunpack.c.l.bf16 %v174
  %v191 = vunpack.c.l.bf16 %v175
  %v192 = vunpack.c.l.bf16 %v176
  %v193 = vunpack.c.l.bf16 %v177
  %v194 = vunpack.c.l.bf16 %v178
  %v195 = vunpack.c.l.bf16 %v179
  %196 = vmatprep.subr.mxu0 0.0
  %197 = vmatpush1.msra.mxu0 %v180
  %198 = vmatprep.subr.mxu0 0.0
  %199 = vmatpush1.msra.mxu0 %v181
  %200 = vmatprep.subr.mxu0 0.0
  %201 = vmatpush1.msra.mxu0 %v182
  %202 = vmatprep.subr.mxu0 0.0
  %203 = vmatpush1.msra.mxu0 %v183
  %204 = vmatprep.subr.mxu0 0.0
  %205 = vmatpush1.msra.mxu0 %v184
  %206 = vmatprep.subr.mxu0 0.0
  %207 = vmatpush1.msra.mxu0 %v185
  %208 = vmatprep.subr.mxu0 0.0
  %209 = vmatpush1.msra.mxu0 %v186
  %210 = vmatprep.subr.mxu0 0.0
  %211 = vmatpush1.msra.mxu0 %v187
  %212 = vmatprep.subr.mxu0 0.0
  %213 = vmatpush1.msra.mxu0 %v188
  %214 = vmatprep.subr.mxu0 0.0
  %215 = vmatpush1.msra.mxu0 %v189
  %216 = vmatprep.subr.mxu0 0.0
  %217 = vmatpush1.msra.mxu0 %v190
  %218 = vmatprep.subr.mxu0 0.0
  %219 = vmatpush1.msra.mxu0 %v191
  %220 = vmatprep.subr.mxu0 0.0
  %221 = vmatpush1.msra.mxu0 %v192
  %222 = vmatprep.subr.mxu0 0.0
  %223 = vmatpush1.msra.mxu0 %v193
  %224 = vmatprep.subr.mxu0 0.0
  %225 = vmatpush1.msra.mxu0 %v194
  %226 = vmatprep.subr.mxu0 0.0
  %227 = vmatpush1.msra.mxu0 %v195
  %228 = vmatprep.subr.mxu0 0.0
  %229 = vmatpush1.msra.mxu0 0.0
  %230 = vmatprep.subr.mxu0 0.0
  %231 = vmatpush1.msra.mxu0 0.0
  %232 = vmatprep.subr.mxu0 0.0
  %233 = vmatpush1.msra.mxu0 0.0
  %234 = vmatprep.subr.mxu0 0.0
  %235 = vmatpush1.msra.mxu0 0.0
  %236 = vmatprep.subr.mxu0 0.0
  %237 = vmatpush1.msra.mxu0 0.0
  %238 = vmatprep.subr.mxu0 0.0
  %239 = vmatpush1.msra.mxu0 0.0
  %240 = vmatprep.subr.mxu0 0.0
  %241 = vmatpush1.msra.mxu0 0.0
  %242 = vmatprep.subr.mxu0 0.0
  %243 = vmatpush1.msra.mxu0 0.0
  %244 = vmatprep.subr.mxu0 0.0
  %245 = vmatpush1.msra.mxu0 0.0
  %246 = vmatprep.subr.mxu0 0.0
  %247 = vmatpush1.msra.mxu0 0.0
  %248 = vmatprep.subr.mxu0 0.0
  %249 = vmatpush1.msra.mxu0 0.0
  %250 = vmatprep.subr.mxu0 0.0
  %251 = vmatpush1.msra.mxu0 0.0
  %252 = vmatprep.subr.mxu0 0.0
  %253 = vmatpush1.msra.mxu0 0.0
  %254 = vmatprep.subr.mxu0 0.0
  %255 = vmatpush1.msra.mxu0 0.0
  %256 = vmatprep.subr.mxu0 0.0
  %257 = vmatpush1.msra.mxu0 0.0
  %258 = vmatprep.subr.mxu0 0.0
  %259 = vmatpush1.msra.mxu0 0.0
  %260 = vmatprep.mubr.f32.mxu0 0.0
  %261 = vmatmul.mubr.f32.gmra.mrb[0].mxu0 %v161
  %v262 = vpop.f32.mrb[0].mxu0
  %v263 = vadd.f32 0.0, %v262
  %v264 = vpop.f32.mrb[0].mxu0
  %265 = vmatprep.mubr.f32.mxu0 0.0
  %266 = vmatmul.mubr.f32.gmra.mrb[0].mxu0 %v162
  %v267 = vpop.f32.mrb[0].mxu0
  %v268 = vadd.f32 0.0, %v267
  %v269 = vpop.f32.mrb[0].mxu0
  %270 = vdwg.mxu0
  %v271 = vpack.c.bf16 %v268, %v263
  %v273 = vunpack.c.l.b16 %v271
  %v274 = vunpack.c.h.b16 %v271
  %v275 = vpack.c.b16 %v273, %v273
  %v276 = vpack.c.b16 %v274, %v274
  %s279 = scalar_lea.vmem %s4, 8
  %280 = vst.msk [vmem:[%s279] sm:$0xf] %vm136, %v275
  %281 = vst.msk [vmem:[%s279 + $0x4] sm:$0xf] %vm136, %v276
  %v282 = vsel %vm139, %v263, 0.0
  %283 = vadd.xlane.f32.xlu0 %v282
  %v284 = vpop.xlane.xlu0 %283
  %v285 = vsel %vm139, %v268, 0.0
  %286 = vadd.xlane.f32.xlu0 %v285
  %v287 = vpop.xlane.xlu0 %286
  %v288 = vadd.f32 %v146, %v284
  %v289 = vadd.f32 %v147, %v287
  %v290 = vmul.f32 %v263, %v263
  %v291 = vmul.f32 %v268, %v268
  %v292 = vsel %vm139, %v290, 0.0
  %293 = vadd.xlane.f32.xlu0 %v292
  %v294 = vpop.xlane.xlu0 %293
  %v295 = vsel %vm139, %v291, 0.0
  %296 = vadd.xlane.f32.xlu0 %v295
  %v297 = vpop.xlane.xlu0 %296
  %v298 = vadd.f32 %v156, %v294
  %v299 = vadd.f32 %v157, %v297
  %s300 = scalar_lea.vmem %s1, 16
  %v301 = vld [vmem:[%s300] sm:$0xf]
  %v302 = vld [vmem:[%s300 + $0x4] sm:$0xf]
  %v303 = vunpack.c.l.bf16 %v301
  %v304 = vunpack.c.l.bf16 %v302
  %s305 = scalar_lea.vmem %s0, 128
  %v306 = vld [vmem:[%s305] sm:$0xf]
  %v307 = vld [vmem:[%s305 + $0x4] sm:$0xf]
  %v308 = vld [vmem:[%s305 + $0x8] sm:$0xf]
  %v309 = vld [vmem:[%s305 + $0xc] sm:$0xf]
  %v310 = vld [vmem:[%s305 + $0x10] sm:$0xf]
  %v311 = vld [vmem:[%s305 + $0x14] sm:$0xf]
  %v312 = vld [vmem:[%s305 + $0x18] sm:$0xf]
  %v313 = vld [vmem:[%s305 + $0x1c] sm:$0xf]
  %v314 = vld [vmem:[%s305 + $0x20] sm:$0xf]
  %v315 = vld [vmem:[%s305 + $0x24] sm:$0xf]
  %v316 = vld [vmem:[%s305 + $0x28] sm:$0xf]
  %v317 = vld [vmem:[%s305 + $0x2c] sm:$0xf]
  %v318 = vld [vmem:[%s305 + $0x30] sm:$0xf]
  %v319 = vld [vmem:[%s305 + $0x34] sm:$0xf]
  %v320 = vld [vmem:[%s305 + $0x38] sm:$0xf]
  %v321 = vld [vmem:[%s305 + $0x3c] sm:$0xf]
  %v322 = vunpack.c.l.bf16 %v306
  %v323 = vunpack.c.l.bf16 %v307
  %v324 = vunpack.c.l.bf16 %v308
  %v325 = vunpack.c.l.bf16 %v309
  %v326 = vunpack.c.l.bf16 %v310
  %v327 = vunpack.c.l.bf16 %v311
  %v328 = vunpack.c.l.bf16 %v312
  %v329 = vunpack.c.l.bf16 %v313
  %v330 = vunpack.c.l.bf16 %v314
  %v331 = vunpack.c.l.bf16 %v315
  %v332 = vunpack.c.l.bf16 %v316
  %v333 = vunpack.c.l.bf16 %v317
  %v334 = vunpack.c.l.bf16 %v318
  %v335 = vunpack.c.l.bf16 %v319
  %v336 = vunpack.c.l.bf16 %v320
  %v337 = vunpack.c.l.bf16 %v321
  %338 = vmatprep.subr.mxu0 0.0
  %339 = vmatpush1.msra.mxu0 %v322
  %340 = vmatprep.subr.mxu0 0.0
  %341 = vmatpush1.msra.mxu0 %v323
  %342 = vmatprep.subr.mxu0 0.0
  %343 = vmatpush1.msra.mxu0 %v324
  %344 = vmatprep.subr.mxu0 0.0
  %345 = vmatpush1.msra.mxu0 %v325
  %346 = vmatprep.subr.mxu0 0.0
  %347 = vmatpush1.msra.mxu0 %v326
  %348 = vmatprep.subr.mxu0 0.0
  %349 = vmatpush1.msra.mxu0 %v327
  %350 = vmatprep.subr.mxu0 0.0
  %351 = vmatpush1.msra.mxu0 %v328
  %352 = vmatprep.subr.mxu0 0.0
  %353 = vmatpush1.msra.mxu0 %v329
  %354 = vmatprep.subr.mxu0 0.0
  %355 = vmatpush1.msra.mxu0 %v330
  %356 = vmatprep.subr.mxu0 0.0
  %357 = vmatpush1.msra.mxu0 %v331
  %358 = vmatprep.subr.mxu0 0.0
  %359 = vmatpush1.msra.mxu0 %v332
  %360 = vmatprep.subr.mxu0 0.0
  %361 = vmatpush1.msra.mxu0 %v333
  %362 = vmatprep.subr.mxu0 0.0
  %363 = vmatpush1.msra.mxu0 %v334
  %364 = vmatprep.subr.mxu0 0.0
  %365 = vmatpush1.msra.mxu0 %v335
  %366 = vmatprep.subr.mxu0 0.0
  %367 = vmatpush1.msra.mxu0 %v336
  %368 = vmatprep.subr.mxu0 0.0
  %369 = vmatpush1.msra.mxu0 %v337
  %370 = vmatprep.subr.mxu0 0.0
  %371 = vmatpush1.msra.mxu0 0.0
  %372 = vmatprep.subr.mxu0 0.0
  %373 = vmatpush1.msra.mxu0 0.0
  %374 = vmatprep.subr.mxu0 0.0
  %375 = vmatpush1.msra.mxu0 0.0
  %376 = vmatprep.subr.mxu0 0.0
  %377 = vmatpush1.msra.mxu0 0.0
  %378 = vmatprep.subr.mxu0 0.0
  %379 = vmatpush1.msra.mxu0 0.0
  %380 = vmatprep.subr.mxu0 0.0
  %381 = vmatpush1.msra.mxu0 0.0
  %382 = vmatprep.subr.mxu0 0.0
  %383 = vmatpush1.msra.mxu0 0.0
  %384 = vmatprep.subr.mxu0 0.0
  %385 = vmatpush1.msra.mxu0 0.0
  %386 = vmatprep.subr.mxu0 0.0
  %387 = vmatpush1.msra.mxu0 0.0
  %388 = vmatprep.subr.mxu0 0.0
  %389 = vmatpush1.msra.mxu0 0.0
  %390 = vmatprep.subr.mxu0 0.0
  %391 = vmatpush1.msra.mxu0 0.0
  %392 = vmatprep.subr.mxu0 0.0
  %393 = vmatpush1.msra.mxu0 0.0
  %394 = vmatprep.subr.mxu0 0.0
  %395 = vmatpush1.msra.mxu0 0.0
  %396 = vmatprep.subr.mxu0 0.0
  %397 = vmatpush1.msra.mxu0 0.0
  %398 = vmatprep.subr.mxu0 0.0
  %399 = vmatpush1.msra.mxu0 0.0
  %400 = vmatprep.subr.mxu0 0.0
  %401 = vmatpush1.msra.mxu0 0.0
  %402 = vmatprep.mubr.f32.mxu0 0.0
  %403 = vmatmul.mubr.f32.gmra.mrb[0].mxu0 %v303
  %v404 = vpop.f32.mrb[0].mxu0
  %v405 = vadd.f32 0.0, %v404
  %v406 = vpop.f32.mrb[0].mxu0
  %407 = vmatprep.mubr.f32.mxu0 0.0
  %408 = vmatmul.mubr.f32.gmra.mrb[0].mxu0 %v304
  %v409 = vpop.f32.mrb[0].mxu0
  %v410 = vadd.f32 0.0, %v409
  %v411 = vpop.f32.mrb[0].mxu0
  %412 = vdwg.mxu0
  %v413 = vpack.c.bf16 %v410, %v405
  %v415 = vunpack.c.l.b16 %v413
  %v416 = vunpack.c.h.b16 %v413
  %v417 = vpack.c.b16 %v415, %v415
  %v418 = vpack.c.b16 %v416, %v416
  %s421 = scalar_lea.vmem %s4, 16
  %422 = vst.msk [vmem:[%s421] sm:$0xf] %vm136, %v417
  %423 = vst.msk [vmem:[%s421 + $0x4] sm:$0xf] %vm136, %v418
  %v424 = vsel %vm139, %v405, 0.0
  %425 = vadd.xlane.f32.xlu0 %v424
  %v426 = vpop.xlane.xlu0 %425
  %v427 = vsel %vm139, %v410, 0.0
  %428 = vadd.xlane.f32.xlu0 %v427
  %v429 = vpop.xlane.xlu0 %428
  %v430 = vadd.f32 %v288, %v426
  %v431 = vadd.f32 %v289, %v429
  %v432 = vmul.f32 %v405, %v405
  %v433 = vmul.f32 %v410, %v410
  %v434 = vsel %vm139, %v432, 0.0
  %435 = vadd.xlane.f32.xlu0 %v434
  %v436 = vpop.xlane.xlu0 %435
  %v437 = vsel %vm139, %v433, 0.0
  %438 = vadd.xlane.f32.xlu0 %v437
  %v439 = vpop.xlane.xlu0 %438
  %v440 = vadd.f32 %v298, %v436
  %v441 = vadd.f32 %v299, %v439
  %s442 = scalar_lea.vmem %s1, 24
  %v443 = vld [vmem:[%s442] sm:$0xf]
  %v444 = vld [vmem:[%s442 + $0x4] sm:$0xf]
  %v445 = vunpack.c.l.bf16 %v443
  %v446 = vunpack.c.l.bf16 %v444
  %s447 = scalar_lea.vmem %s0, 192
  %v448 = vld [vmem:[%s447] sm:$0xf]
  %v449 = vld [vmem:[%s447 + $0x4] sm:$0xf]
  %v450 = vld [vmem:[%s447 + $0x8] sm:$0xf]
  %v451 = vld [vmem:[%s447 + $0xc] sm:$0xf]
  %v452 = vld [vmem:[%s447 + $0x10] sm:$0xf]
  %v453 = vld [vmem:[%s447 + $0x14] sm:$0xf]
  %v454 = vld [vmem:[%s447 + $0x18] sm:$0xf]
  %v455 = vld [vmem:[%s447 + $0x1c] sm:$0xf]
  %v456 = vld [vmem:[%s447 + $0x20] sm:$0xf]
  %v457 = vld [vmem:[%s447 + $0x24] sm:$0xf]
  %v458 = vld [vmem:[%s447 + $0x28] sm:$0xf]
  %v459 = vld [vmem:[%s447 + $0x2c] sm:$0xf]
  %v460 = vld [vmem:[%s447 + $0x30] sm:$0xf]
  %v461 = vld [vmem:[%s447 + $0x34] sm:$0xf]
  %v462 = vld [vmem:[%s447 + $0x38] sm:$0xf]
  %v463 = vld [vmem:[%s447 + $0x3c] sm:$0xf]
  %v464 = vunpack.c.l.bf16 %v448
  %v465 = vunpack.c.l.bf16 %v449
  %v466 = vunpack.c.l.bf16 %v450
  %v467 = vunpack.c.l.bf16 %v451
  %v468 = vunpack.c.l.bf16 %v452
  %v469 = vunpack.c.l.bf16 %v453
  %v470 = vunpack.c.l.bf16 %v454
  %v471 = vunpack.c.l.bf16 %v455
  %v472 = vunpack.c.l.bf16 %v456
  %v473 = vunpack.c.l.bf16 %v457
  %v474 = vunpack.c.l.bf16 %v458
  %v475 = vunpack.c.l.bf16 %v459
  %v476 = vunpack.c.l.bf16 %v460
  %v477 = vunpack.c.l.bf16 %v461
  %v478 = vunpack.c.l.bf16 %v462
  %v479 = vunpack.c.l.bf16 %v463
  %480 = vmatprep.subr.mxu0 0.0
  %481 = vmatpush1.msra.mxu0 %v464
  %482 = vmatprep.subr.mxu0 0.0
  %483 = vmatpush1.msra.mxu0 %v465
  %484 = vmatprep.subr.mxu0 0.0
  %485 = vmatpush1.msra.mxu0 %v466
  %486 = vmatprep.subr.mxu0 0.0
  %487 = vmatpush1.msra.mxu0 %v467
  %488 = vmatprep.subr.mxu0 0.0
  %489 = vmatpush1.msra.mxu0 %v468
  %490 = vmatprep.subr.mxu0 0.0
  %491 = vmatpush1.msra.mxu0 %v469
  %492 = vmatprep.subr.mxu0 0.0
  %493 = vmatpush1.msra.mxu0 %v470
  %494 = vmatprep.subr.mxu0 0.0
  %495 = vmatpush1.msra.mxu0 %v471
  %496 = vmatprep.subr.mxu0 0.0
  %497 = vmatpush1.msra.mxu0 %v472
  %498 = vmatprep.subr.mxu0 0.0
  %499 = vmatpush1.msra.mxu0 %v473
  %500 = vmatprep.subr.mxu0 0.0
  %501 = vmatpush1.msra.mxu0 %v474
  %502 = vmatprep.subr.mxu0 0.0
  %503 = vmatpush1.msra.mxu0 %v475
  %504 = vmatprep.subr.mxu0 0.0
  %505 = vmatpush1.msra.mxu0 %v476
  %506 = vmatprep.subr.mxu0 0.0
  %507 = vmatpush1.msra.mxu0 %v477
  %508 = vmatprep.subr.mxu0 0.0
  %509 = vmatpush1.msra.mxu0 %v478
  %510 = vmatprep.subr.mxu0 0.0
  %511 = vmatpush1.msra.mxu0 %v479
  %512 = vmatprep.subr.mxu0 0.0
  %513 = vmatpush1.msra.mxu0 0.0
  %514 = vmatprep.subr.mxu0 0.0
  %515 = vmatpush1.msra.mxu0 0.0
  %516 = vmatprep.subr.mxu0 0.0
  %517 = vmatpush1.msra.mxu0 0.0
  %518 = vmatprep.subr.mxu0 0.0
  %519 = vmatpush1.msra.mxu0 0.0
  %520 = vmatprep.subr.mxu0 0.0
  %521 = vmatpush1.msra.mxu0 0.0
  %522 = vmatprep.subr.mxu0 0.0
  %523 = vmatpush1.msra.mxu0 0.0
  %524 = vmatprep.subr.mxu0 0.0
  %525 = vmatpush1.msra.mxu0 0.0
  %526 = vmatprep.subr.mxu0 0.0
  %527 = vmatpush1.msra.mxu0 0.0
  %528 = vmatprep.subr.mxu0 0.0
  %529 = vmatpush1.msra.mxu0 0.0
  %530 = vmatprep.subr.mxu0 0.0
  %531 = vmatpush1.msra.mxu0 0.0
  %532 = vmatprep.subr.mxu0 0.0
  %533 = vmatpush1.msra.mxu0 0.0
  %534 = vmatprep.subr.mxu0 0.0
  %535 = vmatpush1.msra.mxu0 0.0
  %536 = vmatprep.subr.mxu0 0.0
  %537 = vmatpush1.msra.mxu0 0.0
  %538 = vmatprep.subr.mxu0 0.0
  %539 = vmatpush1.msra.mxu0 0.0
  %540 = vmatprep.subr.mxu0 0.0
  %541 = vmatpush1.msra.mxu0 0.0
  %542 = vmatprep.subr.mxu0 0.0
  %543 = vmatpush1.msra.mxu0 0.0
  %544 = vmatprep.mubr.f32.mxu0 0.0
  %545 = vmatmul.mubr.f32.gmra.mrb[0].mxu0 %v445
  %v546 = vpop.f32.mrb[0].mxu0
  %v547 = vadd.f32 0.0, %v546
  %v548 = vpop.f32.mrb[0].mxu0
  %549 = vmatprep.mubr.f32.mxu0 0.0
  %550 = vmatmul.mubr.f32.gmra.mrb[0].mxu0 %v446
  %v551 = vpop.f32.mrb[0].mxu0
  %v552 = vadd.f32 0.0, %v551
  %v553 = vpop.f32.mrb[0].mxu0
  %554 = vdwg.mxu0
  %v555 = vpack.c.bf16 %v552, %v547
  %v557 = vunpack.c.l.b16 %v555
  %v558 = vunpack.c.h.b16 %v555
  %v559 = vpack.c.b16 %v557, %v557
  %v560 = vpack.c.b16 %v558, %v558
  %s563 = scalar_lea.vmem %s4, 24
  %564 = vst.msk [vmem:[%s563] sm:$0xf] %vm136, %v559
  %565 = vst.msk [vmem:[%s563 + $0x4] sm:$0xf] %vm136, %v560
  %v566 = vsel %vm139, %v547, 0.0
  %567 = vadd.xlane.f32.xlu0 %v566
  %v568 = vpop.xlane.xlu0 %567
  %v569 = vsel %vm139, %v552, 0.0
  %570 = vadd.xlane.f32.xlu0 %v569
  %v571 = vpop.xlane.xlu0 %570
  %v572 = vadd.f32 %v430, %v568
  %v573 = vadd.f32 %v431, %v571
  %v574 = vmul.f32 %v547, %v547
  %v575 = vmul.f32 %v552, %v552
  %v576 = vsel %vm139, %v574, 0.0
  %577 = vadd.xlane.f32.xlu0 %v576
  %v578 = vpop.xlane.xlu0 %577
  %v579 = vsel %vm139, %v575, 0.0
  %580 = vadd.xlane.f32.xlu0 %v579
  %v581 = vpop.xlane.xlu0 %580
  %v582 = vadd.f32 %v440, %v578
  %v583 = vadd.f32 %v441, %v581
  %v584 = vmul.f32 %v572, 0.0078125
  %v585 = vmul.f32 %v573, 0.0078125
  %v586 = vmul.f32 %v582, 0.0078125
  %v587 = vmul.f32 %v583, 0.0078125
  %v588 = vmul.f32 %v584, %v584
  %v589 = vmul.f32 %v585, %v585
  %v590 = vsub.f32 %v586, %v588
  %v591 = vsub.f32 %v587, %v589
  %v592 = vadd.f32 %v590, 1e-05
  %v593 = vadd.f32 %v591, 1e-05
  %v594 = vrsqrt.pop %v592
  %v595 = vrsqrt.pop %v593
  %v596 = vld [vmem:[%s2] sm:$0xff]
  %v597 = vld [vmem:[%s2 + $0x8] sm:$0xff]
  %v598 = vmul.f32 %v594, %v596
  %v599 = vmul.f32 %v595, %v597
  %v600 = vld [vmem:[%s3] sm:$0xff]
  %v601 = vld [vmem:[%s3 + $0x8] sm:$0xff]
  %v602 = vmul.f32 %v584, %v598
  %v603 = vmul.f32 %v585, %v599
  %v604 = vsub.f32 %v600, %v602
  %v605 = vsub.f32 %v601, %v603
  %v606 = vld [vmem:[%s4] sm:$0xf]
  %v607 = vld [vmem:[%s4 + $0x4] sm:$0xf]
  %v608 = vunpack.c.l.bf16 %v606
  %v609 = vunpack.c.l.bf16 %v607
  %611 = vset.pattern.permute.xlu0 0
  %612 = vperm.xlu0 %611, %v598
  %v613 = vpop.permute.xlu0 %612
  %616 = vset.pattern.permute.xlu0 0
  %617 = vperm.xlu0 %616, %v599
  %v618 = vpop.permute.xlu0 %617
  %v620 = vmul.f32 %v608, %v613
  %v621 = vmul.f32 %v609, %v618
  %623 = vset.pattern.permute.xlu0 0
  %624 = vperm.xlu0 %623, %v604
  %v625 = vpop.permute.xlu0 %624
  %628 = vset.pattern.permute.xlu0 0
  %629 = vperm.xlu0 %628, %v605
  %v630 = vpop.permute.xlu0 %629
  %v632 = vadd.f32 %v620, %v625
  %v633 = vadd.f32 %v621, %v630
  %v634 = vmax.f32 %v632, 0.0
  %v635 = vmax.f32 %v633, 0.0
  %v636 = vpack.c.bf16 %v635, %v634
  %v638 = vunpack.c.l.b16 %v636
  %v639 = vunpack.c.h.b16 %v636
  %v640 = vpack.c.b16 %v638, %v638
  %v641 = vpack.c.b16 %v639, %v639
  %644 = vst.msk [vmem:[%s4] sm:$0xf] %vm136, %v640
  %645 = vst.msk [vmem:[%s4 + $0x4] sm:$0xf] %vm136, %v641
  %v646 = vld [vmem:[%s279] sm:$0xf]
  %v647 = vld [vmem:[%s279 + $0x4] sm:$0xf]
  %v648 = vunpack.c.l.bf16 %v646
  %v649 = vunpack.c.l.bf16 %v647
  %v650 = vmul.f32 %v648, %v613
  %v651 = vmul.f32 %v649, %v618
  %v652 = vadd.f32 %v650, %v625
  %v653 = vadd.f32 %v651, %v630
  %v654 = vmax.f32 %v652, 0.0
  %v655 = vmax.f32 %v653, 0.0
  %v656 = vpack.c.bf16 %v655, %v654
  %v658 = vunpack.c.l.b16 %v656
  %v659 = vunpack.c.h.b16 %v656
  %v660 = vpack.c.b16 %v658, %v658
  %v661 = vpack.c.b16 %v659, %v659
  %664 = vst.msk [vmem:[%s279] sm:$0xf] %vm136, %v660
  %665 = vst.msk [vmem:[%s279 + $0x4] sm:$0xf] %vm136, %v661
  %v666 = vld [vmem:[%s421] sm:$0xf]
  %v667 = vld [vmem:[%s421 + $0x4] sm:$0xf]
  %v668 = vunpack.c.l.bf16 %v666
  %v669 = vunpack.c.l.bf16 %v667
  %v670 = vmul.f32 %v668, %v613
  %v671 = vmul.f32 %v669, %v618
  %v672 = vadd.f32 %v670, %v625
  %v673 = vadd.f32 %v671, %v630
  %v674 = vmax.f32 %v672, 0.0
  %v675 = vmax.f32 %v673, 0.0
  %v676 = vpack.c.bf16 %v675, %v674
  %v678 = vunpack.c.l.b16 %v676
  %v679 = vunpack.c.h.b16 %v676
  %v680 = vpack.c.b16 %v678, %v678
  %v681 = vpack.c.b16 %v679, %v679
  %684 = vst.msk [vmem:[%s421] sm:$0xf] %vm136, %v680
  %685 = vst.msk [vmem:[%s421 + $0x4] sm:$0xf] %vm136, %v681
  %v686 = vld [vmem:[%s563] sm:$0xf]
  %v687 = vld [vmem:[%s563 + $0x4] sm:$0xf]
  %v688 = vunpack.c.l.bf16 %v686
  %v689 = vunpack.c.l.bf16 %v687
  %v690 = vmul.f32 %v688, %v613
  %v691 = vmul.f32 %v689, %v618
  %v692 = vadd.f32 %v690, %v625
  %v693 = vadd.f32 %v691, %v630
  %v694 = vmax.f32 %v692, 0.0
  %v695 = vmax.f32 %v693, 0.0
  %v696 = vpack.c.bf16 %v695, %v694
  %v698 = vunpack.c.l.b16 %v696
  %v699 = vunpack.c.h.b16 %v696
  %v700 = vpack.c.b16 %v698, %v698
  %v701 = vpack.c.b16 %v699, %v699
  %704 = vst.msk [vmem:[%s563] sm:$0xf] %vm136, %v700
  %705 = vst.msk [vmem:[%s563 + $0x4] sm:$0xf] %vm136, %v701
  // Predicated region
  $region18: #{generator_forward.6} parent=0 // pred_check
    _
  $region19: #{generator_forward.6} parent=0 // pred_check_branch
    %707 = sbr.rel (0) target = $region21
  $region20: #{generator_forward.6} parent=0 // pred_region
    _
  $region21: #{generator_forward.6} parent=0 // pred_fallthru
    _
  // Predicated region
  $region22: #{generator_forward.6} parent=0 // pred_check
    _
  $region23: #{generator_forward.6} parent=0 // pred_check_branch
    %709 = sbr.rel (0) target = $region25
  $region24: #{generator_forward.6} parent=0 // pred_region
    _
  $region25: #{generator_forward.6} parent=0 // pred_fallthru
    _

// kernel: generator_forward.7
$region0: #{generator_forward.7}
  #allocation0 [shape = 'u32[]', space=smem, size = 0x4, offset = 0x4, fixed_abs, tag = 'smem constant byte address 0x4 - core index']
  #allocation1 [shape = 'u32[144,128]{1,0:T(1,128)}', space=vmem, size = 0x12000, scoped, tag = 'internal scratch']
  %s0 = inlined_call_operand.vmem [shape: bf16[4,64,128], index: 0, kind: input, shape index: {}]
  %s1 = inlined_call_operand.vmem [shape: bf16[4,8,64], index: 1, kind: input, shape index: {}]
  %s2 = inlined_call_operand.vmem [shape: f32[8,1], index: 2, kind: input, shape index: {}]
  %s3 = inlined_call_operand.vmem [shape: f32[8,1], index: 3, kind: input, shape index: {}]
  %s4 = inlined_call_operand.vmem [shape: bf16[4,8,128], index: 4, kind: output, shape index: {}]
  %s5 = sld [smem:[#allocation0]]
  $region26: #{generator_forward.7} parent=0
    _
  %s7 = ssub.s32 1, %s5
  %s8 = scalar_select 0, %s7, %s5
  // Predicated region
  $region2: #{generator_forward.7} parent=0 // pred_check
    _
  $region3: #{generator_forward.7} parent=0 // pred_check_branch
    %10 = sbr.rel (0) target = $region5
  $region4: #{generator_forward.7} parent=0 // pred_region
    _
  $region5: #{generator_forward.7} parent=0 // pred_fallthru
    _
  // Predicated region
  $region6: #{generator_forward.7} parent=0 // pred_check
    _
  $region7: #{generator_forward.7} parent=0 // pred_check_branch
    %12 = sbr.rel (0) target = $region9
  $region8: #{generator_forward.7} parent=0 // pred_region
    _
  $region9: #{generator_forward.7} parent=0 // pred_fallthru
    _
  // Predicated region
  $region10: #{generator_forward.7} parent=0 // pred_check
    _
  $region11: #{generator_forward.7} parent=0 // pred_check_branch
    %14 = sbr.rel (0) target = $region13
  $region12: #{generator_forward.7} parent=0 // pred_region
    _
  $region13: #{generator_forward.7} parent=0 // pred_fallthru
    _
  // Predicated region
  $region14: #{generator_forward.7} parent=0 // pred_check
    _
  $region15: #{generator_forward.7} parent=0 // pred_check_branch
    %16 = sbr.rel (0) target = $region17
  $region16: #{generator_forward.7} parent=0 // pred_region
    _
  $region17: #{generator_forward.7} parent=0 // pred_fallthru
    _
  %v17 = vld [vmem:[%s1] sm:$0xf]
  %v18 = vunpack.c.l.bf16 %v17
  %v19 = vld [vmem:[%s0] sm:$0xf]
  %v20 = vld [vmem:[%s0 + $0x4] sm:$0xf]
  %v21 = vld [vmem:[%s0 + $0x8] sm:$0xf]
  %v22 = vld [vmem:[%s0 + $0xc] sm:$0xf]
  %v23 = vld [vmem:[%s0 + $0x10] sm:$0xf]
  %v24 = vld [vmem:[%s0 + $0x14] sm:$0xf]
  %v25 = vld [vmem:[%s0 + $0x18] sm:$0xf]
  %v26 = vld [vmem:[%s0 + $0x1c] sm:$0xf]
  %v27 = vunpack.c.l.bf16 %v19
  %v28 = vunpack.c.l.bf16 %v20
  %v29 = vunpack.c.l.bf16 %v21
  %v30 = vunpack.c.l.bf16 %v22
  %v31 = vunpack.c.l.bf16 %v23
  %v32 = vunpack.c.l.bf16 %v24
  %v33 = vunpack.c.l.bf16 %v25
  %v34 = vunpack.c.l.bf16 %v26
  %vm35 = vcmask 523264
  %v37 = vsel %vm35, %v18, 0
  %39 = vmatprep.subr.mxu0 0.0
  %40 = vmatpush1.msra.mxu0 %v27
  %41 = vmatprep.subr.mxu0 0.0
  %42 = vmatpush1.msra.mxu0 %v28
  %43 = vmatprep.subr.mxu0 0.0
  %44 = vmatpush1.msra.mxu0 %v29
  %45 = vmatprep.subr.mxu0 0.0
  %46 = vmatpush1.msra.mxu0 %v30
  %47 = vmatprep.subr.mxu0 0.0
  %48 = vmatpush1.msra.mxu0 %v31
  %49 = vmatprep.subr.mxu0 0.0
  %50 = vmatpush1.msra.mxu0 %v32
  %51 = vmatprep.subr.mxu0 0.0
  %52 = vmatpush1.msra.mxu0 %v33
  %53 = vmatprep.subr.mxu0 0.0
  %54 = vmatpush1.msra.mxu0 %v34
  %55 = vmatprep.subr.mxu0 0.0
  %56 = vmatpush1.msra.mxu0 0.0
  %57 = vmatprep.subr.mxu0 0.0
  %58 = vmatpush1.msra.mxu0 0.0
  %59 = vmatprep.subr.mxu0 0.0
  %60 = vmatpush1.msra.mxu0 0.0
  %61 = vmatprep.subr.mxu0 0.0
  %62 = vmatpush1.msra.mxu0 0.0
  %63 = vmatprep.subr.mxu0 0.0
  %64 = vmatpush1.msra.mxu0 0.0
  %65 = vmatprep.subr.mxu0 0.0
  %66 = vmatpush1.msra.mxu0 0.0
  %67 = vmatprep.subr.mxu0 0.0
  %68 = vmatpush1.msra.mxu0 0.0
  %69 = vmatprep.subr.mxu0 0.0
  %70 = vmatpush1.msra.mxu0 0.0
  %71 = vmatprep.subr.mxu0 0.0
  %72 = vmatpush1.msra.mxu0 0.0
  %73 = vmatprep.subr.mxu0 0.0
  %74 = vmatpush1.msra.mxu0 0.0
  %75 = vmatprep.subr.mxu0 0.0
  %76 = vmatpush1.msra.mxu0 0.0
  %77 = vmatprep.subr.mxu0 0.0
  %78 = vmatpush1.msra.mxu0 0.0
  %79 = vmatprep.subr.mxu0 0.0
  %80 = vmatpush1.msra.mxu0 0.0
  %81 = vmatprep.subr.mxu0 0.0
  %82 = vmatpush1.msra.mxu0 0.0
  %83 = vmatprep.subr.mxu0 0.0
  %84 = vmatpush1.msra.mxu0 0.0
  %85 = vmatprep.subr.mxu0 0.0
  %86 = vmatpush1.msra.mxu0 0.0
  %87 = vmatprep.subr.mxu0 0.0
  %88 = vmatpush1.msra.mxu0 0.0
  %89 = vmatprep.subr.mxu0 0.0
  %90 = vmatpush1.msra.mxu0 0.0
  %91 = vmatprep.subr.mxu0 0.0
  %92 = vmatpush1.msra.mxu0 0.0
  %93 = vmatprep.subr.mxu0 0.0
  %94 = vmatpush1.msra.mxu0 0.0
  %95 = vmatprep.subr.mxu0 0.0
  %96 = vmatpush1.msra.mxu0 0.0
  %97 = vmatprep.subr.mxu0 0.0
  %98 = vmatpush1.msra.mxu0 0.0
  %99 = vmatprep.subr.mxu0 0.0
  %100 = vmatpush1.msra.mxu0 0.0
  %101 = vmatprep.subr.mxu0 0.0
  %102 = vmatpush1.msra.mxu0 0.0
  %103 = vmatprep.mubr.f32.mxu0 0.0
  %104 = vmatmul.mubr.f32.gmra.mrb[0].mxu0 %v37
  %v105 = vpop.f32.mrb[0].mxu0
  %v106 = vadd.f32 0.0, %v105
  %v107 = vpop.f32.mrb[0].mxu0
  %108 = vdwg.mxu0
  %v109 = vpack.c.bf16 %v106, %v106
  %110 = vst [vmem:[%s4] sm:$0xf] %v109
  %111 = vadd.xlane.f32.xlu0 %v106
  %v112 = vpop.xlane.xlu0 %111
  %v113 = vadd.f32 %v112, 0.0
  %v114 = vmul.f32 %v106, %v106
  %115 = vadd.xlane.f32.xlu0 %v114
  %v116 = vpop.xlane.xlu0 %115
  %v117 = vadd.f32 %v116, 0.0
  %s118 = scalar_lea.vmem %s1, 4
  %v119 = vld [vmem:[%s118] sm:$0xf]
  %v120 = vunpack.c.l.bf16 %v119
  %s121 = scalar_lea.vmem %s0, 32
  %v122 = vld [vmem:[%s121] sm:$0xf]
  %v123 = vld [vmem:[%s121 + $0x4] sm:$0xf]
  %v124 = vld [vmem:[%s121 + $0x8] sm:$0xf]
  %v125 = vld [vmem:[%s121 + $0xc] sm:$0xf]
  %v126 = vld [vmem:[%s121 + $0x10] sm:$0xf]
  %v127 = vld [vmem:[%s121 + $0x14] sm:$0xf]
  %v128 = vld [vmem:[%s121 + $0x18] sm:$0xf]
  %v129 = vld [vmem:[%s121 + $0x1c] sm:$0xf]
  %v130 = vunpack.c.l.bf16 %v122
  %v131 = vunpack.c.l.bf16 %v123
  %v132 = vunpack.c.l.bf16 %v124
  %v133 = vunpack.c.l.bf16 %v125
  %v134 = vunpack.c.l.bf16 %v126
  %v135 = vunpack.c.l.bf16 %v127
  %v136 = vunpack.c.l.bf16 %v128
  %v137 = vunpack.c.l.bf16 %v129
  %v139 = vsel %vm35, %v120, 0
  %141 = vmatprep.subr.mxu0 0.0
  %142 = vmatpush1.msra.mxu0 %v130
  %143 = vmatprep.subr.mxu0 0.0
  %144 = vmatpush1.msra.mxu0 %v131
  %145 = vmatprep.subr.mxu0 0.0
  %146 = vmatpush1.msra.mxu0 %v132
  %147 = vmatprep.subr.mxu0 0.0
  %148 = vmatpush1.msra.mxu0 %v133
  %149 = vmatprep.subr.mxu0 0.0
  %150 = vmatpush1.msra.mxu0 %v134
  %151 = vmatprep.subr.mxu0 0.0
  %152 = vmatpush1.msra.mxu0 %v135
  %153 = vmatprep.subr.mxu0 0.0
  %154 = vmatpush1.msra.mxu0 %v136
  %155 = vmatprep.subr.mxu0 0.0
  %156 = vmatpush1.msra.mxu0 %v137
  %157 = vmatprep.subr.mxu0 0.0
  %158 = vmatpush1.msra.mxu0 0.0
  %159 = vmatprep.subr.mxu0 0.0
  %160 = vmatpush1.msra.mxu0 0.0
  %161 = vmatprep.subr.mxu0 0.0
  %162 = vmatpush1.msra.mxu0 0.0
  %163 = vmatprep.subr.mxu0 0.0
  %164 = vmatpush1.msra.mxu0 0.0
  %165 = vmatprep.subr.mxu0 0.0
  %166 = vmatpush1.msra.mxu0 0.0
  %167 = vmatprep.subr.mxu0 0.0
  %168 = vmatpush1.msra.mxu0 0.0
  %169 = vmatprep.subr.mxu0 0.0
  %170 = vmatpush1.msra.mxu0 0.0
  %171 = vmatprep.subr.mxu0 0.0
  %172 = vmatpush1.msra.mxu0 0.0
  %173 = vmatprep.subr.mxu0 0.0
  %174 = vmatpush1.msra.mxu0 0.0
  %175 = vmatprep.subr.mxu0 0.0
  %176 = vmatpush1.msra.mxu0 0.0
  %177 = vmatprep.subr.mxu0 0.0
  %178 = vmatpush1.msra.mxu0 0.0
  %179 = vmatprep.subr.mxu0 0.0
  %180 = vmatpush1.msra.mxu0 0.0
  %181 = vmatprep.subr.mxu0 0.0
  %182 = vmatpush1.msra.mxu0 0.0
  %183 = vmatprep.subr.mxu0 0.0
  %184 = vmatpush1.msra.mxu0 0.0
  %185 = vmatprep.subr.mxu0 0.0
  %186 = vmatpush1.msra.mxu0 0.0
  %187 = vmatprep.subr.mxu0 0.0
  %188 = vmatpush1.msra.mxu0 0.0
  %189 = vmatprep.subr.mxu0 0.0
  %190 = vmatpush1.msra.mxu0 0.0
  %191 = vmatprep.subr.mxu0 0.0
  %192 = vmatpush1.msra.mxu0 0.0
  %193 = vmatprep.subr.mxu0 0.0
  %194 = vmatpush1.msra.mxu0 0.0
  %195 = vmatprep.subr.mxu0 0.0
  %196 = vmatpush1.msra.mxu0 0.0
  %197 = vmatprep.subr.mxu0 0.0
  %198 = vmatpush1.msra.mxu0 0.0
  %199 = vmatprep.subr.mxu0 0.0
  %200 = vmatpush1.msra.mxu0 0.0
  %201 = vmatprep.subr.mxu0 0.0
  %202 = vmatpush1.msra.mxu0 0.0
  %203 = vmatprep.subr.mxu0 0.0
  %204 = vmatpush1.msra.mxu0 0.0
  %205 = vmatprep.mubr.f32.mxu0 0.0
  %206 = vmatmul.mubr.f32.gmra.mrb[0].mxu0 %v139
  %v207 = vpop.f32.mrb[0].mxu0
  %v208 = vadd.f32 0.0, %v207
  %v209 = vpop.f32.mrb[0].mxu0
  %210 = vdwg.mxu0
  %v211 = vpack.c.bf16 %v208, %v208
  %s212 = scalar_lea.vmem %s4, 4
  %213 = vst [vmem:[%s212] sm:$0xf] %v211
  %214 = vadd.xlane.f32.xlu0 %v208
  %v215 = vpop.xlane.xlu0 %214
  %v216 = vadd.f32 %v113, %v215
  %v217 = vmul.f32 %v208, %v208
  %218 = vadd.xlane.f32.xlu0 %v217
  %v219 = vpop.xlane.xlu0 %218
  %v220 = vadd.f32 %v117, %v219
  %s221 = scalar_lea.vmem %s1, 8
  %v222 = vld [vmem:[%s221] sm:$0xf]
  %v223 = vunpack.c.l.bf16 %v222
  %s224 = scalar_lea.vmem %s0, 64
  %v225 = vld [vmem:[%s224] sm:$0xf]
  %v226 = vld [vmem:[%s224 + $0x4] sm:$0xf]
  %v227 = vld [vmem:[%s224 + $0x8] sm:$0xf]
  %v228 = vld [vmem:[%s224 + $0xc] sm:$0xf]
  %v229 = vld [vmem:[%s224 + $0x10] sm:$0xf]
  %v230 = vld [vmem:[%s224 + $0x14] sm:$0xf]
  %v231 = vld [vmem:[%s224 + $0x18] sm:$0xf]
  %v232 = vld [vmem:[%s224 + $0x1c] sm:$0xf]
  %v233 = vunpack.c.l.bf16 %v225
  %v234 = vunpack.c.l.bf16 %v226
  %v235 = vunpack.c.l.bf16 %v227
  %v236 = vunpack.c.l.bf16 %v228
  %v237 = vunpack.c.l.bf16 %v229
  %v238 = vunpack.c.l.bf16 %v230
  %v239 = vunpack.c.l.bf16 %v231
  %v240 = vunpack.c.l.bf16 %v232
  %v242 = vsel %vm35, %v223, 0
  %244 = vmatprep.subr.mxu0 0.0
  %245 = vmatpush1.msra.mxu0 %v233
  %246 = vmatprep.subr.mxu0 0.0
  %247 = vmatpush1.msra.mxu0 %v234
  %248 = vmatprep.subr.mxu0 0.0
  %249 = vmatpush1.msra.mxu0 %v235
  %250 = vmatprep.subr.mxu0 0.0
  %251 = vmatpush1.msra.mxu0 %v236
  %252 = vmatprep.subr.mxu0 0.0
  %253 = vmatpush1.msra.mxu0 %v237
  %254 = vmatprep.subr.mxu0 0.0
  %255 = vmatpush1.msra.mxu0 %v238
  %256 = vmatprep.subr.mxu0 0.0
  %257 = vmatpush1.msra.mxu0 %v239
  %258 = vmatprep.subr.mxu0 0.0
  %259 = vmatpush1.msra.mxu0 %v240
  %260 = vmatprep.subr.mxu0 0.0
  %261 = vmatpush1.msra.mxu0 0.0
  %262 = vmatprep.subr.mxu0 0.0
  %263 = vmatpush1.msra.mxu0 0.0
  %264 = vmatprep.subr.mxu0 0.0
  %265 = vmatpush1.msra.mxu0 0.0
  %266 = vmatprep.subr.mxu0 0.0
  %267 = vmatpush1.msra.mxu0 0.0
  %268 = vmatprep.subr.mxu0 0.0
  %269 = vmatpush1.msra.mxu0 0.0
  %270 = vmatprep.subr.mxu0 0.0
  %271 = vmatpush1.msra.mxu0 0.0
  %272 = vmatprep.subr.mxu0 0.0
  %273 = vmatpush1.msra.mxu0 0.0
  %274 = vmatprep.subr.mxu0 0.0
  %275 = vmatpush1.msra.mxu0 0.0
  %276 = vmatprep.subr.mxu0 0.0
  %277 = vmatpush1.msra.mxu0 0.0
  %278 = vmatprep.subr.mxu0 0.0
  %279 = vmatpush1.msra.mxu0 0.0
  %280 = vmatprep.subr.mxu0 0.0
  %281 = vmatpush1.msra.mxu0 0.0
  %282 = vmatprep.subr.mxu0 0.0
  %283 = vmatpush1.msra.mxu0 0.0
  %284 = vmatprep.subr.mxu0 0.0
  %285 = vmatpush1.msra.mxu0 0.0
  %286 = vmatprep.subr.mxu0 0.0
  %287 = vmatpush1.msra.mxu0 0.0
  %288 = vmatprep.subr.mxu0 0.0
  %289 = vmatpush1.msra.mxu0 0.0
  %290 = vmatprep.subr.mxu0 0.0
  %291 = vmatpush1.msra.mxu0 0.0
  %292 = vmatprep.subr.mxu0 0.0
  %293 = vmatpush1.msra.mxu0 0.0
  %294 = vmatprep.subr.mxu0 0.0
  %295 = vmatpush1.msra.mxu0 0.0
  %296 = vmatprep.subr.mxu0 0.0
  %297 = vmatpush1.msra.mxu0 0.0
  %298 = vmatprep.subr.mxu0 0.0
  %299 = vmatpush1.msra.mxu0 0.0
  %300 = vmatprep.subr.mxu0 0.0
  %301 = vmatpush1.msra.mxu0 0.0
  %302 = vmatprep.subr.mxu0 0.0
  %303 = vmatpush1.msra.mxu0 0.0
  %304 = vmatprep.subr.mxu0 0.0
  %305 = vmatpush1.msra.mxu0 0.0
  %306 = vmatprep.subr.mxu0 0.0
  %307 = vmatpush1.msra.mxu0 0.0
  %308 = vmatprep.mubr.f32.mxu0 0.0
  %309 = vmatmul.mubr.f32.gmra.mrb[0].mxu0 %v242
  %v310 = vpop.f32.mrb[0].mxu0
  %v311 = vadd.f32 0.0, %v310
  %v312 = vpop.f32.mrb[0].mxu0
  %313 = vdwg.mxu0
  %v314 = vpack.c.bf16 %v311, %v311
  %s315 = scalar_lea.vmem %s4, 8
  %316 = vst [vmem:[%s315] sm:$0xf] %v314
  %317 = vadd.xlane.f32.xlu0 %v311
  %v318 = vpop.xlane.xlu0 %317
  %v319 = vadd.f32 %v216, %v318
  %v320 = vmul.f32 %v311, %v311
  %321 = vadd.xlane.f32.xlu0 %v320
  %v322 = vpop.xlane.xlu0 %321
  %v323 = vadd.f32 %v220, %v322
  %s324 = scalar_lea.vmem %s1, 12
  %v325 = vld [vmem:[%s324] sm:$0xf]
  %v326 = vunpack.c.l.bf16 %v325
  %s327 = scalar_lea.vmem %s0, 96
  %v328 = vld [vmem:[%s327] sm:$0xf]
  %v329 = vld [vmem:[%s327 + $0x4] sm:$0xf]
  %v330 = vld [vmem:[%s327 + $0x8] sm:$0xf]
  %v331 = vld [vmem:[%s327 + $0xc] sm:$0xf]
  %v332 = vld [vmem:[%s327 + $0x10] sm:$0xf]
  %v333 = vld [vmem:[%s327 + $0x14] sm:$0xf]
  %v334 = vld [vmem:[%s327 + $0x18] sm:$0xf]
  %v335 = vld [vmem:[%s327 + $0x1c] sm:$0xf]
  %v336 = vunpack.c.l.bf16 %v328
  %v337 = vunpack.c.l.bf16 %v329
  %v338 = vunpack.c.l.bf16 %v330
  %v339 = vunpack.c.l.bf16 %v331
  %v340 = vunpack.c.l.bf16 %v332
  %v341 = vunpack.c.l.bf16 %v333
  %v342 = vunpack.c.l.bf16 %v334
  %v343 = vunpack.c.l.bf16 %v335
  %v345 = vsel %vm35, %v326, 0
  %347 = vmatprep.subr.mxu0 0.0
  %348 = vmatpush1.msra.mxu0 %v336
  %349 = vmatprep.subr.mxu0 0.0
  %350 = vmatpush1.msra.mxu0 %v337
  %351 = vmatprep.subr.mxu0 0.0
  %352 = vmatpush1.msra.mxu0 %v338
  %353 = vmatprep.subr.mxu0 0.0
  %354 = vmatpush1.msra.mxu0 %v339
  %355 = vmatprep.subr.mxu0 0.0
  %356 = vmatpush1.msra.mxu0 %v340
  %357 = vmatprep.subr.mxu0 0.0
  %358 = vmatpush1.msra.mxu0 %v341
  %359 = vmatprep.subr.mxu0 0.0
  %360 = vmatpush1.msra.mxu0 %v342
  %361 = vmatprep.subr.mxu0 0.0
  %362 = vmatpush1.msra.mxu0 %v343
  %363 = vmatprep.subr.mxu0 0.0
  %364 = vmatpush1.msra.mxu0 0.0
  %365 = vmatprep.subr.mxu0 0.0
  %366 = vmatpush1.msra.mxu0 0.0
  %367 = vmatprep.subr.mxu0 0.0
  %368 = vmatpush1.msra.mxu0 0.0
  %369 = vmatprep.subr.mxu0 0.0
  %370 = vmatpush1.msra.mxu0 0.0
  %371 = vmatprep.subr.mxu0 0.0
  %372 = vmatpush1.msra.mxu0 0.0
  %373 = vmatprep.subr.mxu0 0.0
  %374 = vmatpush1.msra.mxu0 0.0
  %375 = vmatprep.subr.mxu0 0.0
  %376 = vmatpush1.msra.mxu0 0.0
  %377 = vmatprep.subr.mxu0 0.0
  %378 = vmatpush1.msra.mxu0 0.0
  %379 = vmatprep.subr.mxu0 0.0
  %380 = vmatpush1.msra.mxu0 0.0
  %381 = vmatprep.subr.mxu0 0.0
  %382 = vmatpush1.msra.mxu0 0.0
  %383 = vmatprep.subr.mxu0 0.0
  %384 = vmatpush1.msra.mxu0 0.0
  %385 = vmatprep.subr.mxu0 0.0
  %386 = vmatpush1.msra.mxu0 0.0
  %387 = vmatprep.subr.mxu0 0.0
  %388 = vmatpush1.msra.mxu0 0.0
  %389 = vmatprep.subr.mxu0 0.0
  %390 = vmatpush1.msra.mxu0 0.0
  %391 = vmatprep.subr.mxu0 0.0
  %392 = vmatpush1.msra.mxu0 0.0
  %393 = vmatprep.subr.mxu0 0.0
  %394 = vmatpush1.msra.mxu0 0.0
  %395 = vmatprep.subr.mxu0 0.0
  %396 = vmatpush1.msra.mxu0 0.0
  %397 = vmatprep.subr.mxu0 0.0
  %398 = vmatpush1.msra.mxu0 0.0
  %399 = vmatprep.subr.mxu0 0.0
  %400 = vmatpush1.msra.mxu0 0.0
  %401 = vmatprep.subr.mxu0 0.0
  %402 = vmatpush1.msra.mxu0 0.0
  %403 = vmatprep.subr.mxu0 0.0
  %404 = vmatpush1.msra.mxu0 0.0
  %405 = vmatprep.subr.mxu0 0.0
  %406 = vmatpush1.msra.mxu0 0.0
  %407 = vmatprep.subr.mxu0 0.0
  %408 = vmatpush1.msra.mxu0 0.0
  %409 = vmatprep.subr.mxu0 0.0
  %410 = vmatpush1.msra.mxu0 0.0
  %411 = vmatprep.mubr.f32.mxu0 0.0
  %412 = vmatmul.mubr.f32.gmra.mrb[0].mxu0 %v345
  %v413 = vpop.f32.mrb[0].mxu0
  %v414 = vadd.f32 0.0, %v413
  %v415 = vpop.f32.mrb[0].mxu0
  %416 = vdwg.mxu0
  %v417 = vpack.c.bf16 %v414, %v414
  %s418 = scalar_lea.vmem %s4, 12
  %419 = vst [vmem:[%s418] sm:$0xf] %v417
  %420 = vadd.xlane.f32.xlu0 %v414
  %v421 = vpop.xlane.xlu0 %420
  %v422 = vadd.f32 %v319, %v421
  %v423 = vmul.f32 %v414, %v414
  %424 = vadd.xlane.f32.xlu0 %v423
  %v425 = vpop.xlane.xlu0 %424
  %v426 = vadd.f32 %v323, %v425
  %v427 = vmul.f32 %v422, 0.001953125
  %v428 = vmul.f32 %v426, 0.001953125
  %v429 = vmul.f32 %v427, %v427
  %v430 = vsub.f32 %v428, %v429
  %v431 = vadd.f32 %v430, 1e-05
  %v432 = vrsqrt.pop %v431
  %v433 = vld [vmem:[%s2] sm:$0xff]
  %v434 = vmul.f32 %v432, %v433
  %v435 = vld [vmem:[%s3] sm:$0xff]
  %v436 = vmul.f32 %v427, %v434
  %v437 = vsub.f32 %v435, %v436
  %v438 = vld [vmem:[%s4] sm:$0xf]
  %v439 = vunpack.c.l.bf16 %v438
  %441 = vset.pattern.permute.xlu0 0
  %442 = vperm.xlu0 %441, %v434
  %v443 = vpop.permute.xlu0 %442
  %v445 = vmul.f32 %v439, %v443
  %447 = vset.pattern.permute.xlu0 0
  %448 = vperm.xlu0 %447, %v437
  %v449 = vpop.permute.xlu0 %448
  %v451 = vadd.f32 %v445, %v449
  %v452 = vmax.f32 %v451, 0.0
  %v453 = vpack.c.bf16 %v452, %v452
  %454 = vst [vmem:[%s4] sm:$0xf] %v453
  %v455 = vld [vmem:[%s212] sm:$0xf]
  %v456 = vunpack.c.l.bf16 %v455
  %v457 = vmul.f32 %v456, %v443
  %v458 = vadd.f32 %v457, %v449
  %v459 = vmax.f32 %v458, 0.0
  %v460 = vpack.c.bf16 %v459, %v459
  %461 = vst [vmem:[%s212] sm:$0xf] %v460
  %v462 = vld [vmem:[%s315] sm:$0xf]
  %v463 = vunpack.c.l.bf16 %v462
  %v464 = vmul.f32 %v463, %v443
  %v465 = vadd.f32 %v464, %v449
  %v466 = vmax.f32 %v465, 0.0
  %v467 = vpack.c.bf16 %v466, %v466
  %468 = vst [vmem:[%s315] sm:$0xf] %v467
  %v469 = vld [vmem:[%s418] sm:$0xf]
  %v470 = vunpack.c.l.bf16 %v469
  %v471 = vmul.f32 %v470, %v443
  %v472 = vadd.f32 %v471, %v449
  %v473 = vmax.f32 %v472, 0.0
  %v474 = vpack.c.bf16 %v473, %v473
  %475 = vst [vmem:[%s418] sm:$0xf] %v474
  // Predicated region
  $region18: #{generator_forward.7} parent=0 // pred_check
    _
  $region19: #{generator_forward.7} parent=0 // pred_check_branch
    %477 = sbr.rel (0) target = $region21
  $region20: #{generator_forward.7} parent=0 // pred_region
    _
  $region21: #{generator_forward.7} parent=0 // pred_fallthru
    _
  // Predicated region
  $region22: #{generator_forward.7} parent=0 // pred_check
    _
  $region23: #{generator_forward.7} parent=0 // pred_check_branch
    %479 = sbr.rel (0) target = $region25
  $region24: #{generator_forward.7} parent=0 // pred_region
    _
  $region25: #{generator_forward.7} parent=0 // pred_fallthru
    _

// kernel: generator_forward.8
$region0: #{generator_forward.8}
  #allocation0 [shape = 'u32[]', space=smem, size = 0x4, offset = 0x4, fixed_abs, tag = 'smem constant byte address 0x4 - core index']
  #allocation1 [shape = 'u32[144,128]{1,0:T(1,128)}', space=vmem, size = 0x12000, scoped, tag = 'internal scratch']
  %s0 = inlined_call_operand.vmem [shape: bf16[4,32,512], index: 0, kind: input, shape index: {}]
  %s1 = inlined_call_operand.vmem [shape: bf16[4,4,32], index: 1, kind: input, shape index: {}]
  %s2 = inlined_call_operand.vmem [shape: f32[4,1], index: 2, kind: input, shape index: {}]
  %s3 = inlined_call_operand.vmem [shape: f32[4,1], index: 3, kind: input, shape index: {}]
  %s4 = inlined_call_operand.vmem [shape: bf16[4,4,512], index: 4, kind: output, shape index: {}]
  %s5 = sld [smem:[#allocation0]]
  $region26: #{generator_forward.8} parent=0
    _
  %s7 = ssub.s32 1, %s5
  %s8 = scalar_select 0, %s7, %s5
  // Predicated region
  $region2: #{generator_forward.8} parent=0 // pred_check
    _
  $region3: #{generator_forward.8} parent=0 // pred_check_branch
    %10 = sbr.rel (0) target = $region5
  $region4: #{generator_forward.8} parent=0 // pred_region
    _
  $region5: #{generator_forward.8} parent=0 // pred_fallthru
    _
  // Predicated region
  $region6: #{generator_forward.8} parent=0 // pred_check
    _
  $region7: #{generator_forward.8} parent=0 // pred_check_branch
    %12 = sbr.rel (0) target = $region9
  $region8: #{generator_forward.8} parent=0 // pred_region
    _
  $region9: #{generator_forward.8} parent=0 // pred_fallthru
    _
  // Predicated region
  $region10: #{generator_forward.8} parent=0 // pred_check
    _
  $region11: #{generator_forward.8} parent=0 // pred_check_branch
    %14 = sbr.rel (0) target = $region13
  $region12: #{generator_forward.8} parent=0 // pred_region
    _
  $region13: #{generator_forward.8} parent=0 // pred_fallthru
    _
  // Predicated region
  $region14: #{generator_forward.8} parent=0 // pred_check
    _
  $region15: #{generator_forward.8} parent=0 // pred_check_branch
    %16 = sbr.rel (0) target = $region17
  $region16: #{generator_forward.8} parent=0 // pred_region
    _
  $region17: #{generator_forward.8} parent=0 // pred_fallthru
    _
  %v17 = vld [vmem:[%s1] sm:$0x3]
  %v18 = vunpack.c.l.bf16 %v17
  %v19 = vld [vmem:[%s0] sm:$0xff]
  %v20 = vld [vmem:[%s0 + $0x8] sm:$0xff]
  %v21 = vld [vmem:[%s0 + $0x10] sm:$0xff]
  %v22 = vld [vmem:[%s0 + $0x18] sm:$0xff]
  %v23 = vld [vmem:[%s0 + $0x20] sm:$0xff]
  %v24 = vld [vmem:[%s0 + $0x28] sm:$0xff]
  %v25 = vld [vmem:[%s0 + $0x30] sm:$0xff]
  %v26 = vld [vmem:[%s0 + $0x38] sm:$0xff]
  %v27 = vunpack.c.l.bf16 %v19
  %v28 = vunpack.c.h.bf16 %v19
  %v29 = vunpack.c.l.bf16 %v20
  %v30 = vunpack.c.h.bf16 %v20
  %v31 = vunpack.c.l.bf16 %v21
  %v32 = vunpack.c.h.bf16 %v21
  %v33 = vunpack.c.l.bf16 %v22
  %v34 = vunpack.c.h.bf16 %v22
  %v35 = vunpack.c.l.bf16 %v23
  %v36 = vunpack.c.h.bf16 %v23
  %v37 = vunpack.c.l.bf16 %v24
  %v38 = vunpack.c.h.bf16 %v24
  %v39 = vunpack.c.l.bf16 %v25
  %v40 = vunpack.c.h.bf16 %v25
  %v41 = vunpack.c.l.bf16 %v26
  %v42 = vunpack.c.h.bf16 %v26
  %vm43 = vcmask 261120
  %v45 = vsel %vm43, %v18, 0
  %47 = vmatprep.subr.mxu0 %v28
  %48 = vmatpush1.msra.mxu0 %v27
  %49 = vmatprep.subr.mxu0 %v32
  %50 = vmatpush1.msra.mxu0 %v31
  %51 = vmatprep.subr.mxu0 %v36
  %52 = vmatpush1.msra.mxu0 %v35
  %53 = vmatprep.subr.mxu0 %v40
  %54 = vmatpush1.msra.mxu0 %v39
  %55 = vmatprep.subr.mxu0 0.0
  %56 = vmatpush1.msra.mxu0 0.0
  %57 = vmatprep.subr.mxu0 0.0
  %58 = vmatpush1.msra.mxu0 0.0
  %59 = vmatprep.subr.mxu0 0.0
  %60 = vmatpush1.msra.mxu0 0.0
  %61 = vmatprep.subr.mxu0 0.0
  %62 = vmatpush1.msra.mxu0 0.0
  %63 = vmatprep.subr.mxu0 0.0
  %64 = vmatpush1.msra.mxu0 0.0
  %65 = vmatprep.subr.mxu0 0.0
  %66 = vmatpush1.msra.mxu0 0.0
  %67 = vmatprep.subr.mxu0 0.0
  %68 = vmatpush1.msra.mxu0 0.0
  %69 = vmatprep.subr.mxu0 0.0
  %70 = vmatpush1.msra.mxu0 0.0
  %71 = vmatprep.subr.mxu0 0.0
  %72 = vmatpush1.msra.mxu0 0.0
  %73 = vmatprep.subr.mxu0 0.0
  %74 = vmatpush1.msra.mxu0 0.0
  %75 = vmatprep.subr.mxu0 0.0
  %76 = vmatpush1.msra.mxu0 0.0
  %77 = vmatprep.subr.mxu0 0.0
  %78 = vmatpush1.msra.mxu0 0.0
  %79 = vmatprep.subr.mxu0 0.0
  %80 = vmatpush1.msra.mxu0 0.0
  %81 = vmatprep.subr.mxu0 0.0
  %82 = vmatpush1.msra.mxu0 0.0
  %83 = vmatprep.subr.mxu0 0.0
  %84 = vmatpush1.msra.mxu0 0.0
  %85 = vmatprep.subr.mxu0 0.0
  %86 = vmatpush1.msra.mxu0 0.0
  %87 = vmatprep.subr.mxu0 0.0
  %88 = vmatpush1.msra.mxu0 0.0
  %89 = vmatprep.subr.mxu0 0.0
  %90 = vmatpush1.msra.mxu0 0.0
  %91 = vmatprep.subr.mxu0 0.0
  %92 = vmatpush1.msra.mxu0 0.0
  %93 = vmatprep.subr.mxu0 0.0
  %94 = vmatpush1.msra.mxu0 0.0
  %95 = vmatprep.subr.mxu0 0.0
  %96 = vmatpush1.msra.mxu0 0.0
  %97 = vmatprep.subr.mxu0 0.0
  %98 = vmatpush1.msra.mxu0 0.0
  %99 = vmatprep.subr.mxu0 0.0
  %100 = vmatpush1.msra.mxu0 0.0
  %101 = vmatprep.subr.mxu0 0.0
  %102 = vmatpush1.msra.mxu0 0.0
  %103 = vmatprep.subr.mxu0 0.0
  %104 = vmatpush1.msra.mxu0 0.0
  %105 = vmatprep.subr.mxu0 0.0
  %106 = vmatpush1.msra.mxu0 0.0
  %107 = vmatprep.subr.mxu0 0.0
  %108 = vmatpush1.msra.mxu0 0.0
  %109 = vmatprep.subr.mxu0 0.0
  %110 = vmatpush1.msra.mxu0 0.0
  %111 = vmatprep.mubr.f32.mxu0 0.0
  %112 = vmatmul.mubr.f32.gmra.mrb[0].mxu0 %v45
  %v113 = vpop.f32.mrb[0].mxu0
  %v114 = vadd.f32 0.0, %v113
  %v115 = vpop.f32.mrb[0].mxu0
  %v116 = vadd.f32 0.0, %v115
  %117 = vdwg.mxu0
  %118 = vmatprep.subr.mxu0 %v30
  %119 = vmatpush1.msra.mxu0 %v29
  %120 = vmatprep.subr.mxu0 %v34
  %121 = vmatpush1.msra.mxu0 %v33
  %122 = vmatprep.subr.mxu0 %v38
  %123 = vmatpush1.msra.mxu0 %v37
  %124 = vmatprep.subr.mxu0 %v42
  %125 = vmatpush1.msra.mxu0 %v41
  %126 = vmatprep.subr.mxu0 0.0
  %127 = vmatpush1.msra.mxu0 0.0
  %128 = vmatprep.subr.mxu0 0.0
  %129 = vmatpush1.msra.mxu0 0.0
  %130 = vmatprep.subr.mxu0 0.0
  %131 = vmatpush1.msra.mxu0 0.0
  %132 = vmatprep.subr.mxu0 0.0
  %133 = vmatpush1.msra.mxu0 0.0
  %134 = vmatprep.subr.mxu0 0.0
  %135 = vmatpush1.msra.mxu0 0.0
  %136 = vmatprep.subr.mxu0 0.0
  %137 = vmatpush1.msra.mxu0 0.0
  %138 = vmatprep.subr.mxu0 0.0
  %139 = vmatpush1.msra.mxu0 0.0
  %140 = vmatprep.subr.mxu0 0.0
  %141 = vmatpush1.msra.mxu0 0.0
  %142 = vmatprep.subr.mxu0 0.0
  %143 = vmatpush1.msra.mxu0 0.0
  %144 = vmatprep.subr.mxu0 0.0
  %145 = vmatpush1.msra.mxu0 0.0
  %146 = vmatprep.subr.mxu0 0.0
  %147 = vmatpush1.msra.mxu0 0.0
  %148 = vmatprep.subr.mxu0 0.0
  %149 = vmatpush1.msra.mxu0 0.0
  %150 = vmatprep.subr.mxu0 0.0
  %151 = vmatpush1.msra.mxu0 0.0
  %152 = vmatprep.subr.mxu0 0.0
  %153 = vmatpush1.msra.mxu0 0.0
  %154 = vmatprep.subr.mxu0 0.0
  %155 = vmatpush1.msra.mxu0 0.0
  %156 = vmatprep.subr.mxu0 0.0
  %157 = vmatpush1.msra.mxu0 0.0
  %158 = vmatprep.subr.mxu0 0.0
  %159 = vmatpush1.msra.mxu0 0.0
  %160 = vmatprep.subr.mxu0 0.0
  %161 = vmatpush1.msra.mxu0 0.0
  %162 = vmatprep.subr.mxu0 0.0
  %163 = vmatpush1.msra.mxu0 0.0
  %164 = vmatprep.subr.mxu0 0.0
  %165 = vmatpush1.msra.mxu0 0.0
  %166 = vmatprep.subr.mxu0 0.0
  %167 = vmatpush1.msra.mxu0 0.0
  %168 = vmatprep.subr.mxu0 0.0
  %169 = vmatpush1.msra.mxu0 0.0
  %170 = vmatprep.subr.mxu0 0.0
  %171 = vmatpush1.msra.mxu0 0.0
  %172 = vmatprep.subr.mxu0 0.0
  %173 = vmatpush1.msra.mxu0 0.0
  %174 = vmatprep.subr.mxu0 0.0
  %175 = vmatpush1.msra.mxu0 0.0
  %176 = vmatprep.subr.mxu0 0.0
  %177 = vmatpush1.msra.mxu0 0.0
  %178 = vmatprep.subr.mxu0 0.0
  %179 = vmatpush1.msra.mxu0 0.0
  %180 = vmatprep.subr.mxu0 0.0
  %181 = vmatpush1.msra.mxu0 0.0
  %182 = vmatprep.mubr.f32.mxu0 0.0
  %183 = vmatmul.mubr.f32.gmra.mrb[0].mxu0 %v45
  %v184 = vpop.f32.mrb[0].mxu0
  %v185 = vadd.f32 0.0, %v184
  %v186 = vpop.f32.mrb[0].mxu0
  %v187 = vadd.f32 0.0, %v186
  %188 = vdwg.mxu0
  %v189 = vpack.c.bf16 %v114, %v114
  %v190 = vpack.c.bf16 %v116, %v116
  %v191 = vpack.c.bf16 %v185, %v185
  %v192 = vpack.c.bf16 %v187, %v187
  %v197 = vcombine.low %v189, %v190
  %v198 = vcombine.low %v191, %v192
  %v200 = vunpack.c.l.s4 1983009808
  %v201 = vunpack.c.0.s8 %v200
  %v202 = vlaneseq
  %v203 = vshrl.u32 %v202, 7
  %v204 = vsub.s32 %v201, %v203
  %v205 = vrot.slane %v197, %v204
  %v207 = vunpack.c.l.s4 1983009808
  %v208 = vunpack.c.0.s8 %v207
  %v209 = vlaneseq
  %v210 = vshrl.u32 %v209, 7
  %v211 = vsub.s32 %v208, %v210
  %v212 = vrot.slane %v198, %v211
  %v213 = vcombine.low %v205, %v212
  %215 = vst [vmem:[%s4] sm:$0xff] %v213
  %vm216 = vcmask 1043456
  %v217 = vsel %vm216, %v114, 0.0
  %v218 = vsel %vm216, %v116, 0.0
  %v219 = vadd.f32 %v217, %v218
  %v220 = vsel %vm216, %v185, 0.0
  %v221 = vadd.f32 %v219, %v220
  %v222 = vsel %vm216, %v187, 0.0
  %v223 = vadd.f32 %v221, %v222
  %224 = vadd.xlane.f32.xlu0 %v223
  %v225 = vpop.xlane.xlu0 %224
  %v226 = vadd.f32 %v225, 0.0
  %v227 = vmul.f32 %v114, %v114
  %v228 = vmul.f32 %v116, %v116
  %v229 = vmul.f32 %v185, %v185
  %v230 = vmul.f32 %v187, %v187
  %v231 = vsel %vm216, %v227, 0.0
  %v232 = vsel %vm216, %v228, 0.0
  %v233 = vadd.f32 %v231, %v232
  %v234 = vsel %vm216, %v229, 0.0
  %v235 = vadd.f32 %v233, %v234
  %v236 = vsel %vm216, %v230, 0.0
  %v237 = vadd.f32 %v235, %v236
  %238 = vadd.xlane.f32.xlu0 %v237
  %v239 = vpop.xlane.xlu0 %238
  %v240 = vadd.f32 %v239, 0.0
  %s241 = scalar_lea.vmem %s1, 2
  %v242 = vld [vmem:[%s241] sm:$0x3]
  %v243 = vunpack.c.l.bf16 %v242
  %s244 = scalar_lea.vmem %s0, 64
  %v245 = vld [vmem:[%s244] sm:$0xff]
  %v246 = vld [vmem:[%s244 + $0x8] sm:$0xff]
  %v247 = vld [vmem:[%s244 + $0x10] sm:$0xff]
  %v248 = vld [vmem:[%s244 + $0x18] sm:$0xff]
  %v249 = vld [vmem:[%s244 + $0x20] sm:$0xff]
  %v250 = vld [vmem:[%s244 + $0x28] sm:$0xff]
  %v251 = vld [vmem:[%s244 + $0x30] sm:$0xff]
  %v252 = vld [vmem:[%s244 + $0x38] sm:$0xff]
  %v253 = vunpack.c.l.bf16 %v245
  %v254 = vunpack.c.h.bf16 %v245
  %v255 = vunpack.c.l.bf16 %v246
  %v256 = vunpack.c.h.bf16 %v246
  %v257 = vunpack.c.l.bf16 %v247
  %v258 = vunpack.c.h.bf16 %v247
  %v259 = vunpack.c.l.bf16 %v248
  %v260 = vunpack.c.h.bf16 %v248
  %v261 = vunpack.c.l.bf16 %v249
  %v262 = vunpack.c.h.bf16 %v249
  %v263 = vunpack.c.l.bf16 %v250
  %v264 = vunpack.c.h.bf16 %v250
  %v265 = vunpack.c.l.bf16 %v251
  %v266 = vunpack.c.h.bf16 %v251
  %v267 = vunpack.c.l.bf16 %v252
  %v268 = vunpack.c.h.bf16 %v252
  %v270 = vsel %vm43, %v243, 0
  %272 = vmatprep.subr.mxu0 %v254
  %273 = vmatpush1.msra.mxu0 %v253
  %274 = vmatprep.subr.mxu0 %v258
  %275 = vmatpush1.msra.mxu0 %v257
  %276 = vmatprep.subr.mxu0 %v262
  %277 = vmatpush1.msra.mxu0 %v261
  %278 = vmatprep.subr.mxu0 %v266
  %279 = vmatpush1.msra.mxu0 %v265
  %280 = vmatprep.subr.mxu0 0.0
  %281 = vmatpush1.msra.mxu0 0.0
  %282 = vmatprep.subr.mxu0 0.0
  %283 = vmatpush1.msra.mxu0 0.0
  %284 = vmatprep.subr.mxu0 0.0
  %285 = vmatpush1.msra.mxu0 0.0
  %286 = vmatprep.subr.mxu0 0.0
  %287 = vmatpush1.msra.mxu0 0.0
  %288 = vmatprep.subr.mxu0 0.0
  %289 = vmatpush1.msra.mxu0 0.0
  %290 = vmatprep.subr.mxu0 0.0
  %291 = vmatpush1.msra.mxu0 0.0
  %292 = vmatprep.subr.mxu0 0.0
  %293 = vmatpush1.msra.mxu0 0.0
  %294 = vmatprep.subr.mxu0 0.0
  %295 = vmatpush1.msra.mxu0 0.0
  %296 = vmatprep.subr.mxu0 0.0
  %297 = vmatpush1.msra.mxu0 0.0
  %298 = vmatprep.subr.mxu0 0.0
  %299 = vmatpush1.msra.mxu0 0.0
  %300 = vmatprep.subr.mxu0 0.0
  %301 = vmatpush1.msra.mxu0 0.0
  %302 = vmatprep.subr.mxu0 0.0
  %303 = vmatpush1.msra.mxu0 0.0
  %304 = vmatprep.subr.mxu0 0.0
  %305 = vmatpush1.msra.mxu0 0.0
  %306 = vmatprep.subr.mxu0 0.0
  %307 = vmatpush1.msra.mxu0 0.0
  %308 = vmatprep.subr.mxu0 0.0
  %309 = vmatpush1.msra.mxu0 0.0
  %310 = vmatprep.subr.mxu0 0.0
  %311 = vmatpush1.msra.mxu0 0.0
  %312 = vmatprep.subr.mxu0 0.0
  %313 = vmatpush1.msra.mxu0 0.0
  %314 = vmatprep.subr.mxu0 0.0
  %315 = vmatpush1.msra.mxu0 0.0
  %316 = vmatprep.subr.mxu0 0.0
  %317 = vmatpush1.msra.mxu0 0.0
  %318 = vmatprep.subr.mxu0 0.0
  %319 = vmatpush1.msra.mxu0 0.0
  %320 = vmatprep.subr.mxu0 0.0
  %321 = vmatpush1.msra.mxu0 0.0
  %322 = vmatprep.subr.mxu0 0.0
  %323 = vmatpush1.msra.mxu0 0.0
  %324 = vmatprep.subr.mxu0 0.0
  %325 = vmatpush1.msra.mxu0 0.0
  %326 = vmatprep.subr.mxu0 0.0
  %327 = vmatpush1.msra.mxu0 0.0
  %328 = vmatprep.subr.mxu0 0.0
  %329 = vmatpush1.msra.mxu0 0.0
  %330 = vmatprep.subr.mxu0 0.0
  %331 = vmatpush1.msra.mxu0 0.0
  %332 = vmatprep.subr.mxu0 0.0
  %333 = vmatpush1.msra.mxu0 0.0
  %334 = vmatprep.subr.mxu0 0.0
  %335 = vmatpush1.msra.mxu0 0.0
  %336 = vmatprep.mubr.f32.mxu0 0.0
  %337 = vmatmul.mubr.f32.gmra.mrb[0].mxu0 %v270
  %v338 = vpop.f32.mrb[0].mxu0
  %v339 = vadd.f32 0.0, %v338
  %v340 = vpop.f32.mrb[0].mxu0
  %v341 = vadd.f32 0.0, %v340
  %342 = vdwg.mxu0
  %343 = vmatprep.subr.mxu0 %v256
  %344 = vmatpush1.msra.mxu0 %v255
  %345 = vmatprep.subr.mxu0 %v260
  %346 = vmatpush1.msra.mxu0 %v259
  %347 = vmatprep.subr.mxu0 %v264
  %348 = vmatpush1.msra.mxu0 %v263
  %349 = vmatprep.subr.mxu0 %v268
  %350 = vmatpush1.msra.mxu0 %v267
  %351 = vmatprep.subr.mxu0 0.0
  %352 = vmatpush1.msra.mxu0 0.0
  %353 = vmatprep.subr.mxu0 0.0
  %354 = vmatpush1.msra.mxu0 0.0
  %355 = vmatprep.subr.mxu0 0.0
  %356 = vmatpush1.msra.mxu0 0.0
  %357 = vmatprep.subr.mxu0 0.0
  %358 = vmatpush1.msra.mxu0 0.0
  %359 = vmatprep.subr.mxu0 0.0
  %360 = vmatpush1.msra.mxu0 0.0
  %361 = vmatprep.subr.mxu0 0.0
  %362 = vmatpush1.msra.mxu0 0.0
  %363 = vmatprep.subr.mxu0 0.0
  %364 = vmatpush1.msra.mxu0 0.0
  %365 = vmatprep.subr.mxu0 0.0
  %366 = vmatpush1.msra.mxu0 0.0
  %367 = vmatprep.subr.mxu0 0.0
  %368 = vmatpush1.msra.mxu0 0.0
  %369 = vmatprep.subr.mxu0 0.0
  %370 = vmatpush1.msra.mxu0 0.0
  %371 = vmatprep.subr.mxu0 0.0
  %372 = vmatpush1.msra.mxu0 0.0
  %373 = vmatprep.subr.mxu0 0.0
  %374 = vmatpush1.msra.mxu0 0.0
  %375 = vmatprep.subr.mxu0 0.0
  %376 = vmatpush1.msra.mxu0 0.0
  %377 = vmatprep.subr.mxu0 0.0
  %378 = vmatpush1.msra.mxu0 0.0
  %379 = vmatprep.subr.mxu0 0.0
  %380 = vmatpush1.msra.mxu0 0.0
  %381 = vmatprep.subr.mxu0 0.0
  %382 = vmatpush1.msra.mxu0 0.0
  %383 = vmatprep.subr.mxu0 0.0
  %384 = vmatpush1.msra.mxu0 0.0
  %385 = vmatprep.subr.mxu0 0.0
  %386 = vmatpush1.msra.mxu0 0.0
  %387 = vmatprep.subr.mxu0 0.0
  %388 = vmatpush1.msra.mxu0 0.0
  %389 = vmatprep.subr.mxu0 0.0
  %390 = vmatpush1.msra.mxu0 0.0
  %391 = vmatprep.subr.mxu0 0.0
  %392 = vmatpush1.msra.mxu0 0.0
  %393 = vmatprep.subr.mxu0 0.0
  %394 = vmatpush1.msra.mxu0 0.0
  %395 = vmatprep.subr.mxu0 0.0
  %396 = vmatpush1.msra.mxu0 0.0
  %397 = vmatprep.subr.mxu0 0.0
  %398 = vmatpush1.msra.mxu0 0.0
  %399 = vmatprep.subr.mxu0 0.0
  %400 = vmatpush1.msra.mxu0 0.0
  %401 = vmatprep.subr.mxu0 0.0
  %402 = vmatpush1.msra.mxu0 0.0
  %403 = vmatprep.subr.mxu0 0.0
  %404 = vmatpush1.msra.mxu0 0.0
  %405 = vmatprep.subr.mxu0 0.0
  %406 = vmatpush1.msra.mxu0 0.0
  %407 = vmatprep.mubr.f32.mxu0 0.0
  %408 = vmatmul.mubr.f32.gmra.mrb[0].mxu0 %v270
  %v409 = vpop.f32.mrb[0].mxu0
  %v410 = vadd.f32 0.0, %v409
  %v411 = vpop.f32.mrb[0].mxu0
  %v412 = vadd.f32 0.0, %v411
  %413 = vdwg.mxu0
  %v414 = vpack.c.bf16 %v339, %v339
  %v415 = vpack.c.bf16 %v341, %v341
  %v416 = vpack.c.bf16 %v410, %v410
  %v417 = vpack.c.bf16 %v412, %v412
  %v422 = vcombine.low %v414, %v415
  %v423 = vcombine.low %v416, %v417
  %v425 = vunpack.c.l.s4 1983009808
  %v426 = vunpack.c.0.s8 %v425
  %v427 = vlaneseq
  %v428 = vshrl.u32 %v427, 7
  %v429 = vsub.s32 %v426, %v428
  %v430 = vrot.slane %v422, %v429
  %v432 = vunpack.c.l.s4 1983009808
  %v433 = vunpack.c.0.s8 %v432
  %v434 = vlaneseq
  %v435 = vshrl.u32 %v434, 7
  %v436 = vsub.s32 %v433, %v435
  %v437 = vrot.slane %v423, %v436
  %v438 = vcombine.low %v430, %v437
  %s440 = scalar_lea.vmem %s4, 8
  %441 = vst [vmem:[%s440] sm:$0xff] %v438
  %v442 = vsel %vm216, %v339, 0.0
  %v443 = vsel %vm216, %v341, 0.0
  %v444 = vadd.f32 %v442, %v443
  %v445 = vsel %vm216, %v410, 0.0
  %v446 = vadd.f32 %v444, %v445
  %v447 = vsel %vm216, %v412, 0.0
  %v448 = vadd.f32 %v446, %v447
  %449 = vadd.xlane.f32.xlu0 %v448
  %v450 = vpop.xlane.xlu0 %449
  %v451 = vadd.f32 %v226, %v450
  %v452 = vmul.f32 %v339, %v339
  %v453 = vmul.f32 %v341, %v341
  %v454 = vmul.f32 %v410, %v410
  %v455 = vmul.f32 %v412, %v412
  %v456 = vsel %vm216, %v452, 0.0
  %v457 = vsel %vm216, %v453, 0.0
  %v458 = vadd.f32 %v456, %v457
  %v459 = vsel %vm216, %v454, 0.0
  %v460 = vadd.f32 %v458, %v459
  %v461 = vsel %vm216, %v455, 0.0
  %v462 = vadd.f32 %v460, %v461
  %463 = vadd.xlane.f32.xlu0 %v462
  %v464 = vpop.xlane.xlu0 %463
  %v465 = vadd.f32 %v240, %v464
  %s466 = scalar_lea.vmem %s1, 4
  %v467 = vld [vmem:[%s466] sm:$0x3]
  %v468 = vunpack.c.l.bf16 %v467
  %s469 = scalar_lea.vmem %s0, 128
  %v470 = vld [vmem:[%s469] sm:$0xff]
  %v471 = vld [vmem:[%s469 + $0x8] sm:$0xff]
  %v472 = vld [vmem:[%s469 + $0x10] sm:$0xff]
  %v473 = vld [vmem:[%s469 + $0x18] sm:$0xff]
  %v474 = vld [vmem:[%s469 + $0x20] sm:$0xff]
  %v475 = vld [vmem:[%s469 + $0x28] sm:$0xff]
  %v476 = vld [vmem:[%s469 + $0x30] sm:$0xff]
  %v477 = vld [vmem:[%s469 + $0x38] sm:$0xff]
  %v478 = vunpack.c.l.bf16 %v470
  %v479 = vunpack.c.h.bf16 %v470
  %v480 = vunpack.c.l.bf16 %v471
  %v481 = vunpack.c.h.bf16 %v471
  %v482 = vunpack.c.l.bf16 %v472
  %v483 = vunpack.c.h.bf16 %v472
  %v484 = vunpack.c.l.bf16 %v473
  %v485 = vunpack.c.h.bf16 %v473
  %v486 = vunpack.c.l.bf16 %v474
  %v487 = vunpack.c.h.bf16 %v474
  %v488 = vunpack.c.l.bf16 %v475
  %v489 = vunpack.c.h.bf16 %v475
  %v490 = vunpack.c.l.bf16 %v476
  %v491 = vunpack.c.h.bf16 %v476
  %v492 = vunpack.c.l.bf16 %v477
  %v493 = vunpack.c.h.bf16 %v477
  %v495 = vsel %vm43, %v468, 0
  %497 = vmatprep.subr.mxu0 %v479
  %498 = vmatpush1.msra.mxu0 %v478
  %499 = vmatprep.subr.mxu0 %v483
  %500 = vmatpush1.msra.mxu0 %v482
  %501 = vmatprep.subr.mxu0 %v487
  %502 = vmatpush1.msra.mxu0 %v486
  %503 = vmatprep.subr.mxu0 %v491
  %504 = vmatpush1.msra.mxu0 %v490
  %505 = vmatprep.subr.mxu0 0.0
  %506 = vmatpush1.msra.mxu0 0.0
  %507 = vmatprep.subr.mxu0 0.0
  %508 = vmatpush1.msra.mxu0 0.0
  %509 = vmatprep.subr.mxu0 0.0
  %510 = vmatpush1.msra.mxu0 0.0
  %511 = vmatprep.subr.mxu0 0.0
  %512 = vmatpush1.msra.mxu0 0.0
  %513 = vmatprep.subr.mxu0 0.0
  %514 = vmatpush1.msra.mxu0 0.0
  %515 = vmatprep.subr.mxu0 0.0
  %516 = vmatpush1.msra.mxu0 0.0
  %517 = vmatprep.subr.mxu0 0.0
  %518 = vmatpush1.msra.mxu0 0.0
  %519 = vmatprep.subr.mxu0 0.0
  %520 = vmatpush1.msra.mxu0 0.0
  %521 = vmatprep.subr.mxu0 0.0
  %522 = vmatpush1.msra.mxu0 0.0
  %523 = vmatprep.subr.mxu0 0.0
  %524 = vmatpush1.msra.mxu0 0.0
  %525 = vmatprep.subr.mxu0 0.0
  %526 = vmatpush1.msra.mxu0 0.0
  %527 = vmatprep.subr.mxu0 0.0
  %528 = vmatpush1.msra.mxu0 0.0
  %529 = vmatprep.subr.mxu0 0.0
  %530 = vmatpush1.msra.mxu0 0.0
  %531 = vmatprep.subr.mxu0 0.0
  %532 = vmatpush1.msra.mxu0 0.0
  %533 = vmatprep.subr.mxu0 0.0
  %534 = vmatpush1.msra.mxu0 0.0
  %535 = vmatprep.subr.mxu0 0.0
  %536 = vmatpush1.msra.mxu0 0.0
  %537 = vmatprep.subr.mxu0 0.0
  %538 = vmatpush1.msra.mxu0 0.0
  %539 = vmatprep.subr.mxu0 0.0
  %540 = vmatpush1.msra.mxu0 0.0
  %541 = vmatprep.subr.mxu0 0.0
  %542 = vmatpush1.msra.mxu0 0.0
  %543 = vmatprep.subr.mxu0 0.0
  %544 = vmatpush1.msra.mxu0 0.0
  %545 = vmatprep.subr.mxu0 0.0
  %546 = vmatpush1.msra.mxu0 0.0
  %547 = vmatprep.subr.mxu0 0.0
  %548 = vmatpush1.msra.mxu0 0.0
  %549 = vmatprep.subr.mxu0 0.0
  %550 = vmatpush1.msra.mxu0 0.0
  %551 = vmatprep.subr.mxu0 0.0
  %552 = vmatpush1.msra.mxu0 0.0
  %553 = vmatprep.subr.mxu0 0.0
  %554 = vmatpush1.msra.mxu0 0.0
  %555 = vmatprep.subr.mxu0 0.0
  %556 = vmatpush1.msra.mxu0 0.0
  %557 = vmatprep.subr.mxu0 0.0
  %558 = vmatpush1.msra.mxu0 0.0
  %559 = vmatprep.subr.mxu0 0.0
  %560 = vmatpush1.msra.mxu0 0.0
  %561 = vmatprep.mubr.f32.mxu0 0.0
  %562 = vmatmul.mubr.f32.gmra.mrb[0].mxu0 %v495
  %v563 = vpop.f32.mrb[0].mxu0
  %v564 = vadd.f32 0.0, %v563
  %v565 = vpop.f32.mrb[0].mxu0
  %v566 = vadd.f32 0.0, %v565
  %567 = vdwg.mxu0
  %568 = vmatprep.subr.mxu0 %v481
  %569 = vmatpush1.msra.mxu0 %v480
  %570 = vmatprep.subr.mxu0 %v485
  %571 = vmatpush1.msra.mxu0 %v484
  %572 = vmatprep.subr.mxu0 %v489
  %573 = vmatpush1.msra.mxu0 %v488
  %574 = vmatprep.subr.mxu0 %v493
  %575 = vmatpush1.msra.mxu0 %v492
  %576 = vmatprep.subr.mxu0 0.0
  %577 = vmatpush1.msra.mxu0 0.0
  %578 = vmatprep.subr.mxu0 0.0
  %579 = vmatpush1.msra.mxu0 0.0
  %580 = vmatprep.subr.mxu0 0.0
  %581 = vmatpush1.msra.mxu0 0.0
  %582 = vmatprep.subr.mxu0 0.0
  %583 = vmatpush1.msra.mxu0 0.0
  %584 = vmatprep.subr.mxu0 0.0
  %585 = vmatpush1.msra.mxu0 0.0
  %586 = vmatprep.subr.mxu0 0.0
  %587 = vmatpush1.msra.mxu0 0.0
  %588 = vmatprep.subr.mxu0 0.0
  %589 = vmatpush1.msra.mxu0 0.0
  %590 = vmatprep.subr.mxu0 0.0
  %591 = vmatpush1.msra.mxu0 0.0
  %592 = vmatprep.subr.mxu0 0.0
  %593 = vmatpush1.msra.mxu0 0.0
  %594 = vmatprep.subr.mxu0 0.0
  %595 = vmatpush1.msra.mxu0 0.0
  %596 = vmatprep.subr.mxu0 0.0
  %597 = vmatpush1.msra.mxu0 0.0
  %598 = vmatprep.subr.mxu0 0.0
  %599 = vmatpush1.msra.mxu0 0.0
  %600 = vmatprep.subr.mxu0 0.0
  %601 = vmatpush1.msra.mxu0 0.0
  %602 = vmatprep.subr.mxu0 0.0
  %603 = vmatpush1.msra.mxu0 0.0
  %604 = vmatprep.subr.mxu0 0.0
  %605 = vmatpush1.msra.mxu0 0.0
  %606 = vmatprep.subr.mxu0 0.0
  %607 = vmatpush1.msra.mxu0 0.0
  %608 = vmatprep.subr.mxu0 0.0
  %609 = vmatpush1.msra.mxu0 0.0
  %610 = vmatprep.subr.mxu0 0.0
  %611 = vmatpush1.msra.mxu0 0.0
  %612 = vmatprep.subr.mxu0 0.0
  %613 = vmatpush1.msra.mxu0 0.0
  %614 = vmatprep.subr.mxu0 0.0
  %615 = vmatpush1.msra.mxu0 0.0
  %616 = vmatprep.subr.mxu0 0.0
  %617 = vmatpush1.msra.mxu0 0.0
  %618 = vmatprep.subr.mxu0 0.0
  %619 = vmatpush1.msra.mxu0 0.0
  %620 = vmatprep.subr.mxu0 0.0
  %621 = vmatpush1.msra.mxu0 0.0
  %622 = vmatprep.subr.mxu0 0.0
  %623 = vmatpush1.msra.mxu0 0.0
  %624 = vmatprep.subr.mxu0 0.0
  %625 = vmatpush1.msra.mxu0 0.0
  %626 = vmatprep.subr.mxu0 0.0
  %627 = vmatpush1.msra.mxu0 0.0
  %628 = vmatprep.subr.mxu0 0.0
  %629 = vmatpush1.msra.mxu0 0.0
  %630 = vmatprep.subr.mxu0 0.0
  %631 = vmatpush1.msra.mxu0 0.0
  %632 = vmatprep.mubr.f32.mxu0 0.0
  %633 = vmatmul.mubr.f32.gmra.mrb[0].mxu0 %v495
  %v634 = vpop.f32.mrb[0].mxu0
  %v635 = vadd.f32 0.0, %v634
  %v636 = vpop.f32.mrb[0].mxu0
  %v637 = vadd.f32 0.0, %v636
  %638 = vdwg.mxu0
  %v639 = vpack.c.bf16 %v564, %v564
  %v640 = vpack.c.bf16 %v566, %v566
  %v641 = vpack.c.bf16 %v635, %v635
  %v642 = vpack.c.bf16 %v637, %v637
  %v647 = vcombine.low %v639, %v640
  %v648 = vcombine.low %v641, %v642
  %v650 = vunpack.c.l.s4 1983009808
  %v651 = vunpack.c.0.s8 %v650
  %v652 = vlaneseq
  %v653 = vshrl.u32 %v652, 7
  %v654 = vsub.s32 %v651, %v653
  %v655 = vrot.slane %v647, %v654
  %v657 = vunpack.c.l.s4 1983009808
  %v658 = vunpack.c.0.s8 %v657
  %v659 = vlaneseq
  %v660 = vshrl.u32 %v659, 7
  %v661 = vsub.s32 %v658, %v660
  %v662 = vrot.slane %v648, %v661
  %v663 = vcombine.low %v655, %v662
  %s665 = scalar_lea.vmem %s4, 16
  %666 = vst [vmem:[%s665] sm:$0xff] %v663
  %v667 = vsel %vm216, %v564, 0.0
  %v668 = vsel %vm216, %v566, 0.0
  %v669 = vadd.f32 %v667, %v668
  %v670 = vsel %vm216, %v635, 0.0
  %v671 = vadd.f32 %v669, %v670
  %v672 = vsel %vm216, %v637, 0.0
  %v673 = vadd.f32 %v671, %v672
  %674 = vadd.xlane.f32.xlu0 %v673
  %v675 = vpop.xlane.xlu0 %674
  %v676 = vadd.f32 %v451, %v675
  %v677 = vmul.f32 %v564, %v564
  %v678 = vmul.f32 %v566, %v566
  %v679 = vmul.f32 %v635, %v635
  %v680 = vmul.f32 %v637, %v637
  %v681 = vsel %vm216, %v677, 0.0
  %v682 = vsel %vm216, %v678, 0.0
  %v683 = vadd.f32 %v681, %v682
  %v684 = vsel %vm216, %v679, 0.0
  %v685 = vadd.f32 %v683, %v684
  %v686 = vsel %vm216, %v680, 0.0
  %v687 = vadd.f32 %v685, %v686
  %688 = vadd.xlane.f32.xlu0 %v687
  %v689 = vpop.xlane.xlu0 %688
  %v690 = vadd.f32 %v465, %v689
  %s691 = scalar_lea.vmem %s1, 6
  %v692 = vld [vmem:[%s691] sm:$0x3]
  %v693 = vunpack.c.l.bf16 %v692
  %s694 = scalar_lea.vmem %s0, 192
  %v695 = vld [vmem:[%s694] sm:$0xff]
  %v696 = vld [vmem:[%s694 + $0x8] sm:$0xff]
  %v697 = vld [vmem:[%s694 + $0x10] sm:$0xff]
  %v698 = vld [vmem:[%s694 + $0x18] sm:$0xff]
  %v699 = vld [vmem:[%s694 + $0x20] sm:$0xff]
  %v700 = vld [vmem:[%s694 + $0x28] sm:$0xff]
  %v701 = vld [vmem:[%s694 + $0x30] sm:$0xff]
  %v702 = vld [vmem:[%s694 + $0x38] sm:$0xff]
  %v703 = vunpack.c.l.bf16 %v695
  %v704 = vunpack.c.h.bf16 %v695
  %v705 = vunpack.c.l.bf16 %v696
  %v706 = vunpack.c.h.bf16 %v696
  %v707 = vunpack.c.l.bf16 %v697
  %v708 = vunpack.c.h.bf16 %v697
  %v709 = vunpack.c.l.bf16 %v698
  %v710 = vunpack.c.h.bf16 %v698
  %v711 = vunpack.c.l.bf16 %v699
  %v712 = vunpack.c.h.bf16 %v699
  %v713 = vunpack.c.l.bf16 %v700
  %v714 = vunpack.c.h.bf16 %v700
  %v715 = vunpack.c.l.bf16 %v701
  %v716 = vunpack.c.h.bf16 %v701
  %v717 = vunpack.c.l.bf16 %v702
  %v718 = vunpack.c.h.bf16 %v702
  %v720 = vsel %vm43, %v693, 0
  %722 = vmatprep.subr.mxu0 %v704
  %723 = vmatpush1.msra.mxu0 %v703
  %724 = vmatprep.subr.mxu0 %v708
  %725 = vmatpush1.msra.mxu0 %v707
  %726 = vmatprep.subr.mxu0 %v712
  %727 = vmatpush1.msra.mxu0 %v711
  %728 = vmatprep.subr.mxu0 %v716
  %729 = vmatpush1.msra.mxu0 %v715
  %730 = vmatprep.subr.mxu0 0.0
  %731 = vmatpush1.msra.mxu0 0.0
  %732 = vmatprep.subr.mxu0 0.0
  %733 = vmatpush1.msra.mxu0 0.0
  %734 = vmatprep.subr.mxu0 0.0
  %735 = vmatpush1.msra.mxu0 0.0
  %736 = vmatprep.subr.mxu0 0.0
  %737 = vmatpush1.msra.mxu0 0.0
  %738 = vmatprep.subr.mxu0 0.0
  %739 = vmatpush1.msra.mxu0 0.0
  %740 = vmatprep.subr.mxu0 0.0
  %741 = vmatpush1.msra.mxu0 0.0
  %742 = vmatprep.subr.mxu0 0.0
  %743 = vmatpush1.msra.mxu0 0.0
  %744 = vmatprep.subr.mxu0 0.0
  %745 = vmatpush1.msra.mxu0 0.0
  %746 = vmatprep.subr.mxu0 0.0
  %747 = vmatpush1.msra.mxu0 0.0
  %748 = vmatprep.subr.mxu0 0.0
  %749 = vmatpush1.msra.mxu0 0.0
  %750 = vmatprep.subr.mxu0 0.0
  %751 = vmatpush1.msra.mxu0 0.0
  %752 = vmatprep.subr.mxu0 0.0
  %753 = vmatpush1.msra.mxu0 0.0
  %754 = vmatprep.subr.mxu0 0.0
  %755 = vmatpush1.msra.mxu0 0.0
  %756 = vmatprep.subr.mxu0 0.0
  %757 = vmatpush1.msra.mxu0 0.0
  %758 = vmatprep.subr.mxu0 0.0
  %759 = vmatpush1.msra.mxu0 0.0
  %760 = vmatprep.subr.mxu0 0.0
  %761 = vmatpush1.msra.mxu0 0.0
  %762 = vmatprep.subr.mxu0 0.0
  %763 = vmatpush1.msra.mxu0 0.0
  %764 = vmatprep.subr.mxu0 0.0
  %765 = vmatpush1.msra.mxu0 0.0
  %766 = vmatprep.subr.mxu0 0.0
  %767 = vmatpush1.msra.mxu0 0.0
  %768 = vmatprep.subr.mxu0 0.0
  %769 = vmatpush1.msra.mxu0 0.0
  %770 = vmatprep.subr.mxu0 0.0
  %771 = vmatpush1.msra.mxu0 0.0
  %772 = vmatprep.subr.mxu0 0.0
  %773 = vmatpush1.msra.mxu0 0.0
  %774 = vmatprep.subr.mxu0 0.0
  %775 = vmatpush1.msra.mxu0 0.0
  %776 = vmatprep.subr.mxu0 0.0
  %777 = vmatpush1.msra.mxu0 0.0
  %778 = vmatprep.subr.mxu0 0.0
  %779 = vmatpush1.msra.mxu0 0.0
  %780 = vmatprep.subr.mxu0 0.0
  %781 = vmatpush1.msra.mxu0 0.0
  %782 = vmatprep.subr.mxu0 0.0
  %783 = vmatpush1.msra.mxu0 0.0
  %784 = vmatprep.subr.mxu0 0.0
  %785 = vmatpush1.msra.mxu0 0.0
  %786 = vmatprep.mubr.f32.mxu0 0.0
  %787 = vmatmul.mubr.f32.gmra.mrb[0].mxu0 %v720
  %v788 = vpop.f32.mrb[0].mxu0
  %v789 = vadd.f32 0.0, %v788
  %v790 = vpop.f32.mrb[0].mxu0
  %v791 = vadd.f32 0.0, %v790
  %792 = vdwg.mxu0
  %793 = vmatprep.subr.mxu0 %v706
  %794 = vmatpush1.msra.mxu0 %v705
  %795 = vmatprep.subr.mxu0 %v710
  %796 = vmatpush1.msra.mxu0 %v709
  %797 = vmatprep.subr.mxu0 %v714
  %798 = vmatpush1.msra.mxu0 %v713
  %799 = vmatprep.subr.mxu0 %v718
  %800 = vmatpush1.msra.mxu0 %v717
  %801 = vmatprep.subr.mxu0 0.0
  %802 = vmatpush1.msra.mxu0 0.0
  %803 = vmatprep.subr.mxu0 0.0
  %804 = vmatpush1.msra.mxu0 0.0
  %805 = vmatprep.subr.mxu0 0.0
  %806 = vmatpush1.msra.mxu0 0.0
  %807 = vmatprep.subr.mxu0 0.0
  %808 = vmatpush1.msra.mxu0 0.0
  %809 = vmatprep.subr.mxu0 0.0
  %810 = vmatpush1.msra.mxu0 0.0
  %811 = vmatprep.subr.mxu0 0.0
  %812 = vmatpush1.msra.mxu0 0.0
  %813 = vmatprep.subr.mxu0 0.0
  %814 = vmatpush1.msra.mxu0 0.0
  %815 = vmatprep.subr.mxu0 0.0
  %816 = vmatpush1.msra.mxu0 0.0
  %817 = vmatprep.subr.mxu0 0.0
  %818 = vmatpush1.msra.mxu0 0.0
  %819 = vmatprep.subr.mxu0 0.0
  %820 = vmatpush1.msra.mxu0 0.0
  %821 = vmatprep.subr.mxu0 0.0
  %822 = vmatpush1.msra.mxu0 0.0
  %823 = vmatprep.subr.mxu0 0.0
  %824 = vmatpush1.msra.mxu0 0.0
  %825 = vmatprep.subr.mxu0 0.0
  %826 = vmatpush1.msra.mxu0 0.0
  %827 = vmatprep.subr.mxu0 0.0
  %828 = vmatpush1.msra.mxu0 0.0
  %829 = vmatprep.subr.mxu0 0.0
  %830 = vmatpush1.msra.mxu0 0.0
  %831 = vmatprep.subr.mxu0 0.0
  %832 = vmatpush1.msra.mxu0 0.0
  %833 = vmatprep.subr.mxu0 0.0
  %834 = vmatpush1.msra.mxu0 0.0
  %835 = vmatprep.subr.mxu0 0.0
  %836 = vmatpush1.msra.mxu0 0.0
  %837 = vmatprep.subr.mxu0 0.0
  %838 = vmatpush1.msra.mxu0 0.0
  %839 = vmatprep.subr.mxu0 0.0
  %840 = vmatpush1.msra.mxu0 0.0
  %841 = vmatprep.subr.mxu0 0.0
  %842 = vmatpush1.msra.mxu0 0.0
  %843 = vmatprep.subr.mxu0 0.0
  %844 = vmatpush1.msra.mxu0 0.0
  %845 = vmatprep.subr.mxu0 0.0
  %846 = vmatpush1.msra.mxu0 0.0
  %847 = vmatprep.subr.mxu0 0.0
  %848 = vmatpush1.msra.mxu0 0.0
  %849 = vmatprep.subr.mxu0 0.0
  %850 = vmatpush1.msra.mxu0 0.0
  %851 = vmatprep.subr.mxu0 0.0
  %852 = vmatpush1.msra.mxu0 0.0
  %853 = vmatprep.subr.mxu0 0.0
  %854 = vmatpush1.msra.mxu0 0.0
  %855 = vmatprep.subr.mxu0 0.0
  %856 = vmatpush1.msra.mxu0 0.0
  %857 = vmatprep.mubr.f32.mxu0 0.0
  %858 = vmatmul.mubr.f32.gmra.mrb[0].mxu0 %v720
  %v859 = vpop.f32.mrb[0].mxu0
  %v860 = vadd.f32 0.0, %v859
  %v861 = vpop.f32.mrb[0].mxu0
  %v862 = vadd.f32 0.0, %v861
  %863 = vdwg.mxu0
  %v864 = vpack.c.bf16 %v789, %v789
  %v865 = vpack.c.bf16 %v791, %v791
  %v866 = vpack.c.bf16 %v860, %v860
  %v867 = vpack.c.bf16 %v862, %v862
  %v872 = vcombine.low %v864, %v865
  %v873 = vcombine.low %v866, %v867
  %v875 = vunpack.c.l.s4 1983009808
  %v876 = vunpack.c.0.s8 %v875
  %v877 = vlaneseq
  %v878 = vshrl.u32 %v877, 7
  %v879 = vsub.s32 %v876, %v878
  %v880 = vrot.slane %v872, %v879
  %v882 = vunpack.c.l.s4 1983009808
  %v883 = vunpack.c.0.s8 %v882
  %v884 = vlaneseq
  %v885 = vshrl.u32 %v884, 7
  %v886 = vsub.s32 %v883, %v885
  %v887 = vrot.slane %v873, %v886
  %v888 = vcombine.low %v880, %v887
  %s890 = scalar_lea.vmem %s4, 24
  %891 = vst [vmem:[%s890] sm:$0xff] %v888
  %v892 = vsel %vm216, %v789, 0.0
  %v893 = vsel %vm216, %v791, 0.0
  %v894 = vadd.f32 %v892, %v893
  %v895 = vsel %vm216, %v860, 0.0
  %v896 = vadd.f32 %v894, %v895
  %v897 = vsel %vm216, %v862, 0.0
  %v898 = vadd.f32 %v896, %v897
  %899 = vadd.xlane.f32.xlu0 %v898
  %v900 = vpop.xlane.xlu0 %899
  %v901 = vadd.f32 %v676, %v900
  %v902 = vmul.f32 %v789, %v789
  %v903 = vmul.f32 %v791, %v791
  %v904 = vmul.f32 %v860, %v860
  %v905 = vmul.f32 %v862, %v862
  %v906 = vsel %vm216, %v902, 0.0
  %v907 = vsel %vm216, %v903, 0.0
  %v908 = vadd.f32 %v906, %v907
  %v909 = vsel %vm216, %v904, 0.0
  %v910 = vadd.f32 %v908, %v909
  %v911 = vsel %vm216, %v905, 0.0
  %v912 = vadd.f32 %v910, %v911
  %913 = vadd.xlane.f32.xlu0 %v912
  %v914 = vpop.xlane.xlu0 %913
  %v915 = vadd.f32 %v690, %v914
  %v916 = vmul.f32 %v901, 0.00048828125
  %v917 = vmul.f32 %v915, 0.00048828125
  %v918 = vmul.f32 %v916, %v916
  %v919 = vsub.f32 %v917, %v918
  %v920 = vadd.f32 %v919, 1e-05
  %v921 = vrsqrt.pop %v920
  %v922 = vld [vmem:[%s2] sm:$0xf]
  %v923 = vmul.f32 %v921, %v922
  %v924 = vld [vmem:[%s3] sm:$0xf]
  %v925 = vmul.f32 %v916, %v923
  %v926 = vsub.f32 %v924, %v925
  %v927 = vld [vmem:[%s4] sm:$0xff]
  %v928 = vunpack.c.l.bf16 %v927
  %v929 = vunpack.c.h.bf16 %v927
  %931 = vset.pattern.permute.xlu0 0
  %932 = vperm.xlu0 %931, %v923
  %v933 = vpop.permute.xlu0 %932
  %v935 = vunpack.c.l.s4 839922192
  %v936 = vunpack.c.0.s8 %v935
  %v937 = vlaneseq
  %v938 = vshrl.u32 %v937, 7
  %v939 = vsub.s32 %v936, %v938
  %v940 = vrot.slane %v933, %v939
  %v942 = vmul.f32 %v928, %v940
  %v943 = vmul.f32 %v929, %v940
  %945 = vset.pattern.permute.xlu0 0
  %946 = vperm.xlu0 %945, %v926
  %v947 = vpop.permute.xlu0 %946
  %v949 = vunpack.c.l.s4 839922192
  %v950 = vunpack.c.0.s8 %v949
  %v951 = vlaneseq
  %v952 = vshrl.u32 %v951, 7
  %v953 = vsub.s32 %v950, %v952
  %v954 = vrot.slane %v947, %v953
  %v956 = vadd.f32 %v942, %v954
  %v957 = vadd.f32 %v943, %v954
  %v958 = vmax.f32 %v956, 0.0
  %v959 = vmax.f32 %v957, 0.0
  %v962 = vcombine.high %v958, %v958
  %v963 = vcombine.high %v959, %v959
  %v966 = vpack.c.bf16 %v958, %v958
  %v967 = vpack.c.bf16 %v962, %v962
  %v968 = vpack.c.bf16 %v959, %v959
  %v969 = vpack.c.bf16 %v963, %v963
  %v974 = vcombine.low %v966, %v967
  %v975 = vcombine.low %v968, %v969
  %v977 = vunpack.c.l.s4 1983009808
  %v978 = vunpack.c.0.s8 %v977
  %v979 = vlaneseq
  %v980 = vshrl.u32 %v979, 7
  %v981 = vsub.s32 %v978, %v980
  %v982 = vrot.slane %v974, %v981
  %v984 = vunpack.c.l.s4 1983009808
  %v985 = vunpack.c.0.s8 %v984
  %v986 = vlaneseq
  %v987 = vshrl.u32 %v986, 7
  %v988 = vsub.s32 %v985, %v987
  %v989 = vrot.slane %v975, %v988
  %v990 = vcombine.low %v982, %v989
  %992 = vst [vmem:[%s4] sm:$0xff] %v990
  %v993 = vld [vmem:[%s440] sm:$0xff]
  %v994 = vunpack.c.l.bf16 %v993
  %v995 = vunpack.c.h.bf16 %v993
  %v996 = vmul.f32 %v994, %v940
  %v997 = vmul.f32 %v995, %v940
  %v998 = vadd.f32 %v996, %v954
  %v999 = vadd.f32 %v997, %v954
  %v1000 = vmax.f32 %v998, 0.0
  %v1001 = vmax.f32 %v999, 0.0
  %v1004 = vcombine.high %v1000, %v1000
  %v1005 = vcombine.high %v1001, %v1001
  %v1008 = vpack.c.bf16 %v1000, %v1000
  %v1009 = vpack.c.bf16 %v1004, %v1004
  %v1010 = vpack.c.bf16 %v1001, %v1001
  %v1011 = vpack.c.bf16 %v1005, %v1005
  %v1016 = vcombine.low %v1008, %v1009
  %v1017 = vcombine.low %v1010, %v1011
  %v1019 = vunpack.c.l.s4 1983009808
  %v1020 = vunpack.c.0.s8 %v1019
  %v1021 = vlaneseq
  %v1022 = vshrl.u32 %v1021, 7
  %v1023 = vsub.s32 %v1020, %v1022
  %v1024 = vrot.slane %v1016, %v1023
  %v1026 = vunpack.c.l.s4 1983009808
  %v1027 = vunpack.c.0.s8 %v1026
  %v1028 = vlaneseq
  %v1029 = vshrl.u32 %v1028, 7
  %v1030 = vsub.s32 %v1027, %v1029
  %v1031 = vrot.slane %v1017, %v1030
  %v1032 = vcombine.low %v1024, %v1031
  %1034 = vst [vmem:[%s440] sm:$0xff] %v1032
  %v1035 = vld [vmem:[%s665] sm:$0xff]
  %v1036 = vunpack.c.l.bf16 %v1035
  %v1037 = vunpack.c.h.bf16 %v1035
  %v1038 = vmul.f32 %v1036, %v940
  %v1039 = vmul.f32 %v1037, %v940
  %v1040 = vadd.f32 %v1038, %v954
  %v1041 = vadd.f32 %v1039, %v954
  %v1042 = vmax.f32 %v1040, 0.0
  %v1043 = vmax.f32 %v1041, 0.0
  %v1046 = vcombine.high %v1042, %v1042
  %v1047 = vcombine.high %v1043, %v1043
  %v1050 = vpack.c.bf16 %v1042, %v1042
  %v1051 = vpack.c.bf16 %v1046, %v1046
  %v1052 = vpack.c.bf16 %v1043, %v1043
  %v1053 = vpack.c.bf16 %v1047, %v1047
  %v1058 = vcombine.low %v1050, %v1051
  %v1059 = vcombine.low %v1052, %v1053
  %v1061 = vunpack.c.l.s4 1983009808
  %v1062 = vunpack.c.0.s8 %v1061
  %v1063 = vlaneseq
  %v1064 = vshrl.u32 %v1063, 7
  %v1065 = vsub.s32 %v1062, %v1064
  %v1066 = vrot.slane %v1058, %v1065
  %v1068 = vunpack.c.l.s4 1983009808
  %v1069 = vunpack.c.0.s8 %v1068
  %v1070 = vlaneseq
  %v1071 = vshrl.u32 %v1070, 7
  %v1072 = vsub.s32 %v1069, %v1071
  %v1073 = vrot.slane %v1059, %v1072
  %v1074 = vcombine.low %v1066, %v1073
  %1076 = vst [vmem:[%s665] sm:$0xff] %v1074
  %v1077 = vld [vmem:[%s890] sm:$0xff]
  %v1078 = vunpack.c.l.bf16 %v1077
  %v1079 = vunpack.c.h.bf16 %v1077
  %v1080 = vmul.f32 %v1078, %v940
  %v1081 = vmul.f32 %v1079, %v940
  %v1082 = vadd.f32 %v1080, %v954
  %v1083 = vadd.f32 %v1081, %v954
  %v1084 = vmax.f32 %v1082, 0.0
  %v1085 = vmax.f32 %v1083, 0.0
  %v1088 = vcombine.high %v1084, %v1084
  %v1089 = vcombine.high %v1085, %v1085
  %v1092 = vpack.c.bf16 %v1084, %v1084
  %v1093 = vpack.c.bf16 %v1088, %v1088
  %v1094 = vpack.c.bf16 %v1085, %v1085
  %v1095 = vpack.c.bf16 %v1089, %v1089
  %v1100 = vcombine.low %v1092, %v1093
  %v1101 = vcombine.low %v1094, %v1095
  %v1103 = vunpack.c.l.s4 1983009808
  %v1104 = vunpack.c.0.s8 %v1103
  %v1105 = vlaneseq
  %v1106 = vshrl.u32 %v1105, 7
  %v1107 = vsub.s32 %v1104, %v1106
  %v1108 = vrot.slane %v1100, %v1107
  %v1110 = vunpack.c.l.s4 1983009808
  %v1111 = vunpack.c.0.s8 %v1110
  %v1112 = vlaneseq
  %v1113 = vshrl.u32 %v1112, 7
  %v1114 = vsub.s32 %v1111, %v1113
  %v1115 = vrot.slane %v1101, %v1114
  %v1116 = vcombine.low %v1108, %v1115
  %1118 = vst [vmem:[%s890] sm:$0xff] %v1116
  // Predicated region
  $region18: #{generator_forward.8} parent=0 // pred_check
    _
  $region19: #{generator_forward.8} parent=0 // pred_check_branch
    %1120 = sbr.rel (0) target = $region21
  $region20: #{generator_forward.8} parent=0 // pred_region
    _
  $region21: #{generator_forward.8} parent=0 // pred_fallthru
    _
  // Predicated region
  $region22: #{generator_forward.8} parent=0 // pred_check
    _
  $region23: #{generator_forward.8} parent=0 // pred_check_branch
    %1122 = sbr.rel (0) target = $region25
  $region24: #{generator_forward.8} parent=0 // pred_region
    _
  $region25: #{generator_forward.8} parent=0 // pred_fallthru
    _

// kernel: generator_forward.9
$region0: #{generator_forward.9}
  #allocation0 [shape = 'u32[]', space=smem, size = 0x4, offset = 0x4, fixed_abs, tag = 'smem constant byte address 0x4 - core index']
  #allocation1 [shape = 'u32[144,128]{1,0:T(1,128)}', space=vmem, size = 0x12000, scoped, tag = 'internal scratch']
  %s0 = inlined_call_operand.vmem [shape: bf16[4,16,2048], index: 0, kind: input, shape index: {}]
  %s1 = inlined_call_operand.vmem [shape: bf16[4,3,16], index: 1, kind: input, shape index: {}]
  %s2 = inlined_call_operand.vmem [shape: f32[3,1], index: 2, kind: input, shape index: {}]
  %s3 = inlined_call_operand.vmem [shape: f32[12,2048], index: 3, kind: output, shape index: {}]
  %s4 = sld [smem:[#allocation0]]
  $region22: #{generator_forward.9} parent=0
    _
  %s6 = ssub.s32 1, %s4
  %s7 = scalar_select 0, %s6, %s4
  // Predicated region
  $region2: #{generator_forward.9} parent=0 // pred_check
    _
  $region3: #{generator_forward.9} parent=0 // pred_check_branch
    %9 = sbr.rel (0) target = $region5
  $region4: #{generator_forward.9} parent=0 // pred_region
    _
  $region5: #{generator_forward.9} parent=0 // pred_fallthru
    _
  // Predicated region
  $region6: #{generator_forward.9} parent=0 // pred_check
    _
  $region7: #{generator_forward.9} parent=0 // pred_check_branch
    %11 = sbr.rel (0) target = $region9
  $region8: #{generator_forward.9} parent=0 // pred_region
    _
  $region9: #{generator_forward.9} parent=0 // pred_fallthru
    _
  // Predicated region
  $region10: #{generator_forward.9} parent=0 // pred_check
    _
  $region11: #{generator_forward.9} parent=0 // pred_check_branch
    %13 = sbr.rel (0) target = $region13
  $region12: #{generator_forward.9} parent=0 // pred_region
    _
  $region13: #{generator_forward.9} parent=0 // pred_fallthru
    _
  %v14 = vld [vmem:[%s1] sm:$0x3]
  %v15 = vunpack.c.l.bf16 %v14
  %v16 = vld [vmem:[%s0] sm:$0xff]
  %v17 = vld [vmem:[%s0 + $0x8] sm:$0xff]
  %v18 = vld [vmem:[%s0 + $0x10] sm:$0xff]
  %v19 = vld [vmem:[%s0 + $0x18] sm:$0xff]
  %v20 = vld [vmem:[%s0 + $0x20] sm:$0xff]
  %v21 = vld [vmem:[%s0 + $0x28] sm:$0xff]
  %v22 = vld [vmem:[%s0 + $0x30] sm:$0xff]
  %v23 = vld [vmem:[%s0 + $0x38] sm:$0xff]
  %v24 = vld [vmem:[%s0 + $0x40] sm:$0xff]
  %v25 = vld [vmem:[%s0 + $0x48] sm:$0xff]
  %v26 = vld [vmem:[%s0 + $0x50] sm:$0xff]
  %v27 = vld [vmem:[%s0 + $0x58] sm:$0xff]
  %v28 = vld [vmem:[%s0 + $0x60] sm:$0xff]
  %v29 = vld [vmem:[%s0 + $0x68] sm:$0xff]
  %v30 = vld [vmem:[%s0 + $0x70] sm:$0xff]
  %v31 = vld [vmem:[%s0 + $0x78] sm:$0xff]
  %v32 = vunpack.c.l.bf16 %v16
  %v33 = vunpack.c.h.bf16 %v16
  %v34 = vunpack.c.l.bf16 %v17
  %v35 = vunpack.c.h.bf16 %v17
  %v36 = vunpack.c.l.bf16 %v18
  %v37 = vunpack.c.h.bf16 %v18
  %v38 = vunpack.c.l.bf16 %v19
  %v39 = vunpack.c.h.bf16 %v19
  %v40 = vunpack.c.l.bf16 %v20
  %v41 = vunpack.c.h.bf16 %v20
  %v42 = vunpack.c.l.bf16 %v21
  %v43 = vunpack.c.h.bf16 %v21
  %v44 = vunpack.c.l.bf16 %v22
  %v45 = vunpack.c.h.bf16 %v22
  %v46 = vunpack.c.l.bf16 %v23
  %v47 = vunpack.c.h.bf16 %v23
  %v48 = vunpack.c.l.bf16 %v24
  %v49 = vunpack.c.h.bf16 %v24
  %v50 = vunpack.c.l.bf16 %v25
  %v51 = vunpack.c.h.bf16 %v25
  %v52 = vunpack.c.l.bf16 %v26
  %v53 = vunpack.c.h.bf16 %v26
  %v54 = vunpack.c.l.bf16 %v27
  %v55 = vunpack.c.h.bf16 %v27
  %v56 = vunpack.c.l.bf16 %v28
  %v57 = vunpack.c.h.bf16 %v28
  %v58 = vunpack.c.l.bf16 %v29
  %v59 = vunpack.c.h.bf16 %v29
  %v60 = vunpack.c.l.bf16 %v30
  %v61 = vunpack.c.h.bf16 %v30
  %v62 = vunpack.c.l.bf16 %v31
  %v63 = vunpack.c.h.bf16 %v31
  %v64 = vld [vmem:[%s2] sm:$0x7]
  %66 = vset.pattern.permute.xlu0 0
  %67 = vperm.xlu0 %66, %v64
  %v68 = vpop.permute.xlu0 %67
  %vm70 = vcmask 130048
  %v72 = vsel %vm70, %v15, 0
  %74 = vmatprep.subr.mxu0 %v33
  %75 = vmatpush1.msra.mxu0 %v32
  %76 = vmatprep.subr.mxu0 %v49
  %77 = vmatpush1.msra.mxu0 %v48
  %78 = vmatprep.subr.mxu0 0.0
  %79 = vmatpush1.msra.mxu0 0.0
  %80 = vmatprep.subr.mxu0 0.0
  %81 = vmatpush1.msra.mxu0 0.0
  %82 = vmatprep.subr.mxu0 0.0
  %83 = vmatpush1.msra.mxu0 0.0
  %84 = vmatprep.subr.mxu0 0.0
  %85 = vmatpush1.msra.mxu0 0.0
  %86 = vmatprep.subr.mxu0 0.0
  %87 = vmatpush1.msra.mxu0 0.0
  %88 = vmatprep.subr.mxu0 0.0
  %89 = vmatpush1.msra.mxu0 0.0
  %90 = vmatprep.subr.mxu0 0.0
  %91 = vmatpush1.msra.mxu0 0.0
  %92 = vmatprep.subr.mxu0 0.0
  %93 = vmatpush1.msra.mxu0 0.0
  %94 = vmatprep.subr.mxu0 0.0
  %95 = vmatpush1.msra.mxu0 0.0
  %96 = vmatprep.subr.mxu0 0.0
  %97 = vmatpush1.msra.mxu0 0.0
  %98 = vmatprep.subr.mxu0 0.0
  %99 = vmatpush1.msra.mxu0 0.0
  %100 = vmatprep.subr.mxu0 0.0
  %101 = vmatpush1.msra.mxu0 0.0
  %102 = vmatprep.subr.mxu0 0.0
  %103 = vmatpush1.msra.mxu0 0.0
  %104 = vmatprep.subr.mxu0 0.0
  %105 = vmatpush1.msra.mxu0 0.0
  %106 = vmatprep.subr.mxu0 0.0
  %107 = vmatpush1.msra.mxu0 0.0
  %108 = vmatprep.subr.mxu0 0.0
  %109 = vmatpush1.msra.mxu0 0.0
  %110 = vmatprep.subr.mxu0 0.0
  %111 = vmatpush1.msra.mxu0 0.0
  %112 = vmatprep.subr.mxu0 0.0
  %113 = vmatpush1.msra.mxu0 0.0
  %114 = vmatprep.subr.mxu0 0.0
  %115 = vmatpush1.msra.mxu0 0.0
  %116 = vmatprep.subr.mxu0 0.0
  %117 = vmatpush1.msra.mxu0 0.0
  %118 = vmatprep.subr.mxu0 0.0
  %119 = vmatpush1.msra.mxu0 0.0
  %120 = vmatprep.subr.mxu0 0.0
  %121 = vmatpush1.msra.mxu0 0.0
  %122 = vmatprep.subr.mxu0 0.0
  %123 = vmatpush1.msra.mxu0 0.0
  %124 = vmatprep.subr.mxu0 0.0
  %125 = vmatpush1.msra.mxu0 0.0
  %126 = vmatprep.subr.mxu0 0.0
  %127 = vmatpush1.msra.mxu0 0.0
  %128 = vmatprep.subr.mxu0 0.0
  %129 = vmatpush1.msra.mxu0 0.0
  %130 = vmatprep.subr.mxu0 0.0
  %131 = vmatpush1.msra.mxu0 0.0
  %132 = vmatprep.subr.mxu0 0.0
  %133 = vmatpush1.msra.mxu0 0.0
  %134 = vmatprep.subr.mxu0 0.0
  %135 = vmatpush1.msra.mxu0 0.0
  %136 = vmatprep.subr.mxu0 0.0
  %137 = vmatpush1.msra.mxu0 0.0
  %138 = vmatprep.mubr.f32.mxu0 0.0
  %139 = vmatmul.mubr.f32.gmra.mrb[0].mxu0 %v72
  %v140 = vpop.f32.mrb[0].mxu0
  %v141 = vadd.f32 %v68, %v140
  %v142 = vpop.f32.mrb[0].mxu0
  %v143 = vadd.f32 %v68, %v142
  %144 = vdwg.mxu0
  %145 = vmatprep.subr.mxu0 %v35
  %146 = vmatpush1.msra.mxu0 %v34
  %147 = vmatprep.subr.mxu0 %v51
  %148 = vmatpush1.msra.mxu0 %v50
  %149 = vmatprep.subr.mxu0 0.0
  %150 = vmatpush1.msra.mxu0 0.0
  %151 = vmatprep.subr.mxu0 0.0
  %152 = vmatpush1.msra.mxu0 0.0
  %153 = vmatprep.subr.mxu0 0.0
  %154 = vmatpush1.msra.mxu0 0.0
  %155 = vmatprep.subr.mxu0 0.0
  %156 = vmatpush1.msra.mxu0 0.0
  %157 = vmatprep.subr.mxu0 0.0
  %158 = vmatpush1.msra.mxu0 0.0
  %159 = vmatprep.subr.mxu0 0.0
  %160 = vmatpush1.msra.mxu0 0.0
  %161 = vmatprep.subr.mxu0 0.0
  %162 = vmatpush1.msra.mxu0 0.0
  %163 = vmatprep.subr.mxu0 0.0
  %164 = vmatpush1.msra.mxu0 0.0
  %165 = vmatprep.subr.mxu0 0.0
  %166 = vmatpush1.msra.mxu0 0.0
  %167 = vmatprep.subr.mxu0 0.0
  %168 = vmatpush1.msra.mxu0 0.0
  %169 = vmatprep.subr.mxu0 0.0
  %170 = vmatpush1.msra.mxu0 0.0
  %171 = vmatprep.subr.mxu0 0.0
  %172 = vmatpush1.msra.mxu0 0.0
  %173 = vmatprep.subr.mxu0 0.0
  %174 = vmatpush1.msra.mxu0 0.0
  %175 = vmatprep.subr.mxu0 0.0
  %176 = vmatpush1.msra.mxu0 0.0
  %177 = vmatprep.subr.mxu0 0.0
  %178 = vmatpush1.msra.mxu0 0.0
  %179 = vmatprep.subr.mxu0 0.0
  %180 = vmatpush1.msra.mxu0 0.0
  %181 = vmatprep.subr.mxu0 0.0
  %182 = vmatpush1.msra.mxu0 0.0
  %183 = vmatprep.subr.mxu0 0.0
  %184 = vmatpush1.msra.mxu0 0.0
  %185 = vmatprep.subr.mxu0 0.0
  %186 = vmatpush1.msra.mxu0 0.0
  %187 = vmatprep.subr.mxu0 0.0
  %188 = vmatpush1.msra.mxu0 0.0
  %189 = vmatprep.subr.mxu0 0.0
  %190 = vmatpush1.msra.mxu0 0.0
  %191 = vmatprep.subr.mxu0 0.0
  %192 = vmatpush1.msra.mxu0 0.0
  %193 = vmatprep.subr.mxu0 0.0
  %194 = vmatpush1.msra.mxu0 0.0
  %195 = vmatprep.subr.mxu0 0.0
  %196 = vmatpush1.msra.mxu0 0.0
  %197 = vmatprep.subr.mxu0 0.0
  %198 = vmatpush1.msra.mxu0 0.0
  %199 = vmatprep.subr.mxu0 0.0
  %200 = vmatpush1.msra.mxu0 0.0
  %201 = vmatprep.subr.mxu0 0.0
  %202 = vmatpush1.msra.mxu0 0.0
  %203 = vmatprep.subr.mxu0 0.0
  %204 = vmatpush1.msra.mxu0 0.0
  %205 = vmatprep.subr.mxu0 0.0
  %206 = vmatpush1.msra.mxu0 0.0
  %207 = vmatprep.subr.mxu0 0.0
  %208 = vmatpush1.msra.mxu0 0.0
  %209 = vmatprep.mubr.f32.mxu0 0.0
  %210 = vmatmul.mubr.f32.gmra.mrb[0].mxu0 %v72
  %v211 = vpop.f32.mrb[0].mxu0
  %v212 = vadd.f32 %v68, %v211
  %v213 = vpop.f32.mrb[0].mxu0
  %v214 = vadd.f32 %v68, %v213
  %215 = vdwg.mxu0
  %216 = vmatprep.subr.mxu0 %v37
  %217 = vmatpush1.msra.mxu0 %v36
  %218 = vmatprep.subr.mxu0 %v53
  %219 = vmatpush1.msra.mxu0 %v52
  %220 = vmatprep.subr.mxu0 0.0
  %221 = vmatpush1.msra.mxu0 0.0
  %222 = vmatprep.subr.mxu0 0.0
  %223 = vmatpush1.msra.mxu0 0.0
  %224 = vmatprep.subr.mxu0 0.0
  %225 = vmatpush1.msra.mxu0 0.0
  %226 = vmatprep.subr.mxu0 0.0
  %227 = vmatpush1.msra.mxu0 0.0
  %228 = vmatprep.subr.mxu0 0.0
  %229 = vmatpush1.msra.mxu0 0.0
  %230 = vmatprep.subr.mxu0 0.0
  %231 = vmatpush1.msra.mxu0 0.0
  %232 = vmatprep.subr.mxu0 0.0
  %233 = vmatpush1.msra.mxu0 0.0
  %234 = vmatprep.subr.mxu0 0.0
  %235 = vmatpush1.msra.mxu0 0.0
  %236 = vmatprep.subr.mxu0 0.0
  %237 = vmatpush1.msra.mxu0 0.0
  %238 = vmatprep.subr.mxu0 0.0
  %239 = vmatpush1.msra.mxu0 0.0
  %240 = vmatprep.subr.mxu0 0.0
  %241 = vmatpush1.msra.mxu0 0.0
  %242 = vmatprep.subr.mxu0 0.0
  %243 = vmatpush1.msra.mxu0 0.0
  %244 = vmatprep.subr.mxu0 0.0
  %245 = vmatpush1.msra.mxu0 0.0
  %246 = vmatprep.subr.mxu0 0.0
  %247 = vmatpush1.msra.mxu0 0.0
  %248 = vmatprep.subr.mxu0 0.0
  %249 = vmatpush1.msra.mxu0 0.0
  %250 = vmatprep.subr.mxu0 0.0
  %251 = vmatpush1.msra.mxu0 0.0
  %252 = vmatprep.subr.mxu0 0.0
  %253 = vmatpush1.msra.mxu0 0.0
  %254 = vmatprep.subr.mxu0 0.0
  %255 = vmatpush1.msra.mxu0 0.0
  %256 = vmatprep.subr.mxu0 0.0
  %257 = vmatpush1.msra.mxu0 0.0
  %258 = vmatprep.subr.mxu0 0.0
  %259 = vmatpush1.msra.mxu0 0.0
  %260 = vmatprep.subr.mxu0 0.0
  %261 = vmatpush1.msra.mxu0 0.0
  %262 = vmatprep.subr.mxu0 0.0
  %263 = vmatpush1.msra.mxu0 0.0
  %264 = vmatprep.subr.mxu0 0.0
  %265 = vmatpush1.msra.mxu0 0.0
  %266 = vmatprep.subr.mxu0 0.0
  %267 = vmatpush1.msra.mxu0 0.0
  %268 = vmatprep.subr.mxu0 0.0
  %269 = vmatpush1.msra.mxu0 0.0
  %270 = vmatprep.subr.mxu0 0.0
  %271 = vmatpush1.msra.mxu0 0.0
  %272 = vmatprep.subr.mxu0 0.0
  %273 = vmatpush1.msra.mxu0 0.0
  %274 = vmatprep.subr.mxu0 0.0
  %275 = vmatpush1.msra.mxu0 0.0
  %276 = vmatprep.subr.mxu0 0.0
  %277 = vmatpush1.msra.mxu0 0.0
  %278 = vmatprep.subr.mxu0 0.0
  %279 = vmatpush1.msra.mxu0 0.0
  %280 = vmatprep.mubr.f32.mxu0 0.0
  %281 = vmatmul.mubr.f32.gmra.mrb[0].mxu0 %v72
  %v282 = vpop.f32.mrb[0].mxu0
  %v283 = vadd.f32 %v68, %v282
  %v284 = vpop.f32.mrb[0].mxu0
  %v285 = vadd.f32 %v68, %v284
  %286 = vdwg.mxu0
  %287 = vmatprep.subr.mxu0 %v39
  %288 = vmatpush1.msra.mxu0 %v38
  %289 = vmatprep.subr.mxu0 %v55
  %290 = vmatpush1.msra.mxu0 %v54
  %291 = vmatprep.subr.mxu0 0.0
  %292 = vmatpush1.msra.mxu0 0.0
  %293 = vmatprep.subr.mxu0 0.0
  %294 = vmatpush1.msra.mxu0 0.0
  %295 = vmatprep.subr.mxu0 0.0
  %296 = vmatpush1.msra.mxu0 0.0
  %297 = vmatprep.subr.mxu0 0.0
  %298 = vmatpush1.msra.mxu0 0.0
  %299 = vmatprep.subr.mxu0 0.0
  %300 = vmatpush1.msra.mxu0 0.0
  %301 = vmatprep.subr.mxu0 0.0
  %302 = vmatpush1.msra.mxu0 0.0
  %303 = vmatprep.subr.mxu0 0.0
  %304 = vmatpush1.msra.mxu0 0.0
  %305 = vmatprep.subr.mxu0 0.0
  %306 = vmatpush1.msra.mxu0 0.0
  %307 = vmatprep.subr.mxu0 0.0
  %308 = vmatpush1.msra.mxu0 0.0
  %309 = vmatprep.subr.mxu0 0.0
  %310 = vmatpush1.msra.mxu0 0.0
  %311 = vmatprep.subr.mxu0 0.0
  %312 = vmatpush1.msra.mxu0 0.0
  %313 = vmatprep.subr.mxu0 0.0
  %314 = vmatpush1.msra.mxu0 0.0
  %315 = vmatprep.subr.mxu0 0.0
  %316 = vmatpush1.msra.mxu0 0.0
  %317 = vmatprep.subr.mxu0 0.0
  %318 = vmatpush1.msra.mxu0 0.0
  %319 = vmatprep.subr.mxu0 0.0
  %320 = vmatpush1.msra.mxu0 0.0
  %321 = vmatprep.subr.mxu0 0.0
  %322 = vmatpush1.msra.mxu0 0.0
  %323 = vmatprep.subr.mxu0 0.0
  %324 = vmatpush1.msra.mxu0 0.0
  %325 = vmatprep.subr.mxu0 0.0
  %326 = vmatpush1.msra.mxu0 0.0
  %327 = vmatprep.subr.mxu0 0.0
  %328 = vmatpush1.msra.mxu0 0.0
  %329 = vmatprep.subr.mxu0 0.0
  %330 = vmatpush1.msra.mxu0 0.0
  %331 = vmatprep.subr.mxu0 0.0
  %332 = vmatpush1.msra.mxu0 0.0
  %333 = vmatprep.subr.mxu0 0.0
  %334 = vmatpush1.msra.mxu0 0.0
  %335 = vmatprep.subr.mxu0 0.0
  %336 = vmatpush1.msra.mxu0 0.0
  %337 = vmatprep.subr.mxu0 0.0
  %338 = vmatpush1.msra.mxu0 0.0
  %339 = vmatprep.subr.mxu0 0.0
  %340 = vmatpush1.msra.mxu0 0.0
  %341 = vmatprep.subr.mxu0 0.0
  %342 = vmatpush1.msra.mxu0 0.0
  %343 = vmatprep.subr.mxu0 0.0
  %344 = vmatpush1.msra.mxu0 0.0
  %345 = vmatprep.subr.mxu0 0.0
  %346 = vmatpush1.msra.mxu0 0.0
  %347 = vmatprep.subr.mxu0 0.0
  %348 = vmatpush1.msra.mxu0 0.0
  %349 = vmatprep.subr.mxu0 0.0
  %350 = vmatpush1.msra.mxu0 0.0
  %351 = vmatprep.mubr.f32.mxu0 0.0
  %352 = vmatmul.mubr.f32.gmra.mrb[0].mxu0 %v72
  %v353 = vpop.f32.mrb[0].mxu0
  %v354 = vadd.f32 %v68, %v353
  %v355 = vpop.f32.mrb[0].mxu0
  %v356 = vadd.f32 %v68, %v355
  %357 = vdwg.mxu0
  %358 = vmatprep.subr.mxu0 %v41
  %359 = vmatpush1.msra.mxu0 %v40
  %360 = vmatprep.subr.mxu0 %v57
  %361 = vmatpush1.msra.mxu0 %v56
  %362 = vmatprep.subr.mxu0 0.0
  %363 = vmatpush1.msra.mxu0 0.0
  %364 = vmatprep.subr.mxu0 0.0
  %365 = vmatpush1.msra.mxu0 0.0
  %366 = vmatprep.subr.mxu0 0.0
  %367 = vmatpush1.msra.mxu0 0.0
  %368 = vmatprep.subr.mxu0 0.0
  %369 = vmatpush1.msra.mxu0 0.0
  %370 = vmatprep.subr.mxu0 0.0
  %371 = vmatpush1.msra.mxu0 0.0
  %372 = vmatprep.subr.mxu0 0.0
  %373 = vmatpush1.msra.mxu0 0.0
  %374 = vmatprep.subr.mxu0 0.0
  %375 = vmatpush1.msra.mxu0 0.0
  %376 = vmatprep.subr.mxu0 0.0
  %377 = vmatpush1.msra.mxu0 0.0
  %378 = vmatprep.subr.mxu0 0.0
  %379 = vmatpush1.msra.mxu0 0.0
  %380 = vmatprep.subr.mxu0 0.0
  %381 = vmatpush1.msra.mxu0 0.0
  %382 = vmatprep.subr.mxu0 0.0
  %383 = vmatpush1.msra.mxu0 0.0
  %384 = vmatprep.subr.mxu0 0.0
  %385 = vmatpush1.msra.mxu0 0.0
  %386 = vmatprep.subr.mxu0 0.0
  %387 = vmatpush1.msra.mxu0 0.0
  %388 = vmatprep.subr.mxu0 0.0
  %389 = vmatpush1.msra.mxu0 0.0
  %390 = vmatprep.subr.mxu0 0.0
  %391 = vmatpush1.msra.mxu0 0.0
  %392 = vmatprep.subr.mxu0 0.0
  %393 = vmatpush1.msra.mxu0 0.0
  %394 = vmatprep.subr.mxu0 0.0
  %395 = vmatpush1.msra.mxu0 0.0
  %396 = vmatprep.subr.mxu0 0.0
  %397 = vmatpush1.msra.mxu0 0.0
  %398 = vmatprep.subr.mxu0 0.0
  %399 = vmatpush1.msra.mxu0 0.0
  %400 = vmatprep.subr.mxu0 0.0
  %401 = vmatpush1.msra.mxu0 0.0
  %402 = vmatprep.subr.mxu0 0.0
  %403 = vmatpush1.msra.mxu0 0.0
  %404 = vmatprep.subr.mxu0 0.0
  %405 = vmatpush1.msra.mxu0 0.0
  %406 = vmatprep.subr.mxu0 0.0
  %407 = vmatpush1.msra.mxu0 0.0
  %408 = vmatprep.subr.mxu0 0.0
  %409 = vmatpush1.msra.mxu0 0.0
  %410 = vmatprep.subr.mxu0 0.0
  %411 = vmatpush1.msra.mxu0 0.0
  %412 = vmatprep.subr.mxu0 0.0
  %413 = vmatpush1.msra.mxu0 0.0
  %414 = vmatprep.subr.mxu0 0.0
  %415 = vmatpush1.msra.mxu0 0.0
  %416 = vmatprep.subr.mxu0 0.0
  %417 = vmatpush1.msra.mxu0 0.0
  %418 = vmatprep.subr.mxu0 0.0
  %419 = vmatpush1.msra.mxu0 0.0
  %420 = vmatprep.subr.mxu0 0.0
  %421 = vmatpush1.msra.mxu0 0.0
  %422 = vmatprep.mubr.f32.mxu0 0.0
  %423 = vmatmul.mubr.f32.gmra.mrb[0].mxu0 %v72
  %v424 = vpop.f32.mrb[0].mxu0
  %v425 = vadd.f32 %v68, %v424
  %v426 = vpop.f32.mrb[0].mxu0
  %v427 = vadd.f32 %v68, %v426
  %428 = vdwg.mxu0
  %429 = vmatprep.subr.mxu0 %v43
  %430 = vmatpush1.msra.mxu0 %v42
  %431 = vmatprep.subr.mxu0 %v59
  %432 = vmatpush1.msra.mxu0 %v58
  %433 = vmatprep.subr.mxu0 0.0
  %434 = vmatpush1.msra.mxu0 0.0
  %435 = vmatprep.subr.mxu0 0.0
  %436 = vmatpush1.msra.mxu0 0.0
  %437 = vmatprep.subr.mxu0 0.0
  %438 = vmatpush1.msra.mxu0 0.0
  %439 = vmatprep.subr.mxu0 0.0
  %440 = vmatpush1.msra.mxu0 0.0
  %441 = vmatprep.subr.mxu0 0.0
  %442 = vmatpush1.msra.mxu0 0.0
  %443 = vmatprep.subr.mxu0 0.0
  %444 = vmatpush1.msra.mxu0 0.0
  %445 = vmatprep.subr.mxu0 0.0
  %446 = vmatpush1.msra.mxu0 0.0
  %447 = vmatprep.subr.mxu0 0.0
  %448 = vmatpush1.msra.mxu0 0.0
  %449 = vmatprep.subr.mxu0 0.0
  %450 = vmatpush1.msra.mxu0 0.0
  %451 = vmatprep.subr.mxu0 0.0
  %452 = vmatpush1.msra.mxu0 0.0
  %453 = vmatprep.subr.mxu0 0.0
  %454 = vmatpush1.msra.mxu0 0.0
  %455 = vmatprep.subr.mxu0 0.0
  %456 = vmatpush1.msra.mxu0 0.0
  %457 = vmatprep.subr.mxu0 0.0
  %458 = vmatpush1.msra.mxu0 0.0
  %459 = vmatprep.subr.mxu0 0.0
  %460 = vmatpush1.msra.mxu0 0.0
  %461 = vmatprep.subr.mxu0 0.0
  %462 = vmatpush1.msra.mxu0 0.0
  %463 = vmatprep.subr.mxu0 0.0
  %464 = vmatpush1.msra.mxu0 0.0
  %465 = vmatprep.subr.mxu0 0.0
  %466 = vmatpush1.msra.mxu0 0.0
  %467 = vmatprep.subr.mxu0 0.0
  %468 = vmatpush1.msra.mxu0 0.0
  %469 = vmatprep.subr.mxu0 0.0
  %470 = vmatpush1.msra.mxu0 0.0
  %471 = vmatprep.subr.mxu0 0.0
  %472 = vmatpush1.msra.mxu0 0.0
  %473 = vmatprep.subr.mxu0 0.0
  %474 = vmatpush1.msra.mxu0 0.0
  %475 = vmatprep.subr.mxu0 0.0
  %476 = vmatpush1.msra.mxu0 0.0
  %477 = vmatprep.subr.mxu0 0.0
  %478 = vmatpush1.msra.mxu0 0.0
  %479 = vmatprep.subr.mxu0 0.0
  %480 = vmatpush1.msra.mxu0 0.0
  %481 = vmatprep.subr.mxu0 0.0
  %482 = vmatpush1.msra.mxu0 0.0
  %483 = vmatprep.subr.mxu0 0.0
  %484 = vmatpush1.msra.mxu0 0.0
  %485 = vmatprep.subr.mxu0 0.0
  %486 = vmatpush1.msra.mxu0 0.0
  %487 = vmatprep.subr.mxu0 0.0
  %488 = vmatpush1.msra.mxu0 0.0
  %489 = vmatprep.subr.mxu0 0.0
  %490 = vmatpush1.msra.mxu0 0.0
  %491 = vmatprep.subr.mxu0 0.0
  %492 = vmatpush1.msra.mxu0 0.0
  %493 = vmatprep.mubr.f32.mxu0 0.0
  %494 = vmatmul.mubr.f32.gmra.mrb[0].mxu0 %v72
  %v495 = vpop.f32.mrb[0].mxu0
  %v496 = vadd.f32 %v68, %v495
  %v497 = vpop.f32.mrb[0].mxu0
  %v498 = vadd.f32 %v68, %v497
  %499 = vdwg.mxu0
  %500 = vmatprep.subr.mxu0 %v45
  %501 = vmatpush1.msra.mxu0 %v44
  %502 = vmatprep.subr.mxu0 %v61
  %503 = vmatpush1.msra.mxu0 %v60
  %504 = vmatprep.subr.mxu0 0.0
  %505 = vmatpush1.msra.mxu0 0.0
  %506 = vmatprep.subr.mxu0 0.0
  %507 = vmatpush1.msra.mxu0 0.0
  %508 = vmatprep.subr.mxu0 0.0
  %509 = vmatpush1.msra.mxu0 0.0
  %510 = vmatprep.subr.mxu0 0.0
  %511 = vmatpush1.msra.mxu0 0.0
  %512 = vmatprep.subr.mxu0 0.0
  %513 = vmatpush1.msra.mxu0 0.0
  %514 = vmatprep.subr.mxu0 0.0
  %515 = vmatpush1.msra.mxu0 0.0
  %516 = vmatprep.subr.mxu0 0.0
  %517 = vmatpush1.msra.mxu0 0.0
  %518 = vmatprep.subr.mxu0 0.0
  %519 = vmatpush1.msra.mxu0 0.0
  %520 = vmatprep.subr.mxu0 0.0
  %521 = vmatpush1.msra.mxu0 0.0
  %522 = vmatprep.subr.mxu0 0.0
  %523 = vmatpush1.msra.mxu0 0.0
  %524 = vmatprep.subr.mxu0 0.0
  %525 = vmatpush1.msra.mxu0 0.0
  %526 = vmatprep.subr.mxu0 0.0
  %527 = vmatpush1.msra.mxu0 0.0
  %528 = vmatprep.subr.mxu0 0.0
  %529 = vmatpush1.msra.mxu0 0.0
  %530 = vmatprep.subr.mxu0 0.0
  %531 = vmatpush1.msra.mxu0 0.0
  %532 = vmatprep.subr.mxu0 0.0
  %533 = vmatpush1.msra.mxu0 0.0
  %534 = vmatprep.subr.mxu0 0.0
  %535 = vmatpush1.msra.mxu0 0.0
  %536 = vmatprep.subr.mxu0 0.0
  %537 = vmatpush1.msra.mxu0 0.0
  %538 = vmatprep.subr.mxu0 0.0
  %539 = vmatpush1.msra.mxu0 0.0
  %540 = vmatprep.subr.mxu0 0.0
  %541 = vmatpush1.msra.mxu0 0.0
  %542 = vmatprep.subr.mxu0 0.0
  %543 = vmatpush1.msra.mxu0 0.0
  %544 = vmatprep.subr.mxu0 0.0
  %545 = vmatpush1.msra.mxu0 0.0
  %546 = vmatprep.subr.mxu0 0.0
  %547 = vmatpush1.msra.mxu0 0.0
  %548 = vmatprep.subr.mxu0 0.0
  %549 = vmatpush1.msra.mxu0 0.0
  %550 = vmatprep.subr.mxu0 0.0
  %551 = vmatpush1.msra.mxu0 0.0
  %552 = vmatprep.subr.mxu0 0.0
  %553 = vmatpush1.msra.mxu0 0.0
  %554 = vmatprep.subr.mxu0 0.0
  %555 = vmatpush1.msra.mxu0 0.0
  %556 = vmatprep.subr.mxu0 0.0
  %557 = vmatpush1.msra.mxu0 0.0
  %558 = vmatprep.subr.mxu0 0.0
  %559 = vmatpush1.msra.mxu0 0.0
  %560 = vmatprep.subr.mxu0 0.0
  %561 = vmatpush1.msra.mxu0 0.0
  %562 = vmatprep.subr.mxu0 0.0
  %563 = vmatpush1.msra.mxu0 0.0
  %564 = vmatprep.mubr.f32.mxu0 0.0
  %565 = vmatmul.mubr.f32.gmra.mrb[0].mxu0 %v72
  %v566 = vpop.f32.mrb[0].mxu0
  %v567 = vadd.f32 %v68, %v566
  %v568 = vpop.f32.mrb[0].mxu0
  %v569 = vadd.f32 %v68, %v568
  %570 = vdwg.mxu0
  %571 = vmatprep.subr.mxu0 %v47
  %572 = vmatpush1.msra.mxu0 %v46
  %573 = vmatprep.subr.mxu0 %v63
  %574 = vmatpush1.msra.mxu0 %v62
  %575 = vmatprep.subr.mxu0 0.0
  %576 = vmatpush1.msra.mxu0 0.0
  %577 = vmatprep.subr.mxu0 0.0
  %578 = vmatpush1.msra.mxu0 0.0
  %579 = vmatprep.subr.mxu0 0.0
  %580 = vmatpush1.msra.mxu0 0.0
  %581 = vmatprep.subr.mxu0 0.0
  %582 = vmatpush1.msra.mxu0 0.0
  %583 = vmatprep.subr.mxu0 0.0
  %584 = vmatpush1.msra.mxu0 0.0
  %585 = vmatprep.subr.mxu0 0.0
  %586 = vmatpush1.msra.mxu0 0.0
  %587 = vmatprep.subr.mxu0 0.0
  %588 = vmatpush1.msra.mxu0 0.0
  %589 = vmatprep.subr.mxu0 0.0
  %590 = vmatpush1.msra.mxu0 0.0
  %591 = vmatprep.subr.mxu0 0.0
  %592 = vmatpush1.msra.mxu0 0.0
  %593 = vmatprep.subr.mxu0 0.0
  %594 = vmatpush1.msra.mxu0 0.0
  %595 = vmatprep.subr.mxu0 0.0
  %596 = vmatpush1.msra.mxu0 0.0
  %597 = vmatprep.subr.mxu0 0.0
  %598 = vmatpush1.msra.mxu0 0.0
  %599 = vmatprep.subr.mxu0 0.0
  %600 = vmatpush1.msra.mxu0 0.0
  %601 = vmatprep.subr.mxu0 0.0
  %602 = vmatpush1.msra.mxu0 0.0
  %603 = vmatprep.subr.mxu0 0.0
  %604 = vmatpush1.msra.mxu0 0.0
  %605 = vmatprep.subr.mxu0 0.0
  %606 = vmatpush1.msra.mxu0 0.0
  %607 = vmatprep.subr.mxu0 0.0
  %608 = vmatpush1.msra.mxu0 0.0
  %609 = vmatprep.subr.mxu0 0.0
  %610 = vmatpush1.msra.mxu0 0.0
  %611 = vmatprep.subr.mxu0 0.0
  %612 = vmatpush1.msra.mxu0 0.0
  %613 = vmatprep.subr.mxu0 0.0
  %614 = vmatpush1.msra.mxu0 0.0
  %615 = vmatprep.subr.mxu0 0.0
  %616 = vmatpush1.msra.mxu0 0.0
  %617 = vmatprep.subr.mxu0 0.0
  %618 = vmatpush1.msra.mxu0 0.0
  %619 = vmatprep.subr.mxu0 0.0
  %620 = vmatpush1.msra.mxu0 0.0
  %621 = vmatprep.subr.mxu0 0.0
  %622 = vmatpush1.msra.mxu0 0.0
  %623 = vmatprep.subr.mxu0 0.0
  %624 = vmatpush1.msra.mxu0 0.0
  %625 = vmatprep.subr.mxu0 0.0
  %626 = vmatpush1.msra.mxu0 0.0
  %627 = vmatprep.subr.mxu0 0.0
  %628 = vmatpush1.msra.mxu0 0.0
  %629 = vmatprep.subr.mxu0 0.0
  %630 = vmatpush1.msra.mxu0 0.0
  %631 = vmatprep.subr.mxu0 0.0
  %632 = vmatpush1.msra.mxu0 0.0
  %633 = vmatprep.subr.mxu0 0.0
  %634 = vmatpush1.msra.mxu0 0.0
  %635 = vmatprep.mubr.f32.mxu0 0.0
  %636 = vmatmul.mubr.f32.gmra.mrb[0].mxu0 %v72
  %v637 = vpop.f32.mrb[0].mxu0
  %v638 = vadd.f32 %v68, %v637
  %v639 = vpop.f32.mrb[0].mxu0
  %v640 = vadd.f32 %v68, %v639
  %641 = vdwg.mxu0
  %v642 = vtanh.pop %v141
  %v643 = vtanh.pop %v143
  %v644 = vtanh.pop %v212
  %v645 = vtanh.pop %v214
  %v646 = vtanh.pop %v283
  %v647 = vtanh.pop %v285
  %v648 = vtanh.pop %v354
  %v649 = vtanh.pop %v356
  %v650 = vtanh.pop %v425
  %v651 = vtanh.pop %v427
  %v652 = vtanh.pop %v496
  %v653 = vtanh.pop %v498
  %v654 = vtanh.pop %v567
  %v655 = vtanh.pop %v569
  %v656 = vtanh.pop %v638
  %v657 = vtanh.pop %v640
  %s658 = scalar_lea.vmem %s1, 2
  %v659 = vld [vmem:[%s658] sm:$0x3]
  %v660 = vunpack.c.l.bf16 %v659
  %s661 = scalar_lea.vmem %s0, 128
  %v662 = vld [vmem:[%s661] sm:$0xff]
  %v663 = vld [vmem:[%s661 + $0x8] sm:$0xff]
  %v664 = vld [vmem:[%s661 + $0x10] sm:$0xff]
  %v665 = vld [vmem:[%s661 + $0x18] sm:$0xff]
  %v666 = vld [vmem:[%s661 + $0x20] sm:$0xff]
  %v667 = vld [vmem:[%s661 + $0x28] sm:$0xff]
  %v668 = vld [vmem:[%s661 + $0x30] sm:$0xff]
  %v669 = vld [vmem:[%s661 + $0x38] sm:$0xff]
  %v670 = vld [vmem:[%s661 + $0x40] sm:$0xff]
  %v671 = vld [vmem:[%s661 + $0x48] sm:$0xff]
  %v672 = vld [vmem:[%s661 + $0x50] sm:$0xff]
  %v673 = vld [vmem:[%s661 + $0x58] sm:$0xff]
  %v674 = vld [vmem:[%s661 + $0x60] sm:$0xff]
  %v675 = vld [vmem:[%s661 + $0x68] sm:$0xff]
  %v676 = vld [vmem:[%s661 + $0x70] sm:$0xff]
  %v677 = vld [vmem:[%s661 + $0x78] sm:$0xff]
  %v678 = vunpack.c.l.bf16 %v662
  %v679 = vunpack.c.h.bf16 %v662
  %v680 = vunpack.c.l.bf16 %v663
  %v681 = vunpack.c.h.bf16 %v663
  %v682 = vunpack.c.l.bf16 %v664
  %v683 = vunpack.c.h.bf16 %v664
  %v684 = vunpack.c.l.bf16 %v665
  %v685 = vunpack.c.h.bf16 %v665
  %v686 = vunpack.c.l.bf16 %v666
  %v687 = vunpack.c.h.bf16 %v666
  %v688 = vunpack.c.l.bf16 %v667
  %v689 = vunpack.c.h.bf16 %v667
  %v690 = vunpack.c.l.bf16 %v668
  %v691 = vunpack.c.h.bf16 %v668
  %v692 = vunpack.c.l.bf16 %v669
  %v693 = vunpack.c.h.bf16 %v669
  %v694 = vunpack.c.l.bf16 %v670
  %v695 = vunpack.c.h.bf16 %v670
  %v696 = vunpack.c.l.bf16 %v671
  %v697 = vunpack.c.h.bf16 %v671
  %v698 = vunpack.c.l.bf16 %v672
  %v699 = vunpack.c.h.bf16 %v672
  %v700 = vunpack.c.l.bf16 %v673
  %v701 = vunpack.c.h.bf16 %v673
  %v702 = vunpack.c.l.bf16 %v674
  %v703 = vunpack.c.h.bf16 %v674
  %v704 = vunpack.c.l.bf16 %v675
  %v705 = vunpack.c.h.bf16 %v675
  %v706 = vunpack.c.l.bf16 %v676
  %v707 = vunpack.c.h.bf16 %v676
  %v708 = vunpack.c.l.bf16 %v677
  %v709 = vunpack.c.h.bf16 %v677
  %v711 = vsel %vm70, %v660, 0
  %713 = vmatprep.subr.mxu0 %v679
  %714 = vmatpush1.msra.mxu0 %v678
  %715 = vmatprep.subr.mxu0 %v695
  %716 = vmatpush1.msra.mxu0 %v694
  %717 = vmatprep.subr.mxu0 0.0
  %718 = vmatpush1.msra.mxu0 0.0
  %719 = vmatprep.subr.mxu0 0.0
  %720 = vmatpush1.msra.mxu0 0.0
  %721 = vmatprep.subr.mxu0 0.0
  %722 = vmatpush1.msra.mxu0 0.0
  %723 = vmatprep.subr.mxu0 0.0
  %724 = vmatpush1.msra.mxu0 0.0
  %725 = vmatprep.subr.mxu0 0.0
  %726 = vmatpush1.msra.mxu0 0.0
  %727 = vmatprep.subr.mxu0 0.0
  %728 = vmatpush1.msra.mxu0 0.0
  %729 = vmatprep.subr.mxu0 0.0
  %730 = vmatpush1.msra.mxu0 0.0
  %731 = vmatprep.subr.mxu0 0.0
  %732 = vmatpush1.msra.mxu0 0.0
  %733 = vmatprep.subr.mxu0 0.0
  %734 = vmatpush1.msra.mxu0 0.0
  %735 = vmatprep.subr.mxu0 0.0
  %736 = vmatpush1.msra.mxu0 0.0
  %737 = vmatprep.subr.mxu0 0.0
  %738 = vmatpush1.msra.mxu0 0.0
  %739 = vmatprep.subr.mxu0 0.0
  %740 = vmatpush1.msra.mxu0 0.0
  %741 = vmatprep.subr.mxu0 0.0
  %742 = vmatpush1.msra.mxu0 0.0
  %743 = vmatprep.subr.mxu0 0.0
  %744 = vmatpush1.msra.mxu0 0.0
  %745 = vmatprep.subr.mxu0 0.0
  %746 = vmatpush1.msra.mxu0 0.0
  %747 = vmatprep.subr.mxu0 0.0
  %748 = vmatpush1.msra.mxu0 0.0
  %749 = vmatprep.subr.mxu0 0.0
  %750 = vmatpush1.msra.mxu0 0.0
  %751 = vmatprep.subr.mxu0 0.0
  %752 = vmatpush1.msra.mxu0 0.0
  %753 = vmatprep.subr.mxu0 0.0
  %754 = vmatpush1.msra.mxu0 0.0
  %755 = vmatprep.subr.mxu0 0.0
  %756 = vmatpush1.msra.mxu0 0.0
  %757 = vmatprep.subr.mxu0 0.0
  %758 = vmatpush1.msra.mxu0 0.0
  %759 = vmatprep.subr.mxu0 0.0
  %760 = vmatpush1.msra.mxu0 0.0
  %761 = vmatprep.subr.mxu0 0.0
  %762 = vmatpush1.msra.mxu0 0.0
  %763 = vmatprep.subr.mxu0 0.0
  %764 = vmatpush1.msra.mxu0 0.0
  %765 = vmatprep.subr.mxu0 0.0
  %766 = vmatpush1.msra.mxu0 0.0
  %767 = vmatprep.subr.mxu0 0.0
  %768 = vmatpush1.msra.mxu0 0.0
  %769 = vmatprep.subr.mxu0 0.0
  %770 = vmatpush1.msra.mxu0 0.0
  %771 = vmatprep.subr.mxu0 0.0
  %772 = vmatpush1.msra.mxu0 0.0
  %773 = vmatprep.subr.mxu0 0.0
  %774 = vmatpush1.msra.mxu0 0.0
  %775 = vmatprep.subr.mxu0 0.0
  %776 = vmatpush1.msra.mxu0 0.0
  %777 = vmatprep.mubr.f32.mxu0 0.0
  %778 = vmatmul.mubr.f32.gmra.mrb[0].mxu0 %v711
  %v779 = vpop.f32.mrb[0].mxu0
  %v780 = vadd.f32 %v68, %v779
  %v781 = vpop.f32.mrb[0].mxu0
  %v782 = vadd.f32 %v68, %v781
  %783 = vdwg.mxu0
  %784 = vmatprep.subr.mxu0 %v681
  %785 = vmatpush1.msra.mxu0 %v680
  %786 = vmatprep.subr.mxu0 %v697
  %787 = vmatpush1.msra.mxu0 %v696
  %788 = vmatprep.subr.mxu0 0.0
  %789 = vmatpush1.msra.mxu0 0.0
  %790 = vmatprep.subr.mxu0 0.0
  %791 = vmatpush1.msra.mxu0 0.0
  %792 = vmatprep.subr.mxu0 0.0
  %793 = vmatpush1.msra.mxu0 0.0
  %794 = vmatprep.subr.mxu0 0.0
  %795 = vmatpush1.msra.mxu0 0.0
  %796 = vmatprep.subr.mxu0 0.0
  %797 = vmatpush1.msra.mxu0 0.0
  %798 = vmatprep.subr.mxu0 0.0
  %799 = vmatpush1.msra.mxu0 0.0
  %800 = vmatprep.subr.mxu0 0.0
  %801 = vmatpush1.msra.mxu0 0.0
  %802 = vmatprep.subr.mxu0 0.0
  %803 = vmatpush1.msra.mxu0 0.0
  %804 = vmatprep.subr.mxu0 0.0
  %805 = vmatpush1.msra.mxu0 0.0
  %806 = vmatprep.subr.mxu0 0.0
  %807 = vmatpush1.msra.mxu0 0.0
  %808 = vmatprep.subr.mxu0 0.0
  %809 = vmatpush1.msra.mxu0 0.0
  %810 = vmatprep.subr.mxu0 0.0
  %811 = vmatpush1.msra.mxu0 0.0
  %812 = vmatprep.subr.mxu0 0.0
  %813 = vmatpush1.msra.mxu0 0.0
  %814 = vmatprep.subr.mxu0 0.0
  %815 = vmatpush1.msra.mxu0 0.0
  %816 = vmatprep.subr.mxu0 0.0
  %817 = vmatpush1.msra.mxu0 0.0
  %818 = vmatprep.subr.mxu0 0.0
  %819 = vmatpush1.msra.mxu0 0.0
  %820 = vmatprep.subr.mxu0 0.0
  %821 = vmatpush1.msra.mxu0 0.0
  %822 = vmatprep.subr.mxu0 0.0
  %823 = vmatpush1.msra.mxu0 0.0
  %824 = vmatprep.subr.mxu0 0.0
  %825 = vmatpush1.msra.mxu0 0.0
  %826 = vmatprep.subr.mxu0 0.0
  %827 = vmatpush1.msra.mxu0 0.0
  %828 = vmatprep.subr.mxu0 0.0
  %829 = vmatpush1.msra.mxu0 0.0
  %830 = vmatprep.subr.mxu0 0.0
  %831 = vmatpush1.msra.mxu0 0.0
  %832 = vmatprep.subr.mxu0 0.0
  %833 = vmatpush1.msra.mxu0 0.0
  %834 = vmatprep.subr.mxu0 0.0
  %835 = vmatpush1.msra.mxu0 0.0
  %836 = vmatprep.subr.mxu0 0.0
  %837 = vmatpush1.msra.mxu0 0.0
  %838 = vmatprep.subr.mxu0 0.0
  %839 = vmatpush1.msra.mxu0 0.0
  %840 = vmatprep.subr.mxu0 0.0
  %841 = vmatpush1.msra.mxu0 0.0
  %842 = vmatprep.subr.mxu0 0.0
  %843 = vmatpush1.msra.mxu0 0.0
  %844 = vmatprep.subr.mxu0 0.0
  %845 = vmatpush1.msra.mxu0 0.0
  %846 = vmatprep.subr.mxu0 0.0
  %847 = vmatpush1.msra.mxu0 0.0
  %848 = vmatprep.mubr.f32.mxu0 0.0
  %849 = vmatmul.mubr.f32.gmra.mrb[0].mxu0 %v711
  %v850 = vpop.f32.mrb[0].mxu0
  %v851 = vadd.f32 %v68, %v850
  %v852 = vpop.f32.mrb[0].mxu0
  %v853 = vadd.f32 %v68, %v852
  %854 = vdwg.mxu0
  %855 = vmatprep.subr.mxu0 %v683
  %856 = vmatpush1.msra.mxu0 %v682
  %857 = vmatprep.subr.mxu0 %v699
  %858 = vmatpush1.msra.mxu0 %v698
  %859 = vmatprep.subr.mxu0 0.0
  %860 = vmatpush1.msra.mxu0 0.0
  %861 = vmatprep.subr.mxu0 0.0
  %862 = vmatpush1.msra.mxu0 0.0
  %863 = vmatprep.subr.mxu0 0.0
  %864 = vmatpush1.msra.mxu0 0.0
  %865 = vmatprep.subr.mxu0 0.0
  %866 = vmatpush1.msra.mxu0 0.0
  %867 = vmatprep.subr.mxu0 0.0
  %868 = vmatpush1.msra.mxu0 0.0
  %869 = vmatprep.subr.mxu0 0.0
  %870 = vmatpush1.msra.mxu0 0.0
  %871 = vmatprep.subr.mxu0 0.0
  %872 = vmatpush1.msra.mxu0 0.0
  %873 = vmatprep.subr.mxu0 0.0
  %874 = vmatpush1.msra.mxu0 0.0
  %875 = vmatprep.subr.mxu0 0.0
  %876 = vmatpush1.msra.mxu0 0.0
  %877 = vmatprep.subr.mxu0 0.0
  %878 = vmatpush1.msra.mxu0 0.0
  %879 = vmatprep.subr.mxu0 0.0
  %880 = vmatpush1.msra.mxu0 0.0
  %881 = vmatprep.subr.mxu0 0.0
  %882 = vmatpush1.msra.mxu0 0.0
  %883 = vmatprep.subr.mxu0 0.0
  %884 = vmatpush1.msra.mxu0 0.0
  %885 = vmatprep.subr.mxu0 0.0
  %886 = vmatpush1.msra.mxu0 0.0
  %887 = vmatprep.subr.mxu0 0.0
  %888 = vmatpush1.msra.mxu0 0.0
  %889 = vmatprep.subr.mxu0 0.0
  %890 = vmatpush1.msra.mxu0 0.0
  %891 = vmatprep.subr.mxu0 0.0
  %892 = vmatpush1.msra.mxu0 0.0
  %893 = vmatprep.subr.mxu0 0.0
  %894 = vmatpush1.msra.mxu0 0.0
  %895 = vmatprep.subr.mxu0 0.0
  %896 = vmatpush1.msra.mxu0 0.0
  %897 = vmatprep.subr.mxu0 0.0
  %898 = vmatpush1.msra.mxu0 0.0
  %899 = vmatprep.subr.mxu0 0.0
  %900 = vmatpush1.msra.mxu0 0.0
  %901 = vmatprep.subr.mxu0 0.0
  %902 = vmatpush1.msra.mxu0 0.0
  %903 = vmatprep.subr.mxu0 0.0
  %904 = vmatpush1.msra.mxu0 0.0
  %905 = vmatprep.subr.mxu0 0.0
  %906 = vmatpush1.msra.mxu0 0.0
  %907 = vmatprep.subr.mxu0 0.0
  %908 = vmatpush1.msra.mxu0 0.0
  %909 = vmatprep.subr.mxu0 0.0
  %910 = vmatpush1.msra.mxu0 0.0
  %911 = vmatprep.subr.mxu0 0.0
  %912 = vmatpush1.msra.mxu0 0.0
  %913 = vmatprep.subr.mxu0 0.0
  %914 = vmatpush1.msra.mxu0 0.0
  %915 = vmatprep.subr.mxu0 0.0
  %916 = vmatpush1.msra.mxu0 0.0
  %917 = vmatprep.subr.mxu0 0.0
  %918 = vmatpush1.msra.mxu0 0.0
  %919 = vmatprep.mubr.f32.mxu0 0.0
  %920 = vmatmul.mubr.f32.gmra.mrb[0].mxu0 %v711
  %v921 = vpop.f32.mrb[0].mxu0
  %v922 = vadd.f32 %v68, %v921
  %v923 = vpop.f32.mrb[0].mxu0
  %v924 = vadd.f32 %v68, %v923
  %925 = vdwg.mxu0
  %926 = vmatprep.subr.mxu0 %v685
  %927 = vmatpush1.msra.mxu0 %v684
  %928 = vmatprep.subr.mxu0 %v701
  %929 = vmatpush1.msra.mxu0 %v700
  %930 = vmatprep.subr.mxu0 0.0
  %931 = vmatpush1.msra.mxu0 0.0
  %932 = vmatprep.subr.mxu0 0.0
  %933 = vmatpush1.msra.mxu0 0.0
  %934 = vmatprep.subr.mxu0 0.0
  %935 = vmatpush1.msra.mxu0 0.0
  %936 = vmatprep.subr.mxu0 0.0
  %937 = vmatpush1.msra.mxu0 0.0
  %938 = vmatprep.subr.mxu0 0.0
  %939 = vmatpush1.msra.mxu0 0.0
  %940 = vmatprep.subr.mxu0 0.0
  %941 = vmatpush1.msra.mxu0 0.0
  %942 = vmatprep.subr.mxu0 0.0
  %943 = vmatpush1.msra.mxu0 0.0
  %944 = vmatprep.subr.mxu0 0.0
  %945 = vmatpush1.msra.mxu0 0.0
  %946 = vmatprep.subr.mxu0 0.0
  %947 = vmatpush1.msra.mxu0 0.0
  %948 = vmatprep.subr.mxu0 0.0
  %949 = vmatpush1.msra.mxu0 0.0
  %950 = vmatprep.subr.mxu0 0.0
  %951 = vmatpush1.msra.mxu0 0.0
  %952 = vmatprep.subr.mxu0 0.0
  %953 = vmatpush1.msra.mxu0 0.0
  %954 = vmatprep.subr.mxu0 0.0
  %955 = vmatpush1.msra.mxu0 0.0
  %956 = vmatprep.subr.mxu0 0.0
  %957 = vmatpush1.msra.mxu0 0.0
  %958 = vmatprep.subr.mxu0 0.0
  %959 = vmatpush1.msra.mxu0 0.0
  %960 = vmatprep.subr.mxu0 0.0
  %961 = vmatpush1.msra.mxu0 0.0
  %962 = vmatprep.subr.mxu0 0.0
  %963 = vmatpush1.msra.mxu0 0.0
  %964 = vmatprep.subr.mxu0 0.0
  %965 = vmatpush1.msra.mxu0 0.0
  %966 = vmatprep.subr.mxu0 0.0
  %967 = vmatpush1.msra.mxu0 0.0
  %968 = vmatprep.subr.mxu0 0.0
  %969 = vmatpush1.msra.mxu0 0.0
  %970 = vmatprep.subr.mxu0 0.0
  %971 = vmatpush1.msra.mxu0 0.0
  %972 = vmatprep.subr.mxu0 0.0
  %973 = vmatpush1.msra.mxu0 0.0
  %974 = vmatprep.subr.mxu0 0.0
  %975 = vmatpush1.msra.mxu0 0.0
  %976 = vmatprep.subr.mxu0 0.0
  %977 = vmatpush1.msra.mxu0 0.0
  %978 = vmatprep.subr.mxu0 0.0
  %979 = vmatpush1.msra.mxu0 0.0
  %980 = vmatprep.subr.mxu0 0.0
  %981 = vmatpush1.msra.mxu0 0.0
  %982 = vmatprep.subr.mxu0 0.0
  %983 = vmatpush1.msra.mxu0 0.0
  %984 = vmatprep.subr.mxu0 0.0
  %985 = vmatpush1.msra.mxu0 0.0
  %986 = vmatprep.subr.mxu0 0.0
  %987 = vmatpush1.msra.mxu0 0.0
  %988 = vmatprep.subr.mxu0 0.0
  %989 = vmatpush1.msra.mxu0 0.0
  %990 = vmatprep.mubr.f32.mxu0 0.0
  %991 = vmatmul.mubr.f32.gmra.mrb[0].mxu0 %v711
  %v992 = vpop.f32.mrb[0].mxu0
  %v993 = vadd.f32 %v68, %v992
  %v994 = vpop.f32.mrb[0].mxu0
  %v995 = vadd.f32 %v68, %v994
  %996 = vdwg.mxu0
  %997 = vmatprep.subr.mxu0 %v687
  %998 = vmatpush1.msra.mxu0 %v686
  %999 = vmatprep.subr.mxu0 %v703
  %1000 = vmatpush1.msra.mxu0 %v702
  %1001 = vmatprep.subr.mxu0 0.0
  %1002 = vmatpush1.msra.mxu0 0.0
  %1003 = vmatprep.subr.mxu0 0.0
  %1004 = vmatpush1.msra.mxu0 0.0
  %1005 = vmatprep.subr.mxu0 0.0
  %1006 = vmatpush1.msra.mxu0 0.0
  %1007 = vmatprep.subr.mxu0 0.0
  %1008 = vmatpush1.msra.mxu0 0.0
  %1009 = vmatprep.subr.mxu0 0.0
  %1010 = vmatpush1.msra.mxu0 0.0
  %1011 = vmatprep.subr.mxu0 0.0
  %1012 = vmatpush1.msra.mxu0 0.0
  %1013 = vmatprep.subr.mxu0 0.0
  %1014 = vmatpush1.msra.mxu0 0.0
  %1015 = vmatprep.subr.mxu0 0.0
  %1016 = vmatpush1.msra.mxu0 0.0
  %1017 = vmatprep.subr.mxu0 0.0
  %1018 = vmatpush1.msra.mxu0 0.0
  %1019 = vmatprep.subr.mxu0 0.0
  %1020 = vmatpush1.msra.mxu0 0.0
  %1021 = vmatprep.subr.mxu0 0.0
  %1022 = vmatpush1.msra.mxu0 0.0
  %1023 = vmatprep.subr.mxu0 0.0
  %1024 = vmatpush1.msra.mxu0 0.0
  %1025 = vmatprep.subr.mxu0 0.0
  %1026 = vmatpush1.msra.mxu0 0.0
  %1027 = vmatprep.subr.mxu0 0.0
  %1028 = vmatpush1.msra.mxu0 0.0
  %1029 = vmatprep.subr.mxu0 0.0
  %1030 = vmatpush1.msra.mxu0 0.0
  %1031 = vmatprep.subr.mxu0 0.0
  %1032 = vmatpush1.msra.mxu0 0.0
  %1033 = vmatprep.subr.mxu0 0.0
  %1034 = vmatpush1.msra.mxu0 0.0
  %1035 = vmatprep.subr.mxu0 0.0
  %1036 = vmatpush1.msra.mxu0 0.0
  %1037 = vmatprep.subr.mxu0 0.0
  %1038 = vmatpush1.msra.mxu0 0.0
  %1039 = vmatprep.subr.mxu0 0.0
  %1040 = vmatpush1.msra.mxu0 0.0
  %1041 = vmatprep.subr.mxu0 0.0
  %1042 = vmatpush1.msra.mxu0 0.0
  %1043 = vmatprep.subr.mxu0 0.0
  %1044 = vmatpush1.msra.mxu0 0.0
  %1045 = vmatprep.subr.mxu0 0.0
  %1046 = vmatpush1.msra.mxu0 0.0
  %1047 = vmatprep.subr.mxu0 0.0
  %1048 = vmatpush1.msra.mxu0 0.0
  %1049 = vmatprep.subr.mxu0 0.0
  %1050 = vmatpush1.msra.mxu0 0.0
  %1051 = vmatprep.subr.mxu0 0.0
  %1052 = vmatpush1.msra.mxu0 0.0
  %1053 = vmatprep.subr.mxu0 0.0
  %1054 = vmatpush1.msra.mxu0 0.0
  %1055 = vmatprep.subr.mxu0 0.0
  %1056 = vmatpush1.msra.mxu0 0.0
  %1057 = vmatprep.subr.mxu0 0.0
  %1058 = vmatpush1.msra.mxu0 0.0
  %1059 = vmatprep.subr.mxu0 0.0
  %1060 = vmatpush1.msra.mxu0 0.0
  %1061 = vmatprep.mubr.f32.mxu0 0.0
  %1062 = vmatmul.mubr.f32.gmra.mrb[0].mxu0 %v711
  %v1063 = vpop.f32.mrb[0].mxu0
  %v1064 = vadd.f32 %v68, %v1063
  %v1065 = vpop.f32.mrb[0].mxu0
  %v1066 = vadd.f32 %v68, %v1065
  %1067 = vdwg.mxu0
  %1068 = vmatprep.subr.mxu0 %v689
  %1069 = vmatpush1.msra.mxu0 %v688
  %1070 = vmatprep.subr.mxu0 %v705
  %1071 = vmatpush1.msra.mxu0 %v704
  %1072 = vmatprep.subr.mxu0 0.0
  %1073 = vmatpush1.msra.mxu0 0.0
  %1074 = vmatprep.subr.mxu0 0.0
  %1075 = vmatpush1.msra.mxu0 0.0
  %1076 = vmatprep.subr.mxu0 0.0
  %1077 = vmatpush1.msra.mxu0 0.0
  %1078 = vmatprep.subr.mxu0 0.0
  %1079 = vmatpush1.msra.mxu0 0.0
  %1080 = vmatprep.subr.mxu0 0.0
  %1081 = vmatpush1.msra.mxu0 0.0
  %1082 = vmatprep.subr.mxu0 0.0
  %1083 = vmatpush1.msra.mxu0 0.0
  %1084 = vmatprep.subr.mxu0 0.0
  %1085 = vmatpush1.msra.mxu0 0.0
  %1086 = vmatprep.subr.mxu0 0.0
  %1087 = vmatpush1.msra.mxu0 0.0
  %1088 = vmatprep.subr.mxu0 0.0
  %1089 = vmatpush1.msra.mxu0 0.0
  %1090 = vmatprep.subr.mxu0 0.0
  %1091 = vmatpush1.msra.mxu0 0.0
  %1092 = vmatprep.subr.mxu0 0.0
  %1093 = vmatpush1.msra.mxu0 0.0
  %1094 = vmatprep.subr.mxu0 0.0
  %1095 = vmatpush1.msra.mxu0 0.0
  %1096 = vmatprep.subr.mxu0 0.0
  %1097 = vmatpush1.msra.mxu0 0.0
  %1098 = vmatprep.subr.mxu0 0.0
  %1099 = vmatpush1.msra.mxu0 0.0
  %1100 = vmatprep.subr.mxu0 0.0
  %1101 = vmatpush1.msra.mxu0 0.0
  %1102 = vmatprep.subr.mxu0 0.0
  %1103 = vmatpush1.msra.mxu0 0.0
  %1104 = vmatprep.subr.mxu0 0.0
  %1105 = vmatpush1.msra.mxu0 0.0
  %1106 = vmatprep.subr.mxu0 0.0
  %1107 = vmatpush1.msra.mxu0 0.0
  %1108 = vmatprep.subr.mxu0 0.0
  %1109 = vmatpush1.msra.mxu0 0.0
  %1110 = vmatprep.subr.mxu0 0.0
  %1111 = vmatpush1.msra.mxu0 0.0
  %1112 = vmatprep.subr.mxu0 0.0
  %1113 = vmatpush1.msra.mxu0 0.0
  %1114 = vmatprep.subr.mxu0 0.0
  %1115 = vmatpush1.msra.mxu0 0.0
  %1116 = vmatprep.subr.mxu0 0.0
  %1117 = vmatpush1.msra.mxu0 0.0
  %1118 = vmatprep.subr.mxu0 0.0
  %1119 = vmatpush1.msra.mxu0 0.0
  %1120 = vmatprep.subr.mxu0 0.0
  %1121 = vmatpush1.msra.mxu0 0.0
  %1122 = vmatprep.subr.mxu0 0.0
  %1123 = vmatpush1.msra.mxu0 0.0
  %1124 = vmatprep.subr.mxu0 0.0
  %1125 = vmatpush1.msra.mxu0 0.0
  %1126 = vmatprep.subr.mxu0 0.0
  %1127 = vmatpush1.msra.mxu0 0.0
  %1128 = vmatprep.subr.mxu0 0.0
  %1129 = vmatpush1.msra.mxu0 0.0
  %1130 = vmatprep.subr.mxu0 0.0
  %1131 = vmatpush1.msra.mxu0 0.0
  %1132 = vmatprep.mubr.f32.mxu0 0.0
  %1133 = vmatmul.mubr.f32.gmra.mrb[0].mxu0 %v711
  %v1134 = vpop.f32.mrb[0].mxu0
  %v1135 = vadd.f32 %v68, %v1134
  %v1136 = vpop.f32.mrb[0].mxu0
  %v1137 = vadd.f32 %v68, %v1136
  %1138 = vdwg.mxu0
  %1139 = vmatprep.subr.mxu0 %v691
  %1140 = vmatpush1.msra.mxu0 %v690
  %1141 = vmatprep.subr.mxu0 %v707
  %1142 = vmatpush1.msra.mxu0 %v706
  %1143 = vmatprep.subr.mxu0 0.0
  %1144 = vmatpush1.msra.mxu0 0.0
  %1145 = vmatprep.subr.mxu0 0.0
  %1146 = vmatpush1.msra.mxu0 0.0
  %1147 = vmatprep.subr.mxu0 0.0
  %1148 = vmatpush1.msra.mxu0 0.0
  %1149 = vmatprep.subr.mxu0 0.0
  %1150 = vmatpush1.msra.mxu0 0.0
  %1151 = vmatprep.subr.mxu0 0.0
  %1152 = vmatpush1.msra.mxu0 0.0
  %1153 = vmatprep.subr.mxu0 0.0
  %1154 = vmatpush1.msra.mxu0 0.0
  %1155 = vmatprep.subr.mxu0 0.0
  %1156 = vmatpush1.msra.mxu0 0.0
  %1157 = vmatprep.subr.mxu0 0.0
  %1158 = vmatpush1.msra.mxu0 0.0
  %1159 = vmatprep.subr.mxu0 0.0
  %1160 = vmatpush1.msra.mxu0 0.0
  %1161 = vmatprep.subr.mxu0 0.0
  %1162 = vmatpush1.msra.mxu0 0.0
  %1163 = vmatprep.subr.mxu0 0.0
  %1164 = vmatpush1.msra.mxu0 0.0
  %1165 = vmatprep.subr.mxu0 0.0
  %1166 = vmatpush1.msra.mxu0 0.0
  %1167 = vmatprep.subr.mxu0 0.0
  %1168 = vmatpush1.msra.mxu0 0.0
  %1169 = vmatprep.subr.mxu0 0.0
  %1170 = vmatpush1.msra.mxu0 0.0
  %1171 = vmatprep.subr.mxu0 0.0
  %1172 = vmatpush1.msra.mxu0 0.0
  %1173 = vmatprep.subr.mxu0 0.0
  %1174 = vmatpush1.msra.mxu0 0.0
  %1175 = vmatprep.subr.mxu0 0.0
  %1176 = vmatpush1.msra.mxu0 0.0
  %1177 = vmatprep.subr.mxu0 0.0
  %1178 = vmatpush1.msra.mxu0 0.0
  %1179 = vmatprep.subr.mxu0 0.0
  %1180 = vmatpush1.msra.mxu0 0.0
  %1181 = vmatprep.subr.mxu0 0.0
  %1182 = vmatpush1.msra.mxu0 0.0
  %1183 = vmatprep.subr.mxu0 0.0
  %1184 = vmatpush1.msra.mxu0 0.0
  %1185 = vmatprep.subr.mxu0 0.0
  %1186 = vmatpush1.msra.mxu0 0.0
  %1187 = vmatprep.subr.mxu0 0.0
  %1188 = vmatpush1.msra.mxu0 0.0
  %1189 = vmatprep.subr.mxu0 0.0
  %1190 = vmatpush1.msra.mxu0 0.0
  %1191 = vmatprep.subr.mxu0 0.0
  %1192 = vmatpush1.msra.mxu0 0.0
  %1193 = vmatprep.subr.mxu0 0.0
  %1194 = vmatpush1.msra.mxu0 0.0
  %1195 = vmatprep.subr.mxu0 0.0
  %1196 = vmatpush1.msra.mxu0 0.0
  %1197 = vmatprep.subr.mxu0 0.0
  %1198 = vmatpush1.msra.mxu0 0.0
  %1199 = vmatprep.subr.mxu0 0.0
  %1200 = vmatpush1.msra.mxu0 0.0
  %1201 = vmatprep.subr.mxu0 0.0
  %1202 = vmatpush1.msra.mxu0 0.0
  %1203 = vmatprep.mubr.f32.mxu0 0.0
  %1204 = vmatmul.mubr.f32.gmra.mrb[0].mxu0 %v711
  %v1205 = vpop.f32.mrb[0].mxu0
  %v1206 = vadd.f32 %v68, %v1205
  %v1207 = vpop.f32.mrb[0].mxu0
  %v1208 = vadd.f32 %v68, %v1207
  %1209 = vdwg.mxu0
  %1210 = vmatprep.subr.mxu0 %v693
  %1211 = vmatpush1.msra.mxu0 %v692
  %1212 = vmatprep.subr.mxu0 %v709
  %1213 = vmatpush1.msra.mxu0 %v708
  %1214 = vmatprep.subr.mxu0 0.0
  %1215 = vmatpush1.msra.mxu0 0.0
  %1216 = vmatprep.subr.mxu0 0.0
  %1217 = vmatpush1.msra.mxu0 0.0
  %1218 = vmatprep.subr.mxu0 0.0
  %1219 = vmatpush1.msra.mxu0 0.0
  %1220 = vmatprep.subr.mxu0 0.0
  %1221 = vmatpush1.msra.mxu0 0.0
  %1222 = vmatprep.subr.mxu0 0.0
  %1223 = vmatpush1.msra.mxu0 0.0
  %1224 = vmatprep.subr.mxu0 0.0
  %1225 = vmatpush1.msra.mxu0 0.0
  %1226 = vmatprep.subr.mxu0 0.0
  %1227 = vmatpush1.msra.mxu0 0.0
  %1228 = vmatprep.subr.mxu0 0.0
  %1229 = vmatpush1.msra.mxu0 0.0
  %1230 = vmatprep.subr.mxu0 0.0
  %1231 = vmatpush1.msra.mxu0 0.0
  %1232 = vmatprep.subr.mxu0 0.0
  %1233 = vmatpush1.msra.mxu0 0.0
  %1234 = vmatprep.subr.mxu0 0.0
  %1235 = vmatpush1.msra.mxu0 0.0
  %1236 = vmatprep.subr.mxu0 0.0
  %1237 = vmatpush1.msra.mxu0 0.0
  %1238 = vmatprep.subr.mxu0 0.0
  %1239 = vmatpush1.msra.mxu0 0.0
  %1240 = vmatprep.subr.mxu0 0.0
  %1241 = vmatpush1.msra.mxu0 0.0
  %1242 = vmatprep.subr.mxu0 0.0
  %1243 = vmatpush1.msra.mxu0 0.0
  %1244 = vmatprep.subr.mxu0 0.0
  %1245 = vmatpush1.msra.mxu0 0.0
  %1246 = vmatprep.subr.mxu0 0.0
  %1247 = vmatpush1.msra.mxu0 0.0
  %1248 = vmatprep.subr.mxu0 0.0
  %1249 = vmatpush1.msra.mxu0 0.0
  %1250 = vmatprep.subr.mxu0 0.0
  %1251 = vmatpush1.msra.mxu0 0.0
  %1252 = vmatprep.subr.mxu0 0.0
  %1253 = vmatpush1.msra.mxu0 0.0
  %1254 = vmatprep.subr.mxu0 0.0
  %1255 = vmatpush1.msra.mxu0 0.0
  %1256 = vmatprep.subr.mxu0 0.0
  %1257 = vmatpush1.msra.mxu0 0.0
  %1258 = vmatprep.subr.mxu0 0.0
  %1259 = vmatpush1.msra.mxu0 0.0
  %1260 = vmatprep.subr.mxu0 0.0
  %1261 = vmatpush1.msra.mxu0 0.0
  %1262 = vmatprep.subr.mxu0 0.0
  %1263 = vmatpush1.msra.mxu0 0.0
  %1264 = vmatprep.subr.mxu0 0.0
  %1265 = vmatpush1.msra.mxu0 0.0
  %1266 = vmatprep.subr.mxu0 0.0
  %1267 = vmatpush1.msra.mxu0 0.0
  %1268 = vmatprep.subr.mxu0 0.0
  %1269 = vmatpush1.msra.mxu0 0.0
  %1270 = vmatprep.subr.mxu0 0.0
  %1271 = vmatpush1.msra.mxu0 0.0
  %1272 = vmatprep.subr.mxu0 0.0
  %1273 = vmatpush1.msra.mxu0 0.0
  %1274 = vmatprep.mubr.f32.mxu0 0.0
  %1275 = vmatmul.mubr.f32.gmra.mrb[0].mxu0 %v711
  %v1276 = vpop.f32.mrb[0].mxu0
  %v1277 = vadd.f32 %v68, %v1276
  %v1278 = vpop.f32.mrb[0].mxu0
  %v1279 = vadd.f32 %v68, %v1278
  %1280 = vdwg.mxu0
  %v1281 = vtanh.pop %v780
  %v1282 = vtanh.pop %v782
  %v1283 = vtanh.pop %v851
  %v1284 = vtanh.pop %v853
  %v1285 = vtanh.pop %v922
  %v1286 = vtanh.pop %v924
  %v1287 = vtanh.pop %v993
  %v1288 = vtanh.pop %v995
  %v1289 = vtanh.pop %v1064
  %v1290 = vtanh.pop %v1066
  %v1291 = vtanh.pop %v1135
  %v1292 = vtanh.pop %v1137
  %v1293 = vtanh.pop %v1206
  %v1294 = vtanh.pop %v1208
  %v1295 = vtanh.pop %v1277
  %v1296 = vtanh.pop %v1279
  %s1297 = scalar_lea.vmem %s1, 4
  %v1298 = vld [vmem:[%s1297] sm:$0x3]
  %v1299 = vunpack.c.l.bf16 %v1298
  %s1300 = scalar_lea.vmem %s0, 256
  %v1301 = vld [vmem:[%s1300] sm:$0xff]
  %v1302 = vld [vmem:[%s1300 + $0x8] sm:$0xff]
  %v1303 = vld [vmem:[%s1300 + $0x10] sm:$0xff]
  %v1304 = vld [vmem:[%s1300 + $0x18] sm:$0xff]
  %v1305 = vld [vmem:[%s1300 + $0x20] sm:$0xff]
  %v1306 = vld [vmem:[%s1300 + $0x28] sm:$0xff]
  %v1307 = vld [vmem:[%s1300 + $0x30] sm:$0xff]
  %v1308 = vld [vmem:[%s1300 + $0x38] sm:$0xff]
  %v1309 = vld [vmem:[%s1300 + $0x40] sm:$0xff]
  %v1310 = vld [vmem:[%s1300 + $0x48] sm:$0xff]
  %v1311 = vld [vmem:[%s1300 + $0x50] sm:$0xff]
  %v1312 = vld [vmem:[%s1300 + $0x58] sm:$0xff]
  %v1313 = vld [vmem:[%s1300 + $0x60] sm:$0xff]
  %v1314 = vld [vmem:[%s1300 + $0x68] sm:$0xff]
  %v1315 = vld [vmem:[%s1300 + $0x70] sm:$0xff]
  %v1316 = vld [vmem:[%s1300 + $0x78] sm:$0xff]
  %v1317 = vunpack.c.l.bf16 %v1301
  %v1318 = vunpack.c.h.bf16 %v1301
  %v1319 = vunpack.c.l.bf16 %v1302
  %v1320 = vunpack.c.h.bf16 %v1302
  %v1321 = vunpack.c.l.bf16 %v1303
  %v1322 = vunpack.c.h.bf16 %v1303
  %v1323 = vunpack.c.l.bf16 %v1304
  %v1324 = vunpack.c.h.bf16 %v1304
  %v1325 = vunpack.c.l.bf16 %v1305
  %v1326 = vunpack.c.h.bf16 %v1305
  %v1327 = vunpack.c.l.bf16 %v1306
  %v1328 = vunpack.c.h.bf16 %v1306
  %v1329 = vunpack.c.l.bf16 %v1307
  %v1330 = vunpack.c.h.bf16 %v1307
  %v1331 = vunpack.c.l.bf16 %v1308
  %v1332 = vunpack.c.h.bf16 %v1308
  %v1333 = vunpack.c.l.bf16 %v1309
  %v1334 = vunpack.c.h.bf16 %v1309
  %v1335 = vunpack.c.l.bf16 %v1310
  %v1336 = vunpack.c.h.bf16 %v1310
  %v1337 = vunpack.c.l.bf16 %v1311
  %v1338 = vunpack.c.h.bf16 %v1311
  %v1339 = vunpack.c.l.bf16 %v1312
  %v1340 = vunpack.c.h.bf16 %v1312
  %v1341 = vunpack.c.l.bf16 %v1313
  %v1342 = vunpack.c.h.bf16 %v1313
  %v1343 = vunpack.c.l.bf16 %v1314
  %v1344 = vunpack.c.h.bf16 %v1314
  %v1345 = vunpack.c.l.bf16 %v1315
  %v1346 = vunpack.c.h.bf16 %v1315
  %v1347 = vunpack.c.l.bf16 %v1316
  %v1348 = vunpack.c.h.bf16 %v1316
  %v1350 = vsel %vm70, %v1299, 0
  %1352 = vmatprep.subr.mxu0 %v1318
  %1353 = vmatpush1.msra.mxu0 %v1317
  %1354 = vmatprep.subr.mxu0 %v1334
  %1355 = vmatpush1.msra.mxu0 %v1333
  %1356 = vmatprep.subr.mxu0 0.0
  %1357 = vmatpush1.msra.mxu0 0.0
  %1358 = vmatprep.subr.mxu0 0.0
  %1359 = vmatpush1.msra.mxu0 0.0
  %1360 = vmatprep.subr.mxu0 0.0
  %1361 = vmatpush1.msra.mxu0 0.0
  %1362 = vmatprep.subr.mxu0 0.0
  %1363 = vmatpush1.msra.mxu0 0.0
  %1364 = vmatprep.subr.mxu0 0.0
  %1365 = vmatpush1.msra.mxu0 0.0
  %1366 = vmatprep.subr.mxu0 0.0
  %1367 = vmatpush1.msra.mxu0 0.0
  %1368 = vmatprep.subr.mxu0 0.0
  %1369 = vmatpush1.msra.mxu0 0.0
  %1370 = vmatprep.subr.mxu0 0.0
  %1371 = vmatpush1.msra.mxu0 0.0
  %1372 = vmatprep.subr.mxu0 0.0
  %1373 = vmatpush1.msra.mxu0 0.0
  %1374 = vmatprep.subr.mxu0 0.0
  %1375 = vmatpush1.msra.mxu0 0.0
  %1376 = vmatprep.subr.mxu0 0.0
  %1377 = vmatpush1.msra.mxu0 0.0
  %1378 = vmatprep.subr.mxu0 0.0
  %1379 = vmatpush1.msra.mxu0 0.0
  %1380 = vmatprep.subr.mxu0 0.0
  %1381 = vmatpush1.msra.mxu0 0.0
  %1382 = vmatprep.subr.mxu0 0.0
  %1383 = vmatpush1.msra.mxu0 0.0
  %1384 = vmatprep.subr.mxu0 0.0
  %1385 = vmatpush1.msra.mxu0 0.0
  %1386 = vmatprep.subr.mxu0 0.0
  %1387 = vmatpush1.msra.mxu0 0.0
  %1388 = vmatprep.subr.mxu0 0.0
  %1389 = vmatpush1.msra.mxu0 0.0
  %1390 = vmatprep.subr.mxu0 0.0
  %1391 = vmatpush1.msra.mxu0 0.0
  %1392 = vmatprep.subr.mxu0 0.0
  %1393 = vmatpush1.msra.mxu0 0.0
  %1394 = vmatprep.subr.mxu0 0.0
  %1395 = vmatpush1.msra.mxu0 0.0
  %1396 = vmatprep.subr.mxu0 0.0
  %1397 = vmatpush1.msra.mxu0 0.0
  %1398 = vmatprep.subr.mxu0 0.0
  %1399 = vmatpush1.msra.mxu0 0.0
  %1400 = vmatprep.subr.mxu0 0.0
  %1401 = vmatpush1.msra.mxu0 0.0
  %1402 = vmatprep.subr.mxu0 0.0
  %1403 = vmatpush1.msra.mxu0 0.0
  %1404 = vmatprep.subr.mxu0 0.0
  %1405 = vmatpush1.msra.mxu0 0.0
  %1406 = vmatprep.subr.mxu0 0.0
  %1407 = vmatpush1.msra.mxu0 0.0
  %1408 = vmatprep.subr.mxu0 0.0
  %1409 = vmatpush1.msra.mxu0 0.0
  %1410 = vmatprep.subr.mxu0 0.0
  %1411 = vmatpush1.msra.mxu0 0.0
  %1412 = vmatprep.subr.mxu0 0.0
  %1413 = vmatpush1.msra.mxu0 0.0
  %1414 = vmatprep.subr.mxu0 0.0
  %1415 = vmatpush1.msra.mxu0 0.0
  %1416 = vmatprep.mubr.f32.mxu0 0.0
  %1417 = vmatmul.mubr.f32.gmra.mrb[0].mxu0 %v1350
  %v1418 = vpop.f32.mrb[0].mxu0
  %v1419 = vadd.f32 %v68, %v1418
  %v1420 = vpop.f32.mrb[0].mxu0
  %v1421 = vadd.f32 %v68, %v1420
  %1422 = vdwg.mxu0
  %1423 = vmatprep.subr.mxu0 %v1320
  %1424 = vmatpush1.msra.mxu0 %v1319
  %1425 = vmatprep.subr.mxu0 %v1336
  %1426 = vmatpush1.msra.mxu0 %v1335
  %1427 = vmatprep.subr.mxu0 0.0
  %1428 = vmatpush1.msra.mxu0 0.0
  %1429 = vmatprep.subr.mxu0 0.0
  %1430 = vmatpush1.msra.mxu0 0.0
  %1431 = vmatprep.subr.mxu0 0.0
  %1432 = vmatpush1.msra.mxu0 0.0
  %1433 = vmatprep.subr.mxu0 0.0
  %1434 = vmatpush1.msra.mxu0 0.0
  %1435 = vmatprep.subr.mxu0 0.0
  %1436 = vmatpush1.msra.mxu0 0.0
  %1437 = vmatprep.subr.mxu0 0.0
  %1438 = vmatpush1.msra.mxu0 0.0
  %1439 = vmatprep.subr.mxu0 0.0
  %1440 = vmatpush1.msra.mxu0 0.0
  %1441 = vmatprep.subr.mxu0 0.0
  %1442 = vmatpush1.msra.mxu0 0.0
  %1443 = vmatprep.subr.mxu0 0.0
  %1444 = vmatpush1.msra.mxu0 0.0
  %1445 = vmatprep.subr.mxu0 0.0
  %1446 = vmatpush1.msra.mxu0 0.0
  %1447 = vmatprep.subr.mxu0 0.0
  %1448 = vmatpush1.msra.mxu0 0.0
  %1449 = vmatprep.subr.mxu0 0.0
  %1450 = vmatpush1.msra.mxu0 0.0
  %1451 = vmatprep.subr.mxu0 0.0
  %1452 = vmatpush1.msra.mxu0 0.0
  %1453 = vmatprep.subr.mxu0 0.0
  %1454 = vmatpush1.msra.mxu0 0.0
  %1455 = vmatprep.subr.mxu0 0.0
  %1456 = vmatpush1.msra.mxu0 0.0
  %1457 = vmatprep.subr.mxu0 0.0
  %1458 = vmatpush1.msra.mxu0 0.0
  %1459 = vmatprep.subr.mxu0 0.0
  %1460 = vmatpush1.msra.mxu0 0.0
  %1461 = vmatprep.subr.mxu0 0.0
  %1462 = vmatpush1.msra.mxu0 0.0
  %1463 = vmatprep.subr.mxu0 0.0
  %1464 = vmatpush1.msra.mxu0 0.0
  %1465 = vmatprep.subr.mxu0 0.0
  %1466 = vmatpush1.msra.mxu0 0.0
  %1467 = vmatprep.subr.mxu0 0.0
  %1468 = vmatpush1.msra.mxu0 0.0
  %1469 = vmatprep.subr.mxu0 0.0
  %1470 = vmatpush1.msra.mxu0 0.0
  %1471 = vmatprep.subr.mxu0 0.0
  %1472 = vmatpush1.msra.mxu0 0.0
  %1473 = vmatprep.subr.mxu0 0.0
  %1474 = vmatpush1.msra.mxu0 0.0
  %1475 = vmatprep.subr.mxu0 0.0
  %1476 = vmatpush1.msra.mxu0 0.0
  %1477 = vmatprep.subr.mxu0 0.0
  %1478 = vmatpush1.msra.mxu0 0.0
  %1479 = vmatprep.subr.mxu0 0.0
  %1480 = vmatpush1.msra.mxu0 0.0
  %1481 = vmatprep.subr.mxu0 0.0
  %1482 = vmatpush1.msra.mxu0 0.0
  %1483 = vmatprep.subr.mxu0 0.0
  %1484 = vmatpush1.msra.mxu0 0.0
  %1485 = vmatprep.subr.mxu0 0.0
  %1486 = vmatpush1.msra.mxu0 0.0
  %1487 = vmatprep.mubr.f32.mxu0 0.0
  %1488 = vmatmul.mubr.f32.gmra.mrb[0].mxu0 %v1350
  %v1489 = vpop.f32.mrb[0].mxu0
  %v1490 = vadd.f32 %v68, %v1489
  %v1491 = vpop.f32.mrb[0].mxu0
  %v1492 = vadd.f32 %v68, %v1491
  %1493 = vdwg.mxu0
  %1494 = vmatprep.subr.mxu0 %v1322
  %1495 = vmatpush1.msra.mxu0 %v1321
  %1496 = vmatprep.subr.mxu0 %v1338
  %1497 = vmatpush1.msra.mxu0 %v1337
  %1498 = vmatprep.subr.mxu0 0.0
  %1499 = vmatpush1.msra.mxu0 0.0
  %1500 = vmatprep.subr.mxu0 0.0
  %1501 = vmatpush1.msra.mxu0 0.0
  %1502 = vmatprep.subr.mxu0 0.0
  %1503 = vmatpush1.msra.mxu0 0.0
  %1504 = vmatprep.subr.mxu0 0.0
  %1505 = vmatpush1.msra.mxu0 0.0
  %1506 = vmatprep.subr.mxu0 0.0
  %1507 = vmatpush1.msra.mxu0 0.0
  %1508 = vmatprep.subr.mxu0 0.0
  %1509 = vmatpush1.msra.mxu0 0.0
  %1510 = vmatprep.subr.mxu0 0.0
  %1511 = vmatpush1.msra.mxu0 0.0
  %1512 = vmatprep.subr.mxu0 0.0
  %1513 = vmatpush1.msra.mxu0 0.0
  %1514 = vmatprep.subr.mxu0 0.0
  %1515 = vmatpush1.msra.mxu0 0.0
  %1516 = vmatprep.subr.mxu0 0.0
  %1517 = vmatpush1.msra.mxu0 0.0
  %1518 = vmatprep.subr.mxu0 0.0
  %1519 = vmatpush1.msra.mxu0 0.0
  %1520 = vmatprep.subr.mxu0 0.0
  %1521 = vmatpush1.msra.mxu0 0.0
  %1522 = vmatprep.subr.mxu0 0.0
  %1523 = vmatpush1.msra.mxu0 0.0
  %1524 = vmatprep.subr.mxu0 0.0
  %1525 = vmatpush1.msra.mxu0 0.0
  %1526 = vmatprep.subr.mxu0 0.0
  %1527 = vmatpush1.msra.mxu0 0.0
  %1528 = vmatprep.subr.mxu0 0.0
  %1529 = vmatpush1.msra.mxu0 0.0
  %1530 = vmatprep.subr.mxu0 0.0
  %1531 = vmatpush1.msra.mxu0 0.0
  %1532 = vmatprep.subr.mxu0 0.0
  %1533 = vmatpush1.msra.mxu0 0.0
  %1534 = vmatprep.subr.mxu0 0.0
  %1535 = vmatpush1.msra.mxu0 0.0
  %1536 = vmatprep.subr.mxu0 0.0
  %1537 = vmatpush1.msra.mxu0 0.0
  %1538 = vmatprep.subr.mxu0 0.0
  %1539 = vmatpush1.msra.mxu0 0.0
  %1540 = vmatprep.subr.mxu0 0.0
  %1541 = vmatpush1.msra.mxu0 0.0
  %1542 = vmatprep.subr.mxu0 0.0
  %1543 = vmatpush1.msra.mxu0 0.0
  %1544 = vmatprep.subr.mxu0 0.0
  %1545 = vmatpush1.msra.mxu0 0.0
  %1546 = vmatprep.subr.mxu0 0.0
  %1547 = vmatpush1.msra.mxu0 0.0
  %1548 = vmatprep.subr.mxu0 0.0
  %1549 = vmatpush1.msra.mxu0 0.0
  %1550 = vmatprep.subr.mxu0 0.0
  %1551 = vmatpush1.msra.mxu0 0.0
  %1552 = vmatprep.subr.mxu0 0.0
  %1553 = vmatpush1.msra.mxu0 0.0
  %1554 = vmatprep.subr.mxu0 0.0
  %1555 = vmatpush1.msra.mxu0 0.0
  %1556 = vmatprep.subr.mxu0 0.0
  %1557 = vmatpush1.msra.mxu0 0.0
  %1558 = vmatprep.mubr.f32.mxu0 0.0
  %1559 = vmatmul.mubr.f32.gmra.mrb[0].mxu0 %v1350
  %v1560 = vpop.f32.mrb[0].mxu0
  %v1561 = vadd.f32 %v68, %v1560
  %v1562 = vpop.f32.mrb[0].mxu0
  %v1563 = vadd.f32 %v68, %v1562
  %1564 = vdwg.mxu0
  %1565 = vmatprep.subr.mxu0 %v1324
  %1566 = vmatpush1.msra.mxu0 %v1323
  %1567 = vmatprep.subr.mxu0 %v1340
  %1568 = vmatpush1.msra.mxu0 %v1339
  %1569 = vmatprep.subr.mxu0 0.0
  %1570 = vmatpush1.msra.mxu0 0.0
  %1571 = vmatprep.subr.mxu0 0.0
  %1572 = vmatpush1.msra.mxu0 0.0
  %1573 = vmatprep.subr.mxu0 0.0
  %1574 = vmatpush1.msra.mxu0 0.0
  %1575 = vmatprep.subr.mxu0 0.0
  %1576 = vmatpush1.msra.mxu0 0.0
  %1577 = vmatprep.subr.mxu0 0.0
  %1578 = vmatpush1.msra.mxu0 0.0
  %1579 = vmatprep.subr.mxu0 0.0
  %1580 = vmatpush1.msra.mxu0 0.0
  %1581 = vmatprep.subr.mxu0 0.0
  %1582 = vmatpush1.msra.mxu0 0.0
  %1583 = vmatprep.subr.mxu0 0.0
  %1584 = vmatpush1.msra.mxu0 0.0
  %1585 = vmatprep.subr.mxu0 0.0
  %1586 = vmatpush1.msra.mxu0 0.0
  %1587 = vmatprep.subr.mxu0 0.0
  %1588 = vmatpush1.msra.mxu0 0.0
  %1589 = vmatprep.subr.mxu0 0.0
  %1590 = vmatpush1.msra.mxu0 0.0
  %1591 = vmatprep.subr.mxu0 0.0
  %1592 = vmatpush1.msra.mxu0 0.0
  %1593 = vmatprep.subr.mxu0 0.0
  %1594 = vmatpush1.msra.mxu0 0.0
  %1595 = vmatprep.subr.mxu0 0.0
  %1596 = vmatpush1.msra.mxu0 0.0
  %1597 = vmatprep.subr.mxu0 0.0
  %1598 = vmatpush1.msra.mxu0 0.0
  %1599 = vmatprep.subr.mxu0 0.0
  %1600 = vmatpush1.msra.mxu0 0.0
  %1601 = vmatprep.subr.mxu0 0.0
  %1602 = vmatpush1.msra.mxu0 0.0
  %1603 = vmatprep.subr.mxu0 0.0
  %1604 = vmatpush1.msra.mxu0 0.0
  %1605 = vmatprep.subr.mxu0 0.0
  %1606 = vmatpush1.msra.mxu0 0.0
  %1607 = vmatprep.subr.mxu0 0.0
  %1608 = vmatpush1.msra.mxu0 0.0
  %1609 = vmatprep.subr.mxu0 0.0
  %1610 = vmatpush1.msra.mxu0 0.0
  %1611 = vmatprep.subr.mxu0 0.0
  %1612 = vmatpush1.msra.mxu0 0.0
  %1613 = vmatprep.subr.mxu0 0.0
  %1614 = vmatpush1.msra.mxu0 0.0
  %1615 = vmatprep.subr.mxu0 0.0
  %1616 = vmatpush1.msra.mxu0 0.0
  %1617 = vmatprep.subr.mxu0 0.0
  %1618 = vmatpush1.msra.mxu0 0.0
  %1619 = vmatprep.subr.mxu0 0.0
  %1620 = vmatpush1.msra.mxu0 0.0
  %1621 = vmatprep.subr.mxu0 0.0
  %1622 = vmatpush1.msra.mxu0 0.0
  %1623 = vmatprep.subr.mxu0 0.0
  %1624 = vmatpush1.msra.mxu0 0.0
  %1625 = vmatprep.subr.mxu0 0.0
  %1626 = vmatpush1.msra.mxu0 0.0
  %1627 = vmatprep.subr.mxu0 0.0
  %1628 = vmatpush1.msra.mxu0 0.0
  %1629 = vmatprep.mubr.f32.mxu0 0.0
  %1630 = vmatmul.mubr.f32.gmra.mrb[0].mxu0 %v1350
  %v1631 = vpop.f32.mrb[0].mxu0
  %v1632 = vadd.f32 %v68, %v1631
  %v1633 = vpop.f32.mrb[0].mxu0
  %v1634 = vadd.f32 %v68, %v1633
  %1635 = vdwg.mxu0
  %1636 = vmatprep.subr.mxu0 %v1326
  %1637 = vmatpush1.msra.mxu0 %v1325
  %1638 = vmatprep.subr.mxu0 %v1342
  %1639 = vmatpush1.msra.mxu0 %v1341
  %1640 = vmatprep.subr.mxu0 0.0
  %1641 = vmatpush1.msra.mxu0 0.0
  %1642 = vmatprep.subr.mxu0 0.0
  %1643 = vmatpush1.msra.mxu0 0.0
  %1644 = vmatprep.subr.mxu0 0.0
  %1645 = vmatpush1.msra.mxu0 0.0
  %1646 = vmatprep.subr.mxu0 0.0
  %1647 = vmatpush1.msra.mxu0 0.0
  %1648 = vmatprep.subr.mxu0 0.0
  %1649 = vmatpush1.msra.mxu0 0.0
  %1650 = vmatprep.subr.mxu0 0.0
  %1651 = vmatpush1.msra.mxu0 0.0
  %1652 = vmatprep.subr.mxu0 0.0
  %1653 = vmatpush1.msra.mxu0 0.0
  %1654 = vmatprep.subr.mxu0 0.0
  %1655 = vmatpush1.msra.mxu0 0.0
  %1656 = vmatprep.subr.mxu0 0.0
  %1657 = vmatpush1.msra.mxu0 0.0
  %1658 = vmatprep.subr.mxu0 0.0
  %1659 = vmatpush1.msra.mxu0 0.0
  %1660 = vmatprep.subr.mxu0 0.0
  %1661 = vmatpush1.msra.mxu0 0.0
  %1662 = vmatprep.subr.mxu0 0.0
  %1663 = vmatpush1.msra.mxu0 0.0
  %1664 = vmatprep.subr.mxu0 0.0
  %1665 = vmatpush1.msra.mxu0 0.0
  %1666 = vmatprep.subr.mxu0 0.0
  %1667 = vmatpush1.msra.mxu0 0.0
  %1668 = vmatprep.subr.mxu0 0.0
  %1669 = vmatpush1.msra.mxu0 0.0
  %1670 = vmatprep.subr.mxu0 0.0
  %1671 = vmatpush1.msra.mxu0 0.0
  %1672 = vmatprep.subr.mxu0 0.0
  %1673 = vmatpush1.msra.mxu0 0.0
  %1674 = vmatprep.subr.mxu0 0.0
  %1675 = vmatpush1.msra.mxu0 0.0
  %1676 = vmatprep.subr.mxu0 0.0
  %1677 = vmatpush1.msra.mxu0 0.0
  %1678 = vmatprep.subr.mxu0 0.0
  %1679 = vmatpush1.msra.mxu0 0.0
  %1680 = vmatprep.subr.mxu0 0.0
  %1681 = vmatpush1.msra.mxu0 0.0
  %1682 = vmatprep.subr.mxu0 0.0
  %1683 = vmatpush1.msra.mxu0 0.0
  %1684 = vmatprep.subr.mxu0 0.0
  %1685 = vmatpush1.msra.mxu0 0.0
  %1686 = vmatprep.subr.mxu0 0.0
  %1687 = vmatpush1.msra.mxu0 0.0
  %1688 = vmatprep.subr.mxu0 0.0
  %1689 = vmatpush1.msra.mxu0 0.0
  %1690 = vmatprep.subr.mxu0 0.0
  %1691 = vmatpush1.msra.mxu0 0.0
  %1692 = vmatprep.subr.mxu0 0.0
  %1693 = vmatpush1.msra.mxu0 0.0
  %1694 = vmatprep.subr.mxu0 0.0
  %1695 = vmatpush1.msra.mxu0 0.0
  %1696 = vmatprep.subr.mxu0 0.0
  %1697 = vmatpush1.msra.mxu0 0.0
  %1698 = vmatprep.subr.mxu0 0.0
  %1699 = vmatpush1.msra.mxu0 0.0
  %1700 = vmatprep.mubr.f32.mxu0 0.0
  %1701 = vmatmul.mubr.f32.gmra.mrb[0].mxu0 %v1350
  %v1702 = vpop.f32.mrb[0].mxu0
  %v1703 = vadd.f32 %v68, %v1702
  %v1704 = vpop.f32.mrb[0].mxu0
  %v1705 = vadd.f32 %v68, %v1704
  %1706 = vdwg.mxu0
  %1707 = vmatprep.subr.mxu0 %v1328
  %1708 = vmatpush1.msra.mxu0 %v1327
  %1709 = vmatprep.subr.mxu0 %v1344
  %1710 = vmatpush1.msra.mxu0 %v1343
  %1711 = vmatprep.subr.mxu0 0.0
  %1712 = vmatpush1.msra.mxu0 0.0
  %1713 = vmatprep.subr.mxu0 0.0
  %1714 = vmatpush1.msra.mxu0 0.0
  %1715 = vmatprep.subr.mxu0 0.0
  %1716 = vmatpush1.msra.mxu0 0.0
  %1717 = vmatprep.subr.mxu0 0.0
  %1718 = vmatpush1.msra.mxu0 0.0
  %1719 = vmatprep.subr.mxu0 0.0
  %1720 = vmatpush1.msra.mxu0 0.0
  %1721 = vmatprep.subr.mxu0 0.0
  %1722 = vmatpush1.msra.mxu0 0.0
  %1723 = vmatprep.subr.mxu0 0.0
  %1724 = vmatpush1.msra.mxu0 0.0
  %1725 = vmatprep.subr.mxu0 0.0
  %1726 = vmatpush1.msra.mxu0 0.0
  %1727 = vmatprep.subr.mxu0 0.0
  %1728 = vmatpush1.msra.mxu0 0.0
  %1729 = vmatprep.subr.mxu0 0.0
  %1730 = vmatpush1.msra.mxu0 0.0
  %1731 = vmatprep.subr.mxu0 0.0
  %1732 = vmatpush1.msra.mxu0 0.0
  %1733 = vmatprep.subr.mxu0 0.0
  %1734 = vmatpush1.msra.mxu0 0.0
  %1735 = vmatprep.subr.mxu0 0.0
  %1736 = vmatpush1.msra.mxu0 0.0
  %1737 = vmatprep.subr.mxu0 0.0
  %1738 = vmatpush1.msra.mxu0 0.0
  %1739 = vmatprep.subr.mxu0 0.0
  %1740 = vmatpush1.msra.mxu0 0.0
  %1741 = vmatprep.subr.mxu0 0.0
  %1742 = vmatpush1.msra.mxu0 0.0
  %1743 = vmatprep.subr.mxu0 0.0
  %1744 = vmatpush1.msra.mxu0 0.0
  %1745 = vmatprep.subr.mxu0 0.0
  %1746 = vmatpush1.msra.mxu0 0.0
  %1747 = vmatprep.subr.mxu0 0.0
  %1748 = vmatpush1.msra.mxu0 0.0
  %1749 = vmatprep.subr.mxu0 0.0
  %1750 = vmatpush1.msra.mxu0 0.0
  %1751 = vmatprep.subr.mxu0 0.0
  %1752 = vmatpush1.msra.mxu0 0.0
  %1753 = vmatprep.subr.mxu0 0.0
  %1754 = vmatpush1.msra.mxu0 0.0
  %1755 = vmatprep.subr.mxu0 0.0
  %1756 = vmatpush1.msra.mxu0 0.0
  %1757 = vmatprep.subr.mxu0 0.0
  %1758 = vmatpush1.msra.mxu0 0.0
  %1759 = vmatprep.subr.mxu0 0.0
  %1760 = vmatpush1.msra.mxu0 0.0
  %1761 = vmatprep.subr.mxu0 0.0
  %1762 = vmatpush1.msra.mxu0 0.0
  %1763 = vmatprep.subr.mxu0 0.0
  %1764 = vmatpush1.msra.mxu0 0.0
  %1765 = vmatprep.subr.mxu0 0.0
  %1766 = vmatpush1.msra.mxu0 0.0
  %1767 = vmatprep.subr.mxu0 0.0
  %1768 = vmatpush1.msra.mxu0 0.0
  %1769 = vmatprep.subr.mxu0 0.0
  %1770 = vmatpush1.msra.mxu0 0.0
  %1771 = vmatprep.mubr.f32.mxu0 0.0
  %1772 = vmatmul.mubr.f32.gmra.mrb[0].mxu0 %v1350
  %v1773 = vpop.f32.mrb[0].mxu0
  %v1774 = vadd.f32 %v68, %v1773
  %v1775 = vpop.f32.mrb[0].mxu0
  %v1776 = vadd.f32 %v68, %v1775
  %1777 = vdwg.mxu0
  %1778 = vmatprep.subr.mxu0 %v1330
  %1779 = vmatpush1.msra.mxu0 %v1329
  %1780 = vmatprep.subr.mxu0 %v1346
  %1781 = vmatpush1.msra.mxu0 %v1345
  %1782 = vmatprep.subr.mxu0 0.0
  %1783 = vmatpush1.msra.mxu0 0.0
  %1784 = vmatprep.subr.mxu0 0.0
  %1785 = vmatpush1.msra.mxu0 0.0
  %1786 = vmatprep.subr.mxu0 0.0
  %1787 = vmatpush1.msra.mxu0 0.0
  %1788 = vmatprep.subr.mxu0 0.0
  %1789 = vmatpush1.msra.mxu0 0.0
  %1790 = vmatprep.subr.mxu0 0.0
  %1791 = vmatpush1.msra.mxu0 0.0
  %1792 = vmatprep.subr.mxu0 0.0
  %1793 = vmatpush1.msra.mxu0 0.0
  %1794 = vmatprep.subr.mxu0 0.0
  %1795 = vmatpush1.msra.mxu0 0.0
  %1796 = vmatprep.subr.mxu0 0.0
  %1797 = vmatpush1.msra.mxu0 0.0
  %1798 = vmatprep.subr.mxu0 0.0
  %1799 = vmatpush1.msra.mxu0 0.0
  %1800 = vmatprep.subr.mxu0 0.0
  %1801 = vmatpush1.msra.mxu0 0.0
  %1802 = vmatprep.subr.mxu0 0.0
  %1803 = vmatpush1.msra.mxu0 0.0
  %1804 = vmatprep.subr.mxu0 0.0
  %1805 = vmatpush1.msra.mxu0 0.0
  %1806 = vmatprep.subr.mxu0 0.0
  %1807 = vmatpush1.msra.mxu0 0.0
  %1808 = vmatprep.subr.mxu0 0.0
  %1809 = vmatpush1.msra.mxu0 0.0
  %1810 = vmatprep.subr.mxu0 0.0
  %1811 = vmatpush1.msra.mxu0 0.0
  %1812 = vmatprep.subr.mxu0 0.0
  %1813 = vmatpush1.msra.mxu0 0.0
  %1814 = vmatprep.subr.mxu0 0.0
  %1815 = vmatpush1.msra.mxu0 0.0
  %1816 = vmatprep.subr.mxu0 0.0
  %1817 = vmatpush1.msra.mxu0 0.0
  %1818 = vmatprep.subr.mxu0 0.0
  %1819 = vmatpush1.msra.mxu0 0.0
  %1820 = vmatprep.subr.mxu0 0.0
  %1821 = vmatpush1.msra.mxu0 0.0
  %1822 = vmatprep.subr.mxu0 0.0
  %1823 = vmatpush1.msra.mxu0 0.0
  %1824 = vmatprep.subr.mxu0 0.0
  %1825 = vmatpush1.msra.mxu0 0.0
  %1826 = vmatprep.subr.mxu0 0.0
  %1827 = vmatpush1.msra.mxu0 0.0
  %1828 = vmatprep.subr.mxu0 0.0
  %1829 = vmatpush1.msra.mxu0 0.0
  %1830 = vmatprep.subr.mxu0 0.0
  %1831 = vmatpush1.msra.mxu0 0.0
  %1832 = vmatprep.subr.mxu0 0.0
  %1833 = vmatpush1.msra.mxu0 0.0
  %1834 = vmatprep.subr.mxu0 0.0
  %1835 = vmatpush1.msra.mxu0 0.0
  %1836 = vmatprep.subr.mxu0 0.0
  %1837 = vmatpush1.msra.mxu0 0.0
  %1838 = vmatprep.subr.mxu0 0.0
  %1839 = vmatpush1.msra.mxu0 0.0
  %1840 = vmatprep.subr.mxu0 0.0
  %1841 = vmatpush1.msra.mxu0 0.0
  %1842 = vmatprep.mubr.f32.mxu0 0.0
  %1843 = vmatmul.mubr.f32.gmra.mrb[0].mxu0 %v1350
  %v1844 = vpop.f32.mrb[0].mxu0
  %v1845 = vadd.f32 %v68, %v1844
  %v1846 = vpop.f32.mrb[0].mxu0
  %v1847 = vadd.f32 %v68, %v1846
  %1848 = vdwg.mxu0
  %1849 = vmatprep.subr.mxu0 %v1332
  %1850 = vmatpush1.msra.mxu0 %v1331
  %1851 = vmatprep.subr.mxu0 %v1348
  %1852 = vmatpush1.msra.mxu0 %v1347
  %1853 = vmatprep.subr.mxu0 0.0
  %1854 = vmatpush1.msra.mxu0 0.0
  %1855 = vmatprep.subr.mxu0 0.0
  %1856 = vmatpush1.msra.mxu0 0.0
  %1857 = vmatprep.subr.mxu0 0.0
  %1858 = vmatpush1.msra.mxu0 0.0
  %1859 = vmatprep.subr.mxu0 0.0
  %1860 = vmatpush1.msra.mxu0 0.0
  %1861 = vmatprep.subr.mxu0 0.0
  %1862 = vmatpush1.msra.mxu0 0.0
  %1863 = vmatprep.subr.mxu0 0.0
  %1864 = vmatpush1.msra.mxu0 0.0
  %1865 = vmatprep.subr.mxu0 0.0
  %1866 = vmatpush1.msra.mxu0 0.0
  %1867 = vmatprep.subr.mxu0 0.0
  %1868 = vmatpush1.msra.mxu0 0.0
  %1869 = vmatprep.subr.mxu0 0.0
  %1870 = vmatpush1.msra.mxu0 0.0
  %1871 = vmatprep.subr.mxu0 0.0
  %1872 = vmatpush1.msra.mxu0 0.0
  %1873 = vmatprep.subr.mxu0 0.0
  %1874 = vmatpush1.msra.mxu0 0.0
  %1875 = vmatprep.subr.mxu0 0.0
  %1876 = vmatpush1.msra.mxu0 0.0
  %1877 = vmatprep.subr.mxu0 0.0
  %1878 = vmatpush1.msra.mxu0 0.0
  %1879 = vmatprep.subr.mxu0 0.0
  %1880 = vmatpush1.msra.mxu0 0.0
  %1881 = vmatprep.subr.mxu0 0.0
  %1882 = vmatpush1.msra.mxu0 0.0
  %1883 = vmatprep.subr.mxu0 0.0
  %1884 = vmatpush1.msra.mxu0 0.0
  %1885 = vmatprep.subr.mxu0 0.0
  %1886 = vmatpush1.msra.mxu0 0.0
  %1887 = vmatprep.subr.mxu0 0.0
  %1888 = vmatpush1.msra.mxu0 0.0
  %1889 = vmatprep.subr.mxu0 0.0
  %1890 = vmatpush1.msra.mxu0 0.0
  %1891 = vmatprep.subr.mxu0 0.0
  %1892 = vmatpush1.msra.mxu0 0.0
  %1893 = vmatprep.subr.mxu0 0.0
  %1894 = vmatpush1.msra.mxu0 0.0
  %1895 = vmatprep.subr.mxu0 0.0
  %1896 = vmatpush1.msra.mxu0 0.0
  %1897 = vmatprep.subr.mxu0 0.0
  %1898 = vmatpush1.msra.mxu0 0.0
  %1899 = vmatprep.subr.mxu0 0.0
  %1900 = vmatpush1.msra.mxu0 0.0
  %1901 = vmatprep.subr.mxu0 0.0
  %1902 = vmatpush1.msra.mxu0 0.0
  %1903 = vmatprep.subr.mxu0 0.0
  %1904 = vmatpush1.msra.mxu0 0.0
  %1905 = vmatprep.subr.mxu0 0.0
  %1906 = vmatpush1.msra.mxu0 0.0
  %1907 = vmatprep.subr.mxu0 0.0
  %1908 = vmatpush1.msra.mxu0 0.0
  %1909 = vmatprep.subr.mxu0 0.0
  %1910 = vmatpush1.msra.mxu0 0.0
  %1911 = vmatprep.subr.mxu0 0.0
  %1912 = vmatpush1.msra.mxu0 0.0
  %1913 = vmatprep.mubr.f32.mxu0 0.0
  %1914 = vmatmul.mubr.f32.gmra.mrb[0].mxu0 %v1350
  %v1915 = vpop.f32.mrb[0].mxu0
  %v1916 = vadd.f32 %v68, %v1915
  %v1917 = vpop.f32.mrb[0].mxu0
  %v1918 = vadd.f32 %v68, %v1917
  %1919 = vdwg.mxu0
  %v1920 = vtanh.pop %v1419
  %v1921 = vtanh.pop %v1421
  %v1922 = vtanh.pop %v1490
  %v1923 = vtanh.pop %v1492
  %v1924 = vtanh.pop %v1561
  %v1925 = vtanh.pop %v1563
  %v1926 = vtanh.pop %v1632
  %v1927 = vtanh.pop %v1634
  %v1928 = vtanh.pop %v1703
  %v1929 = vtanh.pop %v1705
  %v1930 = vtanh.pop %v1774
  %v1931 = vtanh.pop %v1776
  %v1932 = vtanh.pop %v1845
  %v1933 = vtanh.pop %v1847
  %v1934 = vtanh.pop %v1916
  %v1935 = vtanh.pop %v1918
  %s1936 = scalar_lea.vmem %s1, 6
  %v1937 = vld [vmem:[%s1936] sm:$0x3]
  %v1938 = vunpack.c.l.bf16 %v1937
  %s1939 = scalar_lea.vmem %s0, 384
  %v1940 = vld [vmem:[%s1939] sm:$0xff]
  %v1941 = vld [vmem:[%s1939 + $0x8] sm:$0xff]
  %v1942 = vld [vmem:[%s1939 + $0x10] sm:$0xff]
  %v1943 = vld [vmem:[%s1939 + $0x18] sm:$0xff]
  %v1944 = vld [vmem:[%s1939 + $0x20] sm:$0xff]
  %v1945 = vld [vmem:[%s1939 + $0x28] sm:$0xff]
  %v1946 = vld [vmem:[%s1939 + $0x30] sm:$0xff]
  %v1947 = vld [vmem:[%s1939 + $0x38] sm:$0xff]
  %v1948 = vld [vmem:[%s1939 + $0x40] sm:$0xff]
  %v1949 = vld [vmem:[%s1939 + $0x48] sm:$0xff]
  %v1950 = vld [vmem:[%s1939 + $0x50] sm:$0xff]
  %v1951 = vld [vmem:[%s1939 + $0x58] sm:$0xff]
  %v1952 = vld [vmem:[%s1939 + $0x60] sm:$0xff]
  %v1953 = vld [vmem:[%s1939 + $0x68] sm:$0xff]
  %v1954 = vld [vmem:[%s1939 + $0x70] sm:$0xff]
  %v1955 = vld [vmem:[%s1939 + $0x78] sm:$0xff]
  %v1956 = vunpack.c.l.bf16 %v1940
  %v1957 = vunpack.c.h.bf16 %v1940
  %v1958 = vunpack.c.l.bf16 %v1941
  %v1959 = vunpack.c.h.bf16 %v1941
  %v1960 = vunpack.c.l.bf16 %v1942
  %v1961 = vunpack.c.h.bf16 %v1942
  %v1962 = vunpack.c.l.bf16 %v1943
  %v1963 = vunpack.c.h.bf16 %v1943
  %v1964 = vunpack.c.l.bf16 %v1944
  %v1965 = vunpack.c.h.bf16 %v1944
  %v1966 = vunpack.c.l.bf16 %v1945
  %v1967 = vunpack.c.h.bf16 %v1945
  %v1968 = vunpack.c.l.bf16 %v1946
  %v1969 = vunpack.c.h.bf16 %v1946
  %v1970 = vunpack.c.l.bf16 %v1947
  %v1971 = vunpack.c.h.bf16 %v1947
  %v1972 = vunpack.c.l.bf16 %v1948
  %v1973 = vunpack.c.h.bf16 %v1948
  %v1974 = vunpack.c.l.bf16 %v1949
  %v1975 = vunpack.c.h.bf16 %v1949
  %v1976 = vunpack.c.l.bf16 %v1950
  %v1977 = vunpack.c.h.bf16 %v1950
  %v1978 = vunpack.c.l.bf16 %v1951
  %v1979 = vunpack.c.h.bf16 %v1951
  %v1980 = vunpack.c.l.bf16 %v1952
  %v1981 = vunpack.c.h.bf16 %v1952
  %v1982 = vunpack.c.l.bf16 %v1953
  %v1983 = vunpack.c.h.bf16 %v1953
  %v1984 = vunpack.c.l.bf16 %v1954
  %v1985 = vunpack.c.h.bf16 %v1954
  %v1986 = vunpack.c.l.bf16 %v1955
  %v1987 = vunpack.c.h.bf16 %v1955
  %v1989 = vsel %vm70, %v1938, 0
  %1991 = vmatprep.subr.mxu0 %v1957
  %1992 = vmatpush1.msra.mxu0 %v1956
  %1993 = vmatprep.subr.mxu0 %v1973
  %1994 = vmatpush1.msra.mxu0 %v1972
  %1995 = vmatprep.subr.mxu0 0.0
  %1996 = vmatpush1.msra.mxu0 0.0
  %1997 = vmatprep.subr.mxu0 0.0
  %1998 = vmatpush1.msra.mxu0 0.0
  %1999 = vmatprep.subr.mxu0 0.0
  %2000 = vmatpush1.msra.mxu0 0.0
  %2001 = vmatprep.subr.mxu0 0.0
  %2002 = vmatpush1.msra.mxu0 0.0
  %2003 = vmatprep.subr.mxu0 0.0
  %2004 = vmatpush1.msra.mxu0 0.0
  %2005 = vmatprep.subr.mxu0 0.0
  %2006 = vmatpush1.msra.mxu0 0.0
  %2007 = vmatprep.subr.mxu0 0.0
  %2008 = vmatpush1.msra.mxu0 0.0
  %2009 = vmatprep.subr.mxu0 0.0
  %2010 = vmatpush1.msra.mxu0 0.0
  %2011 = vmatprep.subr.mxu0 0.0
  %2012 = vmatpush1.msra.mxu0 0.0
  %2013 = vmatprep.subr.mxu0 0.0
  %2014 = vmatpush1.msra.mxu0 0.0
  %2015 = vmatprep.subr.mxu0 0.0
  %2016 = vmatpush1.msra.mxu0 0.0
  %2017 = vmatprep.subr.mxu0 0.0
  %2018 = vmatpush1.msra.mxu0 0.0
  %2019 = vmatprep.subr.mxu0 0.0
  %2020 = vmatpush1.msra.mxu0 0.0
  %2021 = vmatprep.subr.mxu0 0.0
  %2022 = vmatpush1.msra.mxu0 0.0
  %2023 = vmatprep.subr.mxu0 0.0
  %2024 = vmatpush1.msra.mxu0 0.0
  %2025 = vmatprep.subr.mxu0 0.0
  %2026 = vmatpush1.msra.mxu0 0.0
  %2027 = vmatprep.subr.mxu0 0.0
  %2028 = vmatpush1.msra.mxu0 0.0
  %2029 = vmatprep.subr.mxu0 0.0
  %2030 = vmatpush1.msra.mxu0 0.0
  %2031 = vmatprep.subr.mxu0 0.0
  %2032 = vmatpush1.msra.mxu0 0.0
  %2033 = vmatprep.subr.mxu0 0.0
  %2034 = vmatpush1.msra.mxu0 0.0
  %2035 = vmatprep.subr.mxu0 0.0
  %2036 = vmatpush1.msra.mxu0 0.0
  %2037 = vmatprep.subr.mxu0 0.0
  %2038 = vmatpush1.msra.mxu0 0.0
  %2039 = vmatprep.subr.mxu0 0.0
  %2040 = vmatpush1.msra.mxu0 0.0
  %2041 = vmatprep.subr.mxu0 0.0
  %2042 = vmatpush1.msra.mxu0 0.0
  %2043 = vmatprep.subr.mxu0 0.0
  %2044 = vmatpush1.msra.mxu0 0.0
  %2045 = vmatprep.subr.mxu0 0.0
  %2046 = vmatpush1.msra.mxu0 0.0
  %2047 = vmatprep.subr.mxu0 0.0
  %2048 = vmatpush1.msra.mxu0 0.0
  %2049 = vmatprep.subr.mxu0 0.0
  %2050 = vmatpush1.msra.mxu0 0.0
  %2051 = vmatprep.subr.mxu0 0.0
  %2052 = vmatpush1.msra.mxu0 0.0
  %2053 = vmatprep.subr.mxu0 0.0
  %2054 = vmatpush1.msra.mxu0 0.0
  %2055 = vmatprep.mubr.f32.mxu0 0.0
  %2056 = vmatmul.mubr.f32.gmra.mrb[0].mxu0 %v1989
  %v2057 = vpop.f32.mrb[0].mxu0
  %v2058 = vadd.f32 %v68, %v2057
  %v2059 = vpop.f32.mrb[0].mxu0
  %v2060 = vadd.f32 %v68, %v2059
  %2061 = vdwg.mxu0
  %2062 = vmatprep.subr.mxu0 %v1959
  %2063 = vmatpush1.msra.mxu0 %v1958
  %2064 = vmatprep.subr.mxu0 %v1975
  %2065 = vmatpush1.msra.mxu0 %v1974
  %2066 = vmatprep.subr.mxu0 0.0
  %2067 = vmatpush1.msra.mxu0 0.0
  %2068 = vmatprep.subr.mxu0 0.0
  %2069 = vmatpush1.msra.mxu0 0.0
  %2070 = vmatprep.subr.mxu0 0.0
  %2071 = vmatpush1.msra.mxu0 0.0
  %2072 = vmatprep.subr.mxu0 0.0
  %2073 = vmatpush1.msra.mxu0 0.0
  %2074 = vmatprep.subr.mxu0 0.0
  %2075 = vmatpush1.msra.mxu0 0.0
  %2076 = vmatprep.subr.mxu0 0.0
  %2077 = vmatpush1.msra.mxu0 0.0
  %2078 = vmatprep.subr.mxu0 0.0
  %2079 = vmatpush1.msra.mxu0 0.0
  %2080 = vmatprep.subr.mxu0 0.0
  %2081 = vmatpush1.msra.mxu0 0.0
  %2082 = vmatprep.subr.mxu0 0.0
  %2083 = vmatpush1.msra.mxu0 0.0
  %2084 = vmatprep.subr.mxu0 0.0
  %2085 = vmatpush1.msra.mxu0 0.0
  %2086 = vmatprep.subr.mxu0 0.0
  %2087 = vmatpush1.msra.mxu0 0.0
  %2088 = vmatprep.subr.mxu0 0.0
  %2089 = vmatpush1.msra.mxu0 0.0
  %2090 = vmatprep.subr.mxu0 0.0
  %2091 = vmatpush1.msra.mxu0 0.0
  %2092 = vmatprep.subr.mxu0 0.0
  %2093 = vmatpush1.msra.mxu0 0.0
  %2094 = vmatprep.subr.mxu0 0.0
  %2095 = vmatpush1.msra.mxu0 0.0
  %2096 = vmatprep.subr.mxu0 0.0
  %2097 = vmatpush1.msra.mxu0 0.0
  %2098 = vmatprep.subr.mxu0 0.0
  %2099 = vmatpush1.msra.mxu0 0.0
  %2100 = vmatprep.subr.mxu0 0.0
  %2101 = vmatpush1.msra.mxu0 0.0
  %2102 = vmatprep.subr.mxu0 0.0
  %2103 = vmatpush1.msra.mxu0 0.0
  %2104 = vmatprep.subr.mxu0 0.0
  %2105 = vmatpush1.msra.mxu0 0.0
  %2106 = vmatprep.subr.mxu0 0.0
  %2107 = vmatpush1.msra.mxu0 0.0
  %2108 = vmatprep.subr.mxu0 0.0
  %2109 = vmatpush1.msra.mxu0 0.0
  %2110 = vmatprep.subr.mxu0 0.0
  %2111 = vmatpush1.msra.mxu0 0.0
  %2112 = vmatprep.subr.mxu0 0.0
  %2113 = vmatpush1.msra.mxu0 0.0
  %2114 = vmatprep.subr.mxu0 0.0
  %2115 = vmatpush1.msra.mxu0 0.0
  %2116 = vmatprep.subr.mxu0 0.0
  %2117 = vmatpush1.msra.mxu0 0.0
  %2118 = vmatprep.subr.mxu0 0.0
  %2119 = vmatpush1.msra.mxu0 0.0
  %2120 = vmatprep.subr.mxu0 0.0
  %2121 = vmatpush1.msra.mxu0 0.0
  %2122 = vmatprep.subr.mxu0 0.0
  %2123 = vmatpush1.msra.mxu0 0.0
  %2124 = vmatprep.subr.mxu0 0.0
  %2125 = vmatpush1.msra.mxu0 0.0
  %2126 = vmatprep.mubr.f32.mxu0 0.0
  %2127 = vmatmul.mubr.f32.gmra.mrb[0].mxu0 %v1989
  %v2128 = vpop.f32.mrb[0].mxu0
  %v2129 = vadd.f32 %v68, %v2128
  %v2130 = vpop.f32.mrb[0].mxu0
  %v2131 = vadd.f32 %v68, %v2130
  %2132 = vdwg.mxu0
  %2133 = vmatprep.subr.mxu0 %v1961
  %2134 = vmatpush1.msra.mxu0 %v1960
  %2135 = vmatprep.subr.mxu0 %v1977
  %2136 = vmatpush1.msra.mxu0 %v1976
  %2137 = vmatprep.subr.mxu0 0.0
  %2138 = vmatpush1.msra.mxu0 0.0
  %2139 = vmatprep.subr.mxu0 0.0
  %2140 = vmatpush1.msra.mxu0 0.0
  %2141 = vmatprep.subr.mxu0 0.0
  %2142 = vmatpush1.msra.mxu0 0.0
  %2143 = vmatprep.subr.mxu0 0.0
  %2144 = vmatpush1.msra.mxu0 0.0
  %2145 = vmatprep.subr.mxu0 0.0
  %2146 = vmatpush1.msra.mxu0 0.0
  %2147 = vmatprep.subr.mxu0 0.0
  %2148 = vmatpush1.msra.mxu0 0.0
  %2149 = vmatprep.subr.mxu0 0.0
  %2150 = vmatpush1.msra.mxu0 0.0
  %2151 = vmatprep.subr.mxu0 0.0
  %2152 = vmatpush1.msra.mxu0 0.0
  %2153 = vmatprep.subr.mxu0 0.0
  %2154 = vmatpush1.msra.mxu0 0.0
  %2155 = vmatprep.subr.mxu0 0.0
  %2156 = vmatpush1.msra.mxu0 0.0
  %2157 = vmatprep.subr.mxu0 0.0
  %2158 = vmatpush1.msra.mxu0 0.0
  %2159 = vmatprep.subr.mxu0 0.0
  %2160 = vmatpush1.msra.mxu0 0.0
  %2161 = vmatprep.subr.mxu0 0.0
  %2162 = vmatpush1.msra.mxu0 0.0
  %2163 = vmatprep.subr.mxu0 0.0
  %2164 = vmatpush1.msra.mxu0 0.0
  %2165 = vmatprep.subr.mxu0 0.0
  %2166 = vmatpush1.msra.mxu0 0.0
  %2167 = vmatprep.subr.mxu0 0.0
  %2168 = vmatpush1.msra.mxu0 0.0
  %2169 = vmatprep.subr.mxu0 0.0
  %2170 = vmatpush1.msra.mxu0 0.0
  %2171 = vmatprep.subr.mxu0 0.0
  %2172 = vmatpush1.msra.mxu0 0.0
  %2173 = vmatprep.subr.mxu0 0.0
  %2174 = vmatpush1.msra.mxu0 0.0
  %2175 = vmatprep.subr.mxu0 0.0
  %2176 = vmatpush1.msra.mxu0 0.0
  %2177 = vmatprep.subr.mxu0 0.0
  %2178 = vmatpush1.msra.mxu0 0.0
  %2179 = vmatprep.subr.mxu0 0.0
  %2180 = vmatpush1.msra.mxu0 0.0
  %2181 = vmatprep.subr.mxu0 0.0
  %2182 = vmatpush1.msra.mxu0 0.0
  %2183 = vmatprep.subr.mxu0 0.0
  %2184 = vmatpush1.msra.mxu0 0.0
  %2185 = vmatprep.subr.mxu0 0.0
  %2186 = vmatpush1.msra.mxu0 0.0
  %2187 = vmatprep.subr.mxu0 0.0
  %2188 = vmatpush1.msra.mxu0 0.0
  %2189 = vmatprep.subr.mxu0 0.0
  %2190 = vmatpush1.msra.mxu0 0.0
  %2191 = vmatprep.subr.mxu0 0.0
  %2192 = vmatpush1.msra.mxu0 0.0
  %2193 = vmatprep.subr.mxu0 0.0
  %2194 = vmatpush1.msra.mxu0 0.0
  %2195 = vmatprep.subr.mxu0 0.0
  %2196 = vmatpush1.msra.mxu0 0.0
  %2197 = vmatprep.mubr.f32.mxu0 0.0
  %2198 = vmatmul.mubr.f32.gmra.mrb[0].mxu0 %v1989
  %v2199 = vpop.f32.mrb[0].mxu0
  %v2200 = vadd.f32 %v68, %v2199
  %v2201 = vpop.f32.mrb[0].mxu0
  %v2202 = vadd.f32 %v68, %v2201
  %2203 = vdwg.mxu0
  %2204 = vmatprep.subr.mxu0 %v1963
  %2205 = vmatpush1.msra.mxu0 %v1962
  %2206 = vmatprep.subr.mxu0 %v1979
  %2207 = vmatpush1.msra.mxu0 %v1978
  %2208 = vmatprep.subr.mxu0 0.0
  %2209 = vmatpush1.msra.mxu0 0.0
  %2210 = vmatprep.subr.mxu0 0.0
  %2211 = vmatpush1.msra.mxu0 0.0
  %2212 = vmatprep.subr.mxu0 0.0
  %2213 = vmatpush1.msra.mxu0 0.0
  %2214 = vmatprep.subr.mxu0 0.0
  %2215 = vmatpush1.msra.mxu0 0.0
  %2216 = vmatprep.subr.mxu0 0.0
  %2217 = vmatpush1.msra.mxu0 0.0
  %2218 = vmatprep.subr.mxu0 0.0
  %2219 = vmatpush1.msra.mxu0 0.0
  %2220 = vmatprep.subr.mxu0 0.0
  %2221 = vmatpush1.msra.mxu0 0.0
  %2222 = vmatprep.subr.mxu0 0.0
  %2223 = vmatpush1.msra.mxu0 0.0
  %2224 = vmatprep.subr.mxu0 0.0
  %2225 = vmatpush1.msra.mxu0 0.0
  %2226 = vmatprep.subr.mxu0 0.0
  %2227 = vmatpush1.msra.mxu0 0.0
  %2228 = vmatprep.subr.mxu0 0.0
  %2229 = vmatpush1.msra.mxu0 0.0
  %2230 = vmatprep.subr.mxu0 0.0
  %2231 = vmatpush1.msra.mxu0 0.0
  %2232 = vmatprep.subr.mxu0 0.0
  %2233 = vmatpush1.msra.mxu0 0.0
  %2234 = vmatprep.subr.mxu0 0.0
  %2235 = vmatpush1.msra.mxu0 0.0
  %2236 = vmatprep.subr.mxu0 0.0
  %2237 = vmatpush1.msra.mxu0 0.0
  %2238 = vmatprep.subr.mxu0 0.0
  %2239 = vmatpush1.msra.mxu0 0.0
  %2240 = vmatprep.subr.mxu0 0.0
  %2241 = vmatpush1.msra.mxu0 0.0
  %2242 = vmatprep.subr.mxu0 0.0
  %2243 = vmatpush1.msra.mxu0 0.0
  %2244 = vmatprep.subr.mxu0 0.0
  %2245 = vmatpush1.msra.mxu0 0.0
  %2246 = vmatprep.subr.mxu0 0.0
  %2247 = vmatpush1.msra.mxu0 0.0
  %2248 = vmatprep.subr.mxu0 0.0
  %2249 = vmatpush1.msra.mxu0 0.0
  %2250 = vmatprep.subr.mxu0 0.0
  %2251 = vmatpush1.msra.mxu0 0.0
  %2252 = vmatprep.subr.mxu0 0.0
  %2253 = vmatpush1.msra.mxu0 0.0
  %2254 = vmatprep.subr.mxu0 0.0
  %2255 = vmatpush1.msra.mxu0 0.0
  %2256 = vmatprep.subr.mxu0 0.0
  %2257 = vmatpush1.msra.mxu0 0.0
  %2258 = vmatprep.subr.mxu0 0.0
  %2259 = vmatpush1.msra.mxu0 0.0
  %2260 = vmatprep.subr.mxu0 0.0
  %2261 = vmatpush1.msra.mxu0 0.0
  %2262 = vmatprep.subr.mxu0 0.0
  %2263 = vmatpush1.msra.mxu0 0.0
  %2264 = vmatprep.subr.mxu0 0.0
  %2265 = vmatpush1.msra.mxu0 0.0
  %2266 = vmatprep.subr.mxu0 0.0
  %2267 = vmatpush1.msra.mxu0 0.0
  %2268 = vmatprep.mubr.f32.mxu0 0.0
  %2269 = vmatmul.mubr.f32.gmra.mrb[0].mxu0 %v1989
  %v2270 = vpop.f32.mrb[0].mxu0
  %v2271 = vadd.f32 %v68, %v2270
  %v2272 = vpop.f32.mrb[0].mxu0
  %v2273 = vadd.f32 %v68, %v2272
  %2274 = vdwg.mxu0
  %2275 = vmatprep.subr.mxu0 %v1965
  %2276 = vmatpush1.msra.mxu0 %v1964
  %2277 = vmatprep.subr.mxu0 %v1981
  %2278 = vmatpush1.msra.mxu0 %v1980
  %2279 = vmatprep.subr.mxu0 0.0
  %2280 = vmatpush1.msra.mxu0 0.0
  %2281 = vmatprep.subr.mxu0 0.0
  %2282 = vmatpush1.msra.mxu0 0.0
  %2283 = vmatprep.subr.mxu0 0.0
  %2284 = vmatpush1.msra.mxu0 0.0
  %2285 = vmatprep.subr.mxu0 0.0
  %2286 = vmatpush1.msra.mxu0 0.0
  %2287 = vmatprep.subr.mxu0 0.0
  %2288 = vmatpush1.msra.mxu0 0.0
  %2289 = vmatprep.subr.mxu0 0.0
  %2290 = vmatpush1.msra.mxu0 0.0
  %2291 = vmatprep.subr.mxu0 0.0
  %2292 = vmatpush1.msra.mxu0 0.0
  %2293 = vmatprep.subr.mxu0 0.0
  %2294 = vmatpush1.msra.mxu0 0.0
  %2295 = vmatprep.subr.mxu0 0.0
  %2296 = vmatpush1.msra.mxu0 0.0
  %2297 = vmatprep.subr.mxu0 0.0
  %2298 = vmatpush1.msra.mxu0 0.0
  %2299 = vmatprep.subr.mxu0 0.0
  %2300 = vmatpush1.msra.mxu0 0.0
  %2301 = vmatprep.subr.mxu0 0.0
  %2302 = vmatpush1.msra.mxu0 0.0
  %2303 = vmatprep.subr.mxu0 0.0
  %2304 = vmatpush1.msra.mxu0 0.0
  %2305 = vmatprep.subr.mxu0 0.0
  %2306 = vmatpush1.msra.mxu0 0.0
  %2307 = vmatprep.subr.mxu0 0.0
  %2308 = vmatpush1.msra.mxu0 0.0
  %2309 = vmatprep.subr.mxu0 0.0
  %2310 = vmatpush1.msra.mxu0 0.0
  %2311 = vmatprep.subr.mxu0 0.0
  %2312 = vmatpush1.msra.mxu0 0.0
  %2313 = vmatprep.subr.mxu0 0.0
  %2314 = vmatpush1.msra.mxu0 0.0
  %2315 = vmatprep.subr.mxu0 0.0
  %2316 = vmatpush1.msra.mxu0 0.0
  %2317 = vmatprep.subr.mxu0 0.0
  %2318 = vmatpush1.msra.mxu0 0.0
  %2319 = vmatprep.subr.mxu0 0.0
  %2320 = vmatpush1.msra.mxu0 0.0
  %2321 = vmatprep.subr.mxu0 0.0
  %2322 = vmatpush1.msra.mxu0 0.0
  %2323 = vmatprep.subr.mxu0 0.0
  %2324 = vmatpush1.msra.mxu0 0.0
  %2325 = vmatprep.subr.mxu0 0.0
  %2326 = vmatpush1.msra.mxu0 0.0
  %2327 = vmatprep.subr.mxu0 0.0
  %2328 = vmatpush1.msra.mxu0 0.0
  %2329 = vmatprep.subr.mxu0 0.0
  %2330 = vmatpush1.msra.mxu0 0.0
  %2331 = vmatprep.subr.mxu0 0.0
  %2332 = vmatpush1.msra.mxu0 0.0
  %2333 = vmatprep.subr.mxu0 0.0
  %2334 = vmatpush1.msra.mxu0 0.0
  %2335 = vmatprep.subr.mxu0 0.0
  %2336 = vmatpush1.msra.mxu0 0.0
  %2337 = vmatprep.subr.mxu0 0.0
  %2338 = vmatpush1.msra.mxu0 0.0
  %2339 = vmatprep.mubr.f32.mxu0 0.0
  %2340 = vmatmul.mubr.f32.gmra.mrb[0].mxu0 %v1989
  %v2341 = vpop.f32.mrb[0].mxu0
  %v2342 = vadd.f32 %v68, %v2341
  %v2343 = vpop.f32.mrb[0].mxu0
  %v2344 = vadd.f32 %v68, %v2343
  %2345 = vdwg.mxu0
  %2346 = vmatprep.subr.mxu0 %v1967
  %2347 = vmatpush1.msra.mxu0 %v1966
  %2348 = vmatprep.subr.mxu0 %v1983
  %2349 = vmatpush1.msra.mxu0 %v1982
  %2350 = vmatprep.subr.mxu0 0.0
  %2351 = vmatpush1.msra.mxu0 0.0
  %2352 = vmatprep.subr.mxu0 0.0
  %2353 = vmatpush1.msra.mxu0 0.0
  %2354 = vmatprep.subr.mxu0 0.0
  %2355 = vmatpush1.msra.mxu0 0.0
  %2356 = vmatprep.subr.mxu0 0.0
  %2357 = vmatpush1.msra.mxu0 0.0
  %2358 = vmatprep.subr.mxu0 0.0
  %2359 = vmatpush1.msra.mxu0 0.0
  %2360 = vmatprep.subr.mxu0 0.0
  %2361 = vmatpush1.msra.mxu0 0.0
  %2362 = vmatprep.subr.mxu0 0.0
  %2363 = vmatpush1.msra.mxu0 0.0
  %2364 = vmatprep.subr.mxu0 0.0
  %2365 = vmatpush1.msra.mxu0 0.0
  %2366 = vmatprep.subr.mxu0 0.0
  %2367 = vmatpush1.msra.mxu0 0.0
  %2368 = vmatprep.subr.mxu0 0.0
  %2369 = vmatpush1.msra.mxu0 0.0
  %2370 = vmatprep.subr.mxu0 0.0
  %2371 = vmatpush1.msra.mxu0 0.0
  %2372 = vmatprep.subr.mxu0 0.0
  %2373 = vmatpush1.msra.mxu0 0.0
  %2374 = vmatprep.subr.mxu0 0.0
  %2375 = vmatpush1.msra.mxu0 0.0
  %2376 = vmatprep.subr.mxu0 0.0
  %2377 = vmatpush1.msra.mxu0 0.0
  %2378 = vmatprep.subr.mxu0 0.0
  %2379 = vmatpush1.msra.mxu0 0.0
  %2380 = vmatprep.subr.mxu0 0.0
  %2381 = vmatpush1.msra.mxu0 0.0
  %2382 = vmatprep.subr.mxu0 0.0
  %2383 = vmatpush1.msra.mxu0 0.0
  %2384 = vmatprep.subr.mxu0 0.0
  %2385 = vmatpush1.msra.mxu0 0.0
  %2386 = vmatprep.subr.mxu0 0.0
  %2387 = vmatpush1.msra.mxu0 0.0
  %2388 = vmatprep.subr.mxu0 0.0
  %2389 = vmatpush1.msra.mxu0 0.0
  %2390 = vmatprep.subr.mxu0 0.0
  %2391 = vmatpush1.msra.mxu0 0.0
  %2392 = vmatprep.subr.mxu0 0.0
  %2393 = vmatpush1.msra.mxu0 0.0
  %2394 = vmatprep.subr.mxu0 0.0
  %2395 = vmatpush1.msra.mxu0 0.0
  %2396 = vmatprep.subr.mxu0 0.0
  %2397 = vmatpush1.msra.mxu0 0.0
  %2398 = vmatprep.subr.mxu0 0.0
  %2399 = vmatpush1.msra.mxu0 0.0
  %2400 = vmatprep.subr.mxu0 0.0
  %2401 = vmatpush1.msra.mxu0 0.0
  %2402 = vmatprep.subr.mxu0 0.0
  %2403 = vmatpush1.msra.mxu0 0.0
  %2404 = vmatprep.subr.mxu0 0.0
  %2405 = vmatpush1.msra.mxu0 0.0
  %2406 = vmatprep.subr.mxu0 0.0
  %2407 = vmatpush1.msra.mxu0 0.0
  %2408 = vmatprep.subr.mxu0 0.0
  %2409 = vmatpush1.msra.mxu0 0.0
  %2410 = vmatprep.mubr.f32.mxu0 0.0
  %2411 = vmatmul.mubr.f32.gmra.mrb[0].mxu0 %v1989
  %v2412 = vpop.f32.mrb[0].mxu0
  %v2413 = vadd.f32 %v68, %v2412
  %v2414 = vpop.f32.mrb[0].mxu0
  %v2415 = vadd.f32 %v68, %v2414
  %2416 = vdwg.mxu0
  %2417 = vmatprep.subr.mxu0 %v1969
  %2418 = vmatpush1.msra.mxu0 %v1968
  %2419 = vmatprep.subr.mxu0 %v1985
  %2420 = vmatpush1.msra.mxu0 %v1984
  %2421 = vmatprep.subr.mxu0 0.0
  %2422 = vmatpush1.msra.mxu0 0.0
  %2423 = vmatprep.subr.mxu0 0.0
  %2424 = vmatpush1.msra.mxu0 0.0
  %2425 = vmatprep.subr.mxu0 0.0
  %2426 = vmatpush1.msra.mxu0 0.0
  %2427 = vmatprep.subr.mxu0 0.0
  %2428 = vmatpush1.msra.mxu0 0.0
  %2429 = vmatprep.subr.mxu0 0.0
  %2430 = vmatpush1.msra.mxu0 0.0
  %2431 = vmatprep.subr.mxu0 0.0
  %2432 = vmatpush1.msra.mxu0 0.0
  %2433 = vmatprep.subr.mxu0 0.0
  %2434 = vmatpush1.msra.mxu0 0.0
  %2435 = vmatprep.subr.mxu0 0.0
  %2436 = vmatpush1.msra.mxu0 0.0
  %2437 = vmatprep.subr.mxu0 0.0
  %2438 = vmatpush1.msra.mxu0 0.0
  %2439 = vmatprep.subr.mxu0 0.0
  %2440 = vmatpush1.msra.mxu0 0.0
  %2441 = vmatprep.subr.mxu0 0.0
  %2442 = vmatpush1.msra.mxu0 0.0
  %2443 = vmatprep.subr.mxu0 0.0
  %2444 = vmatpush1.msra.mxu0 0.0
  %2445 = vmatprep.subr.mxu0 0.0
  %2446 = vmatpush1.msra.mxu0 0.0
  %2447 = vmatprep.subr.mxu0 0.0
  %2448 = vmatpush1.msra.mxu0 0.0
  %2449 = vmatprep.subr.mxu0 0.0
  %2450 = vmatpush1.msra.mxu0 0.0
  %2451 = vmatprep.subr.mxu0 0.0
  %2452 = vmatpush1.msra.mxu0 0.0
  %2453 = vmatprep.subr.mxu0 0.0
  %2454 = vmatpush1.msra.mxu0 0.0
  %2455 = vmatprep.subr.mxu0 0.0
  %2456 = vmatpush1.msra.mxu0 0.0
  %2457 = vmatprep.subr.mxu0 0.0
  %2458 = vmatpush1.msra.mxu0 0.0
  %2459 = vmatprep.subr.mxu0 0.0
  %2460 = vmatpush1.msra.mxu0 0.0
  %2461 = vmatprep.subr.mxu0 0.0
  %2462 = vmatpush1.msra.mxu0 0.0
  %2463 = vmatprep.subr.mxu0 0.0
  %2464 = vmatpush1.msra.mxu0 0.0
  %2465 = vmatprep.subr.mxu0 0.0
  %2466 = vmatpush1.msra.mxu0 0.0
  %2467 = vmatprep.subr.mxu0 0.0
  %2468 = vmatpush1.msra.mxu0 0.0
  %2469 = vmatprep.subr.mxu0 0.0
  %2470 = vmatpush1.msra.mxu0 0.0
  %2471 = vmatprep.subr.mxu0 0.0
  %2472 = vmatpush1.msra.mxu0 0.0
  %2473 = vmatprep.subr.mxu0 0.0
  %2474 = vmatpush1.msra.mxu0 0.0
  %2475 = vmatprep.subr.mxu0 0.0
  %2476 = vmatpush1.msra.mxu0 0.0
  %2477 = vmatprep.subr.mxu0 0.0
  %2478 = vmatpush1.msra.mxu0 0.0
  %2479 = vmatprep.subr.mxu0 0.0
  %2480 = vmatpush1.msra.mxu0 0.0
  %2481 = vmatprep.mubr.f32.mxu0 0.0
  %2482 = vmatmul.mubr.f32.gmra.mrb[0].mxu0 %v1989
  %v2483 = vpop.f32.mrb[0].mxu0
  %v2484 = vadd.f32 %v68, %v2483
  %v2485 = vpop.f32.mrb[0].mxu0
  %v2486 = vadd.f32 %v68, %v2485
  %2487 = vdwg.mxu0
  %2488 = vmatprep.subr.mxu0 %v1971
  %2489 = vmatpush1.msra.mxu0 %v1970
  %2490 = vmatprep.subr.mxu0 %v1987
  %2491 = vmatpush1.msra.mxu0 %v1986
  %2492 = vmatprep.subr.mxu0 0.0
  %2493 = vmatpush1.msra.mxu0 0.0
  %2494 = vmatprep.subr.mxu0 0.0
  %2495 = vmatpush1.msra.mxu0 0.0
  %2496 = vmatprep.subr.mxu0 0.0
  %2497 = vmatpush1.msra.mxu0 0.0
  %2498 = vmatprep.subr.mxu0 0.0
  %2499 = vmatpush1.msra.mxu0 0.0
  %2500 = vmatprep.subr.mxu0 0.0
  %2501 = vmatpush1.msra.mxu0 0.0
  %2502 = vmatprep.subr.mxu0 0.0
  %2503 = vmatpush1.msra.mxu0 0.0
  %2504 = vmatprep.subr.mxu0 0.0
  %2505 = vmatpush1.msra.mxu0 0.0
  %2506 = vmatprep.subr.mxu0 0.0
  %2507 = vmatpush1.msra.mxu0 0.0
  %2508 = vmatprep.subr.mxu0 0.0
  %2509 = vmatpush1.msra.mxu0 0.0
  %2510 = vmatprep.subr.mxu0 0.0
  %2511 = vmatpush1.msra.mxu0 0.0
  %2512 = vmatprep.subr.mxu0 0.0
  %2513 = vmatpush1.msra.mxu0 0.0
  %2514 = vmatprep.subr.mxu0 0.0
  %2515 = vmatpush1.msra.mxu0 0.0
  %2516 = vmatprep.subr.mxu0 0.0
  %2517 = vmatpush1.msra.mxu0 0.0
  %2518 = vmatprep.subr.mxu0 0.0
  %2519 = vmatpush1.msra.mxu0 0.0
  %2520 = vmatprep.subr.mxu0 0.0
  %2521 = vmatpush1.msra.mxu0 0.0
  %2522 = vmatprep.subr.mxu0 0.0
  %2523 = vmatpush1.msra.mxu0 0.0
  %2524 = vmatprep.subr.mxu0 0.0
  %2525 = vmatpush1.msra.mxu0 0.0
  %2526 = vmatprep.subr.mxu0 0.0
  %2527 = vmatpush1.msra.mxu0 0.0
  %2528 = vmatprep.subr.mxu0 0.0
  %2529 = vmatpush1.msra.mxu0 0.0
  %2530 = vmatprep.subr.mxu0 0.0
  %2531 = vmatpush1.msra.mxu0 0.0
  %2532 = vmatprep.subr.mxu0 0.0
  %2533 = vmatpush1.msra.mxu0 0.0
  %2534 = vmatprep.subr.mxu0 0.0
  %2535 = vmatpush1.msra.mxu0 0.0
  %2536 = vmatprep.subr.mxu0 0.0
  %2537 = vmatpush1.msra.mxu0 0.0
  %2538 = vmatprep.subr.mxu0 0.0
  %2539 = vmatpush1.msra.mxu0 0.0
  %2540 = vmatprep.subr.mxu0 0.0
  %2541 = vmatpush1.msra.mxu0 0.0
  %2542 = vmatprep.subr.mxu0 0.0
  %2543 = vmatpush1.msra.mxu0 0.0
  %2544 = vmatprep.subr.mxu0 0.0
  %2545 = vmatpush1.msra.mxu0 0.0
  %2546 = vmatprep.subr.mxu0 0.0
  %2547 = vmatpush1.msra.mxu0 0.0
  %2548 = vmatprep.subr.mxu0 0.0
  %2549 = vmatpush1.msra.mxu0 0.0
  %2550 = vmatprep.subr.mxu0 0.0
  %2551 = vmatpush1.msra.mxu0 0.0
  %2552 = vmatprep.mubr.f32.mxu0 0.0
  %2553 = vmatmul.mubr.f32.gmra.mrb[0].mxu0 %v1989
  %v2554 = vpop.f32.mrb[0].mxu0
  %v2555 = vadd.f32 %v68, %v2554
  %v2556 = vpop.f32.mrb[0].mxu0
  %v2557 = vadd.f32 %v68, %v2556
  %2558 = vdwg.mxu0
  %v2559 = vtanh.pop %v2058
  %v2560 = vtanh.pop %v2060
  %v2561 = vtanh.pop %v2129
  %v2562 = vtanh.pop %v2131
  %v2563 = vtanh.pop %v2200
  %v2564 = vtanh.pop %v2202
  %v2565 = vtanh.pop %v2271
  %v2566 = vtanh.pop %v2273
  %v2567 = vtanh.pop %v2342
  %v2568 = vtanh.pop %v2344
  %v2569 = vtanh.pop %v2413
  %v2570 = vtanh.pop %v2415
  %v2571 = vtanh.pop %v2484
  %v2572 = vtanh.pop %v2486
  %v2573 = vtanh.pop %v2555
  %v2574 = vtanh.pop %v2557
  %v2591 = vrot.slane %v1281, 5
  %v2592 = vrot.slane %v1282, 5
  %v2593 = vrot.slane %v1283, 5
  %v2594 = vrot.slane %v1284, 5
  %v2595 = vrot.slane %v1285, 5
  %v2596 = vrot.slane %v1286, 5
  %v2597 = vrot.slane %v1287, 5
  %v2598 = vrot.slane %v1288, 5
  %v2599 = vrot.slane %v1289, 5
  %v2600 = vrot.slane %v1290, 5
  %v2601 = vrot.slane %v1291, 5
  %v2602 = vrot.slane %v1292, 5
  %v2603 = vrot.slane %v1293, 5
  %v2604 = vrot.slane %v1294, 5
  %v2605 = vrot.slane %v1295, 5
  %v2606 = vrot.slane %v1296, 5
  %v2639 = vrot.slane %v1920, 2
  %v2640 = vrot.slane %v1921, 2
  %v2641 = vrot.slane %v1922, 2
  %v2642 = vrot.slane %v1923, 2
  %v2643 = vrot.slane %v1924, 2
  %v2644 = vrot.slane %v1925, 2
  %v2645 = vrot.slane %v1926, 2
  %v2646 = vrot.slane %v1927, 2
  %v2647 = vrot.slane %v1928, 2
  %v2648 = vrot.slane %v1929, 2
  %v2649 = vrot.slane %v1930, 2
  %v2650 = vrot.slane %v1931, 2
  %v2651 = vrot.slane %v1932, 2
  %v2652 = vrot.slane %v1933, 2
  %v2653 = vrot.slane %v1934, 2
  %v2654 = vrot.slane %v1935, 2
  %v2687 = vrot.slane %v2559, 7
  %v2688 = vrot.slane %v2560, 7
  %v2689 = vrot.slane %v2561, 7
  %v2690 = vrot.slane %v2562, 7
  %v2691 = vrot.slane %v2563, 7
  %v2692 = vrot.slane %v2564, 7
  %v2693 = vrot.slane %v2565, 7
  %v2694 = vrot.slane %v2566, 7
  %v2695 = vrot.slane %v2567, 7
  %v2696 = vrot.slane %v2568, 7
  %v2697 = vrot.slane %v2569, 7
  %v2698 = vrot.slane %v2570, 7
  %v2699 = vrot.slane %v2571, 7
  %v2700 = vrot.slane %v2572, 7
  %v2701 = vrot.slane %v2573, 7
  %v2702 = vrot.slane %v2574, 7
  %vm2719 = vcmask 1042432
  %v2720 = vsel %vm2719, %v642, %v2591
  %v2721 = vsel %vm2719, %v643, %v2592
  %v2722 = vsel %vm2719, %v644, %v2593
  %v2723 = vsel %vm2719, %v645, %v2594
  %v2724 = vsel %vm2719, %v646, %v2595
  %v2725 = vsel %vm2719, %v647, %v2596
  %v2726 = vsel %vm2719, %v648, %v2597
  %v2727 = vsel %vm2719, %v649, %v2598
  %v2728 = vsel %vm2719, %v650, %v2599
  %v2729 = vsel %vm2719, %v651, %v2600
  %v2730 = vsel %vm2719, %v652, %v2601
  %v2731 = vsel %vm2719, %v653, %v2602
  %v2732 = vsel %vm2719, %v654, %v2603
  %v2733 = vsel %vm2719, %v655, %v2604
  %v2734 = vsel %vm2719, %v656, %v2605
  %v2735 = vsel %vm2719, %v657, %v2606
  %vm2736 = vcmask 1045504
  %v2737 = vsel %vm2736, %v2720, %v2639
  %v2738 = vsel %vm2736, %v2721, %v2640
  %v2739 = vsel %vm2736, %v2722, %v2641
  %v2740 = vsel %vm2736, %v2723, %v2642
  %v2741 = vsel %vm2736, %v2724, %v2643
  %v2742 = vsel %vm2736, %v2725, %v2644
  %v2743 = vsel %vm2736, %v2726, %v2645
  %v2744 = vsel %vm2736, %v2727, %v2646
  %v2745 = vsel %vm2736, %v2728, %v2647
  %v2746 = vsel %vm2736, %v2729, %v2648
  %v2747 = vsel %vm2736, %v2730, %v2649
  %v2748 = vsel %vm2736, %v2731, %v2650
  %v2749 = vsel %vm2736, %v2732, %v2651
  %v2750 = vsel %vm2736, %v2733, %v2652
  %v2751 = vsel %vm2736, %v2734, %v2653
  %v2752 = vsel %vm2736, %v2735, %v2654
  %vm2753 = vcmask 1040384
  %v2754 = vsel %vm2753, %v2639, %v2687
  %v2755 = vsel %vm2753, %v2640, %v2688
  %v2756 = vsel %vm2753, %v2641, %v2689
  %v2757 = vsel %vm2753, %v2642, %v2690
  %v2758 = vsel %vm2753, %v2643, %v2691
  %v2759 = vsel %vm2753, %v2644, %v2692
  %v2760 = vsel %vm2753, %v2645, %v2693
  %v2761 = vsel %vm2753, %v2646, %v2694
  %v2762 = vsel %vm2753, %v2647, %v2695
  %v2763 = vsel %vm2753, %v2648, %v2696
  %v2764 = vsel %vm2753, %v2649, %v2697
  %v2765 = vsel %vm2753, %v2650, %v2698
  %v2766 = vsel %vm2753, %v2651, %v2699
  %v2767 = vsel %vm2753, %v2652, %v2700
  %v2768 = vsel %vm2753, %v2653, %v2701
  %v2769 = vsel %vm2753, %v2654, %v2702
  %2770 = vst [vmem:[%s3] sm:$0xff] %v2737
  %2771 = vst [vmem:[%s3 + $0x8] sm:$0xff] %v2738
  %2772 = vst [vmem:[%s3 + $0x10] sm:$0xff] %v2739
  %2773 = vst [vmem:[%s3 + $0x18] sm:$0xff] %v2740
  %2774 = vst [vmem:[%s3 + $0x20] sm:$0xff] %v2741
  %2775 = vst [vmem:[%s3 + $0x28] sm:$0xff] %v2742
  %2776 = vst [vmem:[%s3 + $0x30] sm:$0xff] %v2743
  %2777 = vst [vmem:[%s3 + $0x38] sm:$0xff] %v2744
  %2778 = vst [vmem:[%s3 + $0x40] sm:$0xff] %v2745
  %2779 = vst [vmem:[%s3 + $0x48] sm:$0xff] %v2746
  %2780 = vst [vmem:[%s3 + $0x50] sm:$0xff] %v2747
  %2781 = vst [vmem:[%s3 + $0x58] sm:$0xff] %v2748
  %2782 = vst [vmem:[%s3 + $0x60] sm:$0xff] %v2749
  %2783 = vst [vmem:[%s3 + $0x68] sm:$0xff] %v2750
  %2784 = vst [vmem:[%s3 + $0x70] sm:$0xff] %v2751
  %2785 = vst [vmem:[%s3 + $0x78] sm:$0xff] %v2752
  %2786 = vst [vmem:[%s3 + $0x80] sm:$0xf] %v2754
  %2787 = vst [vmem:[%s3 + $0x88] sm:$0xf] %v2755
  %2788 = vst [vmem:[%s3 + $0x90] sm:$0xf] %v2756
  %2789 = vst [vmem:[%s3 + $0x98] sm:$0xf] %v2757
  %2790 = vst [vmem:[%s3 + $0xa0] sm:$0xf] %v2758
  %2791 = vst [vmem:[%s3 + $0xa8] sm:$0xf] %v2759
  %2792 = vst [vmem:[%s3 + $0xb0] sm:$0xf] %v2760
  %2793 = vst [vmem:[%s3 + $0xb8] sm:$0xf] %v2761
  %2794 = vst [vmem:[%s3 + $0xc0] sm:$0xf] %v2762
  %2795 = vst [vmem:[%s3 + $0xc8] sm:$0xf] %v2763
  %2796 = vst [vmem:[%s3 + $0xd0] sm:$0xf] %v2764
  %2797 = vst [vmem:[%s3 + $0xd8] sm:$0xf] %v2765
  %2798 = vst [vmem:[%s3 + $0xe0] sm:$0xf] %v2766
  %2799 = vst [vmem:[%s3 + $0xe8] sm:$0xf] %v2767
  %2800 = vst [vmem:[%s3 + $0xf0] sm:$0xf] %v2768
  %2801 = vst [vmem:[%s3 + $0xf8] sm:$0xf] %v2769
  // Predicated region
  $region14: #{generator_forward.9} parent=0 // pred_check
    _
  $region15: #{generator_forward.9} parent=0 // pred_check_branch
    %2803 = sbr.rel (0) target = $region17
  $region16: #{generator_forward.9} parent=0 // pred_region
    _
  $region17: #{generator_forward.9} parent=0 // pred_fallthru
    _
  // Predicated region
  $region18: #{generator_forward.9} parent=0 // pred_check
    _
  $region19: #{generator_forward.9} parent=0 // pred_check_branch
    %2805 = sbr.rel (0) target = $region21
  $region20: #{generator_forward.9} parent=0 // pred_region
    _
  $region21: #{generator_forward.9} parent=0 // pred_fallthru
    _

</llo_original>
